<compile_context>
chip_gen: v5e
topology: v5e:2x2
jax: 0.10.0
libtpu: 0.0.40
codegen_flags: <defaults>
</compile_context>

<pallas_src>
import functools

import jax
import jax.numpy as jnp
from jax.experimental import pallas as pl
from jax.experimental.pallas import tpu as pltpu

TB = 8  # samples processed per grid step (full f32 sublane tile)


# ---------------------------------------------------------------------------
# In-kernel building blocks (operate on values in (H, W, TB, C) layout)
# ---------------------------------------------------------------------------
def _leaky(x, slope):
    return jnp.where(x >= 0, x, slope * x)


def _conv4x4_s2_p1(x, w_ref, out_hw):
    """4x4 / stride-2 / pad-1 convolution on an (H, W, TB, Cin) activation.

    w_ref: (16, Cin, Cout) bf16, tap-major (tap = kh*4 + kw).
    Returns (out_hw, out_hw, TB, Cout) float32.
    """
    H, W, tb, cin = x.shape
    cout = w_ref.shape[2]
    ho = wo = out_hw

    # Zero-pad H and W by 1 (leading, untiled dims -> cheap concatenates).
    zr = jnp.zeros((1, W, tb, cin), x.dtype)
    xp = jnp.concatenate([zr, x, zr], axis=0)            # (H+2, W,   TB, Cin)
    zc = jnp.zeros((H + 2, 1, tb, cin), x.dtype)
    xp = jnp.concatenate([zc, xp, zc], axis=1)           # (H+2, W+2, TB, Cin)

    # Phase decomposition of the padded input, leading dims only:
    #   phase[r][c][a, b] == xp[2a + r, 2b + c]
    xh = xp.reshape(ho + 1, 2, W + 2, tb, cin)
    phase = []
    for r in range(2):
        row = xh[:, r].reshape(ho + 1, wo + 1, 2, tb, cin)
        phase.append([row[:, :, c] for c in range(2)])

    acc = jnp.zeros((ho * wo * tb, cout), jnp.float32)
    for kh in range(4):
        ah, rh = divmod(kh, 2)
        for kw in range(4):
            aw, rw = divmod(kw, 2)
            # tap[oh, ow] == xp[2*oh + kh, 2*ow + kw]
            tap = phase[rh][rw][ah:ah + ho, aw:aw + wo]  # (ho, wo, TB, Cin)
            lhs = tap.reshape(ho * wo * tb, cin).astype(jnp.bfloat16)
            acc = acc + jnp.dot(lhs, w_ref[kh * 4 + kw],
                                preferred_element_type=jnp.float32)
    return acc.reshape(ho, wo, tb, cout)


def _layernorm_lrelu(x, g, b, eps, slope):
    """Per-sample LayerNorm over (H, W, C) of an (H, W, TB, C) activation.

    Matches torch.nn.LayerNorm (biased variance, eps inside sqrt), followed by
    LeakyReLU(slope).  g, b have shape (H, W, 1, C).
    """
    mean = jnp.mean(x, axis=(0, 1, 3), keepdims=True)
    xc = x - mean
    var = jnp.mean(xc * xc, axis=(0, 1, 3), keepdims=True)
    y = xc * jax.lax.rsqrt(var + eps) * g + b
    return _leaky(y, slope)


# ---------------------------------------------------------------------------
# Fused critic kernel: one grid step == TB samples end-to-end
# ---------------------------------------------------------------------------
def _critic_kernel(p1_ref, w1_ref, w2_ref, g1_ref, b1_ref,
                   w3_ref, g2_ref, b2_ref, w4_ref, o_ref,
                   *, fd, hw1, eps, slope):
    tb = o_ref.shape[0]

    # ---- conv1 (pre-im2col'd patches) + LeakyReLU : 32x32 -> 16x16 --------
    # p1_ref: (hw1*hw1*TB, 16*Cin) bf16, rows ordered (oh, ow, sample).
    a1 = jnp.dot(p1_ref[...], w1_ref[...], preferred_element_type=jnp.float32)
    a1 = _leaky(a1, slope).reshape(hw1, hw1, tb, fd)       # (16,16,TB,fd) f32

    # ---- conv2 + LayerNorm([2fd, 8, 8]) + LeakyReLU : 16x16 -> 8x8 --------
    a2 = _conv4x4_s2_p1(a1, w2_ref, out_hw=8)              # (8,8,TB,2fd)
    a2 = _layernorm_lrelu(a2, g1_ref[...], b1_ref[...], eps, slope)

    # ---- conv3 + LayerNorm([4fd, 4, 4]) + LeakyReLU : 8x8 -> 4x4 ----------
    a3 = _conv4x4_s2_p1(a2, w3_ref, out_hw=4)              # (4,4,TB,4fd)
    a3 = _layernorm_lrelu(a3, g2_ref[...], b2_ref[...], eps, slope)

    # ---- conv4 (4x4 valid, 1 channel) == full per-sample contraction ------
    # VPU multiply + reduce (XLU) instead of a 1-lane MXU matmul.
    s = jnp.sum(a3 * w4_ref[...], axis=(0, 1))             # (TB, 4fd)
    o_ref[...] = jnp.sum(s, axis=1, keepdims=True)         # (TB, 1)


# ---------------------------------------------------------------------------
# Parameters (deterministic, shapes from WGANGPCritic.__init__)
# ---------------------------------------------------------------------------
def init_params(key, channels=3, features_d=64):
    k1, k2, k3, k4 = jax.random.split(key, 4)
    std = 0.02
    fd = features_d

    def conv_w(k, kh, kw, cin, cout):
        # Stored as (kh, kw, cin, cout) == torch_weight.permute(2, 3, 1, 0).
        return std * jax.random.normal(k, (kh, kw, cin, cout), jnp.float32)

    return {
        "w1": conv_w(k1, 4, 4, channels, fd),        # Conv2d(C,   fd, 4, 2, 1)
        "w2": conv_w(k2, 4, 4, fd, 2 * fd),          # Conv2d(fd, 2fd, 4, 2, 1)
        # LayerNorm([2fd, 8, 8]) affine, stored (H, W, 1, C).  To load trained
        # torch params (shape (C, 8, 8)): g.transpose(1, 2, 0)[:, :, None, :].
        "ln1_g": jnp.ones((8, 8, 1, 2 * fd), jnp.float32),
        "ln1_b": jnp.zeros((8, 8, 1, 2 * fd), jnp.float32),
        "w3": conv_w(k3, 4, 4, 2 * fd, 4 * fd),      # Conv2d(2fd, 4fd, 4, 2, 1)
        "ln2_g": jnp.ones((4, 4, 1, 4 * fd), jnp.float32),
        "ln2_b": jnp.zeros((4, 4, 1, 4 * fd), jnp.float32),
        "w4": conv_w(k4, 4, 4, 4 * fd, 1),           # Conv2d(4fd, 1, 4, 1, 0)
    }


# ---------------------------------------------------------------------------
# Forward pass (matches WGANGPCritic.forward semantics)
# ---------------------------------------------------------------------------
def wgan_gp_critic_forward(x_nchw, params, features_d):
    fd = features_d
    N, C, H, W = x_nchw.shape
    assert (H, W) == (32, 32), "spatial size fixed by LayerNorm([2fd, 8, 8])"

    n_pad = ((N + TB - 1) // TB) * TB
    nb = n_pad // TB

    # NCHW -> NHWC, pad batch up to a multiple of TB with zeros.
    x = jnp.transpose(x_nchw, (0, 2, 3, 1)).astype(jnp.float32)
    if n_pad != N:
        x = jnp.pad(x, ((0, n_pad - N), (0, 0), (0, 0), (0, 0)))

    # im2col for conv1 only (k=4, s=2, p=1): 32x32 -> 16x16 output positions.
    xp = jnp.pad(x, ((0, 0), (1, 1), (1, 1), (0, 0)))
    taps = []
    for i in range(4):
        for j in range(4):
            taps.append(xp[:, i:i + 32:2, j:j + 32:2, :])   # (n_pad,16,16,C)
    p1 = jnp.stack(taps, axis=3).reshape(n_pad, 16, 16, 16 * C)
    # Rows ordered (block, oh, ow, sample-in-block): each grid step reads one
    # contiguous (16*16*TB, 16*C) slab.
    p1 = p1.reshape(nb, TB, 16, 16, 16 * C).transpose(0, 2, 3, 1, 4)
    p1 = p1.reshape(nb * 16 * 16 * TB, 16 * C).astype(jnp.bfloat16)

    # Weight packing (bf16 MXU operands; w4 stays f32 for the VPU epilogue).
    w1 = params["w1"].reshape(16 * C, fd).astype(jnp.bfloat16)
    w2 = params["w2"].reshape(16, fd, 2 * fd).astype(jnp.bfloat16)
    w3 = params["w3"].reshape(16, 2 * fd, 4 * fd).astype(jnp.bfloat16)
    w4 = jnp.transpose(params["w4"], (0, 1, 3, 2)).astype(jnp.float32)  # (4,4,1,4fd)

    kernel = functools.partial(_critic_kernel, fd=fd, hw1=16, eps=1e-5, slope=0.2)
    out = pl.pallas_call(
        kernel,
        out_shape=jax.ShapeDtypeStruct((n_pad, 1), jnp.float32),
        grid=(nb,),
        in_specs=[
            pl.BlockSpec((16 * 16 * TB, 16 * C), lambda b: (b, 0)),     # conv1 patches
            pl.BlockSpec((16 * C, fd), lambda b: (0, 0)),               # w1
            pl.BlockSpec((16, fd, 2 * fd), lambda b: (0, 0, 0)),        # w2 taps
            pl.BlockSpec((8, 8, 1, 2 * fd), lambda b: (0, 0, 0, 0)),    # ln1 gamma
            pl.BlockSpec((8, 8, 1, 2 * fd), lambda b: (0, 0, 0, 0)),    # ln1 beta
            pl.BlockSpec((16, 2 * fd, 4 * fd), lambda b: (0, 0, 0)),    # w3 taps
            pl.BlockSpec((4, 4, 1, 4 * fd), lambda b: (0, 0, 0, 0)),    # ln2 gamma
            pl.BlockSpec((4, 4, 1, 4 * fd), lambda b: (0, 0, 0, 0)),    # ln2 beta
            pl.BlockSpec((4, 4, 1, 4 * fd), lambda b: (0, 0, 0, 0)),    # w4
        ],
        out_specs=pl.BlockSpec((TB, 1), lambda b: (b, 0)),
        compiler_params=pltpu.CompilerParams(
            dimension_semantics=("parallel",),
            vmem_limit_bytes=32 * 1024 * 1024,
        ),
    )(p1, w1, w2, params["ln1_g"], params["ln1_b"],
      w3, params["ln2_g"], params["ln2_b"], w4)

    # .view(-1, 1).squeeze(1) -> (N,), dropping the zero-padded samples.
    return out[:N, 0]


# ---------------------------------------------------------------------------
if __name__ == "__main__":
    key = jax.random.PRNGKey(0)
    k_params, k_input = jax.random.split(key)

    batch = 2
    channels = 3
    features_d = 32   # kept small for a quick synthetic run (module default 64)

    params = init_params(k_params, channels=channels, features_d=features_d)
    x = jax.random.normal(k_input, (batch, channels, 32, 32), jnp.float32)

    forward = jax.jit(lambda xx, pp: wgan_gp_critic_forward(xx, pp, features_d))
    out = jax.block_until_ready(forward(x, params))

    assert out.shape == (batch,), out.shape
    assert bool(jnp.all(jnp.isfinite(out)))
    print("KERNEL_OK")
</pallas_src>

<mosaic_0001>
module attributes {stable_mosaic.version = 11 : i64} {
  func.func @_critic_kernel(%arg0: i32, %arg1: memref<2048x48xbf16, #tpu.memory_space<vmem>>, %arg2: memref<48x32xbf16, #tpu.memory_space<vmem>>, %arg3: memref<16x32x64xbf16, #tpu.memory_space<vmem>>, %arg4: memref<8x8x1x64xf32, #tpu.memory_space<vmem>>, %arg5: memref<8x8x1x64xf32, #tpu.memory_space<vmem>>, %arg6: memref<16x64x128xbf16, #tpu.memory_space<vmem>>, %arg7: memref<4x4x1x128xf32, #tpu.memory_space<vmem>>, %arg8: memref<4x4x1x128xf32, #tpu.memory_space<vmem>>, %arg9: memref<4x4x1x128xf32, #tpu.memory_space<vmem>>, %arg10: memref<8x1xf32, #tpu.memory_space<vmem>>) attributes {dimension_semantics = [#tpu.dimension_semantics<parallel>], iteration_bounds = array<i64: 1>, scalar_prefetch = 0 : i64, scratch_operands = 0 : i64, tpu.core_type = #tpu.core_type<tc>, window_params = [{transform_indices = @transform_0, window_bounds = array<i64: 2048, 48>}, {pipeline_mode = #tpu.pipeline_mode<synchronous>, transform_indices = @transform_1, window_bounds = array<i64: 48, 32>}, {pipeline_mode = #tpu.pipeline_mode<synchronous>, transform_indices = @transform_2, window_bounds = array<i64: 16, 32, 64>}, {pipeline_mode = #tpu.pipeline_mode<synchronous>, transform_indices = @transform_3, window_bounds = array<i64: 8, 8, 1, 64>}, {pipeline_mode = #tpu.pipeline_mode<synchronous>, transform_indices = @transform_4, window_bounds = array<i64: 8, 8, 1, 64>}, {pipeline_mode = #tpu.pipeline_mode<synchronous>, transform_indices = @transform_5, window_bounds = array<i64: 16, 64, 128>}, {pipeline_mode = #tpu.pipeline_mode<synchronous>, transform_indices = @transform_6, window_bounds = array<i64: 4, 4, 1, 128>}, {pipeline_mode = #tpu.pipeline_mode<synchronous>, transform_indices = @transform_7, window_bounds = array<i64: 4, 4, 1, 128>}, {pipeline_mode = #tpu.pipeline_mode<synchronous>, transform_indices = @transform_8, window_bounds = array<i64: 4, 4, 1, 128>}, {transform_indices = @transform_9, window_bounds = array<i64: 8, 1>}]} {
    %c0 = arith.constant 0 : index
    %c0_0 = arith.constant 0 : index
    %0 = vector.load %arg1[%c0, %c0_0] : memref<2048x48xbf16, #tpu.memory_space<vmem>>, vector<2048x48xbf16>
    %c0_1 = arith.constant 0 : index
    %c0_2 = arith.constant 0 : index
    %1 = vector.load %arg2[%c0_1, %c0_2] : memref<48x32xbf16, #tpu.memory_space<vmem>>, vector<48x32xbf16>
    %cst = arith.constant dense<0.000000e+00> : vector<2048x32xf32>
    %2 = tpu.matmul %0, %1, %cst {dimension_numbers = #tpu.dot_dimension_numbers<[1], [0], [0], [1], [0, 0, 1, 1], [], []>} : vector<2048x48xbf16>, vector<48x32xbf16>, vector<2048x32xf32> -> vector<2048x32xf32>
    %cst_3 = arith.constant 0.000000e+00 : f32
    %3 = vector.broadcast %cst_3 : f32 to vector<2048x32xf32>
    %4 = arith.cmpf oge, %2, %3 : vector<2048x32xf32>
    %cst_4 = arith.constant 2.000000e-01 : f32
    %5 = vector.broadcast %cst_4 : f32 to vector<2048x32xf32>
    %6 = arith.mulf %5, %2 : vector<2048x32xf32>
    %7 = arith.select %4, %2, %6 : vector<2048x32xi1>, vector<2048x32xf32>
    %8 = vector.shape_cast %7 : vector<2048x32xf32> to vector<16x16x8x32xf32>
    %cst_5 = arith.constant 0.000000e+00 : f32
    %9 = vector.broadcast %cst_5 : f32 to vector<1x16x8x32xf32>
    %10 = tpu.concatenate %9, %8, %9 in 0 : vector<1x16x8x32xf32>, vector<16x16x8x32xf32>, vector<1x16x8x32xf32> -> vector<18x16x8x32xf32>
    %cst_6 = arith.constant 0.000000e+00 : f32
    %11 = vector.broadcast %cst_6 : f32 to vector<18x1x8x32xf32>
    %12 = tpu.concatenate %11, %10, %11 in 1 : vector<18x1x8x32xf32>, vector<18x16x8x32xf32>, vector<18x1x8x32xf32> -> vector<18x18x8x32xf32>
    %13 = vector.shape_cast %12 : vector<18x18x8x32xf32> to vector<9x2x18x8x32xf32>
    %14 = vector.extract_strided_slice %13 {offsets = [0, 0, 0, 0, 0], sizes = [9, 1, 18, 8, 32], strides = [1, 1, 1, 1, 1]} : vector<9x2x18x8x32xf32> to vector<9x1x18x8x32xf32>
    %15 = vector.shape_cast %14 : vector<9x1x18x8x32xf32> to vector<9x18x8x32xf32>
    %16 = vector.shape_cast %15 : vector<9x18x8x32xf32> to vector<9x9x2x8x32xf32>
    %17 = vector.extract_strided_slice %16 {offsets = [0, 0, 0, 0, 0], sizes = [9, 9, 1, 8, 32], strides = [1, 1, 1, 1, 1]} : vector<9x9x2x8x32xf32> to vector<9x9x1x8x32xf32>
    %18 = vector.shape_cast %17 : vector<9x9x1x8x32xf32> to vector<9x9x8x32xf32>
    %19 = vector.extract_strided_slice %16 {offsets = [0, 0, 1, 0, 0], sizes = [9, 9, 1, 8, 32], strides = [1, 1, 1, 1, 1]} : vector<9x9x2x8x32xf32> to vector<9x9x1x8x32xf32>
    %20 = vector.shape_cast %19 : vector<9x9x1x8x32xf32> to vector<9x9x8x32xf32>
    %21 = vector.extract_strided_slice %13 {offsets = [0, 1, 0, 0, 0], sizes = [9, 1, 18, 8, 32], strides = [1, 1, 1, 1, 1]} : vector<9x2x18x8x32xf32> to vector<9x1x18x8x32xf32>
    %22 = vector.shape_cast %21 : vector<9x1x18x8x32xf32> to vector<9x18x8x32xf32>
    %23 = vector.shape_cast %22 : vector<9x18x8x32xf32> to vector<9x9x2x8x32xf32>
    %24 = vector.extract_strided_slice %23 {offsets = [0, 0, 0, 0, 0], sizes = [9, 9, 1, 8, 32], strides = [1, 1, 1, 1, 1]} : vector<9x9x2x8x32xf32> to vector<9x9x1x8x32xf32>
    %25 = vector.shape_cast %24 : vector<9x9x1x8x32xf32> to vector<9x9x8x32xf32>
    %26 = vector.extract_strided_slice %23 {offsets = [0, 0, 1, 0, 0], sizes = [9, 9, 1, 8, 32], strides = [1, 1, 1, 1, 1]} : vector<9x9x2x8x32xf32> to vector<9x9x1x8x32xf32>
    %27 = vector.shape_cast %26 : vector<9x9x1x8x32xf32> to vector<9x9x8x32xf32>
    %cst_7 = arith.constant 0.000000e+00 : f32
    %28 = vector.broadcast %cst_7 : f32 to vector<512x64xf32>
    %29 = vector.extract_strided_slice %18 {offsets = [0, 0, 0, 0], sizes = [8, 8, 8, 32], strides = [1, 1, 1, 1]} : vector<9x9x8x32xf32> to vector<8x8x8x32xf32>
    %30 = vector.shape_cast %29 : vector<8x8x8x32xf32> to vector<512x32xf32>
    %31 = arith.truncf %30 : vector<512x32xf32> to vector<512x32xbf16>
    %c0_8 = arith.constant 0 : index
    %c0_9 = arith.constant 0 : index
    %c0_10 = arith.constant 0 : index
    %32 = vector.load %arg3[%c0_8, %c0_9, %c0_10] : memref<16x32x64xbf16, #tpu.memory_space<vmem>>, vector<1x32x64xbf16>
    %33 = vector.shape_cast %32 : vector<1x32x64xbf16> to vector<32x64xbf16>
    %cst_11 = arith.constant dense<0.000000e+00> : vector<512x64xf32>
    %34 = tpu.matmul %31, %33, %cst_11 {dimension_numbers = #tpu.dot_dimension_numbers<[1], [0], [0], [1], [0, 0, 1, 1], [], []>} : vector<512x32xbf16>, vector<32x64xbf16>, vector<512x64xf32> -> vector<512x64xf32>
    %35 = arith.addf %28, %34 : vector<512x64xf32>
    %36 = vector.extract_strided_slice %20 {offsets = [0, 0, 0, 0], sizes = [8, 8, 8, 32], strides = [1, 1, 1, 1]} : vector<9x9x8x32xf32> to vector<8x8x8x32xf32>
    %37 = vector.shape_cast %36 : vector<8x8x8x32xf32> to vector<512x32xf32>
    %38 = arith.truncf %37 : vector<512x32xf32> to vector<512x32xbf16>
    %c1 = arith.constant 1 : index
    %c0_12 = arith.constant 0 : index
    %c0_13 = arith.constant 0 : index
    %39 = vector.load %arg3[%c1, %c0_12, %c0_13] : memref<16x32x64xbf16, #tpu.memory_space<vmem>>, vector<1x32x64xbf16>
    %40 = vector.shape_cast %39 : vector<1x32x64xbf16> to vector<32x64xbf16>
    %cst_14 = arith.constant dense<0.000000e+00> : vector<512x64xf32>
    %41 = tpu.matmul %38, %40, %cst_14 {dimension_numbers = #tpu.dot_dimension_numbers<[1], [0], [0], [1], [0, 0, 1, 1], [], []>} : vector<512x32xbf16>, vector<32x64xbf16>, vector<512x64xf32> -> vector<512x64xf32>
    %42 = arith.addf %35, %41 : vector<512x64xf32>
    %43 = vector.extract_strided_slice %18 {offsets = [0, 1, 0, 0], sizes = [8, 8, 8, 32], strides = [1, 1, 1, 1]} : vector<9x9x8x32xf32> to vector<8x8x8x32xf32>
    %44 = vector.shape_cast %43 : vector<8x8x8x32xf32> to vector<512x32xf32>
    %45 = arith.truncf %44 : vector<512x32xf32> to vector<512x32xbf16>
    %c2 = arith.constant 2 : index
    %c0_15 = arith.constant 0 : index
    %c0_16 = arith.constant 0 : index
    %46 = vector.load %arg3[%c2, %c0_15, %c0_16] : memref<16x32x64xbf16, #tpu.memory_space<vmem>>, vector<1x32x64xbf16>
    %47 = vector.shape_cast %46 : vector<1x32x64xbf16> to vector<32x64xbf16>
    %cst_17 = arith.constant dense<0.000000e+00> : vector<512x64xf32>
    %48 = tpu.matmul %45, %47, %cst_17 {dimension_numbers = #tpu.dot_dimension_numbers<[1], [0], [0], [1], [0, 0, 1, 1], [], []>} : vector<512x32xbf16>, vector<32x64xbf16>, vector<512x64xf32> -> vector<512x64xf32>
    %49 = arith.addf %42, %48 : vector<512x64xf32>
    %50 = vector.extract_strided_slice %20 {offsets = [0, 1, 0, 0], sizes = [8, 8, 8, 32], strides = [1, 1, 1, 1]} : vector<9x9x8x32xf32> to vector<8x8x8x32xf32>
    %51 = vector.shape_cast %50 : vector<8x8x8x32xf32> to vector<512x32xf32>
    %52 = arith.truncf %51 : vector<512x32xf32> to vector<512x32xbf16>
    %c3 = arith.constant 3 : index
    %c0_18 = arith.constant 0 : index
    %c0_19 = arith.constant 0 : index
    %53 = vector.load %arg3[%c3, %c0_18, %c0_19] : memref<16x32x64xbf16, #tpu.memory_space<vmem>>, vector<1x32x64xbf16>
    %54 = vector.shape_cast %53 : vector<1x32x64xbf16> to vector<32x64xbf16>
    %cst_20 = arith.constant dense<0.000000e+00> : vector<512x64xf32>
    %55 = tpu.matmul %52, %54, %cst_20 {dimension_numbers = #tpu.dot_dimension_numbers<[1], [0], [0], [1], [0, 0, 1, 1], [], []>} : vector<512x32xbf16>, vector<32x64xbf16>, vector<512x64xf32> -> vector<512x64xf32>
    %56 = arith.addf %49, %55 : vector<512x64xf32>
    %57 = vector.extract_strided_slice %25 {offsets = [0, 0, 0, 0], sizes = [8, 8, 8, 32], strides = [1, 1, 1, 1]} : vector<9x9x8x32xf32> to vector<8x8x8x32xf32>
    %58 = vector.shape_cast %57 : vector<8x8x8x32xf32> to vector<512x32xf32>
    %59 = arith.truncf %58 : vector<512x32xf32> to vector<512x32xbf16>
    %c4 = arith.constant 4 : index
    %c0_21 = arith.constant 0 : index
    %c0_22 = arith.constant 0 : index
    %60 = vector.load %arg3[%c4, %c0_21, %c0_22] : memref<16x32x64xbf16, #tpu.memory_space<vmem>>, vector<1x32x64xbf16>
    %61 = vector.shape_cast %60 : vector<1x32x64xbf16> to vector<32x64xbf16>
    %cst_23 = arith.constant dense<0.000000e+00> : vector<512x64xf32>
    %62 = tpu.matmul %59, %61, %cst_23 {dimension_numbers = #tpu.dot_dimension_numbers<[1], [0], [0], [1], [0, 0, 1, 1], [], []>} : vector<512x32xbf16>, vector<32x64xbf16>, vector<512x64xf32> -> vector<512x64xf32>
    %63 = arith.addf %56, %62 : vector<512x64xf32>
    %64 = vector.extract_strided_slice %27 {offsets = [0, 0, 0, 0], sizes = [8, 8, 8, 32], strides = [1, 1, 1, 1]} : vector<9x9x8x32xf32> to vector<8x8x8x32xf32>
    %65 = vector.shape_cast %64 : vector<8x8x8x32xf32> to vector<512x32xf32>
    %66 = arith.truncf %65 : vector<512x32xf32> to vector<512x32xbf16>
    %c5 = arith.constant 5 : index
    %c0_24 = arith.constant 0 : index
    %c0_25 = arith.constant 0 : index
    %67 = vector.load %arg3[%c5, %c0_24, %c0_25] : memref<16x32x64xbf16, #tpu.memory_space<vmem>>, vector<1x32x64xbf16>
    %68 = vector.shape_cast %67 : vector<1x32x64xbf16> to vector<32x64xbf16>
    %cst_26 = arith.constant dense<0.000000e+00> : vector<512x64xf32>
    %69 = tpu.matmul %66, %68, %cst_26 {dimension_numbers = #tpu.dot_dimension_numbers<[1], [0], [0], [1], [0, 0, 1, 1], [], []>} : vector<512x32xbf16>, vector<32x64xbf16>, vector<512x64xf32> -> vector<512x64xf32>
    %70 = arith.addf %63, %69 : vector<512x64xf32>
    %71 = vector.extract_strided_slice %25 {offsets = [0, 1, 0, 0], sizes = [8, 8, 8, 32], strides = [1, 1, 1, 1]} : vector<9x9x8x32xf32> to vector<8x8x8x32xf32>
    %72 = vector.shape_cast %71 : vector<8x8x8x32xf32> to vector<512x32xf32>
    %73 = arith.truncf %72 : vector<512x32xf32> to vector<512x32xbf16>
    %c6 = arith.constant 6 : index
    %c0_27 = arith.constant 0 : index
    %c0_28 = arith.constant 0 : index
    %74 = vector.load %arg3[%c6, %c0_27, %c0_28] : memref<16x32x64xbf16, #tpu.memory_space<vmem>>, vector<1x32x64xbf16>
    %75 = vector.shape_cast %74 : vector<1x32x64xbf16> to vector<32x64xbf16>
    %cst_29 = arith.constant dense<0.000000e+00> : vector<512x64xf32>
    %76 = tpu.matmul %73, %75, %cst_29 {dimension_numbers = #tpu.dot_dimension_numbers<[1], [0], [0], [1], [0, 0, 1, 1], [], []>} : vector<512x32xbf16>, vector<32x64xbf16>, vector<512x64xf32> -> vector<512x64xf32>
    %77 = arith.addf %70, %76 : vector<512x64xf32>
    %78 = vector.extract_strided_slice %27 {offsets = [0, 1, 0, 0], sizes = [8, 8, 8, 32], strides = [1, 1, 1, 1]} : vector<9x9x8x32xf32> to vector<8x8x8x32xf32>
    %79 = vector.shape_cast %78 : vector<8x8x8x32xf32> to vector<512x32xf32>
    %80 = arith.truncf %79 : vector<512x32xf32> to vector<512x32xbf16>
    %c7 = arith.constant 7 : index
    %c0_30 = arith.constant 0 : index
    %c0_31 = arith.constant 0 : index
    %81 = vector.load %arg3[%c7, %c0_30, %c0_31] : memref<16x32x64xbf16, #tpu.memory_space<vmem>>, vector<1x32x64xbf16>
    %82 = vector.shape_cast %81 : vector<1x32x64xbf16> to vector<32x64xbf16>
    %cst_32 = arith.constant dense<0.000000e+00> : vector<512x64xf32>
    %83 = tpu.matmul %80, %82, %cst_32 {dimension_numbers = #tpu.dot_dimension_numbers<[1], [0], [0], [1], [0, 0, 1, 1], [], []>} : vector<512x32xbf16>, vector<32x64xbf16>, vector<512x64xf32> -> vector<512x64xf32>
    %84 = arith.addf %77, %83 : vector<512x64xf32>
    %85 = vector.extract_strided_slice %18 {offsets = [1, 0, 0, 0], sizes = [8, 8, 8, 32], strides = [1, 1, 1, 1]} : vector<9x9x8x32xf32> to vector<8x8x8x32xf32>
    %86 = vector.shape_cast %85 : vector<8x8x8x32xf32> to vector<512x32xf32>
    %87 = arith.truncf %86 : vector<512x32xf32> to vector<512x32xbf16>
    %c8 = arith.constant 8 : index
    %c0_33 = arith.constant 0 : index
    %c0_34 = arith.constant 0 : index
    %88 = vector.load %arg3[%c8, %c0_33, %c0_34] : memref<16x32x64xbf16, #tpu.memory_space<vmem>>, vector<1x32x64xbf16>
    %89 = vector.shape_cast %88 : vector<1x32x64xbf16> to vector<32x64xbf16>
    %cst_35 = arith.constant dense<0.000000e+00> : vector<512x64xf32>
    %90 = tpu.matmul %87, %89, %cst_35 {dimension_numbers = #tpu.dot_dimension_numbers<[1], [0], [0], [1], [0, 0, 1, 1], [], []>} : vector<512x32xbf16>, vector<32x64xbf16>, vector<512x64xf32> -> vector<512x64xf32>
    %91 = arith.addf %84, %90 : vector<512x64xf32>
    %92 = vector.extract_strided_slice %20 {offsets = [1, 0, 0, 0], sizes = [8, 8, 8, 32], strides = [1, 1, 1, 1]} : vector<9x9x8x32xf32> to vector<8x8x8x32xf32>
    %93 = vector.shape_cast %92 : vector<8x8x8x32xf32> to vector<512x32xf32>
    %94 = arith.truncf %93 : vector<512x32xf32> to vector<512x32xbf16>
    %c9 = arith.constant 9 : index
    %c0_36 = arith.constant 0 : index
    %c0_37 = arith.constant 0 : index
    %95 = vector.load %arg3[%c9, %c0_36, %c0_37] : memref<16x32x64xbf16, #tpu.memory_space<vmem>>, vector<1x32x64xbf16>
    %96 = vector.shape_cast %95 : vector<1x32x64xbf16> to vector<32x64xbf16>
    %cst_38 = arith.constant dense<0.000000e+00> : vector<512x64xf32>
    %97 = tpu.matmul %94, %96, %cst_38 {dimension_numbers = #tpu.dot_dimension_numbers<[1], [0], [0], [1], [0, 0, 1, 1], [], []>} : vector<512x32xbf16>, vector<32x64xbf16>, vector<512x64xf32> -> vector<512x64xf32>
    %98 = arith.addf %91, %97 : vector<512x64xf32>
    %99 = vector.extract_strided_slice %18 {offsets = [1, 1, 0, 0], sizes = [8, 8, 8, 32], strides = [1, 1, 1, 1]} : vector<9x9x8x32xf32> to vector<8x8x8x32xf32>
    %100 = vector.shape_cast %99 : vector<8x8x8x32xf32> to vector<512x32xf32>
    %101 = arith.truncf %100 : vector<512x32xf32> to vector<512x32xbf16>
    %c10 = arith.constant 10 : index
    %c0_39 = arith.constant 0 : index
    %c0_40 = arith.constant 0 : index
    %102 = vector.load %arg3[%c10, %c0_39, %c0_40] : memref<16x32x64xbf16, #tpu.memory_space<vmem>>, vector<1x32x64xbf16>
    %103 = vector.shape_cast %102 : vector<1x32x64xbf16> to vector<32x64xbf16>
    %cst_41 = arith.constant dense<0.000000e+00> : vector<512x64xf32>
    %104 = tpu.matmul %101, %103, %cst_41 {dimension_numbers = #tpu.dot_dimension_numbers<[1], [0], [0], [1], [0, 0, 1, 1], [], []>} : vector<512x32xbf16>, vector<32x64xbf16>, vector<512x64xf32> -> vector<512x64xf32>
    %105 = arith.addf %98, %104 : vector<512x64xf32>
    %106 = vector.extract_strided_slice %20 {offsets = [1, 1, 0, 0], sizes = [8, 8, 8, 32], strides = [1, 1, 1, 1]} : vector<9x9x8x32xf32> to vector<8x8x8x32xf32>
    %107 = vector.shape_cast %106 : vector<8x8x8x32xf32> to vector<512x32xf32>
    %108 = arith.truncf %107 : vector<512x32xf32> to vector<512x32xbf16>
    %c11 = arith.constant 11 : index
    %c0_42 = arith.constant 0 : index
    %c0_43 = arith.constant 0 : index
    %109 = vector.load %arg3[%c11, %c0_42, %c0_43] : memref<16x32x64xbf16, #tpu.memory_space<vmem>>, vector<1x32x64xbf16>
    %110 = vector.shape_cast %109 : vector<1x32x64xbf16> to vector<32x64xbf16>
    %cst_44 = arith.constant dense<0.000000e+00> : vector<512x64xf32>
    %111 = tpu.matmul %108, %110, %cst_44 {dimension_numbers = #tpu.dot_dimension_numbers<[1], [0], [0], [1], [0, 0, 1, 1], [], []>} : vector<512x32xbf16>, vector<32x64xbf16>, vector<512x64xf32> -> vector<512x64xf32>
    %112 = arith.addf %105, %111 : vector<512x64xf32>
    %113 = vector.extract_strided_slice %25 {offsets = [1, 0, 0, 0], sizes = [8, 8, 8, 32], strides = [1, 1, 1, 1]} : vector<9x9x8x32xf32> to vector<8x8x8x32xf32>
    %114 = vector.shape_cast %113 : vector<8x8x8x32xf32> to vector<512x32xf32>
    %115 = arith.truncf %114 : vector<512x32xf32> to vector<512x32xbf16>
    %c12 = arith.constant 12 : index
    %c0_45 = arith.constant 0 : index
    %c0_46 = arith.constant 0 : index
    %116 = vector.load %arg3[%c12, %c0_45, %c0_46] : memref<16x32x64xbf16, #tpu.memory_space<vmem>>, vector<1x32x64xbf16>
    %117 = vector.shape_cast %116 : vector<1x32x64xbf16> to vector<32x64xbf16>
    %cst_47 = arith.constant dense<0.000000e+00> : vector<512x64xf32>
    %118 = tpu.matmul %115, %117, %cst_47 {dimension_numbers = #tpu.dot_dimension_numbers<[1], [0], [0], [1], [0, 0, 1, 1], [], []>} : vector<512x32xbf16>, vector<32x64xbf16>, vector<512x64xf32> -> vector<512x64xf32>
    %119 = arith.addf %112, %118 : vector<512x64xf32>
    %120 = vector.extract_strided_slice %27 {offsets = [1, 0, 0, 0], sizes = [8, 8, 8, 32], strides = [1, 1, 1, 1]} : vector<9x9x8x32xf32> to vector<8x8x8x32xf32>
    %121 = vector.shape_cast %120 : vector<8x8x8x32xf32> to vector<512x32xf32>
    %122 = arith.truncf %121 : vector<512x32xf32> to vector<512x32xbf16>
    %c13 = arith.constant 13 : index
    %c0_48 = arith.constant 0 : index
    %c0_49 = arith.constant 0 : index
    %123 = vector.load %arg3[%c13, %c0_48, %c0_49] : memref<16x32x64xbf16, #tpu.memory_space<vmem>>, vector<1x32x64xbf16>
    %124 = vector.shape_cast %123 : vector<1x32x64xbf16> to vector<32x64xbf16>
    %cst_50 = arith.constant dense<0.000000e+00> : vector<512x64xf32>
    %125 = tpu.matmul %122, %124, %cst_50 {dimension_numbers = #tpu.dot_dimension_numbers<[1], [0], [0], [1], [0, 0, 1, 1], [], []>} : vector<512x32xbf16>, vector<32x64xbf16>, vector<512x64xf32> -> vector<512x64xf32>
    %126 = arith.addf %119, %125 : vector<512x64xf32>
    %127 = vector.extract_strided_slice %25 {offsets = [1, 1, 0, 0], sizes = [8, 8, 8, 32], strides = [1, 1, 1, 1]} : vector<9x9x8x32xf32> to vector<8x8x8x32xf32>
    %128 = vector.shape_cast %127 : vector<8x8x8x32xf32> to vector<512x32xf32>
    %129 = arith.truncf %128 : vector<512x32xf32> to vector<512x32xbf16>
    %c14 = arith.constant 14 : index
    %c0_51 = arith.constant 0 : index
    %c0_52 = arith.constant 0 : index
    %130 = vector.load %arg3[%c14, %c0_51, %c0_52] : memref<16x32x64xbf16, #tpu.memory_space<vmem>>, vector<1x32x64xbf16>
    %131 = vector.shape_cast %130 : vector<1x32x64xbf16> to vector<32x64xbf16>
    %cst_53 = arith.constant dense<0.000000e+00> : vector<512x64xf32>
    %132 = tpu.matmul %129, %131, %cst_53 {dimension_numbers = #tpu.dot_dimension_numbers<[1], [0], [0], [1], [0, 0, 1, 1], [], []>} : vector<512x32xbf16>, vector<32x64xbf16>, vector<512x64xf32> -> vector<512x64xf32>
    %133 = arith.addf %126, %132 : vector<512x64xf32>
    %134 = vector.extract_strided_slice %27 {offsets = [1, 1, 0, 0], sizes = [8, 8, 8, 32], strides = [1, 1, 1, 1]} : vector<9x9x8x32xf32> to vector<8x8x8x32xf32>
    %135 = vector.shape_cast %134 : vector<8x8x8x32xf32> to vector<512x32xf32>
    %136 = arith.truncf %135 : vector<512x32xf32> to vector<512x32xbf16>
    %c15 = arith.constant 15 : index
    %c0_54 = arith.constant 0 : index
    %c0_55 = arith.constant 0 : index
    %137 = vector.load %arg3[%c15, %c0_54, %c0_55] : memref<16x32x64xbf16, #tpu.memory_space<vmem>>, vector<1x32x64xbf16>
    %138 = vector.shape_cast %137 : vector<1x32x64xbf16> to vector<32x64xbf16>
    %cst_56 = arith.constant dense<0.000000e+00> : vector<512x64xf32>
    %139 = tpu.matmul %136, %138, %cst_56 {dimension_numbers = #tpu.dot_dimension_numbers<[1], [0], [0], [1], [0, 0, 1, 1], [], []>} : vector<512x32xbf16>, vector<32x64xbf16>, vector<512x64xf32> -> vector<512x64xf32>
    %140 = arith.addf %133, %139 : vector<512x64xf32>
    %141 = vector.shape_cast %140 : vector<512x64xf32> to vector<8x8x8x64xf32>
    %c0_57 = arith.constant 0 : index
    %c0_58 = arith.constant 0 : index
    %c0_59 = arith.constant 0 : index
    %c0_60 = arith.constant 0 : index
    %142 = vector.load %arg4[%c0_57, %c0_58, %c0_59, %c0_60] : memref<8x8x1x64xf32, #tpu.memory_space<vmem>>, vector<8x8x1x64xf32>
    %c0_61 = arith.constant 0 : index
    %c0_62 = arith.constant 0 : index
    %c0_63 = arith.constant 0 : index
    %c0_64 = arith.constant 0 : index
    %143 = vector.load %arg5[%c0_61, %c0_62, %c0_63, %c0_64] : memref<8x8x1x64xf32, #tpu.memory_space<vmem>>, vector<8x8x1x64xf32>
    %cst_65 = arith.constant dense<0.000000e+00> : vector<8xf32>
    %144 = vector.multi_reduction <add>, %141, %cst_65 [0, 1, 3] : vector<8x8x8x64xf32> to vector<8xf32>
    %145 = vector.shape_cast %144 : vector<8xf32> to vector<1x1x8x1xf32>
    %cst_66 = arith.constant 4.096000e+03 : f32
    %146 = vector.broadcast %cst_66 : f32 to vector<1x1x8x1xf32>
    %147 = arith.divf %145, %146 : vector<1x1x8x1xf32>
    %148 = vector.broadcast %147 : vector<1x1x8x1xf32> to vector<8x8x8x64xf32>
    %149 = arith.subf %141, %148 : vector<8x8x8x64xf32>
    %150 = arith.mulf %149, %149 : vector<8x8x8x64xf32>
    %cst_67 = arith.constant dense<0.000000e+00> : vector<8xf32>
    %151 = vector.multi_reduction <add>, %150, %cst_67 [0, 1, 3] : vector<8x8x8x64xf32> to vector<8xf32>
    %152 = vector.shape_cast %151 : vector<8xf32> to vector<1x1x8x1xf32>
    %cst_68 = arith.constant 4.096000e+03 : f32
    %153 = vector.broadcast %cst_68 : f32 to vector<1x1x8x1xf32>
    %154 = arith.divf %152, %153 : vector<1x1x8x1xf32>
    %cst_69 = arith.constant 9.99999974E-6 : f32
    %155 = vector.broadcast %cst_69 : f32 to vector<1x1x8x1xf32>
    %156 = arith.addf %154, %155 : vector<1x1x8x1xf32>
    %157 = math.rsqrt %156 : vector<1x1x8x1xf32>
    %158 = vector.broadcast %157 : vector<1x1x8x1xf32> to vector<8x8x8x64xf32>
    %159 = arith.mulf %149, %158 : vector<8x8x8x64xf32>
    %160 = vector.broadcast %142 : vector<8x8x1x64xf32> to vector<8x8x8x64xf32>
    %161 = arith.mulf %159, %160 : vector<8x8x8x64xf32>
    %162 = vector.broadcast %143 : vector<8x8x1x64xf32> to vector<8x8x8x64xf32>
    %163 = arith.addf %161, %162 : vector<8x8x8x64xf32>
    %cst_70 = arith.constant 0.000000e+00 : f32
    %164 = vector.broadcast %cst_70 : f32 to vector<8x8x8x64xf32>
    %165 = arith.cmpf oge, %163, %164 : vector<8x8x8x64xf32>
    %cst_71 = arith.constant 2.000000e-01 : f32
    %166 = vector.broadcast %cst_71 : f32 to vector<8x8x8x64xf32>
    %167 = arith.mulf %166, %163 : vector<8x8x8x64xf32>
    %168 = arith.select %165, %163, %167 : vector<8x8x8x64xi1>, vector<8x8x8x64xf32>
    %cst_72 = arith.constant 0.000000e+00 : f32
    %169 = vector.broadcast %cst_72 : f32 to vector<1x8x8x64xf32>
    %170 = tpu.concatenate %169, %168, %169 in 0 : vector<1x8x8x64xf32>, vector<8x8x8x64xf32>, vector<1x8x8x64xf32> -> vector<10x8x8x64xf32>
    %cst_73 = arith.constant 0.000000e+00 : f32
    %171 = vector.broadcast %cst_73 : f32 to vector<10x1x8x64xf32>
    %172 = tpu.concatenate %171, %170, %171 in 1 : vector<10x1x8x64xf32>, vector<10x8x8x64xf32>, vector<10x1x8x64xf32> -> vector<10x10x8x64xf32>
    %173 = vector.shape_cast %172 : vector<10x10x8x64xf32> to vector<5x2x10x8x64xf32>
    %174 = vector.extract_strided_slice %173 {offsets = [0, 0, 0, 0, 0], sizes = [5, 1, 10, 8, 64], strides = [1, 1, 1, 1, 1]} : vector<5x2x10x8x64xf32> to vector<5x1x10x8x64xf32>
    %175 = vector.shape_cast %174 : vector<5x1x10x8x64xf32> to vector<5x10x8x64xf32>
    %176 = vector.shape_cast %175 : vector<5x10x8x64xf32> to vector<5x5x2x8x64xf32>
    %177 = vector.extract_strided_slice %176 {offsets = [0, 0, 0, 0, 0], sizes = [5, 5, 1, 8, 64], strides = [1, 1, 1, 1, 1]} : vector<5x5x2x8x64xf32> to vector<5x5x1x8x64xf32>
    %178 = vector.shape_cast %177 : vector<5x5x1x8x64xf32> to vector<5x5x8x64xf32>
    %179 = vector.extract_strided_slice %176 {offsets = [0, 0, 1, 0, 0], sizes = [5, 5, 1, 8, 64], strides = [1, 1, 1, 1, 1]} : vector<5x5x2x8x64xf32> to vector<5x5x1x8x64xf32>
    %180 = vector.shape_cast %179 : vector<5x5x1x8x64xf32> to vector<5x5x8x64xf32>
    %181 = vector.extract_strided_slice %173 {offsets = [0, 1, 0, 0, 0], sizes = [5, 1, 10, 8, 64], strides = [1, 1, 1, 1, 1]} : vector<5x2x10x8x64xf32> to vector<5x1x10x8x64xf32>
    %182 = vector.shape_cast %181 : vector<5x1x10x8x64xf32> to vector<5x10x8x64xf32>
    %183 = vector.shape_cast %182 : vector<5x10x8x64xf32> to vector<5x5x2x8x64xf32>
    %184 = vector.extract_strided_slice %183 {offsets = [0, 0, 0, 0, 0], sizes = [5, 5, 1, 8, 64], strides = [1, 1, 1, 1, 1]} : vector<5x5x2x8x64xf32> to vector<5x5x1x8x64xf32>
    %185 = vector.shape_cast %184 : vector<5x5x1x8x64xf32> to vector<5x5x8x64xf32>
    %186 = vector.extract_strided_slice %183 {offsets = [0, 0, 1, 0, 0], sizes = [5, 5, 1, 8, 64], strides = [1, 1, 1, 1, 1]} : vector<5x5x2x8x64xf32> to vector<5x5x1x8x64xf32>
    %187 = vector.shape_cast %186 : vector<5x5x1x8x64xf32> to vector<5x5x8x64xf32>
    %cst_74 = arith.constant 0.000000e+00 : f32
    %188 = vector.broadcast %cst_74 : f32 to vector<128x128xf32>
    %189 = vector.extract_strided_slice %178 {offsets = [0, 0, 0, 0], sizes = [4, 4, 8, 64], strides = [1, 1, 1, 1]} : vector<5x5x8x64xf32> to vector<4x4x8x64xf32>
    %190 = vector.shape_cast %189 : vector<4x4x8x64xf32> to vector<128x64xf32>
    %191 = arith.truncf %190 : vector<128x64xf32> to vector<128x64xbf16>
    %c0_75 = arith.constant 0 : index
    %c0_76 = arith.constant 0 : index
    %c0_77 = arith.constant 0 : index
    %192 = vector.load %arg6[%c0_75, %c0_76, %c0_77] : memref<16x64x128xbf16, #tpu.memory_space<vmem>>, vector<1x64x128xbf16>
    %193 = vector.shape_cast %192 : vector<1x64x128xbf16> to vector<64x128xbf16>
    %cst_78 = arith.constant dense<0.000000e+00> : vector<128x128xf32>
    %194 = tpu.matmul %191, %193, %cst_78 {dimension_numbers = #tpu.dot_dimension_numbers<[1], [0], [0], [1], [0, 0, 1, 1], [], []>} : vector<128x64xbf16>, vector<64x128xbf16>, vector<128x128xf32> -> vector<128x128xf32>
    %195 = arith.addf %188, %194 : vector<128x128xf32>
    %196 = vector.extract_strided_slice %180 {offsets = [0, 0, 0, 0], sizes = [4, 4, 8, 64], strides = [1, 1, 1, 1]} : vector<5x5x8x64xf32> to vector<4x4x8x64xf32>
    %197 = vector.shape_cast %196 : vector<4x4x8x64xf32> to vector<128x64xf32>
    %198 = arith.truncf %197 : vector<128x64xf32> to vector<128x64xbf16>
    %c1_79 = arith.constant 1 : index
    %c0_80 = arith.constant 0 : index
    %c0_81 = arith.constant 0 : index
    %199 = vector.load %arg6[%c1_79, %c0_80, %c0_81] : memref<16x64x128xbf16, #tpu.memory_space<vmem>>, vector<1x64x128xbf16>
    %200 = vector.shape_cast %199 : vector<1x64x128xbf16> to vector<64x128xbf16>
    %cst_82 = arith.constant dense<0.000000e+00> : vector<128x128xf32>
    %201 = tpu.matmul %198, %200, %cst_82 {dimension_numbers = #tpu.dot_dimension_numbers<[1], [0], [0], [1], [0, 0, 1, 1], [], []>} : vector<128x64xbf16>, vector<64x128xbf16>, vector<128x128xf32> -> vector<128x128xf32>
    %202 = arith.addf %195, %201 : vector<128x128xf32>
    %203 = vector.extract_strided_slice %178 {offsets = [0, 1, 0, 0], sizes = [4, 4, 8, 64], strides = [1, 1, 1, 1]} : vector<5x5x8x64xf32> to vector<4x4x8x64xf32>
    %204 = vector.shape_cast %203 : vector<4x4x8x64xf32> to vector<128x64xf32>
    %205 = arith.truncf %204 : vector<128x64xf32> to vector<128x64xbf16>
    %c2_83 = arith.constant 2 : index
    %c0_84 = arith.constant 0 : index
    %c0_85 = arith.constant 0 : index
    %206 = vector.load %arg6[%c2_83, %c0_84, %c0_85] : memref<16x64x128xbf16, #tpu.memory_space<vmem>>, vector<1x64x128xbf16>
    %207 = vector.shape_cast %206 : vector<1x64x128xbf16> to vector<64x128xbf16>
    %cst_86 = arith.constant dense<0.000000e+00> : vector<128x128xf32>
    %208 = tpu.matmul %205, %207, %cst_86 {dimension_numbers = #tpu.dot_dimension_numbers<[1], [0], [0], [1], [0, 0, 1, 1], [], []>} : vector<128x64xbf16>, vector<64x128xbf16>, vector<128x128xf32> -> vector<128x128xf32>
    %209 = arith.addf %202, %208 : vector<128x128xf32>
    %210 = vector.extract_strided_slice %180 {offsets = [0, 1, 0, 0], sizes = [4, 4, 8, 64], strides = [1, 1, 1, 1]} : vector<5x5x8x64xf32> to vector<4x4x8x64xf32>
    %211 = vector.shape_cast %210 : vector<4x4x8x64xf32> to vector<128x64xf32>
    %212 = arith.truncf %211 : vector<128x64xf32> to vector<128x64xbf16>
    %c3_87 = arith.constant 3 : index
    %c0_88 = arith.constant 0 : index
    %c0_89 = arith.constant 0 : index
    %213 = vector.load %arg6[%c3_87, %c0_88, %c0_89] : memref<16x64x128xbf16, #tpu.memory_space<vmem>>, vector<1x64x128xbf16>
    %214 = vector.shape_cast %213 : vector<1x64x128xbf16> to vector<64x128xbf16>
    %cst_90 = arith.constant dense<0.000000e+00> : vector<128x128xf32>
    %215 = tpu.matmul %212, %214, %cst_90 {dimension_numbers = #tpu.dot_dimension_numbers<[1], [0], [0], [1], [0, 0, 1, 1], [], []>} : vector<128x64xbf16>, vector<64x128xbf16>, vector<128x128xf32> -> vector<128x128xf32>
    %216 = arith.addf %209, %215 : vector<128x128xf32>
    %217 = vector.extract_strided_slice %185 {offsets = [0, 0, 0, 0], sizes = [4, 4, 8, 64], strides = [1, 1, 1, 1]} : vector<5x5x8x64xf32> to vector<4x4x8x64xf32>
    %218 = vector.shape_cast %217 : vector<4x4x8x64xf32> to vector<128x64xf32>
    %219 = arith.truncf %218 : vector<128x64xf32> to vector<128x64xbf16>
    %c4_91 = arith.constant 4 : index
    %c0_92 = arith.constant 0 : index
    %c0_93 = arith.constant 0 : index
    %220 = vector.load %arg6[%c4_91, %c0_92, %c0_93] : memref<16x64x128xbf16, #tpu.memory_space<vmem>>, vector<1x64x128xbf16>
    %221 = vector.shape_cast %220 : vector<1x64x128xbf16> to vector<64x128xbf16>
    %cst_94 = arith.constant dense<0.000000e+00> : vector<128x128xf32>
    %222 = tpu.matmul %219, %221, %cst_94 {dimension_numbers = #tpu.dot_dimension_numbers<[1], [0], [0], [1], [0, 0, 1, 1], [], []>} : vector<128x64xbf16>, vector<64x128xbf16>, vector<128x128xf32> -> vector<128x128xf32>
    %223 = arith.addf %216, %222 : vector<128x128xf32>
    %224 = vector.extract_strided_slice %187 {offsets = [0, 0, 0, 0], sizes = [4, 4, 8, 64], strides = [1, 1, 1, 1]} : vector<5x5x8x64xf32> to vector<4x4x8x64xf32>
    %225 = vector.shape_cast %224 : vector<4x4x8x64xf32> to vector<128x64xf32>
    %226 = arith.truncf %225 : vector<128x64xf32> to vector<128x64xbf16>
    %c5_95 = arith.constant 5 : index
    %c0_96 = arith.constant 0 : index
    %c0_97 = arith.constant 0 : index
    %227 = vector.load %arg6[%c5_95, %c0_96, %c0_97] : memref<16x64x128xbf16, #tpu.memory_space<vmem>>, vector<1x64x128xbf16>
    %228 = vector.shape_cast %227 : vector<1x64x128xbf16> to vector<64x128xbf16>
    %cst_98 = arith.constant dense<0.000000e+00> : vector<128x128xf32>
    %229 = tpu.matmul %226, %228, %cst_98 {dimension_numbers = #tpu.dot_dimension_numbers<[1], [0], [0], [1], [0, 0, 1, 1], [], []>} : vector<128x64xbf16>, vector<64x128xbf16>, vector<128x128xf32> -> vector<128x128xf32>
    %230 = arith.addf %223, %229 : vector<128x128xf32>
    %231 = vector.extract_strided_slice %185 {offsets = [0, 1, 0, 0], sizes = [4, 4, 8, 64], strides = [1, 1, 1, 1]} : vector<5x5x8x64xf32> to vector<4x4x8x64xf32>
    %232 = vector.shape_cast %231 : vector<4x4x8x64xf32> to vector<128x64xf32>
    %233 = arith.truncf %232 : vector<128x64xf32> to vector<128x64xbf16>
    %c6_99 = arith.constant 6 : index
    %c0_100 = arith.constant 0 : index
    %c0_101 = arith.constant 0 : index
    %234 = vector.load %arg6[%c6_99, %c0_100, %c0_101] : memref<16x64x128xbf16, #tpu.memory_space<vmem>>, vector<1x64x128xbf16>
    %235 = vector.shape_cast %234 : vector<1x64x128xbf16> to vector<64x128xbf16>
    %cst_102 = arith.constant dense<0.000000e+00> : vector<128x128xf32>
    %236 = tpu.matmul %233, %235, %cst_102 {dimension_numbers = #tpu.dot_dimension_numbers<[1], [0], [0], [1], [0, 0, 1, 1], [], []>} : vector<128x64xbf16>, vector<64x128xbf16>, vector<128x128xf32> -> vector<128x128xf32>
    %237 = arith.addf %230, %236 : vector<128x128xf32>
    %238 = vector.extract_strided_slice %187 {offsets = [0, 1, 0, 0], sizes = [4, 4, 8, 64], strides = [1, 1, 1, 1]} : vector<5x5x8x64xf32> to vector<4x4x8x64xf32>
    %239 = vector.shape_cast %238 : vector<4x4x8x64xf32> to vector<128x64xf32>
    %240 = arith.truncf %239 : vector<128x64xf32> to vector<128x64xbf16>
    %c7_103 = arith.constant 7 : index
    %c0_104 = arith.constant 0 : index
    %c0_105 = arith.constant 0 : index
    %241 = vector.load %arg6[%c7_103, %c0_104, %c0_105] : memref<16x64x128xbf16, #tpu.memory_space<vmem>>, vector<1x64x128xbf16>
    %242 = vector.shape_cast %241 : vector<1x64x128xbf16> to vector<64x128xbf16>
    %cst_106 = arith.constant dense<0.000000e+00> : vector<128x128xf32>
    %243 = tpu.matmul %240, %242, %cst_106 {dimension_numbers = #tpu.dot_dimension_numbers<[1], [0], [0], [1], [0, 0, 1, 1], [], []>} : vector<128x64xbf16>, vector<64x128xbf16>, vector<128x128xf32> -> vector<128x128xf32>
    %244 = arith.addf %237, %243 : vector<128x128xf32>
    %245 = vector.extract_strided_slice %178 {offsets = [1, 0, 0, 0], sizes = [4, 4, 8, 64], strides = [1, 1, 1, 1]} : vector<5x5x8x64xf32> to vector<4x4x8x64xf32>
    %246 = vector.shape_cast %245 : vector<4x4x8x64xf32> to vector<128x64xf32>
    %247 = arith.truncf %246 : vector<128x64xf32> to vector<128x64xbf16>
    %c8_107 = arith.constant 8 : index
    %c0_108 = arith.constant 0 : index
    %c0_109 = arith.constant 0 : index
    %248 = vector.load %arg6[%c8_107, %c0_108, %c0_109] : memref<16x64x128xbf16, #tpu.memory_space<vmem>>, vector<1x64x128xbf16>
    %249 = vector.shape_cast %248 : vector<1x64x128xbf16> to vector<64x128xbf16>
    %cst_110 = arith.constant dense<0.000000e+00> : vector<128x128xf32>
    %250 = tpu.matmul %247, %249, %cst_110 {dimension_numbers = #tpu.dot_dimension_numbers<[1], [0], [0], [1], [0, 0, 1, 1], [], []>} : vector<128x64xbf16>, vector<64x128xbf16>, vector<128x128xf32> -> vector<128x128xf32>
    %251 = arith.addf %244, %250 : vector<128x128xf32>
    %252 = vector.extract_strided_slice %180 {offsets = [1, 0, 0, 0], sizes = [4, 4, 8, 64], strides = [1, 1, 1, 1]} : vector<5x5x8x64xf32> to vector<4x4x8x64xf32>
    %253 = vector.shape_cast %252 : vector<4x4x8x64xf32> to vector<128x64xf32>
    %254 = arith.truncf %253 : vector<128x64xf32> to vector<128x64xbf16>
    %c9_111 = arith.constant 9 : index
    %c0_112 = arith.constant 0 : index
    %c0_113 = arith.constant 0 : index
    %255 = vector.load %arg6[%c9_111, %c0_112, %c0_113] : memref<16x64x128xbf16, #tpu.memory_space<vmem>>, vector<1x64x128xbf16>
    %256 = vector.shape_cast %255 : vector<1x64x128xbf16> to vector<64x128xbf16>
    %cst_114 = arith.constant dense<0.000000e+00> : vector<128x128xf32>
    %257 = tpu.matmul %254, %256, %cst_114 {dimension_numbers = #tpu.dot_dimension_numbers<[1], [0], [0], [1], [0, 0, 1, 1], [], []>} : vector<128x64xbf16>, vector<64x128xbf16>, vector<128x128xf32> -> vector<128x128xf32>
    %258 = arith.addf %251, %257 : vector<128x128xf32>
    %259 = vector.extract_strided_slice %178 {offsets = [1, 1, 0, 0], sizes = [4, 4, 8, 64], strides = [1, 1, 1, 1]} : vector<5x5x8x64xf32> to vector<4x4x8x64xf32>
    %260 = vector.shape_cast %259 : vector<4x4x8x64xf32> to vector<128x64xf32>
    %261 = arith.truncf %260 : vector<128x64xf32> to vector<128x64xbf16>
    %c10_115 = arith.constant 10 : index
    %c0_116 = arith.constant 0 : index
    %c0_117 = arith.constant 0 : index
    %262 = vector.load %arg6[%c10_115, %c0_116, %c0_117] : memref<16x64x128xbf16, #tpu.memory_space<vmem>>, vector<1x64x128xbf16>
    %263 = vector.shape_cast %262 : vector<1x64x128xbf16> to vector<64x128xbf16>
    %cst_118 = arith.constant dense<0.000000e+00> : vector<128x128xf32>
    %264 = tpu.matmul %261, %263, %cst_118 {dimension_numbers = #tpu.dot_dimension_numbers<[1], [0], [0], [1], [0, 0, 1, 1], [], []>} : vector<128x64xbf16>, vector<64x128xbf16>, vector<128x128xf32> -> vector<128x128xf32>
    %265 = arith.addf %258, %264 : vector<128x128xf32>
    %266 = vector.extract_strided_slice %180 {offsets = [1, 1, 0, 0], sizes = [4, 4, 8, 64], strides = [1, 1, 1, 1]} : vector<5x5x8x64xf32> to vector<4x4x8x64xf32>
    %267 = vector.shape_cast %266 : vector<4x4x8x64xf32> to vector<128x64xf32>
    %268 = arith.truncf %267 : vector<128x64xf32> to vector<128x64xbf16>
    %c11_119 = arith.constant 11 : index
    %c0_120 = arith.constant 0 : index
    %c0_121 = arith.constant 0 : index
    %269 = vector.load %arg6[%c11_119, %c0_120, %c0_121] : memref<16x64x128xbf16, #tpu.memory_space<vmem>>, vector<1x64x128xbf16>
    %270 = vector.shape_cast %269 : vector<1x64x128xbf16> to vector<64x128xbf16>
    %cst_122 = arith.constant dense<0.000000e+00> : vector<128x128xf32>
    %271 = tpu.matmul %268, %270, %cst_122 {dimension_numbers = #tpu.dot_dimension_numbers<[1], [0], [0], [1], [0, 0, 1, 1], [], []>} : vector<128x64xbf16>, vector<64x128xbf16>, vector<128x128xf32> -> vector<128x128xf32>
    %272 = arith.addf %265, %271 : vector<128x128xf32>
    %273 = vector.extract_strided_slice %185 {offsets = [1, 0, 0, 0], sizes = [4, 4, 8, 64], strides = [1, 1, 1, 1]} : vector<5x5x8x64xf32> to vector<4x4x8x64xf32>
    %274 = vector.shape_cast %273 : vector<4x4x8x64xf32> to vector<128x64xf32>
    %275 = arith.truncf %274 : vector<128x64xf32> to vector<128x64xbf16>
    %c12_123 = arith.constant 12 : index
    %c0_124 = arith.constant 0 : index
    %c0_125 = arith.constant 0 : index
    %276 = vector.load %arg6[%c12_123, %c0_124, %c0_125] : memref<16x64x128xbf16, #tpu.memory_space<vmem>>, vector<1x64x128xbf16>
    %277 = vector.shape_cast %276 : vector<1x64x128xbf16> to vector<64x128xbf16>
    %cst_126 = arith.constant dense<0.000000e+00> : vector<128x128xf32>
    %278 = tpu.matmul %275, %277, %cst_126 {dimension_numbers = #tpu.dot_dimension_numbers<[1], [0], [0], [1], [0, 0, 1, 1], [], []>} : vector<128x64xbf16>, vector<64x128xbf16>, vector<128x128xf32> -> vector<128x128xf32>
    %279 = arith.addf %272, %278 : vector<128x128xf32>
    %280 = vector.extract_strided_slice %187 {offsets = [1, 0, 0, 0], sizes = [4, 4, 8, 64], strides = [1, 1, 1, 1]} : vector<5x5x8x64xf32> to vector<4x4x8x64xf32>
    %281 = vector.shape_cast %280 : vector<4x4x8x64xf32> to vector<128x64xf32>
    %282 = arith.truncf %281 : vector<128x64xf32> to vector<128x64xbf16>
    %c13_127 = arith.constant 13 : index
    %c0_128 = arith.constant 0 : index
    %c0_129 = arith.constant 0 : index
    %283 = vector.load %arg6[%c13_127, %c0_128, %c0_129] : memref<16x64x128xbf16, #tpu.memory_space<vmem>>, vector<1x64x128xbf16>
    %284 = vector.shape_cast %283 : vector<1x64x128xbf16> to vector<64x128xbf16>
    %cst_130 = arith.constant dense<0.000000e+00> : vector<128x128xf32>
    %285 = tpu.matmul %282, %284, %cst_130 {dimension_numbers = #tpu.dot_dimension_numbers<[1], [0], [0], [1], [0, 0, 1, 1], [], []>} : vector<128x64xbf16>, vector<64x128xbf16>, vector<128x128xf32> -> vector<128x128xf32>
    %286 = arith.addf %279, %285 : vector<128x128xf32>
    %287 = vector.extract_strided_slice %185 {offsets = [1, 1, 0, 0], sizes = [4, 4, 8, 64], strides = [1, 1, 1, 1]} : vector<5x5x8x64xf32> to vector<4x4x8x64xf32>
    %288 = vector.shape_cast %287 : vector<4x4x8x64xf32> to vector<128x64xf32>
    %289 = arith.truncf %288 : vector<128x64xf32> to vector<128x64xbf16>
    %c14_131 = arith.constant 14 : index
    %c0_132 = arith.constant 0 : index
    %c0_133 = arith.constant 0 : index
    %290 = vector.load %arg6[%c14_131, %c0_132, %c0_133] : memref<16x64x128xbf16, #tpu.memory_space<vmem>>, vector<1x64x128xbf16>
    %291 = vector.shape_cast %290 : vector<1x64x128xbf16> to vector<64x128xbf16>
    %cst_134 = arith.constant dense<0.000000e+00> : vector<128x128xf32>
    %292 = tpu.matmul %289, %291, %cst_134 {dimension_numbers = #tpu.dot_dimension_numbers<[1], [0], [0], [1], [0, 0, 1, 1], [], []>} : vector<128x64xbf16>, vector<64x128xbf16>, vector<128x128xf32> -> vector<128x128xf32>
    %293 = arith.addf %286, %292 : vector<128x128xf32>
    %294 = vector.extract_strided_slice %187 {offsets = [1, 1, 0, 0], sizes = [4, 4, 8, 64], strides = [1, 1, 1, 1]} : vector<5x5x8x64xf32> to vector<4x4x8x64xf32>
    %295 = vector.shape_cast %294 : vector<4x4x8x64xf32> to vector<128x64xf32>
    %296 = arith.truncf %295 : vector<128x64xf32> to vector<128x64xbf16>
    %c15_135 = arith.constant 15 : index
    %c0_136 = arith.constant 0 : index
    %c0_137 = arith.constant 0 : index
    %297 = vector.load %arg6[%c15_135, %c0_136, %c0_137] : memref<16x64x128xbf16, #tpu.memory_space<vmem>>, vector<1x64x128xbf16>
    %298 = vector.shape_cast %297 : vector<1x64x128xbf16> to vector<64x128xbf16>
    %cst_138 = arith.constant dense<0.000000e+00> : vector<128x128xf32>
    %299 = tpu.matmul %296, %298, %cst_138 {dimension_numbers = #tpu.dot_dimension_numbers<[1], [0], [0], [1], [0, 0, 1, 1], [], []>} : vector<128x64xbf16>, vector<64x128xbf16>, vector<128x128xf32> -> vector<128x128xf32>
    %300 = arith.addf %293, %299 : vector<128x128xf32>
    %301 = vector.shape_cast %300 : vector<128x128xf32> to vector<4x4x8x128xf32>
    %c0_139 = arith.constant 0 : index
    %c0_140 = arith.constant 0 : index
    %c0_141 = arith.constant 0 : index
    %c0_142 = arith.constant 0 : index
    %302 = vector.load %arg7[%c0_139, %c0_140, %c0_141, %c0_142] : memref<4x4x1x128xf32, #tpu.memory_space<vmem>>, vector<4x4x1x128xf32>
    %c0_143 = arith.constant 0 : index
    %c0_144 = arith.constant 0 : index
    %c0_145 = arith.constant 0 : index
    %c0_146 = arith.constant 0 : index
    %303 = vector.load %arg8[%c0_143, %c0_144, %c0_145, %c0_146] : memref<4x4x1x128xf32, #tpu.memory_space<vmem>>, vector<4x4x1x128xf32>
    %cst_147 = arith.constant dense<0.000000e+00> : vector<8xf32>
    %304 = vector.multi_reduction <add>, %301, %cst_147 [0, 1, 3] : vector<4x4x8x128xf32> to vector<8xf32>
    %305 = vector.shape_cast %304 : vector<8xf32> to vector<1x1x8x1xf32>
    %cst_148 = arith.constant 2.048000e+03 : f32
    %306 = vector.broadcast %cst_148 : f32 to vector<1x1x8x1xf32>
    %307 = arith.divf %305, %306 : vector<1x1x8x1xf32>
    %308 = vector.broadcast %307 : vector<1x1x8x1xf32> to vector<4x4x8x128xf32>
    %309 = arith.subf %301, %308 : vector<4x4x8x128xf32>
    %310 = arith.mulf %309, %309 : vector<4x4x8x128xf32>
    %cst_149 = arith.constant dense<0.000000e+00> : vector<8xf32>
    %311 = vector.multi_reduction <add>, %310, %cst_149 [0, 1, 3] : vector<4x4x8x128xf32> to vector<8xf32>
    %312 = vector.shape_cast %311 : vector<8xf32> to vector<1x1x8x1xf32>
    %cst_150 = arith.constant 2.048000e+03 : f32
    %313 = vector.broadcast %cst_150 : f32 to vector<1x1x8x1xf32>
    %314 = arith.divf %312, %313 : vector<1x1x8x1xf32>
    %cst_151 = arith.constant 9.99999974E-6 : f32
    %315 = vector.broadcast %cst_151 : f32 to vector<1x1x8x1xf32>
    %316 = arith.addf %314, %315 : vector<1x1x8x1xf32>
    %317 = math.rsqrt %316 : vector<1x1x8x1xf32>
    %318 = vector.broadcast %317 : vector<1x1x8x1xf32> to vector<4x4x8x128xf32>
    %319 = arith.mulf %309, %318 : vector<4x4x8x128xf32>
    %320 = vector.broadcast %302 : vector<4x4x1x128xf32> to vector<4x4x8x128xf32>
    %321 = arith.mulf %319, %320 : vector<4x4x8x128xf32>
    %322 = vector.broadcast %303 : vector<4x4x1x128xf32> to vector<4x4x8x128xf32>
    %323 = arith.addf %321, %322 : vector<4x4x8x128xf32>
    %cst_152 = arith.constant 0.000000e+00 : f32
    %324 = vector.broadcast %cst_152 : f32 to vector<4x4x8x128xf32>
    %325 = arith.cmpf oge, %323, %324 : vector<4x4x8x128xf32>
    %cst_153 = arith.constant 2.000000e-01 : f32
    %326 = vector.broadcast %cst_153 : f32 to vector<4x4x8x128xf32>
    %327 = arith.mulf %326, %323 : vector<4x4x8x128xf32>
    %328 = arith.select %325, %323, %327 : vector<4x4x8x128xi1>, vector<4x4x8x128xf32>
    %c0_154 = arith.constant 0 : index
    %c0_155 = arith.constant 0 : index
    %c0_156 = arith.constant 0 : index
    %c0_157 = arith.constant 0 : index
    %329 = vector.load %arg9[%c0_154, %c0_155, %c0_156, %c0_157] : memref<4x4x1x128xf32, #tpu.memory_space<vmem>>, vector<4x4x1x128xf32>
    %330 = vector.broadcast %329 : vector<4x4x1x128xf32> to vector<4x4x8x128xf32>
    %331 = arith.mulf %328, %330 : vector<4x4x8x128xf32>
    %cst_158 = arith.constant dense<0.000000e+00> : vector<8x128xf32>
    %332 = vector.multi_reduction <add>, %331, %cst_158 [0, 1] : vector<4x4x8x128xf32> to vector<8x128xf32>
    %cst_159 = arith.constant dense<0.000000e+00> : vector<8xf32>
    %333 = vector.multi_reduction <add>, %332, %cst_159 [1] : vector<8x128xf32> to vector<8xf32>
    %334 = vector.shape_cast %333 : vector<8xf32> to vector<8x1xf32>
    %c0_160 = arith.constant 0 : index
    %c0_161 = arith.constant 0 : index
    %335 = vector.load %arg10[%c0_160, %c0_161] : memref<8x1xf32, #tpu.memory_space<vmem>>, vector<8x1xf32>
    tpu.vector_store %arg10[%c0_160, %c0_161], %334 {strides = array<i32>} : memref<8x1xf32, #tpu.memory_space<vmem>>, vector<8x1xf32>,
    return
  }
  func.func @transform_0(%arg0: i32) -> (i32, i32) {
    %c0_i32 = arith.constant 0 : i32
    %c0_i32_0 = arith.constant 0 : i32
    return %arg0, %c0_i32 : i32, i32
  }
  func.func @transform_1(%arg0: i32) -> (i32, i32) {
    %c0_i32 = arith.constant 0 : i32
    %c0_i32_0 = arith.constant 0 : i32
    %c0_i32_1 = arith.constant 0 : i32
    return %c0_i32, %c0_i32_0 : i32, i32
  }
  func.func @transform_2(%arg0: i32) -> (i32, i32, i32) {
    %c0_i32 = arith.constant 0 : i32
    %c0_i32_0 = arith.constant 0 : i32
    %c0_i32_1 = arith.constant 0 : i32
    %c0_i32_2 = arith.constant 0 : i32
    return %c0_i32, %c0_i32_0, %c0_i32_1 : i32, i32, i32
  }
  func.func @transform_3(%arg0: i32) -> (i32, i32, i32, i32) {
    %c0_i32 = arith.constant 0 : i32
    %c0_i32_0 = arith.constant 0 : i32
    %c0_i32_1 = arith.constant 0 : i32
    %c0_i32_2 = arith.constant 0 : i32
    %c0_i32_3 = arith.constant 0 : i32
    return %c0_i32, %c0_i32_0, %c0_i32_1, %c0_i32_2 : i32, i32, i32, i32
  }
  func.func @transform_4(%arg0: i32) -> (i32, i32, i32, i32) {
    %c0_i32 = arith.constant 0 : i32
    %c0_i32_0 = arith.constant 0 : i32
    %c0_i32_1 = arith.constant 0 : i32
    %c0_i32_2 = arith.constant 0 : i32
    %c0_i32_3 = arith.constant 0 : i32
    return %c0_i32, %c0_i32_0, %c0_i32_1, %c0_i32_2 : i32, i32, i32, i32
  }
  func.func @transform_5(%arg0: i32) -> (i32, i32, i32) {
    %c0_i32 = arith.constant 0 : i32
    %c0_i32_0 = arith.constant 0 : i32
    %c0_i32_1 = arith.constant 0 : i32
    %c0_i32_2 = arith.constant 0 : i32
    return %c0_i32, %c0_i32_0, %c0_i32_1 : i32, i32, i32
  }
  func.func @transform_6(%arg0: i32) -> (i32, i32, i32, i32) {
    %c0_i32 = arith.constant 0 : i32
    %c0_i32_0 = arith.constant 0 : i32
    %c0_i32_1 = arith.constant 0 : i32
    %c0_i32_2 = arith.constant 0 : i32
    %c0_i32_3 = arith.constant 0 : i32
    return %c0_i32, %c0_i32_0, %c0_i32_1, %c0_i32_2 : i32, i32, i32, i32
  }
  func.func @transform_7(%arg0: i32) -> (i32, i32, i32, i32) {
    %c0_i32 = arith.constant 0 : i32
    %c0_i32_0 = arith.constant 0 : i32
    %c0_i32_1 = arith.constant 0 : i32
    %c0_i32_2 = arith.constant 0 : i32
    %c0_i32_3 = arith.constant 0 : i32
    return %c0_i32, %c0_i32_0, %c0_i32_1, %c0_i32_2 : i32, i32, i32, i32
  }
  func.func @transform_8(%arg0: i32) -> (i32, i32, i32, i32) {
    %c0_i32 = arith.constant 0 : i32
    %c0_i32_0 = arith.constant 0 : i32
    %c0_i32_1 = arith.constant 0 : i32
    %c0_i32_2 = arith.constant 0 : i32
    %c0_i32_3 = arith.constant 0 : i32
    return %c0_i32, %c0_i32_0, %c0_i32_1, %c0_i32_2 : i32, i32, i32, i32
  }
  func.func @transform_9(%arg0: i32) -> (i32, i32) {
    %c0_i32 = arith.constant 0 : i32
    %c0_i32_0 = arith.constant 0 : i32
    return %arg0, %c0_i32 : i32, i32
  }
}

</mosaic_0001>

<llo_original>
// kernel: _lambda_.1
$region0: #{_lambda_.1}
  #allocation0 [shape = 'u32[]', space=smem, size = 0x4, offset = 0x4, fixed_abs, tag = 'smem constant byte address 0x4 - core index']
  #allocation1 [shape = 'u32[72,128]{1,0:T(1,128)}', space=vmem, size = 0x9000, scoped, tag = 'internal scratch']
  %s0 = inlined_call_operand.vmem [shape: bf16[2048,48], index: 0, kind: input, shape index: {}]
  %s1 = inlined_call_operand.vmem [shape: bf16[48,32], index: 1, kind: input, shape index: {}]
  %s2 = inlined_call_operand.vmem [shape: bf16[16,32,64], index: 2, kind: input, shape index: {}]
  %s3 = inlined_call_operand.vmem [shape: f32[8,8,1,64], index: 3, kind: input, shape index: {}]
  %s4 = inlined_call_operand.vmem [shape: f32[8,8,1,64], index: 4, kind: input, shape index: {}]
  %s5 = inlined_call_operand.vmem [shape: bf16[16,64,128], index: 5, kind: input, shape index: {}]
  %s6 = inlined_call_operand.vmem [shape: f32[4,4,1,128], index: 6, kind: input, shape index: {}]
  %s7 = inlined_call_operand.vmem [shape: f32[4,4,1,128], index: 7, kind: input, shape index: {}]
  %s8 = inlined_call_operand.vmem [shape: f32[4,4,1,128], index: 8, kind: input, shape index: {}]
  %s9 = inlined_call_operand.vmem [shape: f32[8,1], index: 9, kind: output, shape index: {}]
  %s10 = sld [smem:[#allocation0]]
  $region46: #{_lambda_.1} parent=0
    _
  %s12 = ssub.s32 1, %s10
  %s13 = scalar_select 0, %s12, %s10
  // Predicated region
  $region2: #{_lambda_.1} parent=0 // pred_check
    _
  $region3: #{_lambda_.1} parent=0 // pred_check_branch
    %15 = sbr.rel (0) target = $region5
  $region4: #{_lambda_.1} parent=0 // pred_region
    _
  $region5: #{_lambda_.1} parent=0 // pred_fallthru
    _
  // Predicated region
  $region6: #{_lambda_.1} parent=0 // pred_check
    _
  $region7: #{_lambda_.1} parent=0 // pred_check_branch
    %17 = sbr.rel (0) target = $region9
  $region8: #{_lambda_.1} parent=0 // pred_region
    _
  $region9: #{_lambda_.1} parent=0 // pred_fallthru
    _
  // Predicated region
  $region10: #{_lambda_.1} parent=0 // pred_check
    _
  $region11: #{_lambda_.1} parent=0 // pred_check_branch
    %19 = sbr.rel (0) target = $region13
  $region12: #{_lambda_.1} parent=0 // pred_region
    _
  $region13: #{_lambda_.1} parent=0 // pred_fallthru
    _
  // Predicated region
  $region14: #{_lambda_.1} parent=0 // pred_check
    _
  $region15: #{_lambda_.1} parent=0 // pred_check_branch
    %21 = sbr.rel (0) target = $region17
  $region16: #{_lambda_.1} parent=0 // pred_region
    _
  $region17: #{_lambda_.1} parent=0 // pred_fallthru
    _
  // Predicated region
  $region18: #{_lambda_.1} parent=0 // pred_check
    _
  $region19: #{_lambda_.1} parent=0 // pred_check_branch
    %23 = sbr.rel (0) target = $region21
  $region20: #{_lambda_.1} parent=0 // pred_region
    _
  $region21: #{_lambda_.1} parent=0 // pred_fallthru
    _
  // Predicated region
  $region22: #{_lambda_.1} parent=0 // pred_check
    _
  $region23: #{_lambda_.1} parent=0 // pred_check_branch
    %25 = sbr.rel (0) target = $region25
  $region24: #{_lambda_.1} parent=0 // pred_region
    _
  $region25: #{_lambda_.1} parent=0 // pred_fallthru
    _
  // Predicated region
  $region26: #{_lambda_.1} parent=0 // pred_check
    _
  $region27: #{_lambda_.1} parent=0 // pred_check_branch
    %27 = sbr.rel (0) target = $region29
  $region28: #{_lambda_.1} parent=0 // pred_region
    _
  $region29: #{_lambda_.1} parent=0 // pred_fallthru
    _
  // Predicated region
  $region30: #{_lambda_.1} parent=0 // pred_check
    _
  $region31: #{_lambda_.1} parent=0 // pred_check_branch
    %29 = sbr.rel (0) target = $region33
  $region32: #{_lambda_.1} parent=0 // pred_region
    _
  $region33: #{_lambda_.1} parent=0 // pred_fallthru
    _
  // Predicated region
  $region34: #{_lambda_.1} parent=0 // pred_check
    _
  $region35: #{_lambda_.1} parent=0 // pred_check_branch
    %31 = sbr.rel (0) target = $region37
  $region36: #{_lambda_.1} parent=0 // pred_region
    _
  $region37: #{_lambda_.1} parent=0 // pred_fallthru
    _
  %v33 = vld [vmem:[%s0] sm:$0xf]
  %v34 = vld [vmem:[%s0 + $0x4] sm:$0xf]
  %v35 = vld [vmem:[%s0 + $0x8] sm:$0xf]
  %v36 = vld [vmem:[%s0 + $0xc] sm:$0xf]
  %v37 = vld [vmem:[%s0 + $0x10] sm:$0xf]
  %v38 = vld [vmem:[%s0 + $0x14] sm:$0xf]
  %v39 = vld [vmem:[%s0 + $0x18] sm:$0xf]
  %v40 = vld [vmem:[%s0 + $0x1c] sm:$0xf]
  %v41 = vld [vmem:[%s0 + $0x20] sm:$0xf]
  %v42 = vld [vmem:[%s0 + $0x24] sm:$0xf]
  %v43 = vld [vmem:[%s0 + $0x28] sm:$0xf]
  %v44 = vld [vmem:[%s0 + $0x2c] sm:$0xf]
  %v45 = vld [vmem:[%s0 + $0x30] sm:$0xf]
  %v46 = vld [vmem:[%s0 + $0x34] sm:$0xf]
  %v47 = vld [vmem:[%s0 + $0x38] sm:$0xf]
  %v48 = vld [vmem:[%s0 + $0x3c] sm:$0xf]
  %v49 = vld [vmem:[%s0 + $0x40] sm:$0xf]
  %v50 = vld [vmem:[%s0 + $0x44] sm:$0xf]
  %v51 = vld [vmem:[%s0 + $0x48] sm:$0xf]
  %v52 = vld [vmem:[%s0 + $0x4c] sm:$0xf]
  %v53 = vld [vmem:[%s0 + $0x50] sm:$0xf]
  %v54 = vld [vmem:[%s0 + $0x54] sm:$0xf]
  %v55 = vld [vmem:[%s0 + $0x58] sm:$0xf]
  %v56 = vld [vmem:[%s0 + $0x5c] sm:$0xf]
  %v57 = vld [vmem:[%s0 + $0x60] sm:$0xf]
  %v58 = vld [vmem:[%s0 + $0x64] sm:$0xf]
  %v59 = vld [vmem:[%s0 + $0x68] sm:$0xf]
  %v60 = vld [vmem:[%s0 + $0x6c] sm:$0xf]
  %v61 = vld [vmem:[%s0 + $0x70] sm:$0xf]
  %v62 = vld [vmem:[%s0 + $0x74] sm:$0xf]
  %v63 = vld [vmem:[%s0 + $0x78] sm:$0xf]
  %v64 = vld [vmem:[%s0 + $0x7c] sm:$0xf]
  %v65 = vld [vmem:[%s0 + $0x80] sm:$0xf]
  %v66 = vld [vmem:[%s0 + $0x84] sm:$0xf]
  %v67 = vld [vmem:[%s0 + $0x88] sm:$0xf]
  %v68 = vld [vmem:[%s0 + $0x8c] sm:$0xf]
  %v69 = vld [vmem:[%s0 + $0x90] sm:$0xf]
  %v70 = vld [vmem:[%s0 + $0x94] sm:$0xf]
  %v71 = vld [vmem:[%s0 + $0x98] sm:$0xf]
  %v72 = vld [vmem:[%s0 + $0x9c] sm:$0xf]
  %v73 = vld [vmem:[%s0 + $0xa0] sm:$0xf]
  %v74 = vld [vmem:[%s0 + $0xa4] sm:$0xf]
  %v75 = vld [vmem:[%s0 + $0xa8] sm:$0xf]
  %v76 = vld [vmem:[%s0 + $0xac] sm:$0xf]
  %v77 = vld [vmem:[%s0 + $0xb0] sm:$0xf]
  %v78 = vld [vmem:[%s0 + $0xb4] sm:$0xf]
  %v79 = vld [vmem:[%s0 + $0xb8] sm:$0xf]
  %v80 = vld [vmem:[%s0 + $0xbc] sm:$0xf]
  %v81 = vld [vmem:[%s0 + $0xc0] sm:$0xf]
  %v82 = vld [vmem:[%s0 + $0xc4] sm:$0xf]
  %v83 = vld [vmem:[%s0 + $0xc8] sm:$0xf]
  %v84 = vld [vmem:[%s0 + $0xcc] sm:$0xf]
  %v85 = vld [vmem:[%s0 + $0xd0] sm:$0xf]
  %v86 = vld [vmem:[%s0 + $0xd4] sm:$0xf]
  %v87 = vld [vmem:[%s0 + $0xd8] sm:$0xf]
  %v88 = vld [vmem:[%s0 + $0xdc] sm:$0xf]
  %v89 = vld [vmem:[%s0 + $0xe0] sm:$0xf]
  %v90 = vld [vmem:[%s0 + $0xe4] sm:$0xf]
  %v91 = vld [vmem:[%s0 + $0xe8] sm:$0xf]
  %v92 = vld [vmem:[%s0 + $0xec] sm:$0xf]
  %v93 = vld [vmem:[%s0 + $0xf0] sm:$0xf]
  %v94 = vld [vmem:[%s0 + $0xf4] sm:$0xf]
  %v95 = vld [vmem:[%s0 + $0xf8] sm:$0xf]
  %v96 = vld [vmem:[%s0 + $0xfc] sm:$0xf]
  %v97 = vld [vmem:[%s0 + $0x100] sm:$0xf]
  %v98 = vld [vmem:[%s0 + $0x104] sm:$0xf]
  %v99 = vld [vmem:[%s0 + $0x108] sm:$0xf]
  %v100 = vld [vmem:[%s0 + $0x10c] sm:$0xf]
  %v101 = vld [vmem:[%s0 + $0x110] sm:$0xf]
  %v102 = vld [vmem:[%s0 + $0x114] sm:$0xf]
  %v103 = vld [vmem:[%s0 + $0x118] sm:$0xf]
  %v104 = vld [vmem:[%s0 + $0x11c] sm:$0xf]
  %v105 = vld [vmem:[%s0 + $0x120] sm:$0xf]
  %v106 = vld [vmem:[%s0 + $0x124] sm:$0xf]
  %v107 = vld [vmem:[%s0 + $0x128] sm:$0xf]
  %v108 = vld [vmem:[%s0 + $0x12c] sm:$0xf]
  %v109 = vld [vmem:[%s0 + $0x130] sm:$0xf]
  %v110 = vld [vmem:[%s0 + $0x134] sm:$0xf]
  %v111 = vld [vmem:[%s0 + $0x138] sm:$0xf]
  %v112 = vld [vmem:[%s0 + $0x13c] sm:$0xf]
  %v113 = vld [vmem:[%s0 + $0x140] sm:$0xf]
  %v114 = vld [vmem:[%s0 + $0x144] sm:$0xf]
  %v115 = vld [vmem:[%s0 + $0x148] sm:$0xf]
  %v116 = vld [vmem:[%s0 + $0x14c] sm:$0xf]
  %v117 = vld [vmem:[%s0 + $0x150] sm:$0xf]
  %v118 = vld [vmem:[%s0 + $0x154] sm:$0xf]
  %v119 = vld [vmem:[%s0 + $0x158] sm:$0xf]
  %v120 = vld [vmem:[%s0 + $0x15c] sm:$0xf]
  %v121 = vld [vmem:[%s0 + $0x160] sm:$0xf]
  %v122 = vld [vmem:[%s0 + $0x164] sm:$0xf]
  %v123 = vld [vmem:[%s0 + $0x168] sm:$0xf]
  %v124 = vld [vmem:[%s0 + $0x16c] sm:$0xf]
  %v125 = vld [vmem:[%s0 + $0x170] sm:$0xf]
  %v126 = vld [vmem:[%s0 + $0x174] sm:$0xf]
  %v127 = vld [vmem:[%s0 + $0x178] sm:$0xf]
  %v128 = vld [vmem:[%s0 + $0x17c] sm:$0xf]
  %v129 = vld [vmem:[%s0 + $0x180] sm:$0xf]
  %v130 = vld [vmem:[%s0 + $0x184] sm:$0xf]
  %v131 = vld [vmem:[%s0 + $0x188] sm:$0xf]
  %v132 = vld [vmem:[%s0 + $0x18c] sm:$0xf]
  %v133 = vld [vmem:[%s0 + $0x190] sm:$0xf]
  %v134 = vld [vmem:[%s0 + $0x194] sm:$0xf]
  %v135 = vld [vmem:[%s0 + $0x198] sm:$0xf]
  %v136 = vld [vmem:[%s0 + $0x19c] sm:$0xf]
  %v137 = vld [vmem:[%s0 + $0x1a0] sm:$0xf]
  %v138 = vld [vmem:[%s0 + $0x1a4] sm:$0xf]
  %v139 = vld [vmem:[%s0 + $0x1a8] sm:$0xf]
  %v140 = vld [vmem:[%s0 + $0x1ac] sm:$0xf]
  %v141 = vld [vmem:[%s0 + $0x1b0] sm:$0xf]
  %v142 = vld [vmem:[%s0 + $0x1b4] sm:$0xf]
  %v143 = vld [vmem:[%s0 + $0x1b8] sm:$0xf]
  %v144 = vld [vmem:[%s0 + $0x1bc] sm:$0xf]
  %v145 = vld [vmem:[%s0 + $0x1c0] sm:$0xf]
  %v146 = vld [vmem:[%s0 + $0x1c4] sm:$0xf]
  %v147 = vld [vmem:[%s0 + $0x1c8] sm:$0xf]
  %v148 = vld [vmem:[%s0 + $0x1cc] sm:$0xf]
  %v149 = vld [vmem:[%s0 + $0x1d0] sm:$0xf]
  %v150 = vld [vmem:[%s0 + $0x1d4] sm:$0xf]
  %v151 = vld [vmem:[%s0 + $0x1d8] sm:$0xf]
  %v152 = vld [vmem:[%s0 + $0x1dc] sm:$0xf]
  %v153 = vld [vmem:[%s0 + $0x1e0] sm:$0xf]
  %v154 = vld [vmem:[%s0 + $0x1e4] sm:$0xf]
  %v155 = vld [vmem:[%s0 + $0x1e8] sm:$0xf]
  %v156 = vld [vmem:[%s0 + $0x1ec] sm:$0xf]
  %v157 = vld [vmem:[%s0 + $0x1f0] sm:$0xf]
  %v158 = vld [vmem:[%s0 + $0x1f4] sm:$0xf]
  %v159 = vld [vmem:[%s0 + $0x1f8] sm:$0xf]
  %v160 = vld [vmem:[%s0 + $0x1fc] sm:$0xf]
  %v161 = vld [vmem:[%s0 + $0x200] sm:$0xf]
  %v162 = vld [vmem:[%s0 + $0x204] sm:$0xf]
  %v163 = vld [vmem:[%s0 + $0x208] sm:$0xf]
  %v164 = vld [vmem:[%s0 + $0x20c] sm:$0xf]
  %v165 = vld [vmem:[%s0 + $0x210] sm:$0xf]
  %v166 = vld [vmem:[%s0 + $0x214] sm:$0xf]
  %v167 = vld [vmem:[%s0 + $0x218] sm:$0xf]
  %v168 = vld [vmem:[%s0 + $0x21c] sm:$0xf]
  %v169 = vld [vmem:[%s0 + $0x220] sm:$0xf]
  %v170 = vld [vmem:[%s0 + $0x224] sm:$0xf]
  %v171 = vld [vmem:[%s0 + $0x228] sm:$0xf]
  %v172 = vld [vmem:[%s0 + $0x22c] sm:$0xf]
  %v173 = vld [vmem:[%s0 + $0x230] sm:$0xf]
  %v174 = vld [vmem:[%s0 + $0x234] sm:$0xf]
  %v175 = vld [vmem:[%s0 + $0x238] sm:$0xf]
  %v176 = vld [vmem:[%s0 + $0x23c] sm:$0xf]
  %v177 = vld [vmem:[%s0 + $0x240] sm:$0xf]
  %v178 = vld [vmem:[%s0 + $0x244] sm:$0xf]
  %v179 = vld [vmem:[%s0 + $0x248] sm:$0xf]
  %v180 = vld [vmem:[%s0 + $0x24c] sm:$0xf]
  %v181 = vld [vmem:[%s0 + $0x250] sm:$0xf]
  %v182 = vld [vmem:[%s0 + $0x254] sm:$0xf]
  %v183 = vld [vmem:[%s0 + $0x258] sm:$0xf]
  %v184 = vld [vmem:[%s0 + $0x25c] sm:$0xf]
  %v185 = vld [vmem:[%s0 + $0x260] sm:$0xf]
  %v186 = vld [vmem:[%s0 + $0x264] sm:$0xf]
  %v187 = vld [vmem:[%s0 + $0x268] sm:$0xf]
  %v188 = vld [vmem:[%s0 + $0x26c] sm:$0xf]
  %v189 = vld [vmem:[%s0 + $0x270] sm:$0xf]
  %v190 = vld [vmem:[%s0 + $0x274] sm:$0xf]
  %v191 = vld [vmem:[%s0 + $0x278] sm:$0xf]
  %v192 = vld [vmem:[%s0 + $0x27c] sm:$0xf]
  %v193 = vld [vmem:[%s0 + $0x280] sm:$0xf]
  %v194 = vld [vmem:[%s0 + $0x284] sm:$0xf]
  %v195 = vld [vmem:[%s0 + $0x288] sm:$0xf]
  %v196 = vld [vmem:[%s0 + $0x28c] sm:$0xf]
  %v197 = vld [vmem:[%s0 + $0x290] sm:$0xf]
  %v198 = vld [vmem:[%s0 + $0x294] sm:$0xf]
  %v199 = vld [vmem:[%s0 + $0x298] sm:$0xf]
  %v200 = vld [vmem:[%s0 + $0x29c] sm:$0xf]
  %v201 = vld [vmem:[%s0 + $0x2a0] sm:$0xf]
  %v202 = vld [vmem:[%s0 + $0x2a4] sm:$0xf]
  %v203 = vld [vmem:[%s0 + $0x2a8] sm:$0xf]
  %v204 = vld [vmem:[%s0 + $0x2ac] sm:$0xf]
  %v205 = vld [vmem:[%s0 + $0x2b0] sm:$0xf]
  %v206 = vld [vmem:[%s0 + $0x2b4] sm:$0xf]
  %v207 = vld [vmem:[%s0 + $0x2b8] sm:$0xf]
  %v208 = vld [vmem:[%s0 + $0x2bc] sm:$0xf]
  %v209 = vld [vmem:[%s0 + $0x2c0] sm:$0xf]
  %v210 = vld [vmem:[%s0 + $0x2c4] sm:$0xf]
  %v211 = vld [vmem:[%s0 + $0x2c8] sm:$0xf]
  %v212 = vld [vmem:[%s0 + $0x2cc] sm:$0xf]
  %v213 = vld [vmem:[%s0 + $0x2d0] sm:$0xf]
  %v214 = vld [vmem:[%s0 + $0x2d4] sm:$0xf]
  %v215 = vld [vmem:[%s0 + $0x2d8] sm:$0xf]
  %v216 = vld [vmem:[%s0 + $0x2dc] sm:$0xf]
  %v217 = vld [vmem:[%s0 + $0x2e0] sm:$0xf]
  %v218 = vld [vmem:[%s0 + $0x2e4] sm:$0xf]
  %v219 = vld [vmem:[%s0 + $0x2e8] sm:$0xf]
  %v220 = vld [vmem:[%s0 + $0x2ec] sm:$0xf]
  %v221 = vld [vmem:[%s0 + $0x2f0] sm:$0xf]
  %v222 = vld [vmem:[%s0 + $0x2f4] sm:$0xf]
  %v223 = vld [vmem:[%s0 + $0x2f8] sm:$0xf]
  %v224 = vld [vmem:[%s0 + $0x2fc] sm:$0xf]
  %v225 = vld [vmem:[%s0 + $0x300] sm:$0xf]
  %v226 = vld [vmem:[%s0 + $0x304] sm:$0xf]
  %v227 = vld [vmem:[%s0 + $0x308] sm:$0xf]
  %v228 = vld [vmem:[%s0 + $0x30c] sm:$0xf]
  %v229 = vld [vmem:[%s0 + $0x310] sm:$0xf]
  %v230 = vld [vmem:[%s0 + $0x314] sm:$0xf]
  %v231 = vld [vmem:[%s0 + $0x318] sm:$0xf]
  %v232 = vld [vmem:[%s0 + $0x31c] sm:$0xf]
  %v233 = vld [vmem:[%s0 + $0x320] sm:$0xf]
  %v234 = vld [vmem:[%s0 + $0x324] sm:$0xf]
  %v235 = vld [vmem:[%s0 + $0x328] sm:$0xf]
  %v236 = vld [vmem:[%s0 + $0x32c] sm:$0xf]
  %v237 = vld [vmem:[%s0 + $0x330] sm:$0xf]
  %v238 = vld [vmem:[%s0 + $0x334] sm:$0xf]
  %v239 = vld [vmem:[%s0 + $0x338] sm:$0xf]
  %v240 = vld [vmem:[%s0 + $0x33c] sm:$0xf]
  %v241 = vld [vmem:[%s0 + $0x340] sm:$0xf]
  %v242 = vld [vmem:[%s0 + $0x344] sm:$0xf]
  %v243 = vld [vmem:[%s0 + $0x348] sm:$0xf]
  %v244 = vld [vmem:[%s0 + $0x34c] sm:$0xf]
  %v245 = vld [vmem:[%s0 + $0x350] sm:$0xf]
  %v246 = vld [vmem:[%s0 + $0x354] sm:$0xf]
  %v247 = vld [vmem:[%s0 + $0x358] sm:$0xf]
  %v248 = vld [vmem:[%s0 + $0x35c] sm:$0xf]
  %v249 = vld [vmem:[%s0 + $0x360] sm:$0xf]
  %v250 = vld [vmem:[%s0 + $0x364] sm:$0xf]
  %v251 = vld [vmem:[%s0 + $0x368] sm:$0xf]
  %v252 = vld [vmem:[%s0 + $0x36c] sm:$0xf]
  %v253 = vld [vmem:[%s0 + $0x370] sm:$0xf]
  %v254 = vld [vmem:[%s0 + $0x374] sm:$0xf]
  %v255 = vld [vmem:[%s0 + $0x378] sm:$0xf]
  %v256 = vld [vmem:[%s0 + $0x37c] sm:$0xf]
  %v257 = vld [vmem:[%s0 + $0x380] sm:$0xf]
  %v258 = vld [vmem:[%s0 + $0x384] sm:$0xf]
  %v259 = vld [vmem:[%s0 + $0x388] sm:$0xf]
  %v260 = vld [vmem:[%s0 + $0x38c] sm:$0xf]
  %v261 = vld [vmem:[%s0 + $0x390] sm:$0xf]
  %v262 = vld [vmem:[%s0 + $0x394] sm:$0xf]
  %v263 = vld [vmem:[%s0 + $0x398] sm:$0xf]
  %v264 = vld [vmem:[%s0 + $0x39c] sm:$0xf]
  %v265 = vld [vmem:[%s0 + $0x3a0] sm:$0xf]
  %v266 = vld [vmem:[%s0 + $0x3a4] sm:$0xf]
  %v267 = vld [vmem:[%s0 + $0x3a8] sm:$0xf]
  %v268 = vld [vmem:[%s0 + $0x3ac] sm:$0xf]
  %v269 = vld [vmem:[%s0 + $0x3b0] sm:$0xf]
  %v270 = vld [vmem:[%s0 + $0x3b4] sm:$0xf]
  %v271 = vld [vmem:[%s0 + $0x3b8] sm:$0xf]
  %v272 = vld [vmem:[%s0 + $0x3bc] sm:$0xf]
  %v273 = vld [vmem:[%s0 + $0x3c0] sm:$0xf]
  %v274 = vld [vmem:[%s0 + $0x3c4] sm:$0xf]
  %v275 = vld [vmem:[%s0 + $0x3c8] sm:$0xf]
  %v276 = vld [vmem:[%s0 + $0x3cc] sm:$0xf]
  %v277 = vld [vmem:[%s0 + $0x3d0] sm:$0xf]
  %v278 = vld [vmem:[%s0 + $0x3d4] sm:$0xf]
  %v279 = vld [vmem:[%s0 + $0x3d8] sm:$0xf]
  %v280 = vld [vmem:[%s0 + $0x3dc] sm:$0xf]
  %v281 = vld [vmem:[%s0 + $0x3e0] sm:$0xf]
  %v282 = vld [vmem:[%s0 + $0x3e4] sm:$0xf]
  %v283 = vld [vmem:[%s0 + $0x3e8] sm:$0xf]
  %v284 = vld [vmem:[%s0 + $0x3ec] sm:$0xf]
  %v285 = vld [vmem:[%s0 + $0x3f0] sm:$0xf]
  %v286 = vld [vmem:[%s0 + $0x3f4] sm:$0xf]
  %v287 = vld [vmem:[%s0 + $0x3f8] sm:$0xf]
  %v288 = vld [vmem:[%s0 + $0x3fc] sm:$0xf]
  %v289 = vld [vmem:[%s1] sm:$0xf]
  %v290 = vld [vmem:[%s1 + $0x4] sm:$0xf]
  %v291 = vld [vmem:[%s1 + $0x8] sm:$0xf]
  %v292 = vld [vmem:[%s1 + $0xc] sm:$0xf]
  %v293 = vld [vmem:[%s1 + $0x10] sm:$0xf]
  %v294 = vld [vmem:[%s1 + $0x14] sm:$0xf]
  %v551 = vunpack.c.l.b16 %v33
  %v552 = vunpack.c.l.b16 %v34
  %v553 = vunpack.c.l.b16 %v35
  %v554 = vunpack.c.l.b16 %v36
  %v555 = vunpack.c.l.b16 %v37
  %v556 = vunpack.c.l.b16 %v38
  %v557 = vunpack.c.l.b16 %v39
  %v558 = vunpack.c.l.b16 %v40
  %v559 = vunpack.c.l.b16 %v41
  %v560 = vunpack.c.l.b16 %v42
  %v561 = vunpack.c.l.b16 %v43
  %v562 = vunpack.c.l.b16 %v44
  %v563 = vunpack.c.l.b16 %v45
  %v564 = vunpack.c.l.b16 %v46
  %v565 = vunpack.c.l.b16 %v47
  %v566 = vunpack.c.l.b16 %v48
  %v567 = vunpack.c.l.b16 %v49
  %v568 = vunpack.c.l.b16 %v50
  %v569 = vunpack.c.l.b16 %v51
  %v570 = vunpack.c.l.b16 %v52
  %v571 = vunpack.c.l.b16 %v53
  %v572 = vunpack.c.l.b16 %v54
  %v573 = vunpack.c.l.b16 %v55
  %v574 = vunpack.c.l.b16 %v56
  %v575 = vunpack.c.l.b16 %v57
  %v576 = vunpack.c.l.b16 %v58
  %v577 = vunpack.c.l.b16 %v59
  %v578 = vunpack.c.l.b16 %v60
  %v579 = vunpack.c.l.b16 %v61
  %v580 = vunpack.c.l.b16 %v62
  %v581 = vunpack.c.l.b16 %v63
  %v582 = vunpack.c.l.b16 %v64
  %v583 = vunpack.c.l.b16 %v65
  %v584 = vunpack.c.l.b16 %v66
  %v585 = vunpack.c.l.b16 %v67
  %v586 = vunpack.c.l.b16 %v68
  %v587 = vunpack.c.l.b16 %v69
  %v588 = vunpack.c.l.b16 %v70
  %v589 = vunpack.c.l.b16 %v71
  %v590 = vunpack.c.l.b16 %v72
  %v591 = vunpack.c.l.b16 %v73
  %v592 = vunpack.c.l.b16 %v74
  %v593 = vunpack.c.l.b16 %v75
  %v594 = vunpack.c.l.b16 %v76
  %v595 = vunpack.c.l.b16 %v77
  %v596 = vunpack.c.l.b16 %v78
  %v597 = vunpack.c.l.b16 %v79
  %v598 = vunpack.c.l.b16 %v80
  %v599 = vunpack.c.l.b16 %v81
  %v600 = vunpack.c.l.b16 %v82
  %v601 = vunpack.c.l.b16 %v83
  %v602 = vunpack.c.l.b16 %v84
  %v603 = vunpack.c.l.b16 %v85
  %v604 = vunpack.c.l.b16 %v86
  %v605 = vunpack.c.l.b16 %v87
  %v606 = vunpack.c.l.b16 %v88
  %v607 = vunpack.c.l.b16 %v89
  %v608 = vunpack.c.l.b16 %v90
  %v609 = vunpack.c.l.b16 %v91
  %v610 = vunpack.c.l.b16 %v92
  %v611 = vunpack.c.l.b16 %v93
  %v612 = vunpack.c.l.b16 %v94
  %v613 = vunpack.c.l.b16 %v95
  %v614 = vunpack.c.l.b16 %v96
  %v615 = vunpack.c.l.b16 %v97
  %v616 = vunpack.c.l.b16 %v98
  %v617 = vunpack.c.l.b16 %v99
  %v618 = vunpack.c.l.b16 %v100
  %v619 = vunpack.c.l.b16 %v101
  %v620 = vunpack.c.l.b16 %v102
  %v621 = vunpack.c.l.b16 %v103
  %v622 = vunpack.c.l.b16 %v104
  %v623 = vunpack.c.l.b16 %v105
  %v624 = vunpack.c.l.b16 %v106
  %v625 = vunpack.c.l.b16 %v107
  %v626 = vunpack.c.l.b16 %v108
  %v627 = vunpack.c.l.b16 %v109
  %v628 = vunpack.c.l.b16 %v110
  %v629 = vunpack.c.l.b16 %v111
  %v630 = vunpack.c.l.b16 %v112
  %v631 = vunpack.c.l.b16 %v113
  %v632 = vunpack.c.l.b16 %v114
  %v633 = vunpack.c.l.b16 %v115
  %v634 = vunpack.c.l.b16 %v116
  %v635 = vunpack.c.l.b16 %v117
  %v636 = vunpack.c.l.b16 %v118
  %v637 = vunpack.c.l.b16 %v119
  %v638 = vunpack.c.l.b16 %v120
  %v639 = vunpack.c.l.b16 %v121
  %v640 = vunpack.c.l.b16 %v122
  %v641 = vunpack.c.l.b16 %v123
  %v642 = vunpack.c.l.b16 %v124
  %v643 = vunpack.c.l.b16 %v125
  %v644 = vunpack.c.l.b16 %v126
  %v645 = vunpack.c.l.b16 %v127
  %v646 = vunpack.c.l.b16 %v128
  %v647 = vunpack.c.l.b16 %v129
  %v648 = vunpack.c.l.b16 %v130
  %v649 = vunpack.c.l.b16 %v131
  %v650 = vunpack.c.l.b16 %v132
  %v651 = vunpack.c.l.b16 %v133
  %v652 = vunpack.c.l.b16 %v134
  %v653 = vunpack.c.l.b16 %v135
  %v654 = vunpack.c.l.b16 %v136
  %v655 = vunpack.c.l.b16 %v137
  %v656 = vunpack.c.l.b16 %v138
  %v657 = vunpack.c.l.b16 %v139
  %v658 = vunpack.c.l.b16 %v140
  %v659 = vunpack.c.l.b16 %v141
  %v660 = vunpack.c.l.b16 %v142
  %v661 = vunpack.c.l.b16 %v143
  %v662 = vunpack.c.l.b16 %v144
  %v663 = vunpack.c.l.b16 %v145
  %v664 = vunpack.c.l.b16 %v146
  %v665 = vunpack.c.l.b16 %v147
  %v666 = vunpack.c.l.b16 %v148
  %v667 = vunpack.c.l.b16 %v149
  %v668 = vunpack.c.l.b16 %v150
  %v669 = vunpack.c.l.b16 %v151
  %v670 = vunpack.c.l.b16 %v152
  %v671 = vunpack.c.l.b16 %v153
  %v672 = vunpack.c.l.b16 %v154
  %v673 = vunpack.c.l.b16 %v155
  %v674 = vunpack.c.l.b16 %v156
  %v675 = vunpack.c.l.b16 %v157
  %v676 = vunpack.c.l.b16 %v158
  %v677 = vunpack.c.l.b16 %v159
  %v678 = vunpack.c.l.b16 %v160
  %v679 = vunpack.c.l.b16 %v161
  %v680 = vunpack.c.l.b16 %v162
  %v681 = vunpack.c.l.b16 %v163
  %v682 = vunpack.c.l.b16 %v164
  %v683 = vunpack.c.l.b16 %v165
  %v684 = vunpack.c.l.b16 %v166
  %v685 = vunpack.c.l.b16 %v167
  %v686 = vunpack.c.l.b16 %v168
  %v687 = vunpack.c.l.b16 %v169
  %v688 = vunpack.c.l.b16 %v170
  %v689 = vunpack.c.l.b16 %v171
  %v690 = vunpack.c.l.b16 %v172
  %v691 = vunpack.c.l.b16 %v173
  %v692 = vunpack.c.l.b16 %v174
  %v693 = vunpack.c.l.b16 %v175
  %v694 = vunpack.c.l.b16 %v176
  %v695 = vunpack.c.l.b16 %v177
  %v696 = vunpack.c.l.b16 %v178
  %v697 = vunpack.c.l.b16 %v179
  %v698 = vunpack.c.l.b16 %v180
  %v699 = vunpack.c.l.b16 %v181
  %v700 = vunpack.c.l.b16 %v182
  %v701 = vunpack.c.l.b16 %v183
  %v702 = vunpack.c.l.b16 %v184
  %v703 = vunpack.c.l.b16 %v185
  %v704 = vunpack.c.l.b16 %v186
  %v705 = vunpack.c.l.b16 %v187
  %v706 = vunpack.c.l.b16 %v188
  %v707 = vunpack.c.l.b16 %v189
  %v708 = vunpack.c.l.b16 %v190
  %v709 = vunpack.c.l.b16 %v191
  %v710 = vunpack.c.l.b16 %v192
  %v711 = vunpack.c.l.b16 %v193
  %v712 = vunpack.c.l.b16 %v194
  %v713 = vunpack.c.l.b16 %v195
  %v714 = vunpack.c.l.b16 %v196
  %v715 = vunpack.c.l.b16 %v197
  %v716 = vunpack.c.l.b16 %v198
  %v717 = vunpack.c.l.b16 %v199
  %v718 = vunpack.c.l.b16 %v200
  %v719 = vunpack.c.l.b16 %v201
  %v720 = vunpack.c.l.b16 %v202
  %v721 = vunpack.c.l.b16 %v203
  %v722 = vunpack.c.l.b16 %v204
  %v723 = vunpack.c.l.b16 %v205
  %v724 = vunpack.c.l.b16 %v206
  %v725 = vunpack.c.l.b16 %v207
  %v726 = vunpack.c.l.b16 %v208
  %v727 = vunpack.c.l.b16 %v209
  %v728 = vunpack.c.l.b16 %v210
  %v729 = vunpack.c.l.b16 %v211
  %v730 = vunpack.c.l.b16 %v212
  %v731 = vunpack.c.l.b16 %v213
  %v732 = vunpack.c.l.b16 %v214
  %v733 = vunpack.c.l.b16 %v215
  %v734 = vunpack.c.l.b16 %v216
  %v735 = vunpack.c.l.b16 %v217
  %v736 = vunpack.c.l.b16 %v218
  %v737 = vunpack.c.l.b16 %v219
  %v738 = vunpack.c.l.b16 %v220
  %v739 = vunpack.c.l.b16 %v221
  %v740 = vunpack.c.l.b16 %v222
  %v741 = vunpack.c.l.b16 %v223
  %v742 = vunpack.c.l.b16 %v224
  %v743 = vunpack.c.l.b16 %v225
  %v744 = vunpack.c.l.b16 %v226
  %v745 = vunpack.c.l.b16 %v227
  %v746 = vunpack.c.l.b16 %v228
  %v747 = vunpack.c.l.b16 %v229
  %v748 = vunpack.c.l.b16 %v230
  %v749 = vunpack.c.l.b16 %v231
  %v750 = vunpack.c.l.b16 %v232
  %v751 = vunpack.c.l.b16 %v233
  %v752 = vunpack.c.l.b16 %v234
  %v753 = vunpack.c.l.b16 %v235
  %v754 = vunpack.c.l.b16 %v236
  %v755 = vunpack.c.l.b16 %v237
  %v756 = vunpack.c.l.b16 %v238
  %v757 = vunpack.c.l.b16 %v239
  %v758 = vunpack.c.l.b16 %v240
  %v759 = vunpack.c.l.b16 %v241
  %v760 = vunpack.c.l.b16 %v242
  %v761 = vunpack.c.l.b16 %v243
  %v762 = vunpack.c.l.b16 %v244
  %v763 = vunpack.c.l.b16 %v245
  %v764 = vunpack.c.l.b16 %v246
  %v765 = vunpack.c.l.b16 %v247
  %v766 = vunpack.c.l.b16 %v248
  %v767 = vunpack.c.l.b16 %v249
  %v768 = vunpack.c.l.b16 %v250
  %v769 = vunpack.c.l.b16 %v251
  %v770 = vunpack.c.l.b16 %v252
  %v771 = vunpack.c.l.b16 %v253
  %v772 = vunpack.c.l.b16 %v254
  %v773 = vunpack.c.l.b16 %v255
  %v774 = vunpack.c.l.b16 %v256
  %v775 = vunpack.c.l.b16 %v257
  %v776 = vunpack.c.l.b16 %v258
  %v777 = vunpack.c.l.b16 %v259
  %v778 = vunpack.c.l.b16 %v260
  %v779 = vunpack.c.l.b16 %v261
  %v780 = vunpack.c.l.b16 %v262
  %v781 = vunpack.c.l.b16 %v263
  %v782 = vunpack.c.l.b16 %v264
  %v783 = vunpack.c.l.b16 %v265
  %v784 = vunpack.c.l.b16 %v266
  %v785 = vunpack.c.l.b16 %v267
  %v786 = vunpack.c.l.b16 %v268
  %v787 = vunpack.c.l.b16 %v269
  %v788 = vunpack.c.l.b16 %v270
  %v789 = vunpack.c.l.b16 %v271
  %v790 = vunpack.c.l.b16 %v272
  %v791 = vunpack.c.l.b16 %v273
  %v792 = vunpack.c.l.b16 %v274
  %v793 = vunpack.c.l.b16 %v275
  %v794 = vunpack.c.l.b16 %v276
  %v795 = vunpack.c.l.b16 %v277
  %v796 = vunpack.c.l.b16 %v278
  %v797 = vunpack.c.l.b16 %v279
  %v798 = vunpack.c.l.b16 %v280
  %v799 = vunpack.c.l.b16 %v281
  %v800 = vunpack.c.l.b16 %v282
  %v801 = vunpack.c.l.b16 %v283
  %v802 = vunpack.c.l.b16 %v284
  %v803 = vunpack.c.l.b16 %v285
  %v804 = vunpack.c.l.b16 %v286
  %v805 = vunpack.c.l.b16 %v287
  %v806 = vunpack.c.l.b16 %v288
  %v807 = vpack.c.b16 %v552, %v551
  %v808 = vpack.c.b16 %v554, %v553
  %v809 = vpack.c.b16 %v556, %v555
  %v810 = vpack.c.b16 %v558, %v557
  %v811 = vpack.c.b16 %v560, %v559
  %v812 = vpack.c.b16 %v562, %v561
  %v813 = vpack.c.b16 %v564, %v563
  %v814 = vpack.c.b16 %v566, %v565
  %v815 = vpack.c.b16 %v568, %v567
  %v816 = vpack.c.b16 %v570, %v569
  %v817 = vpack.c.b16 %v572, %v571
  %v818 = vpack.c.b16 %v574, %v573
  %v819 = vpack.c.b16 %v576, %v575
  %v820 = vpack.c.b16 %v578, %v577
  %v821 = vpack.c.b16 %v580, %v579
  %v822 = vpack.c.b16 %v582, %v581
  %v823 = vpack.c.b16 %v584, %v583
  %v824 = vpack.c.b16 %v586, %v585
  %v825 = vpack.c.b16 %v588, %v587
  %v826 = vpack.c.b16 %v590, %v589
  %v827 = vpack.c.b16 %v592, %v591
  %v828 = vpack.c.b16 %v594, %v593
  %v829 = vpack.c.b16 %v596, %v595
  %v830 = vpack.c.b16 %v598, %v597
  %v831 = vpack.c.b16 %v600, %v599
  %v832 = vpack.c.b16 %v602, %v601
  %v833 = vpack.c.b16 %v604, %v603
  %v834 = vpack.c.b16 %v606, %v605
  %v835 = vpack.c.b16 %v608, %v607
  %v836 = vpack.c.b16 %v610, %v609
  %v837 = vpack.c.b16 %v612, %v611
  %v838 = vpack.c.b16 %v614, %v613
  %v839 = vpack.c.b16 %v616, %v615
  %v840 = vpack.c.b16 %v618, %v617
  %v841 = vpack.c.b16 %v620, %v619
  %v842 = vpack.c.b16 %v622, %v621
  %v843 = vpack.c.b16 %v624, %v623
  %v844 = vpack.c.b16 %v626, %v625
  %v845 = vpack.c.b16 %v628, %v627
  %v846 = vpack.c.b16 %v630, %v629
  %v847 = vpack.c.b16 %v632, %v631
  %v848 = vpack.c.b16 %v634, %v633
  %v849 = vpack.c.b16 %v636, %v635
  %v850 = vpack.c.b16 %v638, %v637
  %v851 = vpack.c.b16 %v640, %v639
  %v852 = vpack.c.b16 %v642, %v641
  %v853 = vpack.c.b16 %v644, %v643
  %v854 = vpack.c.b16 %v646, %v645
  %v855 = vpack.c.b16 %v648, %v647
  %v856 = vpack.c.b16 %v650, %v649
  %v857 = vpack.c.b16 %v652, %v651
  %v858 = vpack.c.b16 %v654, %v653
  %v859 = vpack.c.b16 %v656, %v655
  %v860 = vpack.c.b16 %v658, %v657
  %v861 = vpack.c.b16 %v660, %v659
  %v862 = vpack.c.b16 %v662, %v661
  %v863 = vpack.c.b16 %v664, %v663
  %v864 = vpack.c.b16 %v666, %v665
  %v865 = vpack.c.b16 %v668, %v667
  %v866 = vpack.c.b16 %v670, %v669
  %v867 = vpack.c.b16 %v672, %v671
  %v868 = vpack.c.b16 %v674, %v673
  %v869 = vpack.c.b16 %v676, %v675
  %v870 = vpack.c.b16 %v678, %v677
  %v871 = vpack.c.b16 %v680, %v679
  %v872 = vpack.c.b16 %v682, %v681
  %v873 = vpack.c.b16 %v684, %v683
  %v874 = vpack.c.b16 %v686, %v685
  %v875 = vpack.c.b16 %v688, %v687
  %v876 = vpack.c.b16 %v690, %v689
  %v877 = vpack.c.b16 %v692, %v691
  %v878 = vpack.c.b16 %v694, %v693
  %v879 = vpack.c.b16 %v696, %v695
  %v880 = vpack.c.b16 %v698, %v697
  %v881 = vpack.c.b16 %v700, %v699
  %v882 = vpack.c.b16 %v702, %v701
  %v883 = vpack.c.b16 %v704, %v703
  %v884 = vpack.c.b16 %v706, %v705
  %v885 = vpack.c.b16 %v708, %v707
  %v886 = vpack.c.b16 %v710, %v709
  %v887 = vpack.c.b16 %v712, %v711
  %v888 = vpack.c.b16 %v714, %v713
  %v889 = vpack.c.b16 %v716, %v715
  %v890 = vpack.c.b16 %v718, %v717
  %v891 = vpack.c.b16 %v720, %v719
  %v892 = vpack.c.b16 %v722, %v721
  %v893 = vpack.c.b16 %v724, %v723
  %v894 = vpack.c.b16 %v726, %v725
  %v895 = vpack.c.b16 %v728, %v727
  %v896 = vpack.c.b16 %v730, %v729
  %v897 = vpack.c.b16 %v732, %v731
  %v898 = vpack.c.b16 %v734, %v733
  %v899 = vpack.c.b16 %v736, %v735
  %v900 = vpack.c.b16 %v738, %v737
  %v901 = vpack.c.b16 %v740, %v739
  %v902 = vpack.c.b16 %v742, %v741
  %v903 = vpack.c.b16 %v744, %v743
  %v904 = vpack.c.b16 %v746, %v745
  %v905 = vpack.c.b16 %v748, %v747
  %v906 = vpack.c.b16 %v750, %v749
  %v907 = vpack.c.b16 %v752, %v751
  %v908 = vpack.c.b16 %v754, %v753
  %v909 = vpack.c.b16 %v756, %v755
  %v910 = vpack.c.b16 %v758, %v757
  %v911 = vpack.c.b16 %v760, %v759
  %v912 = vpack.c.b16 %v762, %v761
  %v913 = vpack.c.b16 %v764, %v763
  %v914 = vpack.c.b16 %v766, %v765
  %v915 = vpack.c.b16 %v768, %v767
  %v916 = vpack.c.b16 %v770, %v769
  %v917 = vpack.c.b16 %v772, %v771
  %v918 = vpack.c.b16 %v774, %v773
  %v919 = vpack.c.b16 %v776, %v775
  %v920 = vpack.c.b16 %v778, %v777
  %v921 = vpack.c.b16 %v780, %v779
  %v922 = vpack.c.b16 %v782, %v781
  %v923 = vpack.c.b16 %v784, %v783
  %v924 = vpack.c.b16 %v786, %v785
  %v925 = vpack.c.b16 %v788, %v787
  %v926 = vpack.c.b16 %v790, %v789
  %v927 = vpack.c.b16 %v792, %v791
  %v928 = vpack.c.b16 %v794, %v793
  %v929 = vpack.c.b16 %v796, %v795
  %v930 = vpack.c.b16 %v798, %v797
  %v931 = vpack.c.b16 %v800, %v799
  %v932 = vpack.c.b16 %v802, %v801
  %v933 = vpack.c.b16 %v804, %v803
  %v934 = vpack.c.b16 %v806, %v805
  %v941 = vunpack.c.l.b16 %v289
  %v942 = vunpack.c.l.b16 %v290
  %v943 = vunpack.c.l.b16 %v291
  %v944 = vunpack.c.l.b16 %v292
  %v945 = vunpack.c.l.b16 %v293
  %v946 = vunpack.c.l.b16 %v294
  %v947 = vpack.c.b16 %v942, %v941
  %v948 = vpack.c.b16 %v944, %v943
  %v949 = vpack.c.b16 %v946, %v945
  %vm953 = vcmask 392192
  %v955 = vsel %vm953, %v807, 0
  %v958 = vsel %vm953, %v808, 0
  %v961 = vsel %vm953, %v809, 0
  %v964 = vsel %vm953, %v810, 0
  %v967 = vsel %vm953, %v811, 0
  %v970 = vsel %vm953, %v812, 0
  %v973 = vsel %vm953, %v813, 0
  %v976 = vsel %vm953, %v814, 0
  %v979 = vsel %vm953, %v815, 0
  %v982 = vsel %vm953, %v816, 0
  %v985 = vsel %vm953, %v817, 0
  %v988 = vsel %vm953, %v818, 0
  %v991 = vsel %vm953, %v819, 0
  %v994 = vsel %vm953, %v820, 0
  %v997 = vsel %vm953, %v821, 0
  %v1000 = vsel %vm953, %v822, 0
  %v1003 = vsel %vm953, %v823, 0
  %v1006 = vsel %vm953, %v824, 0
  %v1009 = vsel %vm953, %v825, 0
  %v1012 = vsel %vm953, %v826, 0
  %v1015 = vsel %vm953, %v827, 0
  %v1018 = vsel %vm953, %v828, 0
  %v1021 = vsel %vm953, %v829, 0
  %v1024 = vsel %vm953, %v830, 0
  %v1027 = vsel %vm953, %v831, 0
  %v1030 = vsel %vm953, %v832, 0
  %v1033 = vsel %vm953, %v833, 0
  %v1036 = vsel %vm953, %v834, 0
  %v1039 = vsel %vm953, %v835, 0
  %v1042 = vsel %vm953, %v836, 0
  %v1045 = vsel %vm953, %v837, 0
  %v1048 = vsel %vm953, %v838, 0
  %v1051 = vsel %vm953, %v839, 0
  %v1054 = vsel %vm953, %v840, 0
  %v1057 = vsel %vm953, %v841, 0
  %v1060 = vsel %vm953, %v842, 0
  %v1063 = vsel %vm953, %v843, 0
  %v1066 = vsel %vm953, %v844, 0
  %v1069 = vsel %vm953, %v845, 0
  %v1072 = vsel %vm953, %v846, 0
  %v1075 = vsel %vm953, %v847, 0
  %v1078 = vsel %vm953, %v848, 0
  %v1081 = vsel %vm953, %v849, 0
  %v1084 = vsel %vm953, %v850, 0
  %v1087 = vsel %vm953, %v851, 0
  %v1090 = vsel %vm953, %v852, 0
  %v1093 = vsel %vm953, %v853, 0
  %v1096 = vsel %vm953, %v854, 0
  %v1099 = vsel %vm953, %v855, 0
  %v1102 = vsel %vm953, %v856, 0
  %v1105 = vsel %vm953, %v857, 0
  %v1108 = vsel %vm953, %v858, 0
  %v1111 = vsel %vm953, %v859, 0
  %v1114 = vsel %vm953, %v860, 0
  %v1117 = vsel %vm953, %v861, 0
  %v1120 = vsel %vm953, %v862, 0
  %v1123 = vsel %vm953, %v863, 0
  %v1126 = vsel %vm953, %v864, 0
  %v1129 = vsel %vm953, %v865, 0
  %v1132 = vsel %vm953, %v866, 0
  %v1135 = vsel %vm953, %v867, 0
  %v1138 = vsel %vm953, %v868, 0
  %v1141 = vsel %vm953, %v869, 0
  %v1144 = vsel %vm953, %v870, 0
  %v1147 = vsel %vm953, %v871, 0
  %v1150 = vsel %vm953, %v872, 0
  %v1153 = vsel %vm953, %v873, 0
  %v1156 = vsel %vm953, %v874, 0
  %v1159 = vsel %vm953, %v875, 0
  %v1162 = vsel %vm953, %v876, 0
  %v1165 = vsel %vm953, %v877, 0
  %v1168 = vsel %vm953, %v878, 0
  %v1171 = vsel %vm953, %v879, 0
  %v1174 = vsel %vm953, %v880, 0
  %v1177 = vsel %vm953, %v881, 0
  %v1180 = vsel %vm953, %v882, 0
  %v1183 = vsel %vm953, %v883, 0
  %v1186 = vsel %vm953, %v884, 0
  %v1189 = vsel %vm953, %v885, 0
  %v1192 = vsel %vm953, %v886, 0
  %v1195 = vsel %vm953, %v887, 0
  %v1198 = vsel %vm953, %v888, 0
  %v1201 = vsel %vm953, %v889, 0
  %v1204 = vsel %vm953, %v890, 0
  %v1207 = vsel %vm953, %v891, 0
  %v1210 = vsel %vm953, %v892, 0
  %v1213 = vsel %vm953, %v893, 0
  %v1216 = vsel %vm953, %v894, 0
  %v1219 = vsel %vm953, %v895, 0
  %v1222 = vsel %vm953, %v896, 0
  %v1225 = vsel %vm953, %v897, 0
  %v1228 = vsel %vm953, %v898, 0
  %v1231 = vsel %vm953, %v899, 0
  %v1234 = vsel %vm953, %v900, 0
  %v1237 = vsel %vm953, %v901, 0
  %v1240 = vsel %vm953, %v902, 0
  %v1243 = vsel %vm953, %v903, 0
  %v1246 = vsel %vm953, %v904, 0
  %v1249 = vsel %vm953, %v905, 0
  %v1252 = vsel %vm953, %v906, 0
  %v1255 = vsel %vm953, %v907, 0
  %v1258 = vsel %vm953, %v908, 0
  %v1261 = vsel %vm953, %v909, 0
  %v1264 = vsel %vm953, %v910, 0
  %v1267 = vsel %vm953, %v911, 0
  %v1270 = vsel %vm953, %v912, 0
  %v1273 = vsel %vm953, %v913, 0
  %v1276 = vsel %vm953, %v914, 0
  %v1279 = vsel %vm953, %v915, 0
  %v1282 = vsel %vm953, %v916, 0
  %v1285 = vsel %vm953, %v917, 0
  %v1288 = vsel %vm953, %v918, 0
  %v1291 = vsel %vm953, %v919, 0
  %v1294 = vsel %vm953, %v920, 0
  %v1297 = vsel %vm953, %v921, 0
  %v1300 = vsel %vm953, %v922, 0
  %v1303 = vsel %vm953, %v923, 0
  %v1306 = vsel %vm953, %v924, 0
  %v1309 = vsel %vm953, %v925, 0
  %v1312 = vsel %vm953, %v926, 0
  %v1315 = vsel %vm953, %v927, 0
  %v1318 = vsel %vm953, %v928, 0
  %v1321 = vsel %vm953, %v929, 0
  %v1324 = vsel %vm953, %v930, 0
  %v1327 = vsel %vm953, %v931, 0
  %v1330 = vsel %vm953, %v932, 0
  %v1333 = vsel %vm953, %v933, 0
  %v1336 = vsel %vm953, %v934, 0
  %1338 = vmatpush.bf16.msra.mxu0 0
  %1339 = vmatpush.bf16.msra.mxu0 0
  %1340 = vmatpush.bf16.msra.mxu0 0
  %1341 = vmatpush.bf16.msra.mxu0 0
  %1342 = vmatpush.bf16.msra.mxu0 0
  %1343 = vmatpush.bf16.msra.mxu0 %v949
  %1344 = vmatpush.bf16.msra.mxu0 %v948
  %1345 = vmatpush.bf16.msra.mxu0 %v947
  %1346 = vmatmul.bf16.gmra.mxu0 %v955
  %v1347 = vpop.f32.mrf.mxu0
  %v1348 = vadd.f32 0.0, %v1347
  %v1349 = vpop.f32.mrf.mxu0
  %v1350 = vadd.f32 0.0, %v1349
  %1351 = vmatmul.bf16.gmra.mxu0 %v958
  %v1352 = vpop.f32.mrf.mxu0
  %v1353 = vadd.f32 0.0, %v1352
  %v1354 = vpop.f32.mrf.mxu0
  %v1355 = vadd.f32 0.0, %v1354
  %1356 = vmatmul.bf16.gmra.mxu0 %v961
  %v1357 = vpop.f32.mrf.mxu0
  %v1358 = vadd.f32 0.0, %v1357
  %v1359 = vpop.f32.mrf.mxu0
  %v1360 = vadd.f32 0.0, %v1359
  %1361 = vmatmul.bf16.gmra.mxu0 %v964
  %v1362 = vpop.f32.mrf.mxu0
  %v1363 = vadd.f32 0.0, %v1362
  %v1364 = vpop.f32.mrf.mxu0
  %v1365 = vadd.f32 0.0, %v1364
  %1366 = vmatmul.bf16.gmra.mxu0 %v967
  %v1367 = vpop.f32.mrf.mxu0
  %v1368 = vadd.f32 0.0, %v1367
  %v1369 = vpop.f32.mrf.mxu0
  %v1370 = vadd.f32 0.0, %v1369
  %1371 = vmatmul.bf16.gmra.mxu0 %v970
  %v1372 = vpop.f32.mrf.mxu0
  %v1373 = vadd.f32 0.0, %v1372
  %v1374 = vpop.f32.mrf.mxu0
  %v1375 = vadd.f32 0.0, %v1374
  %1376 = vmatmul.bf16.gmra.mxu0 %v973
  %v1377 = vpop.f32.mrf.mxu0
  %v1378 = vadd.f32 0.0, %v1377
  %v1379 = vpop.f32.mrf.mxu0
  %v1380 = vadd.f32 0.0, %v1379
  %1381 = vmatmul.bf16.gmra.mxu0 %v976
  %v1382 = vpop.f32.mrf.mxu0
  %v1383 = vadd.f32 0.0, %v1382
  %v1384 = vpop.f32.mrf.mxu0
  %v1385 = vadd.f32 0.0, %v1384
  %1386 = vmatmul.bf16.gmra.mxu0 %v979
  %v1387 = vpop.f32.mrf.mxu0
  %v1388 = vadd.f32 0.0, %v1387
  %v1389 = vpop.f32.mrf.mxu0
  %v1390 = vadd.f32 0.0, %v1389
  %1391 = vmatmul.bf16.gmra.mxu0 %v982
  %v1392 = vpop.f32.mrf.mxu0
  %v1393 = vadd.f32 0.0, %v1392
  %v1394 = vpop.f32.mrf.mxu0
  %v1395 = vadd.f32 0.0, %v1394
  %1396 = vmatmul.bf16.gmra.mxu0 %v985
  %v1397 = vpop.f32.mrf.mxu0
  %v1398 = vadd.f32 0.0, %v1397
  %v1399 = vpop.f32.mrf.mxu0
  %v1400 = vadd.f32 0.0, %v1399
  %1401 = vmatmul.bf16.gmra.mxu0 %v988
  %v1402 = vpop.f32.mrf.mxu0
  %v1403 = vadd.f32 0.0, %v1402
  %v1404 = vpop.f32.mrf.mxu0
  %v1405 = vadd.f32 0.0, %v1404
  %1406 = vmatmul.bf16.gmra.mxu0 %v991
  %v1407 = vpop.f32.mrf.mxu0
  %v1408 = vadd.f32 0.0, %v1407
  %v1409 = vpop.f32.mrf.mxu0
  %v1410 = vadd.f32 0.0, %v1409
  %1411 = vmatmul.bf16.gmra.mxu0 %v994
  %v1412 = vpop.f32.mrf.mxu0
  %v1413 = vadd.f32 0.0, %v1412
  %v1414 = vpop.f32.mrf.mxu0
  %v1415 = vadd.f32 0.0, %v1414
  %1416 = vmatmul.bf16.gmra.mxu0 %v997
  %v1417 = vpop.f32.mrf.mxu0
  %v1418 = vadd.f32 0.0, %v1417
  %v1419 = vpop.f32.mrf.mxu0
  %v1420 = vadd.f32 0.0, %v1419
  %1421 = vmatmul.bf16.gmra.mxu0 %v1000
  %v1422 = vpop.f32.mrf.mxu0
  %v1423 = vadd.f32 0.0, %v1422
  %v1424 = vpop.f32.mrf.mxu0
  %v1425 = vadd.f32 0.0, %v1424
  %1426 = vmatmul.bf16.gmra.mxu0 %v1003
  %v1427 = vpop.f32.mrf.mxu0
  %v1428 = vadd.f32 0.0, %v1427
  %v1429 = vpop.f32.mrf.mxu0
  %v1430 = vadd.f32 0.0, %v1429
  %1431 = vmatmul.bf16.gmra.mxu0 %v1006
  %v1432 = vpop.f32.mrf.mxu0
  %v1433 = vadd.f32 0.0, %v1432
  %v1434 = vpop.f32.mrf.mxu0
  %v1435 = vadd.f32 0.0, %v1434
  %1436 = vmatmul.bf16.gmra.mxu0 %v1009
  %v1437 = vpop.f32.mrf.mxu0
  %v1438 = vadd.f32 0.0, %v1437
  %v1439 = vpop.f32.mrf.mxu0
  %v1440 = vadd.f32 0.0, %v1439
  %1441 = vmatmul.bf16.gmra.mxu0 %v1012
  %v1442 = vpop.f32.mrf.mxu0
  %v1443 = vadd.f32 0.0, %v1442
  %v1444 = vpop.f32.mrf.mxu0
  %v1445 = vadd.f32 0.0, %v1444
  %1446 = vmatmul.bf16.gmra.mxu0 %v1015
  %v1447 = vpop.f32.mrf.mxu0
  %v1448 = vadd.f32 0.0, %v1447
  %v1449 = vpop.f32.mrf.mxu0
  %v1450 = vadd.f32 0.0, %v1449
  %1451 = vmatmul.bf16.gmra.mxu0 %v1018
  %v1452 = vpop.f32.mrf.mxu0
  %v1453 = vadd.f32 0.0, %v1452
  %v1454 = vpop.f32.mrf.mxu0
  %v1455 = vadd.f32 0.0, %v1454
  %1456 = vmatmul.bf16.gmra.mxu0 %v1021
  %v1457 = vpop.f32.mrf.mxu0
  %v1458 = vadd.f32 0.0, %v1457
  %v1459 = vpop.f32.mrf.mxu0
  %v1460 = vadd.f32 0.0, %v1459
  %1461 = vmatmul.bf16.gmra.mxu0 %v1024
  %v1462 = vpop.f32.mrf.mxu0
  %v1463 = vadd.f32 0.0, %v1462
  %v1464 = vpop.f32.mrf.mxu0
  %v1465 = vadd.f32 0.0, %v1464
  %1466 = vmatmul.bf16.gmra.mxu0 %v1027
  %v1467 = vpop.f32.mrf.mxu0
  %v1468 = vadd.f32 0.0, %v1467
  %v1469 = vpop.f32.mrf.mxu0
  %v1470 = vadd.f32 0.0, %v1469
  %1471 = vmatmul.bf16.gmra.mxu0 %v1030
  %v1472 = vpop.f32.mrf.mxu0
  %v1473 = vadd.f32 0.0, %v1472
  %v1474 = vpop.f32.mrf.mxu0
  %v1475 = vadd.f32 0.0, %v1474
  %1476 = vmatmul.bf16.gmra.mxu0 %v1033
  %v1477 = vpop.f32.mrf.mxu0
  %v1478 = vadd.f32 0.0, %v1477
  %v1479 = vpop.f32.mrf.mxu0
  %v1480 = vadd.f32 0.0, %v1479
  %1481 = vmatmul.bf16.gmra.mxu0 %v1036
  %v1482 = vpop.f32.mrf.mxu0
  %v1483 = vadd.f32 0.0, %v1482
  %v1484 = vpop.f32.mrf.mxu0
  %v1485 = vadd.f32 0.0, %v1484
  %1486 = vmatmul.bf16.gmra.mxu0 %v1039
  %v1487 = vpop.f32.mrf.mxu0
  %v1488 = vadd.f32 0.0, %v1487
  %v1489 = vpop.f32.mrf.mxu0
  %v1490 = vadd.f32 0.0, %v1489
  %1491 = vmatmul.bf16.gmra.mxu0 %v1042
  %v1492 = vpop.f32.mrf.mxu0
  %v1493 = vadd.f32 0.0, %v1492
  %v1494 = vpop.f32.mrf.mxu0
  %v1495 = vadd.f32 0.0, %v1494
  %1496 = vmatmul.bf16.gmra.mxu0 %v1045
  %v1497 = vpop.f32.mrf.mxu0
  %v1498 = vadd.f32 0.0, %v1497
  %v1499 = vpop.f32.mrf.mxu0
  %v1500 = vadd.f32 0.0, %v1499
  %1501 = vmatmul.bf16.gmra.mxu0 %v1048
  %v1502 = vpop.f32.mrf.mxu0
  %v1503 = vadd.f32 0.0, %v1502
  %v1504 = vpop.f32.mrf.mxu0
  %v1505 = vadd.f32 0.0, %v1504
  %1506 = vmatmul.bf16.gmra.mxu0 %v1051
  %v1507 = vpop.f32.mrf.mxu0
  %v1508 = vadd.f32 0.0, %v1507
  %v1509 = vpop.f32.mrf.mxu0
  %v1510 = vadd.f32 0.0, %v1509
  %1511 = vmatmul.bf16.gmra.mxu0 %v1054
  %v1512 = vpop.f32.mrf.mxu0
  %v1513 = vadd.f32 0.0, %v1512
  %v1514 = vpop.f32.mrf.mxu0
  %v1515 = vadd.f32 0.0, %v1514
  %1516 = vmatmul.bf16.gmra.mxu0 %v1057
  %v1517 = vpop.f32.mrf.mxu0
  %v1518 = vadd.f32 0.0, %v1517
  %v1519 = vpop.f32.mrf.mxu0
  %v1520 = vadd.f32 0.0, %v1519
  %1521 = vmatmul.bf16.gmra.mxu0 %v1060
  %v1522 = vpop.f32.mrf.mxu0
  %v1523 = vadd.f32 0.0, %v1522
  %v1524 = vpop.f32.mrf.mxu0
  %v1525 = vadd.f32 0.0, %v1524
  %1526 = vmatmul.bf16.gmra.mxu0 %v1063
  %v1527 = vpop.f32.mrf.mxu0
  %v1528 = vadd.f32 0.0, %v1527
  %v1529 = vpop.f32.mrf.mxu0
  %v1530 = vadd.f32 0.0, %v1529
  %1531 = vmatmul.bf16.gmra.mxu0 %v1066
  %v1532 = vpop.f32.mrf.mxu0
  %v1533 = vadd.f32 0.0, %v1532
  %v1534 = vpop.f32.mrf.mxu0
  %v1535 = vadd.f32 0.0, %v1534
  %1536 = vmatmul.bf16.gmra.mxu0 %v1069
  %v1537 = vpop.f32.mrf.mxu0
  %v1538 = vadd.f32 0.0, %v1537
  %v1539 = vpop.f32.mrf.mxu0
  %v1540 = vadd.f32 0.0, %v1539
  %1541 = vmatmul.bf16.gmra.mxu0 %v1072
  %v1542 = vpop.f32.mrf.mxu0
  %v1543 = vadd.f32 0.0, %v1542
  %v1544 = vpop.f32.mrf.mxu0
  %v1545 = vadd.f32 0.0, %v1544
  %1546 = vmatmul.bf16.gmra.mxu0 %v1075
  %v1547 = vpop.f32.mrf.mxu0
  %v1548 = vadd.f32 0.0, %v1547
  %v1549 = vpop.f32.mrf.mxu0
  %v1550 = vadd.f32 0.0, %v1549
  %1551 = vmatmul.bf16.gmra.mxu0 %v1078
  %v1552 = vpop.f32.mrf.mxu0
  %v1553 = vadd.f32 0.0, %v1552
  %v1554 = vpop.f32.mrf.mxu0
  %v1555 = vadd.f32 0.0, %v1554
  %1556 = vmatmul.bf16.gmra.mxu0 %v1081
  %v1557 = vpop.f32.mrf.mxu0
  %v1558 = vadd.f32 0.0, %v1557
  %v1559 = vpop.f32.mrf.mxu0
  %v1560 = vadd.f32 0.0, %v1559
  %1561 = vmatmul.bf16.gmra.mxu0 %v1084
  %v1562 = vpop.f32.mrf.mxu0
  %v1563 = vadd.f32 0.0, %v1562
  %v1564 = vpop.f32.mrf.mxu0
  %v1565 = vadd.f32 0.0, %v1564
  %1566 = vmatmul.bf16.gmra.mxu0 %v1087
  %v1567 = vpop.f32.mrf.mxu0
  %v1568 = vadd.f32 0.0, %v1567
  %v1569 = vpop.f32.mrf.mxu0
  %v1570 = vadd.f32 0.0, %v1569
  %1571 = vmatmul.bf16.gmra.mxu0 %v1090
  %v1572 = vpop.f32.mrf.mxu0
  %v1573 = vadd.f32 0.0, %v1572
  %v1574 = vpop.f32.mrf.mxu0
  %v1575 = vadd.f32 0.0, %v1574
  %1576 = vmatmul.bf16.gmra.mxu0 %v1093
  %v1577 = vpop.f32.mrf.mxu0
  %v1578 = vadd.f32 0.0, %v1577
  %v1579 = vpop.f32.mrf.mxu0
  %v1580 = vadd.f32 0.0, %v1579
  %1581 = vmatmul.bf16.gmra.mxu0 %v1096
  %v1582 = vpop.f32.mrf.mxu0
  %v1583 = vadd.f32 0.0, %v1582
  %v1584 = vpop.f32.mrf.mxu0
  %v1585 = vadd.f32 0.0, %v1584
  %1586 = vmatmul.bf16.gmra.mxu0 %v1099
  %v1587 = vpop.f32.mrf.mxu0
  %v1588 = vadd.f32 0.0, %v1587
  %v1589 = vpop.f32.mrf.mxu0
  %v1590 = vadd.f32 0.0, %v1589
  %1591 = vmatmul.bf16.gmra.mxu0 %v1102
  %v1592 = vpop.f32.mrf.mxu0
  %v1593 = vadd.f32 0.0, %v1592
  %v1594 = vpop.f32.mrf.mxu0
  %v1595 = vadd.f32 0.0, %v1594
  %1596 = vmatmul.bf16.gmra.mxu0 %v1105
  %v1597 = vpop.f32.mrf.mxu0
  %v1598 = vadd.f32 0.0, %v1597
  %v1599 = vpop.f32.mrf.mxu0
  %v1600 = vadd.f32 0.0, %v1599
  %1601 = vmatmul.bf16.gmra.mxu0 %v1108
  %v1602 = vpop.f32.mrf.mxu0
  %v1603 = vadd.f32 0.0, %v1602
  %v1604 = vpop.f32.mrf.mxu0
  %v1605 = vadd.f32 0.0, %v1604
  %1606 = vmatmul.bf16.gmra.mxu0 %v1111
  %v1607 = vpop.f32.mrf.mxu0
  %v1608 = vadd.f32 0.0, %v1607
  %v1609 = vpop.f32.mrf.mxu0
  %v1610 = vadd.f32 0.0, %v1609
  %1611 = vmatmul.bf16.gmra.mxu0 %v1114
  %v1612 = vpop.f32.mrf.mxu0
  %v1613 = vadd.f32 0.0, %v1612
  %v1614 = vpop.f32.mrf.mxu0
  %v1615 = vadd.f32 0.0, %v1614
  %1616 = vmatmul.bf16.gmra.mxu0 %v1117
  %v1617 = vpop.f32.mrf.mxu0
  %v1618 = vadd.f32 0.0, %v1617
  %v1619 = vpop.f32.mrf.mxu0
  %v1620 = vadd.f32 0.0, %v1619
  %1621 = vmatmul.bf16.gmra.mxu0 %v1120
  %v1622 = vpop.f32.mrf.mxu0
  %v1623 = vadd.f32 0.0, %v1622
  %v1624 = vpop.f32.mrf.mxu0
  %v1625 = vadd.f32 0.0, %v1624
  %1626 = vmatmul.bf16.gmra.mxu0 %v1123
  %v1627 = vpop.f32.mrf.mxu0
  %v1628 = vadd.f32 0.0, %v1627
  %v1629 = vpop.f32.mrf.mxu0
  %v1630 = vadd.f32 0.0, %v1629
  %1631 = vmatmul.bf16.gmra.mxu0 %v1126
  %v1632 = vpop.f32.mrf.mxu0
  %v1633 = vadd.f32 0.0, %v1632
  %v1634 = vpop.f32.mrf.mxu0
  %v1635 = vadd.f32 0.0, %v1634
  %1636 = vmatmul.bf16.gmra.mxu0 %v1129
  %v1637 = vpop.f32.mrf.mxu0
  %v1638 = vadd.f32 0.0, %v1637
  %v1639 = vpop.f32.mrf.mxu0
  %v1640 = vadd.f32 0.0, %v1639
  %1641 = vmatmul.bf16.gmra.mxu0 %v1132
  %v1642 = vpop.f32.mrf.mxu0
  %v1643 = vadd.f32 0.0, %v1642
  %v1644 = vpop.f32.mrf.mxu0
  %v1645 = vadd.f32 0.0, %v1644
  %1646 = vmatmul.bf16.gmra.mxu0 %v1135
  %v1647 = vpop.f32.mrf.mxu0
  %v1648 = vadd.f32 0.0, %v1647
  %v1649 = vpop.f32.mrf.mxu0
  %v1650 = vadd.f32 0.0, %v1649
  %1651 = vmatmul.bf16.gmra.mxu0 %v1138
  %v1652 = vpop.f32.mrf.mxu0
  %v1653 = vadd.f32 0.0, %v1652
  %v1654 = vpop.f32.mrf.mxu0
  %v1655 = vadd.f32 0.0, %v1654
  %1656 = vmatmul.bf16.gmra.mxu0 %v1141
  %v1657 = vpop.f32.mrf.mxu0
  %v1658 = vadd.f32 0.0, %v1657
  %v1659 = vpop.f32.mrf.mxu0
  %v1660 = vadd.f32 0.0, %v1659
  %1661 = vmatmul.bf16.gmra.mxu0 %v1144
  %v1662 = vpop.f32.mrf.mxu0
  %v1663 = vadd.f32 0.0, %v1662
  %v1664 = vpop.f32.mrf.mxu0
  %v1665 = vadd.f32 0.0, %v1664
  %1666 = vmatmul.bf16.gmra.mxu0 %v1147
  %v1667 = vpop.f32.mrf.mxu0
  %v1668 = vadd.f32 0.0, %v1667
  %v1669 = vpop.f32.mrf.mxu0
  %v1670 = vadd.f32 0.0, %v1669
  %1671 = vmatmul.bf16.gmra.mxu0 %v1150
  %v1672 = vpop.f32.mrf.mxu0
  %v1673 = vadd.f32 0.0, %v1672
  %v1674 = vpop.f32.mrf.mxu0
  %v1675 = vadd.f32 0.0, %v1674
  %1676 = vmatmul.bf16.gmra.mxu0 %v1153
  %v1677 = vpop.f32.mrf.mxu0
  %v1678 = vadd.f32 0.0, %v1677
  %v1679 = vpop.f32.mrf.mxu0
  %v1680 = vadd.f32 0.0, %v1679
  %1681 = vmatmul.bf16.gmra.mxu0 %v1156
  %v1682 = vpop.f32.mrf.mxu0
  %v1683 = vadd.f32 0.0, %v1682
  %v1684 = vpop.f32.mrf.mxu0
  %v1685 = vadd.f32 0.0, %v1684
  %1686 = vmatmul.bf16.gmra.mxu0 %v1159
  %v1687 = vpop.f32.mrf.mxu0
  %v1688 = vadd.f32 0.0, %v1687
  %v1689 = vpop.f32.mrf.mxu0
  %v1690 = vadd.f32 0.0, %v1689
  %1691 = vmatmul.bf16.gmra.mxu0 %v1162
  %v1692 = vpop.f32.mrf.mxu0
  %v1693 = vadd.f32 0.0, %v1692
  %v1694 = vpop.f32.mrf.mxu0
  %v1695 = vadd.f32 0.0, %v1694
  %1696 = vmatmul.bf16.gmra.mxu0 %v1165
  %v1697 = vpop.f32.mrf.mxu0
  %v1698 = vadd.f32 0.0, %v1697
  %v1699 = vpop.f32.mrf.mxu0
  %v1700 = vadd.f32 0.0, %v1699
  %1701 = vmatmul.bf16.gmra.mxu0 %v1168
  %v1702 = vpop.f32.mrf.mxu0
  %v1703 = vadd.f32 0.0, %v1702
  %v1704 = vpop.f32.mrf.mxu0
  %v1705 = vadd.f32 0.0, %v1704
  %1706 = vmatmul.bf16.gmra.mxu0 %v1171
  %v1707 = vpop.f32.mrf.mxu0
  %v1708 = vadd.f32 0.0, %v1707
  %v1709 = vpop.f32.mrf.mxu0
  %v1710 = vadd.f32 0.0, %v1709
  %1711 = vmatmul.bf16.gmra.mxu0 %v1174
  %v1712 = vpop.f32.mrf.mxu0
  %v1713 = vadd.f32 0.0, %v1712
  %v1714 = vpop.f32.mrf.mxu0
  %v1715 = vadd.f32 0.0, %v1714
  %1716 = vmatmul.bf16.gmra.mxu0 %v1177
  %v1717 = vpop.f32.mrf.mxu0
  %v1718 = vadd.f32 0.0, %v1717
  %v1719 = vpop.f32.mrf.mxu0
  %v1720 = vadd.f32 0.0, %v1719
  %1721 = vmatmul.bf16.gmra.mxu0 %v1180
  %v1722 = vpop.f32.mrf.mxu0
  %v1723 = vadd.f32 0.0, %v1722
  %v1724 = vpop.f32.mrf.mxu0
  %v1725 = vadd.f32 0.0, %v1724
  %1726 = vmatmul.bf16.gmra.mxu0 %v1183
  %v1727 = vpop.f32.mrf.mxu0
  %v1728 = vadd.f32 0.0, %v1727
  %v1729 = vpop.f32.mrf.mxu0
  %v1730 = vadd.f32 0.0, %v1729
  %1731 = vmatmul.bf16.gmra.mxu0 %v1186
  %v1732 = vpop.f32.mrf.mxu0
  %v1733 = vadd.f32 0.0, %v1732
  %v1734 = vpop.f32.mrf.mxu0
  %v1735 = vadd.f32 0.0, %v1734
  %1736 = vmatmul.bf16.gmra.mxu0 %v1189
  %v1737 = vpop.f32.mrf.mxu0
  %v1738 = vadd.f32 0.0, %v1737
  %v1739 = vpop.f32.mrf.mxu0
  %v1740 = vadd.f32 0.0, %v1739
  %1741 = vmatmul.bf16.gmra.mxu0 %v1192
  %v1742 = vpop.f32.mrf.mxu0
  %v1743 = vadd.f32 0.0, %v1742
  %v1744 = vpop.f32.mrf.mxu0
  %v1745 = vadd.f32 0.0, %v1744
  %1746 = vmatmul.bf16.gmra.mxu0 %v1195
  %v1747 = vpop.f32.mrf.mxu0
  %v1748 = vadd.f32 0.0, %v1747
  %v1749 = vpop.f32.mrf.mxu0
  %v1750 = vadd.f32 0.0, %v1749
  %1751 = vmatmul.bf16.gmra.mxu0 %v1198
  %v1752 = vpop.f32.mrf.mxu0
  %v1753 = vadd.f32 0.0, %v1752
  %v1754 = vpop.f32.mrf.mxu0
  %v1755 = vadd.f32 0.0, %v1754
  %1756 = vmatmul.bf16.gmra.mxu0 %v1201
  %v1757 = vpop.f32.mrf.mxu0
  %v1758 = vadd.f32 0.0, %v1757
  %v1759 = vpop.f32.mrf.mxu0
  %v1760 = vadd.f32 0.0, %v1759
  %1761 = vmatmul.bf16.gmra.mxu0 %v1204
  %v1762 = vpop.f32.mrf.mxu0
  %v1763 = vadd.f32 0.0, %v1762
  %v1764 = vpop.f32.mrf.mxu0
  %v1765 = vadd.f32 0.0, %v1764
  %1766 = vmatmul.bf16.gmra.mxu0 %v1207
  %v1767 = vpop.f32.mrf.mxu0
  %v1768 = vadd.f32 0.0, %v1767
  %v1769 = vpop.f32.mrf.mxu0
  %v1770 = vadd.f32 0.0, %v1769
  %1771 = vmatmul.bf16.gmra.mxu0 %v1210
  %v1772 = vpop.f32.mrf.mxu0
  %v1773 = vadd.f32 0.0, %v1772
  %v1774 = vpop.f32.mrf.mxu0
  %v1775 = vadd.f32 0.0, %v1774
  %1776 = vmatmul.bf16.gmra.mxu0 %v1213
  %v1777 = vpop.f32.mrf.mxu0
  %v1778 = vadd.f32 0.0, %v1777
  %v1779 = vpop.f32.mrf.mxu0
  %v1780 = vadd.f32 0.0, %v1779
  %1781 = vmatmul.bf16.gmra.mxu0 %v1216
  %v1782 = vpop.f32.mrf.mxu0
  %v1783 = vadd.f32 0.0, %v1782
  %v1784 = vpop.f32.mrf.mxu0
  %v1785 = vadd.f32 0.0, %v1784
  %1786 = vmatmul.bf16.gmra.mxu0 %v1219
  %v1787 = vpop.f32.mrf.mxu0
  %v1788 = vadd.f32 0.0, %v1787
  %v1789 = vpop.f32.mrf.mxu0
  %v1790 = vadd.f32 0.0, %v1789
  %1791 = vmatmul.bf16.gmra.mxu0 %v1222
  %v1792 = vpop.f32.mrf.mxu0
  %v1793 = vadd.f32 0.0, %v1792
  %v1794 = vpop.f32.mrf.mxu0
  %v1795 = vadd.f32 0.0, %v1794
  %1796 = vmatmul.bf16.gmra.mxu0 %v1225
  %v1797 = vpop.f32.mrf.mxu0
  %v1798 = vadd.f32 0.0, %v1797
  %v1799 = vpop.f32.mrf.mxu0
  %v1800 = vadd.f32 0.0, %v1799
  %1801 = vmatmul.bf16.gmra.mxu0 %v1228
  %v1802 = vpop.f32.mrf.mxu0
  %v1803 = vadd.f32 0.0, %v1802
  %v1804 = vpop.f32.mrf.mxu0
  %v1805 = vadd.f32 0.0, %v1804
  %1806 = vmatmul.bf16.gmra.mxu0 %v1231
  %v1807 = vpop.f32.mrf.mxu0
  %v1808 = vadd.f32 0.0, %v1807
  %v1809 = vpop.f32.mrf.mxu0
  %v1810 = vadd.f32 0.0, %v1809
  %1811 = vmatmul.bf16.gmra.mxu0 %v1234
  %v1812 = vpop.f32.mrf.mxu0
  %v1813 = vadd.f32 0.0, %v1812
  %v1814 = vpop.f32.mrf.mxu0
  %v1815 = vadd.f32 0.0, %v1814
  %1816 = vmatmul.bf16.gmra.mxu0 %v1237
  %v1817 = vpop.f32.mrf.mxu0
  %v1818 = vadd.f32 0.0, %v1817
  %v1819 = vpop.f32.mrf.mxu0
  %v1820 = vadd.f32 0.0, %v1819
  %1821 = vmatmul.bf16.gmra.mxu0 %v1240
  %v1822 = vpop.f32.mrf.mxu0
  %v1823 = vadd.f32 0.0, %v1822
  %v1824 = vpop.f32.mrf.mxu0
  %v1825 = vadd.f32 0.0, %v1824
  %1826 = vmatmul.bf16.gmra.mxu0 %v1243
  %v1827 = vpop.f32.mrf.mxu0
  %v1828 = vadd.f32 0.0, %v1827
  %v1829 = vpop.f32.mrf.mxu0
  %v1830 = vadd.f32 0.0, %v1829
  %1831 = vmatmul.bf16.gmra.mxu0 %v1246
  %v1832 = vpop.f32.mrf.mxu0
  %v1833 = vadd.f32 0.0, %v1832
  %v1834 = vpop.f32.mrf.mxu0
  %v1835 = vadd.f32 0.0, %v1834
  %1836 = vmatmul.bf16.gmra.mxu0 %v1249
  %v1837 = vpop.f32.mrf.mxu0
  %v1838 = vadd.f32 0.0, %v1837
  %v1839 = vpop.f32.mrf.mxu0
  %v1840 = vadd.f32 0.0, %v1839
  %1841 = vmatmul.bf16.gmra.mxu0 %v1252
  %v1842 = vpop.f32.mrf.mxu0
  %v1843 = vadd.f32 0.0, %v1842
  %v1844 = vpop.f32.mrf.mxu0
  %v1845 = vadd.f32 0.0, %v1844
  %1846 = vmatmul.bf16.gmra.mxu0 %v1255
  %v1847 = vpop.f32.mrf.mxu0
  %v1848 = vadd.f32 0.0, %v1847
  %v1849 = vpop.f32.mrf.mxu0
  %v1850 = vadd.f32 0.0, %v1849
  %1851 = vmatmul.bf16.gmra.mxu0 %v1258
  %v1852 = vpop.f32.mrf.mxu0
  %v1853 = vadd.f32 0.0, %v1852
  %v1854 = vpop.f32.mrf.mxu0
  %v1855 = vadd.f32 0.0, %v1854
  %1856 = vmatmul.bf16.gmra.mxu0 %v1261
  %v1857 = vpop.f32.mrf.mxu0
  %v1858 = vadd.f32 0.0, %v1857
  %v1859 = vpop.f32.mrf.mxu0
  %v1860 = vadd.f32 0.0, %v1859
  %1861 = vmatmul.bf16.gmra.mxu0 %v1264
  %v1862 = vpop.f32.mrf.mxu0
  %v1863 = vadd.f32 0.0, %v1862
  %v1864 = vpop.f32.mrf.mxu0
  %v1865 = vadd.f32 0.0, %v1864
  %1866 = vmatmul.bf16.gmra.mxu0 %v1267
  %v1867 = vpop.f32.mrf.mxu0
  %v1868 = vadd.f32 0.0, %v1867
  %v1869 = vpop.f32.mrf.mxu0
  %v1870 = vadd.f32 0.0, %v1869
  %1871 = vmatmul.bf16.gmra.mxu0 %v1270
  %v1872 = vpop.f32.mrf.mxu0
  %v1873 = vadd.f32 0.0, %v1872
  %v1874 = vpop.f32.mrf.mxu0
  %v1875 = vadd.f32 0.0, %v1874
  %1876 = vmatmul.bf16.gmra.mxu0 %v1273
  %v1877 = vpop.f32.mrf.mxu0
  %v1878 = vadd.f32 0.0, %v1877
  %v1879 = vpop.f32.mrf.mxu0
  %v1880 = vadd.f32 0.0, %v1879
  %1881 = vmatmul.bf16.gmra.mxu0 %v1276
  %v1882 = vpop.f32.mrf.mxu0
  %v1883 = vadd.f32 0.0, %v1882
  %v1884 = vpop.f32.mrf.mxu0
  %v1885 = vadd.f32 0.0, %v1884
  %1886 = vmatmul.bf16.gmra.mxu0 %v1279
  %v1887 = vpop.f32.mrf.mxu0
  %v1888 = vadd.f32 0.0, %v1887
  %v1889 = vpop.f32.mrf.mxu0
  %v1890 = vadd.f32 0.0, %v1889
  %1891 = vmatmul.bf16.gmra.mxu0 %v1282
  %v1892 = vpop.f32.mrf.mxu0
  %v1893 = vadd.f32 0.0, %v1892
  %v1894 = vpop.f32.mrf.mxu0
  %v1895 = vadd.f32 0.0, %v1894
  %1896 = vmatmul.bf16.gmra.mxu0 %v1285
  %v1897 = vpop.f32.mrf.mxu0
  %v1898 = vadd.f32 0.0, %v1897
  %v1899 = vpop.f32.mrf.mxu0
  %v1900 = vadd.f32 0.0, %v1899
  %1901 = vmatmul.bf16.gmra.mxu0 %v1288
  %v1902 = vpop.f32.mrf.mxu0
  %v1903 = vadd.f32 0.0, %v1902
  %v1904 = vpop.f32.mrf.mxu0
  %v1905 = vadd.f32 0.0, %v1904
  %1906 = vmatmul.bf16.gmra.mxu0 %v1291
  %v1907 = vpop.f32.mrf.mxu0
  %v1908 = vadd.f32 0.0, %v1907
  %v1909 = vpop.f32.mrf.mxu0
  %v1910 = vadd.f32 0.0, %v1909
  %1911 = vmatmul.bf16.gmra.mxu0 %v1294
  %v1912 = vpop.f32.mrf.mxu0
  %v1913 = vadd.f32 0.0, %v1912
  %v1914 = vpop.f32.mrf.mxu0
  %v1915 = vadd.f32 0.0, %v1914
  %1916 = vmatmul.bf16.gmra.mxu0 %v1297
  %v1917 = vpop.f32.mrf.mxu0
  %v1918 = vadd.f32 0.0, %v1917
  %v1919 = vpop.f32.mrf.mxu0
  %v1920 = vadd.f32 0.0, %v1919
  %1921 = vmatmul.bf16.gmra.mxu0 %v1300
  %v1922 = vpop.f32.mrf.mxu0
  %v1923 = vadd.f32 0.0, %v1922
  %v1924 = vpop.f32.mrf.mxu0
  %v1925 = vadd.f32 0.0, %v1924
  %1926 = vmatmul.bf16.gmra.mxu0 %v1303
  %v1927 = vpop.f32.mrf.mxu0
  %v1928 = vadd.f32 0.0, %v1927
  %v1929 = vpop.f32.mrf.mxu0
  %v1930 = vadd.f32 0.0, %v1929
  %1931 = vmatmul.bf16.gmra.mxu0 %v1306
  %v1932 = vpop.f32.mrf.mxu0
  %v1933 = vadd.f32 0.0, %v1932
  %v1934 = vpop.f32.mrf.mxu0
  %v1935 = vadd.f32 0.0, %v1934
  %1936 = vmatmul.bf16.gmra.mxu0 %v1309
  %v1937 = vpop.f32.mrf.mxu0
  %v1938 = vadd.f32 0.0, %v1937
  %v1939 = vpop.f32.mrf.mxu0
  %v1940 = vadd.f32 0.0, %v1939
  %1941 = vmatmul.bf16.gmra.mxu0 %v1312
  %v1942 = vpop.f32.mrf.mxu0
  %v1943 = vadd.f32 0.0, %v1942
  %v1944 = vpop.f32.mrf.mxu0
  %v1945 = vadd.f32 0.0, %v1944
  %1946 = vmatmul.bf16.gmra.mxu0 %v1315
  %v1947 = vpop.f32.mrf.mxu0
  %v1948 = vadd.f32 0.0, %v1947
  %v1949 = vpop.f32.mrf.mxu0
  %v1950 = vadd.f32 0.0, %v1949
  %1951 = vmatmul.bf16.gmra.mxu0 %v1318
  %v1952 = vpop.f32.mrf.mxu0
  %v1953 = vadd.f32 0.0, %v1952
  %v1954 = vpop.f32.mrf.mxu0
  %v1955 = vadd.f32 0.0, %v1954
  %1956 = vmatmul.bf16.gmra.mxu0 %v1321
  %v1957 = vpop.f32.mrf.mxu0
  %v1958 = vadd.f32 0.0, %v1957
  %v1959 = vpop.f32.mrf.mxu0
  %v1960 = vadd.f32 0.0, %v1959
  %1961 = vmatmul.bf16.gmra.mxu0 %v1324
  %v1962 = vpop.f32.mrf.mxu0
  %v1963 = vadd.f32 0.0, %v1962
  %v1964 = vpop.f32.mrf.mxu0
  %v1965 = vadd.f32 0.0, %v1964
  %1966 = vmatmul.bf16.gmra.mxu0 %v1327
  %v1967 = vpop.f32.mrf.mxu0
  %v1968 = vadd.f32 0.0, %v1967
  %v1969 = vpop.f32.mrf.mxu0
  %v1970 = vadd.f32 0.0, %v1969
  %1971 = vmatmul.bf16.gmra.mxu0 %v1330
  %v1972 = vpop.f32.mrf.mxu0
  %v1973 = vadd.f32 0.0, %v1972
  %v1974 = vpop.f32.mrf.mxu0
  %v1975 = vadd.f32 0.0, %v1974
  %1976 = vmatmul.bf16.gmra.mxu0 %v1333
  %v1977 = vpop.f32.mrf.mxu0
  %v1978 = vadd.f32 0.0, %v1977
  %v1979 = vpop.f32.mrf.mxu0
  %v1980 = vadd.f32 0.0, %v1979
  %1981 = vmatmul.bf16.gmra.mxu0 %v1336
  %v1982 = vpop.f32.mrf.mxu0
  %v1983 = vadd.f32 0.0, %v1982
  %v1984 = vpop.f32.mrf.mxu0
  %v1985 = vadd.f32 0.0, %v1984
  %1986 = vdwg.mxu0
  %vm1987 = vcmp.ge.f32.partialorder %v1348, 0.0
  %vm1988 = vcmp.ge.f32.partialorder %v1350, 0.0
  %vm1989 = vcmp.ge.f32.partialorder %v1353, 0.0
  %vm1990 = vcmp.ge.f32.partialorder %v1355, 0.0
  %vm1991 = vcmp.ge.f32.partialorder %v1358, 0.0
  %vm1992 = vcmp.ge.f32.partialorder %v1360, 0.0
  %vm1993 = vcmp.ge.f32.partialorder %v1363, 0.0
  %vm1994 = vcmp.ge.f32.partialorder %v1365, 0.0
  %vm1995 = vcmp.ge.f32.partialorder %v1368, 0.0
  %vm1996 = vcmp.ge.f32.partialorder %v1370, 0.0
  %vm1997 = vcmp.ge.f32.partialorder %v1373, 0.0
  %vm1998 = vcmp.ge.f32.partialorder %v1375, 0.0
  %vm1999 = vcmp.ge.f32.partialorder %v1378, 0.0
  %vm2000 = vcmp.ge.f32.partialorder %v1380, 0.0
  %vm2001 = vcmp.ge.f32.partialorder %v1383, 0.0
  %vm2002 = vcmp.ge.f32.partialorder %v1385, 0.0
  %vm2003 = vcmp.ge.f32.partialorder %v1388, 0.0
  %vm2004 = vcmp.ge.f32.partialorder %v1390, 0.0
  %vm2005 = vcmp.ge.f32.partialorder %v1393, 0.0
  %vm2006 = vcmp.ge.f32.partialorder %v1395, 0.0
  %vm2007 = vcmp.ge.f32.partialorder %v1398, 0.0
  %vm2008 = vcmp.ge.f32.partialorder %v1400, 0.0
  %vm2009 = vcmp.ge.f32.partialorder %v1403, 0.0
  %vm2010 = vcmp.ge.f32.partialorder %v1405, 0.0
  %vm2011 = vcmp.ge.f32.partialorder %v1408, 0.0
  %vm2012 = vcmp.ge.f32.partialorder %v1410, 0.0
  %vm2013 = vcmp.ge.f32.partialorder %v1413, 0.0
  %vm2014 = vcmp.ge.f32.partialorder %v1415, 0.0
  %vm2015 = vcmp.ge.f32.partialorder %v1418, 0.0
  %vm2016 = vcmp.ge.f32.partialorder %v1420, 0.0
  %vm2017 = vcmp.ge.f32.partialorder %v1423, 0.0
  %vm2018 = vcmp.ge.f32.partialorder %v1425, 0.0
  %vm2019 = vcmp.ge.f32.partialorder %v1428, 0.0
  %vm2020 = vcmp.ge.f32.partialorder %v1430, 0.0
  %vm2021 = vcmp.ge.f32.partialorder %v1433, 0.0
  %vm2022 = vcmp.ge.f32.partialorder %v1435, 0.0
  %vm2023 = vcmp.ge.f32.partialorder %v1438, 0.0
  %vm2024 = vcmp.ge.f32.partialorder %v1440, 0.0
  %vm2025 = vcmp.ge.f32.partialorder %v1443, 0.0
  %vm2026 = vcmp.ge.f32.partialorder %v1445, 0.0
  %vm2027 = vcmp.ge.f32.partialorder %v1448, 0.0
  %vm2028 = vcmp.ge.f32.partialorder %v1450, 0.0
  %vm2029 = vcmp.ge.f32.partialorder %v1453, 0.0
  %vm2030 = vcmp.ge.f32.partialorder %v1455, 0.0
  %vm2031 = vcmp.ge.f32.partialorder %v1458, 0.0
  %vm2032 = vcmp.ge.f32.partialorder %v1460, 0.0
  %vm2033 = vcmp.ge.f32.partialorder %v1463, 0.0
  %vm2034 = vcmp.ge.f32.partialorder %v1465, 0.0
  %vm2035 = vcmp.ge.f32.partialorder %v1468, 0.0
  %vm2036 = vcmp.ge.f32.partialorder %v1470, 0.0
  %vm2037 = vcmp.ge.f32.partialorder %v1473, 0.0
  %vm2038 = vcmp.ge.f32.partialorder %v1475, 0.0
  %vm2039 = vcmp.ge.f32.partialorder %v1478, 0.0
  %vm2040 = vcmp.ge.f32.partialorder %v1480, 0.0
  %vm2041 = vcmp.ge.f32.partialorder %v1483, 0.0
  %vm2042 = vcmp.ge.f32.partialorder %v1485, 0.0
  %vm2043 = vcmp.ge.f32.partialorder %v1488, 0.0
  %vm2044 = vcmp.ge.f32.partialorder %v1490, 0.0
  %vm2045 = vcmp.ge.f32.partialorder %v1493, 0.0
  %vm2046 = vcmp.ge.f32.partialorder %v1495, 0.0
  %vm2047 = vcmp.ge.f32.partialorder %v1498, 0.0
  %vm2048 = vcmp.ge.f32.partialorder %v1500, 0.0
  %vm2049 = vcmp.ge.f32.partialorder %v1503, 0.0
  %vm2050 = vcmp.ge.f32.partialorder %v1505, 0.0
  %vm2051 = vcmp.ge.f32.partialorder %v1508, 0.0
  %vm2052 = vcmp.ge.f32.partialorder %v1510, 0.0
  %vm2053 = vcmp.ge.f32.partialorder %v1513, 0.0
  %vm2054 = vcmp.ge.f32.partialorder %v1515, 0.0
  %vm2055 = vcmp.ge.f32.partialorder %v1518, 0.0
  %vm2056 = vcmp.ge.f32.partialorder %v1520, 0.0
  %vm2057 = vcmp.ge.f32.partialorder %v1523, 0.0
  %vm2058 = vcmp.ge.f32.partialorder %v1525, 0.0
  %vm2059 = vcmp.ge.f32.partialorder %v1528, 0.0
  %vm2060 = vcmp.ge.f32.partialorder %v1530, 0.0
  %vm2061 = vcmp.ge.f32.partialorder %v1533, 0.0
  %vm2062 = vcmp.ge.f32.partialorder %v1535, 0.0
  %vm2063 = vcmp.ge.f32.partialorder %v1538, 0.0
  %vm2064 = vcmp.ge.f32.partialorder %v1540, 0.0
  %vm2065 = vcmp.ge.f32.partialorder %v1543, 0.0
  %vm2066 = vcmp.ge.f32.partialorder %v1545, 0.0
  %vm2067 = vcmp.ge.f32.partialorder %v1548, 0.0
  %vm2068 = vcmp.ge.f32.partialorder %v1550, 0.0
  %vm2069 = vcmp.ge.f32.partialorder %v1553, 0.0
  %vm2070 = vcmp.ge.f32.partialorder %v1555, 0.0
  %vm2071 = vcmp.ge.f32.partialorder %v1558, 0.0
  %vm2072 = vcmp.ge.f32.partialorder %v1560, 0.0
  %vm2073 = vcmp.ge.f32.partialorder %v1563, 0.0
  %vm2074 = vcmp.ge.f32.partialorder %v1565, 0.0
  %vm2075 = vcmp.ge.f32.partialorder %v1568, 0.0
  %vm2076 = vcmp.ge.f32.partialorder %v1570, 0.0
  %vm2077 = vcmp.ge.f32.partialorder %v1573, 0.0
  %vm2078 = vcmp.ge.f32.partialorder %v1575, 0.0
  %vm2079 = vcmp.ge.f32.partialorder %v1578, 0.0
  %vm2080 = vcmp.ge.f32.partialorder %v1580, 0.0
  %vm2081 = vcmp.ge.f32.partialorder %v1583, 0.0
  %vm2082 = vcmp.ge.f32.partialorder %v1585, 0.0
  %vm2083 = vcmp.ge.f32.partialorder %v1588, 0.0
  %vm2084 = vcmp.ge.f32.partialorder %v1590, 0.0
  %vm2085 = vcmp.ge.f32.partialorder %v1593, 0.0
  %vm2086 = vcmp.ge.f32.partialorder %v1595, 0.0
  %vm2087 = vcmp.ge.f32.partialorder %v1598, 0.0
  %vm2088 = vcmp.ge.f32.partialorder %v1600, 0.0
  %vm2089 = vcmp.ge.f32.partialorder %v1603, 0.0
  %vm2090 = vcmp.ge.f32.partialorder %v1605, 0.0
  %vm2091 = vcmp.ge.f32.partialorder %v1608, 0.0
  %vm2092 = vcmp.ge.f32.partialorder %v1610, 0.0
  %vm2093 = vcmp.ge.f32.partialorder %v1613, 0.0
  %vm2094 = vcmp.ge.f32.partialorder %v1615, 0.0
  %vm2095 = vcmp.ge.f32.partialorder %v1618, 0.0
  %vm2096 = vcmp.ge.f32.partialorder %v1620, 0.0
  %vm2097 = vcmp.ge.f32.partialorder %v1623, 0.0
  %vm2098 = vcmp.ge.f32.partialorder %v1625, 0.0
  %vm2099 = vcmp.ge.f32.partialorder %v1628, 0.0
  %vm2100 = vcmp.ge.f32.partialorder %v1630, 0.0
  %vm2101 = vcmp.ge.f32.partialorder %v1633, 0.0
  %vm2102 = vcmp.ge.f32.partialorder %v1635, 0.0
  %vm2103 = vcmp.ge.f32.partialorder %v1638, 0.0
  %vm2104 = vcmp.ge.f32.partialorder %v1640, 0.0
  %vm2105 = vcmp.ge.f32.partialorder %v1643, 0.0
  %vm2106 = vcmp.ge.f32.partialorder %v1645, 0.0
  %vm2107 = vcmp.ge.f32.partialorder %v1648, 0.0
  %vm2108 = vcmp.ge.f32.partialorder %v1650, 0.0
  %vm2109 = vcmp.ge.f32.partialorder %v1653, 0.0
  %vm2110 = vcmp.ge.f32.partialorder %v1655, 0.0
  %vm2111 = vcmp.ge.f32.partialorder %v1658, 0.0
  %vm2112 = vcmp.ge.f32.partialorder %v1660, 0.0
  %vm2113 = vcmp.ge.f32.partialorder %v1663, 0.0
  %vm2114 = vcmp.ge.f32.partialorder %v1665, 0.0
  %vm2115 = vcmp.ge.f32.partialorder %v1668, 0.0
  %vm2116 = vcmp.ge.f32.partialorder %v1670, 0.0
  %vm2117 = vcmp.ge.f32.partialorder %v1673, 0.0
  %vm2118 = vcmp.ge.f32.partialorder %v1675, 0.0
  %vm2119 = vcmp.ge.f32.partialorder %v1678, 0.0
  %vm2120 = vcmp.ge.f32.partialorder %v1680, 0.0
  %vm2121 = vcmp.ge.f32.partialorder %v1683, 0.0
  %vm2122 = vcmp.ge.f32.partialorder %v1685, 0.0
  %vm2123 = vcmp.ge.f32.partialorder %v1688, 0.0
  %vm2124 = vcmp.ge.f32.partialorder %v1690, 0.0
  %vm2125 = vcmp.ge.f32.partialorder %v1693, 0.0
  %vm2126 = vcmp.ge.f32.partialorder %v1695, 0.0
  %vm2127 = vcmp.ge.f32.partialorder %v1698, 0.0
  %vm2128 = vcmp.ge.f32.partialorder %v1700, 0.0
  %vm2129 = vcmp.ge.f32.partialorder %v1703, 0.0
  %vm2130 = vcmp.ge.f32.partialorder %v1705, 0.0
  %vm2131 = vcmp.ge.f32.partialorder %v1708, 0.0
  %vm2132 = vcmp.ge.f32.partialorder %v1710, 0.0
  %vm2133 = vcmp.ge.f32.partialorder %v1713, 0.0
  %vm2134 = vcmp.ge.f32.partialorder %v1715, 0.0
  %vm2135 = vcmp.ge.f32.partialorder %v1718, 0.0
  %vm2136 = vcmp.ge.f32.partialorder %v1720, 0.0
  %vm2137 = vcmp.ge.f32.partialorder %v1723, 0.0
  %vm2138 = vcmp.ge.f32.partialorder %v1725, 0.0
  %vm2139 = vcmp.ge.f32.partialorder %v1728, 0.0
  %vm2140 = vcmp.ge.f32.partialorder %v1730, 0.0
  %vm2141 = vcmp.ge.f32.partialorder %v1733, 0.0
  %vm2142 = vcmp.ge.f32.partialorder %v1735, 0.0
  %vm2143 = vcmp.ge.f32.partialorder %v1738, 0.0
  %vm2144 = vcmp.ge.f32.partialorder %v1740, 0.0
  %vm2145 = vcmp.ge.f32.partialorder %v1743, 0.0
  %vm2146 = vcmp.ge.f32.partialorder %v1745, 0.0
  %vm2147 = vcmp.ge.f32.partialorder %v1748, 0.0
  %vm2148 = vcmp.ge.f32.partialorder %v1750, 0.0
  %vm2149 = vcmp.ge.f32.partialorder %v1753, 0.0
  %vm2150 = vcmp.ge.f32.partialorder %v1755, 0.0
  %vm2151 = vcmp.ge.f32.partialorder %v1758, 0.0
  %vm2152 = vcmp.ge.f32.partialorder %v1760, 0.0
  %vm2153 = vcmp.ge.f32.partialorder %v1763, 0.0
  %vm2154 = vcmp.ge.f32.partialorder %v1765, 0.0
  %vm2155 = vcmp.ge.f32.partialorder %v1768, 0.0
  %vm2156 = vcmp.ge.f32.partialorder %v1770, 0.0
  %vm2157 = vcmp.ge.f32.partialorder %v1773, 0.0
  %vm2158 = vcmp.ge.f32.partialorder %v1775, 0.0
  %vm2159 = vcmp.ge.f32.partialorder %v1778, 0.0
  %vm2160 = vcmp.ge.f32.partialorder %v1780, 0.0
  %vm2161 = vcmp.ge.f32.partialorder %v1783, 0.0
  %vm2162 = vcmp.ge.f32.partialorder %v1785, 0.0
  %vm2163 = vcmp.ge.f32.partialorder %v1788, 0.0
  %vm2164 = vcmp.ge.f32.partialorder %v1790, 0.0
  %vm2165 = vcmp.ge.f32.partialorder %v1793, 0.0
  %vm2166 = vcmp.ge.f32.partialorder %v1795, 0.0
  %vm2167 = vcmp.ge.f32.partialorder %v1798, 0.0
  %vm2168 = vcmp.ge.f32.partialorder %v1800, 0.0
  %vm2169 = vcmp.ge.f32.partialorder %v1803, 0.0
  %vm2170 = vcmp.ge.f32.partialorder %v1805, 0.0
  %vm2171 = vcmp.ge.f32.partialorder %v1808, 0.0
  %vm2172 = vcmp.ge.f32.partialorder %v1810, 0.0
  %vm2173 = vcmp.ge.f32.partialorder %v1813, 0.0
  %vm2174 = vcmp.ge.f32.partialorder %v1815, 0.0
  %vm2175 = vcmp.ge.f32.partialorder %v1818, 0.0
  %vm2176 = vcmp.ge.f32.partialorder %v1820, 0.0
  %vm2177 = vcmp.ge.f32.partialorder %v1823, 0.0
  %vm2178 = vcmp.ge.f32.partialorder %v1825, 0.0
  %vm2179 = vcmp.ge.f32.partialorder %v1828, 0.0
  %vm2180 = vcmp.ge.f32.partialorder %v1830, 0.0
  %vm2181 = vcmp.ge.f32.partialorder %v1833, 0.0
  %vm2182 = vcmp.ge.f32.partialorder %v1835, 0.0
  %vm2183 = vcmp.ge.f32.partialorder %v1838, 0.0
  %vm2184 = vcmp.ge.f32.partialorder %v1840, 0.0
  %vm2185 = vcmp.ge.f32.partialorder %v1843, 0.0
  %vm2186 = vcmp.ge.f32.partialorder %v1845, 0.0
  %vm2187 = vcmp.ge.f32.partialorder %v1848, 0.0
  %vm2188 = vcmp.ge.f32.partialorder %v1850, 0.0
  %vm2189 = vcmp.ge.f32.partialorder %v1853, 0.0
  %vm2190 = vcmp.ge.f32.partialorder %v1855, 0.0
  %vm2191 = vcmp.ge.f32.partialorder %v1858, 0.0
  %vm2192 = vcmp.ge.f32.partialorder %v1860, 0.0
  %vm2193 = vcmp.ge.f32.partialorder %v1863, 0.0
  %vm2194 = vcmp.ge.f32.partialorder %v1865, 0.0
  %vm2195 = vcmp.ge.f32.partialorder %v1868, 0.0
  %vm2196 = vcmp.ge.f32.partialorder %v1870, 0.0
  %vm2197 = vcmp.ge.f32.partialorder %v1873, 0.0
  %vm2198 = vcmp.ge.f32.partialorder %v1875, 0.0
  %vm2199 = vcmp.ge.f32.partialorder %v1878, 0.0
  %vm2200 = vcmp.ge.f32.partialorder %v1880, 0.0
  %vm2201 = vcmp.ge.f32.partialorder %v1883, 0.0
  %vm2202 = vcmp.ge.f32.partialorder %v1885, 0.0
  %vm2203 = vcmp.ge.f32.partialorder %v1888, 0.0
  %vm2204 = vcmp.ge.f32.partialorder %v1890, 0.0
  %vm2205 = vcmp.ge.f32.partialorder %v1893, 0.0
  %vm2206 = vcmp.ge.f32.partialorder %v1895, 0.0
  %vm2207 = vcmp.ge.f32.partialorder %v1898, 0.0
  %vm2208 = vcmp.ge.f32.partialorder %v1900, 0.0
  %vm2209 = vcmp.ge.f32.partialorder %v1903, 0.0
  %vm2210 = vcmp.ge.f32.partialorder %v1905, 0.0
  %vm2211 = vcmp.ge.f32.partialorder %v1908, 0.0
  %vm2212 = vcmp.ge.f32.partialorder %v1910, 0.0
  %vm2213 = vcmp.ge.f32.partialorder %v1913, 0.0
  %vm2214 = vcmp.ge.f32.partialorder %v1915, 0.0
  %vm2215 = vcmp.ge.f32.partialorder %v1918, 0.0
  %vm2216 = vcmp.ge.f32.partialorder %v1920, 0.0
  %vm2217 = vcmp.ge.f32.partialorder %v1923, 0.0
  %vm2218 = vcmp.ge.f32.partialorder %v1925, 0.0
  %vm2219 = vcmp.ge.f32.partialorder %v1928, 0.0
  %vm2220 = vcmp.ge.f32.partialorder %v1930, 0.0
  %vm2221 = vcmp.ge.f32.partialorder %v1933, 0.0
  %vm2222 = vcmp.ge.f32.partialorder %v1935, 0.0
  %vm2223 = vcmp.ge.f32.partialorder %v1938, 0.0
  %vm2224 = vcmp.ge.f32.partialorder %v1940, 0.0
  %vm2225 = vcmp.ge.f32.partialorder %v1943, 0.0
  %vm2226 = vcmp.ge.f32.partialorder %v1945, 0.0
  %vm2227 = vcmp.ge.f32.partialorder %v1948, 0.0
  %vm2228 = vcmp.ge.f32.partialorder %v1950, 0.0
  %vm2229 = vcmp.ge.f32.partialorder %v1953, 0.0
  %vm2230 = vcmp.ge.f32.partialorder %v1955, 0.0
  %vm2231 = vcmp.ge.f32.partialorder %v1958, 0.0
  %vm2232 = vcmp.ge.f32.partialorder %v1960, 0.0
  %vm2233 = vcmp.ge.f32.partialorder %v1963, 0.0
  %vm2234 = vcmp.ge.f32.partialorder %v1965, 0.0
  %vm2235 = vcmp.ge.f32.partialorder %v1968, 0.0
  %vm2236 = vcmp.ge.f32.partialorder %v1970, 0.0
  %vm2237 = vcmp.ge.f32.partialorder %v1973, 0.0
  %vm2238 = vcmp.ge.f32.partialorder %v1975, 0.0
  %vm2239 = vcmp.ge.f32.partialorder %v1978, 0.0
  %vm2240 = vcmp.ge.f32.partialorder %v1980, 0.0
  %vm2241 = vcmp.ge.f32.partialorder %v1983, 0.0
  %vm2242 = vcmp.ge.f32.partialorder %v1985, 0.0
  %v2243 = vmul.f32 %v1348, 0.2
  %v2244 = vmul.f32 %v1350, 0.2
  %v2245 = vmul.f32 %v1353, 0.2
  %v2246 = vmul.f32 %v1355, 0.2
  %v2247 = vmul.f32 %v1358, 0.2
  %v2248 = vmul.f32 %v1360, 0.2
  %v2249 = vmul.f32 %v1363, 0.2
  %v2250 = vmul.f32 %v1365, 0.2
  %v2251 = vmul.f32 %v1368, 0.2
  %v2252 = vmul.f32 %v1370, 0.2
  %v2253 = vmul.f32 %v1373, 0.2
  %v2254 = vmul.f32 %v1375, 0.2
  %v2255 = vmul.f32 %v1378, 0.2
  %v2256 = vmul.f32 %v1380, 0.2
  %v2257 = vmul.f32 %v1383, 0.2
  %v2258 = vmul.f32 %v1385, 0.2
  %v2259 = vmul.f32 %v1388, 0.2
  %v2260 = vmul.f32 %v1390, 0.2
  %v2261 = vmul.f32 %v1393, 0.2
  %v2262 = vmul.f32 %v1395, 0.2
  %v2263 = vmul.f32 %v1398, 0.2
  %v2264 = vmul.f32 %v1400, 0.2
  %v2265 = vmul.f32 %v1403, 0.2
  %v2266 = vmul.f32 %v1405, 0.2
  %v2267 = vmul.f32 %v1408, 0.2
  %v2268 = vmul.f32 %v1410, 0.2
  %v2269 = vmul.f32 %v1413, 0.2
  %v2270 = vmul.f32 %v1415, 0.2
  %v2271 = vmul.f32 %v1418, 0.2
  %v2272 = vmul.f32 %v1420, 0.2
  %v2273 = vmul.f32 %v1423, 0.2
  %v2274 = vmul.f32 %v1425, 0.2
  %v2275 = vmul.f32 %v1428, 0.2
  %v2276 = vmul.f32 %v1430, 0.2
  %v2277 = vmul.f32 %v1433, 0.2
  %v2278 = vmul.f32 %v1435, 0.2
  %v2279 = vmul.f32 %v1438, 0.2
  %v2280 = vmul.f32 %v1440, 0.2
  %v2281 = vmul.f32 %v1443, 0.2
  %v2282 = vmul.f32 %v1445, 0.2
  %v2283 = vmul.f32 %v1448, 0.2
  %v2284 = vmul.f32 %v1450, 0.2
  %v2285 = vmul.f32 %v1453, 0.2
  %v2286 = vmul.f32 %v1455, 0.2
  %v2287 = vmul.f32 %v1458, 0.2
  %v2288 = vmul.f32 %v1460, 0.2
  %v2289 = vmul.f32 %v1463, 0.2
  %v2290 = vmul.f32 %v1465, 0.2
  %v2291 = vmul.f32 %v1468, 0.2
  %v2292 = vmul.f32 %v1470, 0.2
  %v2293 = vmul.f32 %v1473, 0.2
  %v2294 = vmul.f32 %v1475, 0.2
  %v2295 = vmul.f32 %v1478, 0.2
  %v2296 = vmul.f32 %v1480, 0.2
  %v2297 = vmul.f32 %v1483, 0.2
  %v2298 = vmul.f32 %v1485, 0.2
  %v2299 = vmul.f32 %v1488, 0.2
  %v2300 = vmul.f32 %v1490, 0.2
  %v2301 = vmul.f32 %v1493, 0.2
  %v2302 = vmul.f32 %v1495, 0.2
  %v2303 = vmul.f32 %v1498, 0.2
  %v2304 = vmul.f32 %v1500, 0.2
  %v2305 = vmul.f32 %v1503, 0.2
  %v2306 = vmul.f32 %v1505, 0.2
  %v2307 = vmul.f32 %v1508, 0.2
  %v2308 = vmul.f32 %v1510, 0.2
  %v2309 = vmul.f32 %v1513, 0.2
  %v2310 = vmul.f32 %v1515, 0.2
  %v2311 = vmul.f32 %v1518, 0.2
  %v2312 = vmul.f32 %v1520, 0.2
  %v2313 = vmul.f32 %v1523, 0.2
  %v2314 = vmul.f32 %v1525, 0.2
  %v2315 = vmul.f32 %v1528, 0.2
  %v2316 = vmul.f32 %v1530, 0.2
  %v2317 = vmul.f32 %v1533, 0.2
  %v2318 = vmul.f32 %v1535, 0.2
  %v2319 = vmul.f32 %v1538, 0.2
  %v2320 = vmul.f32 %v1540, 0.2
  %v2321 = vmul.f32 %v1543, 0.2
  %v2322 = vmul.f32 %v1545, 0.2
  %v2323 = vmul.f32 %v1548, 0.2
  %v2324 = vmul.f32 %v1550, 0.2
  %v2325 = vmul.f32 %v1553, 0.2
  %v2326 = vmul.f32 %v1555, 0.2
  %v2327 = vmul.f32 %v1558, 0.2
  %v2328 = vmul.f32 %v1560, 0.2
  %v2329 = vmul.f32 %v1563, 0.2
  %v2330 = vmul.f32 %v1565, 0.2
  %v2331 = vmul.f32 %v1568, 0.2
  %v2332 = vmul.f32 %v1570, 0.2
  %v2333 = vmul.f32 %v1573, 0.2
  %v2334 = vmul.f32 %v1575, 0.2
  %v2335 = vmul.f32 %v1578, 0.2
  %v2336 = vmul.f32 %v1580, 0.2
  %v2337 = vmul.f32 %v1583, 0.2
  %v2338 = vmul.f32 %v1585, 0.2
  %v2339 = vmul.f32 %v1588, 0.2
  %v2340 = vmul.f32 %v1590, 0.2
  %v2341 = vmul.f32 %v1593, 0.2
  %v2342 = vmul.f32 %v1595, 0.2
  %v2343 = vmul.f32 %v1598, 0.2
  %v2344 = vmul.f32 %v1600, 0.2
  %v2345 = vmul.f32 %v1603, 0.2
  %v2346 = vmul.f32 %v1605, 0.2
  %v2347 = vmul.f32 %v1608, 0.2
  %v2348 = vmul.f32 %v1610, 0.2
  %v2349 = vmul.f32 %v1613, 0.2
  %v2350 = vmul.f32 %v1615, 0.2
  %v2351 = vmul.f32 %v1618, 0.2
  %v2352 = vmul.f32 %v1620, 0.2
  %v2353 = vmul.f32 %v1623, 0.2
  %v2354 = vmul.f32 %v1625, 0.2
  %v2355 = vmul.f32 %v1628, 0.2
  %v2356 = vmul.f32 %v1630, 0.2
  %v2357 = vmul.f32 %v1633, 0.2
  %v2358 = vmul.f32 %v1635, 0.2
  %v2359 = vmul.f32 %v1638, 0.2
  %v2360 = vmul.f32 %v1640, 0.2
  %v2361 = vmul.f32 %v1643, 0.2
  %v2362 = vmul.f32 %v1645, 0.2
  %v2363 = vmul.f32 %v1648, 0.2
  %v2364 = vmul.f32 %v1650, 0.2
  %v2365 = vmul.f32 %v1653, 0.2
  %v2366 = vmul.f32 %v1655, 0.2
  %v2367 = vmul.f32 %v1658, 0.2
  %v2368 = vmul.f32 %v1660, 0.2
  %v2369 = vmul.f32 %v1663, 0.2
  %v2370 = vmul.f32 %v1665, 0.2
  %v2371 = vmul.f32 %v1668, 0.2
  %v2372 = vmul.f32 %v1670, 0.2
  %v2373 = vmul.f32 %v1673, 0.2
  %v2374 = vmul.f32 %v1675, 0.2
  %v2375 = vmul.f32 %v1678, 0.2
  %v2376 = vmul.f32 %v1680, 0.2
  %v2377 = vmul.f32 %v1683, 0.2
  %v2378 = vmul.f32 %v1685, 0.2
  %v2379 = vmul.f32 %v1688, 0.2
  %v2380 = vmul.f32 %v1690, 0.2
  %v2381 = vmul.f32 %v1693, 0.2
  %v2382 = vmul.f32 %v1695, 0.2
  %v2383 = vmul.f32 %v1698, 0.2
  %v2384 = vmul.f32 %v1700, 0.2
  %v2385 = vmul.f32 %v1703, 0.2
  %v2386 = vmul.f32 %v1705, 0.2
  %v2387 = vmul.f32 %v1708, 0.2
  %v2388 = vmul.f32 %v1710, 0.2
  %v2389 = vmul.f32 %v1713, 0.2
  %v2390 = vmul.f32 %v1715, 0.2
  %v2391 = vmul.f32 %v1718, 0.2
  %v2392 = vmul.f32 %v1720, 0.2
  %v2393 = vmul.f32 %v1723, 0.2
  %v2394 = vmul.f32 %v1725, 0.2
  %v2395 = vmul.f32 %v1728, 0.2
  %v2396 = vmul.f32 %v1730, 0.2
  %v2397 = vmul.f32 %v1733, 0.2
  %v2398 = vmul.f32 %v1735, 0.2
  %v2399 = vmul.f32 %v1738, 0.2
  %v2400 = vmul.f32 %v1740, 0.2
  %v2401 = vmul.f32 %v1743, 0.2
  %v2402 = vmul.f32 %v1745, 0.2
  %v2403 = vmul.f32 %v1748, 0.2
  %v2404 = vmul.f32 %v1750, 0.2
  %v2405 = vmul.f32 %v1753, 0.2
  %v2406 = vmul.f32 %v1755, 0.2
  %v2407 = vmul.f32 %v1758, 0.2
  %v2408 = vmul.f32 %v1760, 0.2
  %v2409 = vmul.f32 %v1763, 0.2
  %v2410 = vmul.f32 %v1765, 0.2
  %v2411 = vmul.f32 %v1768, 0.2
  %v2412 = vmul.f32 %v1770, 0.2
  %v2413 = vmul.f32 %v1773, 0.2
  %v2414 = vmul.f32 %v1775, 0.2
  %v2415 = vmul.f32 %v1778, 0.2
  %v2416 = vmul.f32 %v1780, 0.2
  %v2417 = vmul.f32 %v1783, 0.2
  %v2418 = vmul.f32 %v1785, 0.2
  %v2419 = vmul.f32 %v1788, 0.2
  %v2420 = vmul.f32 %v1790, 0.2
  %v2421 = vmul.f32 %v1793, 0.2
  %v2422 = vmul.f32 %v1795, 0.2
  %v2423 = vmul.f32 %v1798, 0.2
  %v2424 = vmul.f32 %v1800, 0.2
  %v2425 = vmul.f32 %v1803, 0.2
  %v2426 = vmul.f32 %v1805, 0.2
  %v2427 = vmul.f32 %v1808, 0.2
  %v2428 = vmul.f32 %v1810, 0.2
  %v2429 = vmul.f32 %v1813, 0.2
  %v2430 = vmul.f32 %v1815, 0.2
  %v2431 = vmul.f32 %v1818, 0.2
  %v2432 = vmul.f32 %v1820, 0.2
  %v2433 = vmul.f32 %v1823, 0.2
  %v2434 = vmul.f32 %v1825, 0.2
  %v2435 = vmul.f32 %v1828, 0.2
  %v2436 = vmul.f32 %v1830, 0.2
  %v2437 = vmul.f32 %v1833, 0.2
  %v2438 = vmul.f32 %v1835, 0.2
  %v2439 = vmul.f32 %v1838, 0.2
  %v2440 = vmul.f32 %v1840, 0.2
  %v2441 = vmul.f32 %v1843, 0.2
  %v2442 = vmul.f32 %v1845, 0.2
  %v2443 = vmul.f32 %v1848, 0.2
  %v2444 = vmul.f32 %v1850, 0.2
  %v2445 = vmul.f32 %v1853, 0.2
  %v2446 = vmul.f32 %v1855, 0.2
  %v2447 = vmul.f32 %v1858, 0.2
  %v2448 = vmul.f32 %v1860, 0.2
  %v2449 = vmul.f32 %v1863, 0.2
  %v2450 = vmul.f32 %v1865, 0.2
  %v2451 = vmul.f32 %v1868, 0.2
  %v2452 = vmul.f32 %v1870, 0.2
  %v2453 = vmul.f32 %v1873, 0.2
  %v2454 = vmul.f32 %v1875, 0.2
  %v2455 = vmul.f32 %v1878, 0.2
  %v2456 = vmul.f32 %v1880, 0.2
  %v2457 = vmul.f32 %v1883, 0.2
  %v2458 = vmul.f32 %v1885, 0.2
  %v2459 = vmul.f32 %v1888, 0.2
  %v2460 = vmul.f32 %v1890, 0.2
  %v2461 = vmul.f32 %v1893, 0.2
  %v2462 = vmul.f32 %v1895, 0.2
  %v2463 = vmul.f32 %v1898, 0.2
  %v2464 = vmul.f32 %v1900, 0.2
  %v2465 = vmul.f32 %v1903, 0.2
  %v2466 = vmul.f32 %v1905, 0.2
  %v2467 = vmul.f32 %v1908, 0.2
  %v2468 = vmul.f32 %v1910, 0.2
  %v2469 = vmul.f32 %v1913, 0.2
  %v2470 = vmul.f32 %v1915, 0.2
  %v2471 = vmul.f32 %v1918, 0.2
  %v2472 = vmul.f32 %v1920, 0.2
  %v2473 = vmul.f32 %v1923, 0.2
  %v2474 = vmul.f32 %v1925, 0.2
  %v2475 = vmul.f32 %v1928, 0.2
  %v2476 = vmul.f32 %v1930, 0.2
  %v2477 = vmul.f32 %v1933, 0.2
  %v2478 = vmul.f32 %v1935, 0.2
  %v2479 = vmul.f32 %v1938, 0.2
  %v2480 = vmul.f32 %v1940, 0.2
  %v2481 = vmul.f32 %v1943, 0.2
  %v2482 = vmul.f32 %v1945, 0.2
  %v2483 = vmul.f32 %v1948, 0.2
  %v2484 = vmul.f32 %v1950, 0.2
  %v2485 = vmul.f32 %v1953, 0.2
  %v2486 = vmul.f32 %v1955, 0.2
  %v2487 = vmul.f32 %v1958, 0.2
  %v2488 = vmul.f32 %v1960, 0.2
  %v2489 = vmul.f32 %v1963, 0.2
  %v2490 = vmul.f32 %v1965, 0.2
  %v2491 = vmul.f32 %v1968, 0.2
  %v2492 = vmul.f32 %v1970, 0.2
  %v2493 = vmul.f32 %v1973, 0.2
  %v2494 = vmul.f32 %v1975, 0.2
  %v2495 = vmul.f32 %v1978, 0.2
  %v2496 = vmul.f32 %v1980, 0.2
  %v2497 = vmul.f32 %v1983, 0.2
  %v2498 = vmul.f32 %v1985, 0.2
  %v2499 = vsel %vm1987, %v1348, %v2243
  %v2500 = vsel %vm1988, %v1350, %v2244
  %v2501 = vsel %vm1989, %v1353, %v2245
  %v2502 = vsel %vm1990, %v1355, %v2246
  %v2503 = vsel %vm1991, %v1358, %v2247
  %v2504 = vsel %vm1992, %v1360, %v2248
  %v2505 = vsel %vm1993, %v1363, %v2249
  %v2506 = vsel %vm1994, %v1365, %v2250
  %v2507 = vsel %vm1995, %v1368, %v2251
  %v2508 = vsel %vm1996, %v1370, %v2252
  %v2509 = vsel %vm1997, %v1373, %v2253
  %v2510 = vsel %vm1998, %v1375, %v2254
  %v2511 = vsel %vm1999, %v1378, %v2255
  %v2512 = vsel %vm2000, %v1380, %v2256
  %v2513 = vsel %vm2001, %v1383, %v2257
  %v2514 = vsel %vm2002, %v1385, %v2258
  %v2515 = vsel %vm2003, %v1388, %v2259
  %v2516 = vsel %vm2004, %v1390, %v2260
  %v2517 = vsel %vm2005, %v1393, %v2261
  %v2518 = vsel %vm2006, %v1395, %v2262
  %v2519 = vsel %vm2007, %v1398, %v2263
  %v2520 = vsel %vm2008, %v1400, %v2264
  %v2521 = vsel %vm2009, %v1403, %v2265
  %v2522 = vsel %vm2010, %v1405, %v2266
  %v2523 = vsel %vm2011, %v1408, %v2267
  %v2524 = vsel %vm2012, %v1410, %v2268
  %v2525 = vsel %vm2013, %v1413, %v2269
  %v2526 = vsel %vm2014, %v1415, %v2270
  %v2527 = vsel %vm2015, %v1418, %v2271
  %v2528 = vsel %vm2016, %v1420, %v2272
  %v2529 = vsel %vm2017, %v1423, %v2273
  %v2530 = vsel %vm2018, %v1425, %v2274
  %v2531 = vsel %vm2019, %v1428, %v2275
  %v2532 = vsel %vm2020, %v1430, %v2276
  %v2533 = vsel %vm2021, %v1433, %v2277
  %v2534 = vsel %vm2022, %v1435, %v2278
  %v2535 = vsel %vm2023, %v1438, %v2279
  %v2536 = vsel %vm2024, %v1440, %v2280
  %v2537 = vsel %vm2025, %v1443, %v2281
  %v2538 = vsel %vm2026, %v1445, %v2282
  %v2539 = vsel %vm2027, %v1448, %v2283
  %v2540 = vsel %vm2028, %v1450, %v2284
  %v2541 = vsel %vm2029, %v1453, %v2285
  %v2542 = vsel %vm2030, %v1455, %v2286
  %v2543 = vsel %vm2031, %v1458, %v2287
  %v2544 = vsel %vm2032, %v1460, %v2288
  %v2545 = vsel %vm2033, %v1463, %v2289
  %v2546 = vsel %vm2034, %v1465, %v2290
  %v2547 = vsel %vm2035, %v1468, %v2291
  %v2548 = vsel %vm2036, %v1470, %v2292
  %v2549 = vsel %vm2037, %v1473, %v2293
  %v2550 = vsel %vm2038, %v1475, %v2294
  %v2551 = vsel %vm2039, %v1478, %v2295
  %v2552 = vsel %vm2040, %v1480, %v2296
  %v2553 = vsel %vm2041, %v1483, %v2297
  %v2554 = vsel %vm2042, %v1485, %v2298
  %v2555 = vsel %vm2043, %v1488, %v2299
  %v2556 = vsel %vm2044, %v1490, %v2300
  %v2557 = vsel %vm2045, %v1493, %v2301
  %v2558 = vsel %vm2046, %v1495, %v2302
  %v2559 = vsel %vm2047, %v1498, %v2303
  %v2560 = vsel %vm2048, %v1500, %v2304
  %v2561 = vsel %vm2049, %v1503, %v2305
  %v2562 = vsel %vm2050, %v1505, %v2306
  %v2563 = vsel %vm2051, %v1508, %v2307
  %v2564 = vsel %vm2052, %v1510, %v2308
  %v2565 = vsel %vm2053, %v1513, %v2309
  %v2566 = vsel %vm2054, %v1515, %v2310
  %v2567 = vsel %vm2055, %v1518, %v2311
  %v2568 = vsel %vm2056, %v1520, %v2312
  %v2569 = vsel %vm2057, %v1523, %v2313
  %v2570 = vsel %vm2058, %v1525, %v2314
  %v2571 = vsel %vm2059, %v1528, %v2315
  %v2572 = vsel %vm2060, %v1530, %v2316
  %v2573 = vsel %vm2061, %v1533, %v2317
  %v2574 = vsel %vm2062, %v1535, %v2318
  %v2575 = vsel %vm2063, %v1538, %v2319
  %v2576 = vsel %vm2064, %v1540, %v2320
  %v2577 = vsel %vm2065, %v1543, %v2321
  %v2578 = vsel %vm2066, %v1545, %v2322
  %v2579 = vsel %vm2067, %v1548, %v2323
  %v2580 = vsel %vm2068, %v1550, %v2324
  %v2581 = vsel %vm2069, %v1553, %v2325
  %v2582 = vsel %vm2070, %v1555, %v2326
  %v2583 = vsel %vm2071, %v1558, %v2327
  %v2584 = vsel %vm2072, %v1560, %v2328
  %v2585 = vsel %vm2073, %v1563, %v2329
  %v2586 = vsel %vm2074, %v1565, %v2330
  %v2587 = vsel %vm2075, %v1568, %v2331
  %v2588 = vsel %vm2076, %v1570, %v2332
  %v2589 = vsel %vm2077, %v1573, %v2333
  %v2590 = vsel %vm2078, %v1575, %v2334
  %v2591 = vsel %vm2079, %v1578, %v2335
  %v2592 = vsel %vm2080, %v1580, %v2336
  %v2593 = vsel %vm2081, %v1583, %v2337
  %v2594 = vsel %vm2082, %v1585, %v2338
  %v2595 = vsel %vm2083, %v1588, %v2339
  %v2596 = vsel %vm2084, %v1590, %v2340
  %v2597 = vsel %vm2085, %v1593, %v2341
  %v2598 = vsel %vm2086, %v1595, %v2342
  %v2599 = vsel %vm2087, %v1598, %v2343
  %v2600 = vsel %vm2088, %v1600, %v2344
  %v2601 = vsel %vm2089, %v1603, %v2345
  %v2602 = vsel %vm2090, %v1605, %v2346
  %v2603 = vsel %vm2091, %v1608, %v2347
  %v2604 = vsel %vm2092, %v1610, %v2348
  %v2605 = vsel %vm2093, %v1613, %v2349
  %v2606 = vsel %vm2094, %v1615, %v2350
  %v2607 = vsel %vm2095, %v1618, %v2351
  %v2608 = vsel %vm2096, %v1620, %v2352
  %v2609 = vsel %vm2097, %v1623, %v2353
  %v2610 = vsel %vm2098, %v1625, %v2354
  %v2611 = vsel %vm2099, %v1628, %v2355
  %v2612 = vsel %vm2100, %v1630, %v2356
  %v2613 = vsel %vm2101, %v1633, %v2357
  %v2614 = vsel %vm2102, %v1635, %v2358
  %v2615 = vsel %vm2103, %v1638, %v2359
  %v2616 = vsel %vm2104, %v1640, %v2360
  %v2617 = vsel %vm2105, %v1643, %v2361
  %v2618 = vsel %vm2106, %v1645, %v2362
  %v2619 = vsel %vm2107, %v1648, %v2363
  %v2620 = vsel %vm2108, %v1650, %v2364
  %v2621 = vsel %vm2109, %v1653, %v2365
  %v2622 = vsel %vm2110, %v1655, %v2366
  %v2623 = vsel %vm2111, %v1658, %v2367
  %v2624 = vsel %vm2112, %v1660, %v2368
  %v2625 = vsel %vm2113, %v1663, %v2369
  %v2626 = vsel %vm2114, %v1665, %v2370
  %v2627 = vsel %vm2115, %v1668, %v2371
  %v2628 = vsel %vm2116, %v1670, %v2372
  %v2629 = vsel %vm2117, %v1673, %v2373
  %v2630 = vsel %vm2118, %v1675, %v2374
  %v2631 = vsel %vm2119, %v1678, %v2375
  %v2632 = vsel %vm2120, %v1680, %v2376
  %v2633 = vsel %vm2121, %v1683, %v2377
  %v2634 = vsel %vm2122, %v1685, %v2378
  %v2635 = vsel %vm2123, %v1688, %v2379
  %v2636 = vsel %vm2124, %v1690, %v2380
  %v2637 = vsel %vm2125, %v1693, %v2381
  %v2638 = vsel %vm2126, %v1695, %v2382
  %v2639 = vsel %vm2127, %v1698, %v2383
  %v2640 = vsel %vm2128, %v1700, %v2384
  %v2641 = vsel %vm2129, %v1703, %v2385
  %v2642 = vsel %vm2130, %v1705, %v2386
  %v2643 = vsel %vm2131, %v1708, %v2387
  %v2644 = vsel %vm2132, %v1710, %v2388
  %v2645 = vsel %vm2133, %v1713, %v2389
  %v2646 = vsel %vm2134, %v1715, %v2390
  %v2647 = vsel %vm2135, %v1718, %v2391
  %v2648 = vsel %vm2136, %v1720, %v2392
  %v2649 = vsel %vm2137, %v1723, %v2393
  %v2650 = vsel %vm2138, %v1725, %v2394
  %v2651 = vsel %vm2139, %v1728, %v2395
  %v2652 = vsel %vm2140, %v1730, %v2396
  %v2653 = vsel %vm2141, %v1733, %v2397
  %v2654 = vsel %vm2142, %v1735, %v2398
  %v2655 = vsel %vm2143, %v1738, %v2399
  %v2656 = vsel %vm2144, %v1740, %v2400
  %v2657 = vsel %vm2145, %v1743, %v2401
  %v2658 = vsel %vm2146, %v1745, %v2402
  %v2659 = vsel %vm2147, %v1748, %v2403
  %v2660 = vsel %vm2148, %v1750, %v2404
  %v2661 = vsel %vm2149, %v1753, %v2405
  %v2662 = vsel %vm2150, %v1755, %v2406
  %v2663 = vsel %vm2151, %v1758, %v2407
  %v2664 = vsel %vm2152, %v1760, %v2408
  %v2665 = vsel %vm2153, %v1763, %v2409
  %v2666 = vsel %vm2154, %v1765, %v2410
  %v2667 = vsel %vm2155, %v1768, %v2411
  %v2668 = vsel %vm2156, %v1770, %v2412
  %v2669 = vsel %vm2157, %v1773, %v2413
  %v2670 = vsel %vm2158, %v1775, %v2414
  %v2671 = vsel %vm2159, %v1778, %v2415
  %v2672 = vsel %vm2160, %v1780, %v2416
  %v2673 = vsel %vm2161, %v1783, %v2417
  %v2674 = vsel %vm2162, %v1785, %v2418
  %v2675 = vsel %vm2163, %v1788, %v2419
  %v2676 = vsel %vm2164, %v1790, %v2420
  %v2677 = vsel %vm2165, %v1793, %v2421
  %v2678 = vsel %vm2166, %v1795, %v2422
  %v2679 = vsel %vm2167, %v1798, %v2423
  %v2680 = vsel %vm2168, %v1800, %v2424
  %v2681 = vsel %vm2169, %v1803, %v2425
  %v2682 = vsel %vm2170, %v1805, %v2426
  %v2683 = vsel %vm2171, %v1808, %v2427
  %v2684 = vsel %vm2172, %v1810, %v2428
  %v2685 = vsel %vm2173, %v1813, %v2429
  %v2686 = vsel %vm2174, %v1815, %v2430
  %v2687 = vsel %vm2175, %v1818, %v2431
  %v2688 = vsel %vm2176, %v1820, %v2432
  %v2689 = vsel %vm2177, %v1823, %v2433
  %v2690 = vsel %vm2178, %v1825, %v2434
  %v2691 = vsel %vm2179, %v1828, %v2435
  %v2692 = vsel %vm2180, %v1830, %v2436
  %v2693 = vsel %vm2181, %v1833, %v2437
  %v2694 = vsel %vm2182, %v1835, %v2438
  %v2695 = vsel %vm2183, %v1838, %v2439
  %v2696 = vsel %vm2184, %v1840, %v2440
  %v2697 = vsel %vm2185, %v1843, %v2441
  %v2698 = vsel %vm2186, %v1845, %v2442
  %v2699 = vsel %vm2187, %v1848, %v2443
  %v2700 = vsel %vm2188, %v1850, %v2444
  %v2701 = vsel %vm2189, %v1853, %v2445
  %v2702 = vsel %vm2190, %v1855, %v2446
  %v2703 = vsel %vm2191, %v1858, %v2447
  %v2704 = vsel %vm2192, %v1860, %v2448
  %v2705 = vsel %vm2193, %v1863, %v2449
  %v2706 = vsel %vm2194, %v1865, %v2450
  %v2707 = vsel %vm2195, %v1868, %v2451
  %v2708 = vsel %vm2196, %v1870, %v2452
  %v2709 = vsel %vm2197, %v1873, %v2453
  %v2710 = vsel %vm2198, %v1875, %v2454
  %v2711 = vsel %vm2199, %v1878, %v2455
  %v2712 = vsel %vm2200, %v1880, %v2456
  %v2713 = vsel %vm2201, %v1883, %v2457
  %v2714 = vsel %vm2202, %v1885, %v2458
  %v2715 = vsel %vm2203, %v1888, %v2459
  %v2716 = vsel %vm2204, %v1890, %v2460
  %v2717 = vsel %vm2205, %v1893, %v2461
  %v2718 = vsel %vm2206, %v1895, %v2462
  %v2719 = vsel %vm2207, %v1898, %v2463
  %v2720 = vsel %vm2208, %v1900, %v2464
  %v2721 = vsel %vm2209, %v1903, %v2465
  %v2722 = vsel %vm2210, %v1905, %v2466
  %v2723 = vsel %vm2211, %v1908, %v2467
  %v2724 = vsel %vm2212, %v1910, %v2468
  %v2725 = vsel %vm2213, %v1913, %v2469
  %v2726 = vsel %vm2214, %v1915, %v2470
  %v2727 = vsel %vm2215, %v1918, %v2471
  %v2728 = vsel %vm2216, %v1920, %v2472
  %v2729 = vsel %vm2217, %v1923, %v2473
  %v2730 = vsel %vm2218, %v1925, %v2474
  %v2731 = vsel %vm2219, %v1928, %v2475
  %v2732 = vsel %vm2220, %v1930, %v2476
  %v2733 = vsel %vm2221, %v1933, %v2477
  %v2734 = vsel %vm2222, %v1935, %v2478
  %v2735 = vsel %vm2223, %v1938, %v2479
  %v2736 = vsel %vm2224, %v1940, %v2480
  %v2737 = vsel %vm2225, %v1943, %v2481
  %v2738 = vsel %vm2226, %v1945, %v2482
  %v2739 = vsel %vm2227, %v1948, %v2483
  %v2740 = vsel %vm2228, %v1950, %v2484
  %v2741 = vsel %vm2229, %v1953, %v2485
  %v2742 = vsel %vm2230, %v1955, %v2486
  %v2743 = vsel %vm2231, %v1958, %v2487
  %v2744 = vsel %vm2232, %v1960, %v2488
  %v2745 = vsel %vm2233, %v1963, %v2489
  %v2746 = vsel %vm2234, %v1965, %v2490
  %v2747 = vsel %vm2235, %v1968, %v2491
  %v2748 = vsel %vm2236, %v1970, %v2492
  %v2749 = vsel %vm2237, %v1973, %v2493
  %v2750 = vsel %vm2238, %v1975, %v2494
  %v2751 = vsel %vm2239, %v1978, %v2495
  %v2752 = vsel %vm2240, %v1980, %v2496
  %v2753 = vsel %vm2241, %v1983, %v2497
  %v2754 = vsel %vm2242, %v1985, %v2498
  %v2755 = vpack.c.bf16 0.0, 0.0
  %v2756 = vpack.c.bf16 %v2516, 0.0
  %v2757 = vpack.c.bf16 %v2520, %v2518
  %v2758 = vpack.c.bf16 %v2524, %v2522
  %v2759 = vpack.c.bf16 %v2528, %v2526
  %v2760 = vpack.c.bf16 %v2548, 0.0
  %v2761 = vpack.c.bf16 %v2552, %v2550
  %v2762 = vpack.c.bf16 %v2556, %v2554
  %v2763 = vpack.c.bf16 %v2560, %v2558
  %v2764 = vpack.c.bf16 %v2580, 0.0
  %v2765 = vpack.c.bf16 %v2584, %v2582
  %v2766 = vpack.c.bf16 %v2588, %v2586
  %v2767 = vpack.c.bf16 %v2592, %v2590
  %v2768 = vpack.c.bf16 %v2612, 0.0
  %v2769 = vpack.c.bf16 %v2616, %v2614
  %v2770 = vpack.c.bf16 %v2620, %v2618
  %v2771 = vpack.c.bf16 %v2624, %v2622
  %v2772 = vpack.c.bf16 %v2644, 0.0
  %v2773 = vpack.c.bf16 %v2648, %v2646
  %v2774 = vpack.c.bf16 %v2652, %v2650
  %v2775 = vpack.c.bf16 %v2656, %v2654
  %v2776 = vpack.c.bf16 %v2676, 0.0
  %v2777 = vpack.c.bf16 %v2680, %v2678
  %v2778 = vpack.c.bf16 %v2684, %v2682
  %v2779 = vpack.c.bf16 %v2688, %v2686
  %v2780 = vpack.c.bf16 %v2708, 0.0
  %v2781 = vpack.c.bf16 %v2712, %v2710
  %v2782 = vpack.c.bf16 %v2716, %v2714
  %v2783 = vpack.c.bf16 %v2720, %v2718
  %v2784 = vld [vmem:[%s2] sm:$0xf]
  %v2785 = vld [vmem:[%s2 + $0x4] sm:$0xf]
  %v2786 = vld [vmem:[%s2 + $0x8] sm:$0xf]
  %v2787 = vld [vmem:[%s2 + $0xc] sm:$0xf]
  %v2788 = vpack.c.bf16 %v2517, %v2515
  %v2789 = vpack.c.bf16 %v2521, %v2519
  %v2790 = vpack.c.bf16 %v2525, %v2523
  %v2791 = vpack.c.bf16 %v2529, %v2527
  %v2792 = vpack.c.bf16 %v2549, %v2547
  %v2793 = vpack.c.bf16 %v2553, %v2551
  %v2794 = vpack.c.bf16 %v2557, %v2555
  %v2795 = vpack.c.bf16 %v2561, %v2559
  %v2796 = vpack.c.bf16 %v2581, %v2579
  %v2797 = vpack.c.bf16 %v2585, %v2583
  %v2798 = vpack.c.bf16 %v2589, %v2587
  %v2799 = vpack.c.bf16 %v2593, %v2591
  %v2800 = vpack.c.bf16 %v2613, %v2611
  %v2801 = vpack.c.bf16 %v2617, %v2615
  %v2802 = vpack.c.bf16 %v2621, %v2619
  %v2803 = vpack.c.bf16 %v2625, %v2623
  %v2804 = vpack.c.bf16 %v2645, %v2643
  %v2805 = vpack.c.bf16 %v2649, %v2647
  %v2806 = vpack.c.bf16 %v2653, %v2651
  %v2807 = vpack.c.bf16 %v2657, %v2655
  %v2808 = vpack.c.bf16 %v2677, %v2675
  %v2809 = vpack.c.bf16 %v2681, %v2679
  %v2810 = vpack.c.bf16 %v2685, %v2683
  %v2811 = vpack.c.bf16 %v2689, %v2687
  %v2812 = vpack.c.bf16 %v2709, %v2707
  %v2813 = vpack.c.bf16 %v2713, %v2711
  %v2814 = vpack.c.bf16 %v2717, %v2715
  %v2815 = vpack.c.bf16 %v2721, %v2719
  %s2816 = scalar_lea.vmem %s2, 16
  %v2817 = vld [vmem:[%s2816] sm:$0xf]
  %v2818 = vld [vmem:[%s2816 + $0x4] sm:$0xf]
  %v2819 = vld [vmem:[%s2816 + $0x8] sm:$0xf]
  %v2820 = vld [vmem:[%s2816 + $0xc] sm:$0xf]
  %v2825 = vunpack.c.l.b16 %v2817
  %v2826 = vunpack.c.l.b16 %v2818
  %v2827 = vunpack.c.l.b16 %v2819
  %v2828 = vunpack.c.l.b16 %v2820
  %v2829 = vpack.c.b16 %v2826, %v2825
  %v2830 = vpack.c.b16 %v2828, %v2827
  %vm2833 = vcmask 261120
  %v2835 = vsel %vm2833, %v2755, 0
  %v2838 = vsel %vm2833, %v2788, 0
  %v2841 = vsel %vm2833, %v2789, 0
  %v2844 = vsel %vm2833, %v2790, 0
  %v2847 = vsel %vm2833, %v2791, 0
  %v2850 = vsel %vm2833, %v2792, 0
  %v2853 = vsel %vm2833, %v2793, 0
  %v2856 = vsel %vm2833, %v2794, 0
  %v2859 = vsel %vm2833, %v2795, 0
  %v2862 = vsel %vm2833, %v2796, 0
  %v2865 = vsel %vm2833, %v2797, 0
  %v2868 = vsel %vm2833, %v2798, 0
  %v2871 = vsel %vm2833, %v2799, 0
  %v2874 = vsel %vm2833, %v2800, 0
  %v2877 = vsel %vm2833, %v2801, 0
  %v2880 = vsel %vm2833, %v2802, 0
  %v2883 = vsel %vm2833, %v2803, 0
  %v2886 = vsel %vm2833, %v2804, 0
  %v2889 = vsel %vm2833, %v2805, 0
  %v2892 = vsel %vm2833, %v2806, 0
  %v2895 = vsel %vm2833, %v2807, 0
  %v2898 = vsel %vm2833, %v2808, 0
  %v2901 = vsel %vm2833, %v2809, 0
  %v2904 = vsel %vm2833, %v2810, 0
  %v2907 = vsel %vm2833, %v2811, 0
  %v2910 = vsel %vm2833, %v2812, 0
  %v2913 = vsel %vm2833, %v2813, 0
  %v2916 = vsel %vm2833, %v2814, 0
  %v2919 = vsel %vm2833, %v2815, 0
  %2921 = vmatpush.bf16.msra.mxu0 0
  %2922 = vmatpush.bf16.msra.mxu0 0
  %2923 = vmatpush.bf16.msra.mxu0 0
  %2924 = vmatpush.bf16.msra.mxu0 0
  %2925 = vmatpush.bf16.msra.mxu0 0
  %2926 = vmatpush.bf16.msra.mxu0 0
  %2927 = vmatpush.bf16.msra.mxu0 %v2830
  %2928 = vmatpush.bf16.msra.mxu0 %v2829
  %2929 = vmatmul.bf16.gmra.mxu0 %v2835
  %v2930 = vpop.f32.mrf.mxu0
  %v2931 = vadd.f32 0.0, %v2930
  %v2932 = vpop.f32.mrf.mxu0
  %v2933 = vadd.f32 0.0, %v2932
  %2934 = vmatmul.bf16.gmra.mxu0 %v2835
  %v2935 = vpop.f32.mrf.mxu0
  %v2936 = vadd.f32 0.0, %v2935
  %v2937 = vpop.f32.mrf.mxu0
  %v2938 = vadd.f32 0.0, %v2937
  %2939 = vmatmul.bf16.gmra.mxu0 %v2835
  %v2940 = vpop.f32.mrf.mxu0
  %v2941 = vadd.f32 0.0, %v2940
  %v2942 = vpop.f32.mrf.mxu0
  %v2943 = vadd.f32 0.0, %v2942
  %2944 = vmatmul.bf16.gmra.mxu0 %v2835
  %v2945 = vpop.f32.mrf.mxu0
  %v2946 = vadd.f32 0.0, %v2945
  %v2947 = vpop.f32.mrf.mxu0
  %v2948 = vadd.f32 0.0, %v2947
  %2949 = vmatmul.bf16.gmra.mxu0 %v2838
  %v2950 = vpop.f32.mrf.mxu0
  %v2951 = vadd.f32 0.0, %v2950
  %v2952 = vpop.f32.mrf.mxu0
  %v2953 = vadd.f32 0.0, %v2952
  %2954 = vmatmul.bf16.gmra.mxu0 %v2841
  %v2955 = vpop.f32.mrf.mxu0
  %v2956 = vadd.f32 0.0, %v2955
  %v2957 = vpop.f32.mrf.mxu0
  %v2958 = vadd.f32 0.0, %v2957
  %2959 = vmatmul.bf16.gmra.mxu0 %v2844
  %v2960 = vpop.f32.mrf.mxu0
  %v2961 = vadd.f32 0.0, %v2960
  %v2962 = vpop.f32.mrf.mxu0
  %v2963 = vadd.f32 0.0, %v2962
  %2964 = vmatmul.bf16.gmra.mxu0 %v2847
  %v2965 = vpop.f32.mrf.mxu0
  %v2966 = vadd.f32 0.0, %v2965
  %v2967 = vpop.f32.mrf.mxu0
  %v2968 = vadd.f32 0.0, %v2967
  %2969 = vmatmul.bf16.gmra.mxu0 %v2850
  %v2970 = vpop.f32.mrf.mxu0
  %v2971 = vadd.f32 0.0, %v2970
  %v2972 = vpop.f32.mrf.mxu0
  %v2973 = vadd.f32 0.0, %v2972
  %2974 = vmatmul.bf16.gmra.mxu0 %v2853
  %v2975 = vpop.f32.mrf.mxu0
  %v2976 = vadd.f32 0.0, %v2975
  %v2977 = vpop.f32.mrf.mxu0
  %v2978 = vadd.f32 0.0, %v2977
  %2979 = vmatmul.bf16.gmra.mxu0 %v2856
  %v2980 = vpop.f32.mrf.mxu0
  %v2981 = vadd.f32 0.0, %v2980
  %v2982 = vpop.f32.mrf.mxu0
  %v2983 = vadd.f32 0.0, %v2982
  %2984 = vmatmul.bf16.gmra.mxu0 %v2859
  %v2985 = vpop.f32.mrf.mxu0
  %v2986 = vadd.f32 0.0, %v2985
  %v2987 = vpop.f32.mrf.mxu0
  %v2988 = vadd.f32 0.0, %v2987
  %2989 = vmatmul.bf16.gmra.mxu0 %v2862
  %v2990 = vpop.f32.mrf.mxu0
  %v2991 = vadd.f32 0.0, %v2990
  %v2992 = vpop.f32.mrf.mxu0
  %v2993 = vadd.f32 0.0, %v2992
  %2994 = vmatmul.bf16.gmra.mxu0 %v2865
  %v2995 = vpop.f32.mrf.mxu0
  %v2996 = vadd.f32 0.0, %v2995
  %v2997 = vpop.f32.mrf.mxu0
  %v2998 = vadd.f32 0.0, %v2997
  %2999 = vmatmul.bf16.gmra.mxu0 %v2868
  %v3000 = vpop.f32.mrf.mxu0
  %v3001 = vadd.f32 0.0, %v3000
  %v3002 = vpop.f32.mrf.mxu0
  %v3003 = vadd.f32 0.0, %v3002
  %3004 = vmatmul.bf16.gmra.mxu0 %v2871
  %v3005 = vpop.f32.mrf.mxu0
  %v3006 = vadd.f32 0.0, %v3005
  %v3007 = vpop.f32.mrf.mxu0
  %v3008 = vadd.f32 0.0, %v3007
  %3009 = vmatmul.bf16.gmra.mxu0 %v2874
  %v3010 = vpop.f32.mrf.mxu0
  %v3011 = vadd.f32 0.0, %v3010
  %v3012 = vpop.f32.mrf.mxu0
  %v3013 = vadd.f32 0.0, %v3012
  %3014 = vmatmul.bf16.gmra.mxu0 %v2877
  %v3015 = vpop.f32.mrf.mxu0
  %v3016 = vadd.f32 0.0, %v3015
  %v3017 = vpop.f32.mrf.mxu0
  %v3018 = vadd.f32 0.0, %v3017
  %3019 = vmatmul.bf16.gmra.mxu0 %v2880
  %v3020 = vpop.f32.mrf.mxu0
  %v3021 = vadd.f32 0.0, %v3020
  %v3022 = vpop.f32.mrf.mxu0
  %v3023 = vadd.f32 0.0, %v3022
  %3024 = vmatmul.bf16.gmra.mxu0 %v2883
  %v3025 = vpop.f32.mrf.mxu0
  %v3026 = vadd.f32 0.0, %v3025
  %v3027 = vpop.f32.mrf.mxu0
  %v3028 = vadd.f32 0.0, %v3027
  %3029 = vmatmul.bf16.gmra.mxu0 %v2886
  %v3030 = vpop.f32.mrf.mxu0
  %v3031 = vadd.f32 0.0, %v3030
  %v3032 = vpop.f32.mrf.mxu0
  %v3033 = vadd.f32 0.0, %v3032
  %3034 = vmatmul.bf16.gmra.mxu0 %v2889
  %v3035 = vpop.f32.mrf.mxu0
  %v3036 = vadd.f32 0.0, %v3035
  %v3037 = vpop.f32.mrf.mxu0
  %v3038 = vadd.f32 0.0, %v3037
  %3039 = vmatmul.bf16.gmra.mxu0 %v2892
  %v3040 = vpop.f32.mrf.mxu0
  %v3041 = vadd.f32 0.0, %v3040
  %v3042 = vpop.f32.mrf.mxu0
  %v3043 = vadd.f32 0.0, %v3042
  %3044 = vmatmul.bf16.gmra.mxu0 %v2895
  %v3045 = vpop.f32.mrf.mxu0
  %v3046 = vadd.f32 0.0, %v3045
  %v3047 = vpop.f32.mrf.mxu0
  %v3048 = vadd.f32 0.0, %v3047
  %3049 = vmatmul.bf16.gmra.mxu0 %v2898
  %v3050 = vpop.f32.mrf.mxu0
  %v3051 = vadd.f32 0.0, %v3050
  %v3052 = vpop.f32.mrf.mxu0
  %v3053 = vadd.f32 0.0, %v3052
  %3054 = vmatmul.bf16.gmra.mxu0 %v2901
  %v3055 = vpop.f32.mrf.mxu0
  %v3056 = vadd.f32 0.0, %v3055
  %v3057 = vpop.f32.mrf.mxu0
  %v3058 = vadd.f32 0.0, %v3057
  %3059 = vmatmul.bf16.gmra.mxu0 %v2904
  %v3060 = vpop.f32.mrf.mxu0
  %v3061 = vadd.f32 0.0, %v3060
  %v3062 = vpop.f32.mrf.mxu0
  %v3063 = vadd.f32 0.0, %v3062
  %3064 = vmatmul.bf16.gmra.mxu0 %v2907
  %v3065 = vpop.f32.mrf.mxu0
  %v3066 = vadd.f32 0.0, %v3065
  %v3067 = vpop.f32.mrf.mxu0
  %v3068 = vadd.f32 0.0, %v3067
  %3069 = vmatmul.bf16.gmra.mxu0 %v2910
  %v3070 = vpop.f32.mrf.mxu0
  %v3071 = vadd.f32 0.0, %v3070
  %v3072 = vpop.f32.mrf.mxu0
  %v3073 = vadd.f32 0.0, %v3072
  %3074 = vmatmul.bf16.gmra.mxu0 %v2913
  %v3075 = vpop.f32.mrf.mxu0
  %v3076 = vadd.f32 0.0, %v3075
  %v3077 = vpop.f32.mrf.mxu0
  %v3078 = vadd.f32 0.0, %v3077
  %3079 = vmatmul.bf16.gmra.mxu0 %v2916
  %v3080 = vpop.f32.mrf.mxu0
  %v3081 = vadd.f32 0.0, %v3080
  %v3082 = vpop.f32.mrf.mxu0
  %v3083 = vadd.f32 0.0, %v3082
  %3084 = vmatmul.bf16.gmra.mxu0 %v2919
  %v3085 = vpop.f32.mrf.mxu0
  %v3086 = vadd.f32 0.0, %v3085
  %v3087 = vpop.f32.mrf.mxu0
  %v3088 = vadd.f32 0.0, %v3087
  %3089 = vdwg.mxu0
  %v3094 = vunpack.c.l.b16 %v2784
  %v3095 = vunpack.c.l.b16 %v2785
  %v3096 = vunpack.c.l.b16 %v2786
  %v3097 = vunpack.c.l.b16 %v2787
  %v3098 = vpack.c.b16 %v3095, %v3094
  %v3099 = vpack.c.b16 %v3097, %v3096
  %v3103 = vsel %vm2833, %v2756, 0
  %v3106 = vsel %vm2833, %v2757, 0
  %v3109 = vsel %vm2833, %v2758, 0
  %v3112 = vsel %vm2833, %v2759, 0
  %v3115 = vsel %vm2833, %v2760, 0
  %v3118 = vsel %vm2833, %v2761, 0
  %v3121 = vsel %vm2833, %v2762, 0
  %v3124 = vsel %vm2833, %v2763, 0
  %v3127 = vsel %vm2833, %v2764, 0
  %v3130 = vsel %vm2833, %v2765, 0
  %v3133 = vsel %vm2833, %v2766, 0
  %v3136 = vsel %vm2833, %v2767, 0
  %v3139 = vsel %vm2833, %v2768, 0
  %v3142 = vsel %vm2833, %v2769, 0
  %v3145 = vsel %vm2833, %v2770, 0
  %v3148 = vsel %vm2833, %v2771, 0
  %v3151 = vsel %vm2833, %v2772, 0
  %v3154 = vsel %vm2833, %v2773, 0
  %v3157 = vsel %vm2833, %v2774, 0
  %v3160 = vsel %vm2833, %v2775, 0
  %v3163 = vsel %vm2833, %v2776, 0
  %v3166 = vsel %vm2833, %v2777, 0
  %v3169 = vsel %vm2833, %v2778, 0
  %v3172 = vsel %vm2833, %v2779, 0
  %v3175 = vsel %vm2833, %v2780, 0
  %v3178 = vsel %vm2833, %v2781, 0
  %v3181 = vsel %vm2833, %v2782, 0
  %v3184 = vsel %vm2833, %v2783, 0
  %3186 = vmatpush.bf16.msra.mxu0 0
  %3187 = vmatpush.bf16.msra.mxu0 0
  %3188 = vmatpush.bf16.msra.mxu0 0
  %3189 = vmatpush.bf16.msra.mxu0 0
  %3190 = vmatpush.bf16.msra.mxu0 0
  %3191 = vmatpush.bf16.msra.mxu0 0
  %3192 = vmatpush.bf16.msra.mxu0 %v3099
  %3193 = vmatpush.bf16.msra.mxu0 %v3098
  %3194 = vmatmul.bf16.gmra.mxu0 %v2835
  %v3195 = vpop.f32.mrf.mxu0
  %v3196 = vadd.f32 %v2931, %v3195
  %v3197 = vpop.f32.mrf.mxu0
  %v3198 = vadd.f32 %v2933, %v3197
  %3199 = vmatmul.bf16.gmra.mxu0 %v2835
  %v3200 = vpop.f32.mrf.mxu0
  %v3201 = vadd.f32 %v2936, %v3200
  %v3202 = vpop.f32.mrf.mxu0
  %v3203 = vadd.f32 %v2938, %v3202
  %3204 = vmatmul.bf16.gmra.mxu0 %v2835
  %v3205 = vpop.f32.mrf.mxu0
  %v3206 = vadd.f32 %v2941, %v3205
  %v3207 = vpop.f32.mrf.mxu0
  %v3208 = vadd.f32 %v2943, %v3207
  %3209 = vmatmul.bf16.gmra.mxu0 %v2835
  %v3210 = vpop.f32.mrf.mxu0
  %v3211 = vadd.f32 %v2946, %v3210
  %v3212 = vpop.f32.mrf.mxu0
  %v3213 = vadd.f32 %v2948, %v3212
  %3214 = vmatmul.bf16.gmra.mxu0 %v3103
  %v3215 = vpop.f32.mrf.mxu0
  %v3216 = vadd.f32 %v2951, %v3215
  %v3217 = vpop.f32.mrf.mxu0
  %v3218 = vadd.f32 %v2953, %v3217
  %3219 = vmatmul.bf16.gmra.mxu0 %v3106
  %v3220 = vpop.f32.mrf.mxu0
  %v3221 = vadd.f32 %v2956, %v3220
  %v3222 = vpop.f32.mrf.mxu0
  %v3223 = vadd.f32 %v2958, %v3222
  %3224 = vmatmul.bf16.gmra.mxu0 %v3109
  %v3225 = vpop.f32.mrf.mxu0
  %v3226 = vadd.f32 %v2961, %v3225
  %v3227 = vpop.f32.mrf.mxu0
  %v3228 = vadd.f32 %v2963, %v3227
  %3229 = vmatmul.bf16.gmra.mxu0 %v3112
  %v3230 = vpop.f32.mrf.mxu0
  %v3231 = vadd.f32 %v2966, %v3230
  %v3232 = vpop.f32.mrf.mxu0
  %v3233 = vadd.f32 %v2968, %v3232
  %3234 = vmatmul.bf16.gmra.mxu0 %v3115
  %v3235 = vpop.f32.mrf.mxu0
  %v3236 = vadd.f32 %v2971, %v3235
  %v3237 = vpop.f32.mrf.mxu0
  %v3238 = vadd.f32 %v2973, %v3237
  %3239 = vmatmul.bf16.gmra.mxu0 %v3118
  %v3240 = vpop.f32.mrf.mxu0
  %v3241 = vadd.f32 %v2976, %v3240
  %v3242 = vpop.f32.mrf.mxu0
  %v3243 = vadd.f32 %v2978, %v3242
  %3244 = vmatmul.bf16.gmra.mxu0 %v3121
  %v3245 = vpop.f32.mrf.mxu0
  %v3246 = vadd.f32 %v2981, %v3245
  %v3247 = vpop.f32.mrf.mxu0
  %v3248 = vadd.f32 %v2983, %v3247
  %3249 = vmatmul.bf16.gmra.mxu0 %v3124
  %v3250 = vpop.f32.mrf.mxu0
  %v3251 = vadd.f32 %v2986, %v3250
  %v3252 = vpop.f32.mrf.mxu0
  %v3253 = vadd.f32 %v2988, %v3252
  %3254 = vmatmul.bf16.gmra.mxu0 %v3127
  %v3255 = vpop.f32.mrf.mxu0
  %v3256 = vadd.f32 %v2991, %v3255
  %v3257 = vpop.f32.mrf.mxu0
  %v3258 = vadd.f32 %v2993, %v3257
  %3259 = vmatmul.bf16.gmra.mxu0 %v3130
  %v3260 = vpop.f32.mrf.mxu0
  %v3261 = vadd.f32 %v2996, %v3260
  %v3262 = vpop.f32.mrf.mxu0
  %v3263 = vadd.f32 %v2998, %v3262
  %3264 = vmatmul.bf16.gmra.mxu0 %v3133
  %v3265 = vpop.f32.mrf.mxu0
  %v3266 = vadd.f32 %v3001, %v3265
  %v3267 = vpop.f32.mrf.mxu0
  %v3268 = vadd.f32 %v3003, %v3267
  %3269 = vmatmul.bf16.gmra.mxu0 %v3136
  %v3270 = vpop.f32.mrf.mxu0
  %v3271 = vadd.f32 %v3006, %v3270
  %v3272 = vpop.f32.mrf.mxu0
  %v3273 = vadd.f32 %v3008, %v3272
  %3274 = vmatmul.bf16.gmra.mxu0 %v3139
  %v3275 = vpop.f32.mrf.mxu0
  %v3276 = vadd.f32 %v3011, %v3275
  %v3277 = vpop.f32.mrf.mxu0
  %v3278 = vadd.f32 %v3013, %v3277
  %3279 = vmatmul.bf16.gmra.mxu0 %v3142
  %v3280 = vpop.f32.mrf.mxu0
  %v3281 = vadd.f32 %v3016, %v3280
  %v3282 = vpop.f32.mrf.mxu0
  %v3283 = vadd.f32 %v3018, %v3282
  %3284 = vmatmul.bf16.gmra.mxu0 %v3145
  %v3285 = vpop.f32.mrf.mxu0
  %v3286 = vadd.f32 %v3021, %v3285
  %v3287 = vpop.f32.mrf.mxu0
  %v3288 = vadd.f32 %v3023, %v3287
  %3289 = vmatmul.bf16.gmra.mxu0 %v3148
  %v3290 = vpop.f32.mrf.mxu0
  %v3291 = vadd.f32 %v3026, %v3290
  %v3292 = vpop.f32.mrf.mxu0
  %v3293 = vadd.f32 %v3028, %v3292
  %3294 = vmatmul.bf16.gmra.mxu0 %v3151
  %v3295 = vpop.f32.mrf.mxu0
  %v3296 = vadd.f32 %v3031, %v3295
  %v3297 = vpop.f32.mrf.mxu0
  %v3298 = vadd.f32 %v3033, %v3297
  %3299 = vmatmul.bf16.gmra.mxu0 %v3154
  %v3300 = vpop.f32.mrf.mxu0
  %v3301 = vadd.f32 %v3036, %v3300
  %v3302 = vpop.f32.mrf.mxu0
  %v3303 = vadd.f32 %v3038, %v3302
  %3304 = vmatmul.bf16.gmra.mxu0 %v3157
  %v3305 = vpop.f32.mrf.mxu0
  %v3306 = vadd.f32 %v3041, %v3305
  %v3307 = vpop.f32.mrf.mxu0
  %v3308 = vadd.f32 %v3043, %v3307
  %3309 = vmatmul.bf16.gmra.mxu0 %v3160
  %v3310 = vpop.f32.mrf.mxu0
  %v3311 = vadd.f32 %v3046, %v3310
  %v3312 = vpop.f32.mrf.mxu0
  %v3313 = vadd.f32 %v3048, %v3312
  %3314 = vmatmul.bf16.gmra.mxu0 %v3163
  %v3315 = vpop.f32.mrf.mxu0
  %v3316 = vadd.f32 %v3051, %v3315
  %v3317 = vpop.f32.mrf.mxu0
  %v3318 = vadd.f32 %v3053, %v3317
  %3319 = vmatmul.bf16.gmra.mxu0 %v3166
  %v3320 = vpop.f32.mrf.mxu0
  %v3321 = vadd.f32 %v3056, %v3320
  %v3322 = vpop.f32.mrf.mxu0
  %v3323 = vadd.f32 %v3058, %v3322
  %3324 = vmatmul.bf16.gmra.mxu0 %v3169
  %v3325 = vpop.f32.mrf.mxu0
  %v3326 = vadd.f32 %v3061, %v3325
  %v3327 = vpop.f32.mrf.mxu0
  %v3328 = vadd.f32 %v3063, %v3327
  %3329 = vmatmul.bf16.gmra.mxu0 %v3172
  %v3330 = vpop.f32.mrf.mxu0
  %v3331 = vadd.f32 %v3066, %v3330
  %v3332 = vpop.f32.mrf.mxu0
  %v3333 = vadd.f32 %v3068, %v3332
  %3334 = vmatmul.bf16.gmra.mxu0 %v3175
  %v3335 = vpop.f32.mrf.mxu0
  %v3336 = vadd.f32 %v3071, %v3335
  %v3337 = vpop.f32.mrf.mxu0
  %v3338 = vadd.f32 %v3073, %v3337
  %3339 = vmatmul.bf16.gmra.mxu0 %v3178
  %v3340 = vpop.f32.mrf.mxu0
  %v3341 = vadd.f32 %v3076, %v3340
  %v3342 = vpop.f32.mrf.mxu0
  %v3343 = vadd.f32 %v3078, %v3342
  %3344 = vmatmul.bf16.gmra.mxu0 %v3181
  %v3345 = vpop.f32.mrf.mxu0
  %v3346 = vadd.f32 %v3081, %v3345
  %v3347 = vpop.f32.mrf.mxu0
  %v3348 = vadd.f32 %v3083, %v3347
  %3349 = vmatmul.bf16.gmra.mxu0 %v3184
  %v3350 = vpop.f32.mrf.mxu0
  %v3351 = vadd.f32 %v3086, %v3350
  %v3352 = vpop.f32.mrf.mxu0
  %v3353 = vadd.f32 %v3088, %v3352
  %3354 = vdwg.mxu0
  %v3355 = vpack.c.bf16 %v2518, %v2516
  %v3356 = vpack.c.bf16 %v2522, %v2520
  %v3357 = vpack.c.bf16 %v2526, %v2524
  %v3358 = vpack.c.bf16 %v2530, %v2528
  %v3359 = vpack.c.bf16 %v2550, %v2548
  %v3360 = vpack.c.bf16 %v2554, %v2552
  %v3361 = vpack.c.bf16 %v2558, %v2556
  %v3362 = vpack.c.bf16 %v2562, %v2560
  %v3363 = vpack.c.bf16 %v2582, %v2580
  %v3364 = vpack.c.bf16 %v2586, %v2584
  %v3365 = vpack.c.bf16 %v2590, %v2588
  %v3366 = vpack.c.bf16 %v2594, %v2592
  %v3367 = vpack.c.bf16 %v2614, %v2612
  %v3368 = vpack.c.bf16 %v2618, %v2616
  %v3369 = vpack.c.bf16 %v2622, %v2620
  %v3370 = vpack.c.bf16 %v2626, %v2624
  %v3371 = vpack.c.bf16 %v2646, %v2644
  %v3372 = vpack.c.bf16 %v2650, %v2648
  %v3373 = vpack.c.bf16 %v2654, %v2652
  %v3374 = vpack.c.bf16 %v2658, %v2656
  %v3375 = vpack.c.bf16 %v2678, %v2676
  %v3376 = vpack.c.bf16 %v2682, %v2680
  %v3377 = vpack.c.bf16 %v2686, %v2684
  %v3378 = vpack.c.bf16 %v2690, %v2688
  %v3379 = vpack.c.bf16 %v2710, %v2708
  %v3380 = vpack.c.bf16 %v2714, %v2712
  %v3381 = vpack.c.bf16 %v2718, %v2716
  %v3382 = vpack.c.bf16 %v2722, %v2720
  %s3383 = scalar_lea.vmem %s2, 32
  %v3384 = vld [vmem:[%s3383] sm:$0xf]
  %v3385 = vld [vmem:[%s3383 + $0x4] sm:$0xf]
  %v3386 = vld [vmem:[%s3383 + $0x8] sm:$0xf]
  %v3387 = vld [vmem:[%s3383 + $0xc] sm:$0xf]
  %v3392 = vunpack.c.l.b16 %v3384
  %v3393 = vunpack.c.l.b16 %v3385
  %v3394 = vunpack.c.l.b16 %v3386
  %v3395 = vunpack.c.l.b16 %v3387
  %v3396 = vpack.c.b16 %v3393, %v3392
  %v3397 = vpack.c.b16 %v3395, %v3394
  %v3401 = vsel %vm2833, %v3355, 0
  %v3404 = vsel %vm2833, %v3356, 0
  %v3407 = vsel %vm2833, %v3357, 0
  %v3410 = vsel %vm2833, %v3358, 0
  %v3413 = vsel %vm2833, %v3359, 0
  %v3416 = vsel %vm2833, %v3360, 0
  %v3419 = vsel %vm2833, %v3361, 0
  %v3422 = vsel %vm2833, %v3362, 0
  %v3425 = vsel %vm2833, %v3363, 0
  %v3428 = vsel %vm2833, %v3364, 0
  %v3431 = vsel %vm2833, %v3365, 0
  %v3434 = vsel %vm2833, %v3366, 0
  %v3437 = vsel %vm2833, %v3367, 0
  %v3440 = vsel %vm2833, %v3368, 0
  %v3443 = vsel %vm2833, %v3369, 0
  %v3446 = vsel %vm2833, %v3370, 0
  %v3449 = vsel %vm2833, %v3371, 0
  %v3452 = vsel %vm2833, %v3372, 0
  %v3455 = vsel %vm2833, %v3373, 0
  %v3458 = vsel %vm2833, %v3374, 0
  %v3461 = vsel %vm2833, %v3375, 0
  %v3464 = vsel %vm2833, %v3376, 0
  %v3467 = vsel %vm2833, %v3377, 0
  %v3470 = vsel %vm2833, %v3378, 0
  %v3473 = vsel %vm2833, %v3379, 0
  %v3476 = vsel %vm2833, %v3380, 0
  %v3479 = vsel %vm2833, %v3381, 0
  %v3482 = vsel %vm2833, %v3382, 0
  %3484 = vmatpush.bf16.msra.mxu0 0
  %3485 = vmatpush.bf16.msra.mxu0 0
  %3486 = vmatpush.bf16.msra.mxu0 0
  %3487 = vmatpush.bf16.msra.mxu0 0
  %3488 = vmatpush.bf16.msra.mxu0 0
  %3489 = vmatpush.bf16.msra.mxu0 0
  %3490 = vmatpush.bf16.msra.mxu0 %v3397
  %3491 = vmatpush.bf16.msra.mxu0 %v3396
  %3492 = vmatmul.bf16.gmra.mxu0 %v2835
  %v3493 = vpop.f32.mrf.mxu0
  %v3494 = vadd.f32 0.0, %v3493
  %v3495 = vpop.f32.mrf.mxu0
  %v3496 = vadd.f32 0.0, %v3495
  %3497 = vmatmul.bf16.gmra.mxu0 %v2835
  %v3498 = vpop.f32.mrf.mxu0
  %v3499 = vadd.f32 0.0, %v3498
  %v3500 = vpop.f32.mrf.mxu0
  %v3501 = vadd.f32 0.0, %v3500
  %3502 = vmatmul.bf16.gmra.mxu0 %v2835
  %v3503 = vpop.f32.mrf.mxu0
  %v3504 = vadd.f32 0.0, %v3503
  %v3505 = vpop.f32.mrf.mxu0
  %v3506 = vadd.f32 0.0, %v3505
  %3507 = vmatmul.bf16.gmra.mxu0 %v2835
  %v3508 = vpop.f32.mrf.mxu0
  %v3509 = vadd.f32 0.0, %v3508
  %v3510 = vpop.f32.mrf.mxu0
  %v3511 = vadd.f32 0.0, %v3510
  %3512 = vmatmul.bf16.gmra.mxu0 %v3401
  %v3513 = vpop.f32.mrf.mxu0
  %v3514 = vadd.f32 0.0, %v3513
  %v3515 = vpop.f32.mrf.mxu0
  %v3516 = vadd.f32 0.0, %v3515
  %3517 = vmatmul.bf16.gmra.mxu0 %v3404
  %v3518 = vpop.f32.mrf.mxu0
  %v3519 = vadd.f32 0.0, %v3518
  %v3520 = vpop.f32.mrf.mxu0
  %v3521 = vadd.f32 0.0, %v3520
  %3522 = vmatmul.bf16.gmra.mxu0 %v3407
  %v3523 = vpop.f32.mrf.mxu0
  %v3524 = vadd.f32 0.0, %v3523
  %v3525 = vpop.f32.mrf.mxu0
  %v3526 = vadd.f32 0.0, %v3525
  %3527 = vmatmul.bf16.gmra.mxu0 %v3410
  %v3528 = vpop.f32.mrf.mxu0
  %v3529 = vadd.f32 0.0, %v3528
  %v3530 = vpop.f32.mrf.mxu0
  %v3531 = vadd.f32 0.0, %v3530
  %3532 = vmatmul.bf16.gmra.mxu0 %v3413
  %v3533 = vpop.f32.mrf.mxu0
  %v3534 = vadd.f32 0.0, %v3533
  %v3535 = vpop.f32.mrf.mxu0
  %v3536 = vadd.f32 0.0, %v3535
  %3537 = vmatmul.bf16.gmra.mxu0 %v3416
  %v3538 = vpop.f32.mrf.mxu0
  %v3539 = vadd.f32 0.0, %v3538
  %v3540 = vpop.f32.mrf.mxu0
  %v3541 = vadd.f32 0.0, %v3540
  %3542 = vmatmul.bf16.gmra.mxu0 %v3419
  %v3543 = vpop.f32.mrf.mxu0
  %v3544 = vadd.f32 0.0, %v3543
  %v3545 = vpop.f32.mrf.mxu0
  %v3546 = vadd.f32 0.0, %v3545
  %3547 = vmatmul.bf16.gmra.mxu0 %v3422
  %v3548 = vpop.f32.mrf.mxu0
  %v3549 = vadd.f32 0.0, %v3548
  %v3550 = vpop.f32.mrf.mxu0
  %v3551 = vadd.f32 0.0, %v3550
  %3552 = vmatmul.bf16.gmra.mxu0 %v3425
  %v3553 = vpop.f32.mrf.mxu0
  %v3554 = vadd.f32 0.0, %v3553
  %v3555 = vpop.f32.mrf.mxu0
  %v3556 = vadd.f32 0.0, %v3555
  %3557 = vmatmul.bf16.gmra.mxu0 %v3428
  %v3558 = vpop.f32.mrf.mxu0
  %v3559 = vadd.f32 0.0, %v3558
  %v3560 = vpop.f32.mrf.mxu0
  %v3561 = vadd.f32 0.0, %v3560
  %3562 = vmatmul.bf16.gmra.mxu0 %v3431
  %v3563 = vpop.f32.mrf.mxu0
  %v3564 = vadd.f32 0.0, %v3563
  %v3565 = vpop.f32.mrf.mxu0
  %v3566 = vadd.f32 0.0, %v3565
  %3567 = vmatmul.bf16.gmra.mxu0 %v3434
  %v3568 = vpop.f32.mrf.mxu0
  %v3569 = vadd.f32 0.0, %v3568
  %v3570 = vpop.f32.mrf.mxu0
  %v3571 = vadd.f32 0.0, %v3570
  %3572 = vmatmul.bf16.gmra.mxu0 %v3437
  %v3573 = vpop.f32.mrf.mxu0
  %v3574 = vadd.f32 0.0, %v3573
  %v3575 = vpop.f32.mrf.mxu0
  %v3576 = vadd.f32 0.0, %v3575
  %3577 = vmatmul.bf16.gmra.mxu0 %v3440
  %v3578 = vpop.f32.mrf.mxu0
  %v3579 = vadd.f32 0.0, %v3578
  %v3580 = vpop.f32.mrf.mxu0
  %v3581 = vadd.f32 0.0, %v3580
  %3582 = vmatmul.bf16.gmra.mxu0 %v3443
  %v3583 = vpop.f32.mrf.mxu0
  %v3584 = vadd.f32 0.0, %v3583
  %v3585 = vpop.f32.mrf.mxu0
  %v3586 = vadd.f32 0.0, %v3585
  %3587 = vmatmul.bf16.gmra.mxu0 %v3446
  %v3588 = vpop.f32.mrf.mxu0
  %v3589 = vadd.f32 0.0, %v3588
  %v3590 = vpop.f32.mrf.mxu0
  %v3591 = vadd.f32 0.0, %v3590
  %3592 = vmatmul.bf16.gmra.mxu0 %v3449
  %v3593 = vpop.f32.mrf.mxu0
  %v3594 = vadd.f32 0.0, %v3593
  %v3595 = vpop.f32.mrf.mxu0
  %v3596 = vadd.f32 0.0, %v3595
  %3597 = vmatmul.bf16.gmra.mxu0 %v3452
  %v3598 = vpop.f32.mrf.mxu0
  %v3599 = vadd.f32 0.0, %v3598
  %v3600 = vpop.f32.mrf.mxu0
  %v3601 = vadd.f32 0.0, %v3600
  %3602 = vmatmul.bf16.gmra.mxu0 %v3455
  %v3603 = vpop.f32.mrf.mxu0
  %v3604 = vadd.f32 0.0, %v3603
  %v3605 = vpop.f32.mrf.mxu0
  %v3606 = vadd.f32 0.0, %v3605
  %3607 = vmatmul.bf16.gmra.mxu0 %v3458
  %v3608 = vpop.f32.mrf.mxu0
  %v3609 = vadd.f32 0.0, %v3608
  %v3610 = vpop.f32.mrf.mxu0
  %v3611 = vadd.f32 0.0, %v3610
  %3612 = vmatmul.bf16.gmra.mxu0 %v3461
  %v3613 = vpop.f32.mrf.mxu0
  %v3614 = vadd.f32 0.0, %v3613
  %v3615 = vpop.f32.mrf.mxu0
  %v3616 = vadd.f32 0.0, %v3615
  %3617 = vmatmul.bf16.gmra.mxu0 %v3464
  %v3618 = vpop.f32.mrf.mxu0
  %v3619 = vadd.f32 0.0, %v3618
  %v3620 = vpop.f32.mrf.mxu0
  %v3621 = vadd.f32 0.0, %v3620
  %3622 = vmatmul.bf16.gmra.mxu0 %v3467
  %v3623 = vpop.f32.mrf.mxu0
  %v3624 = vadd.f32 0.0, %v3623
  %v3625 = vpop.f32.mrf.mxu0
  %v3626 = vadd.f32 0.0, %v3625
  %3627 = vmatmul.bf16.gmra.mxu0 %v3470
  %v3628 = vpop.f32.mrf.mxu0
  %v3629 = vadd.f32 0.0, %v3628
  %v3630 = vpop.f32.mrf.mxu0
  %v3631 = vadd.f32 0.0, %v3630
  %3632 = vmatmul.bf16.gmra.mxu0 %v3473
  %v3633 = vpop.f32.mrf.mxu0
  %v3634 = vadd.f32 0.0, %v3633
  %v3635 = vpop.f32.mrf.mxu0
  %v3636 = vadd.f32 0.0, %v3635
  %3637 = vmatmul.bf16.gmra.mxu0 %v3476
  %v3638 = vpop.f32.mrf.mxu0
  %v3639 = vadd.f32 0.0, %v3638
  %v3640 = vpop.f32.mrf.mxu0
  %v3641 = vadd.f32 0.0, %v3640
  %3642 = vmatmul.bf16.gmra.mxu0 %v3479
  %v3643 = vpop.f32.mrf.mxu0
  %v3644 = vadd.f32 0.0, %v3643
  %v3645 = vpop.f32.mrf.mxu0
  %v3646 = vadd.f32 0.0, %v3645
  %3647 = vmatmul.bf16.gmra.mxu0 %v3482
  %v3648 = vpop.f32.mrf.mxu0
  %v3649 = vadd.f32 0.0, %v3648
  %v3650 = vpop.f32.mrf.mxu0
  %v3651 = vadd.f32 0.0, %v3650
  %3652 = vdwg.mxu0
  %v3653 = vadd.f32 %v3196, %v3494
  %v3654 = vadd.f32 %v3198, %v3496
  %v3655 = vadd.f32 %v3201, %v3499
  %v3656 = vadd.f32 %v3203, %v3501
  %v3657 = vadd.f32 %v3206, %v3504
  %v3658 = vadd.f32 %v3208, %v3506
  %v3659 = vadd.f32 %v3211, %v3509
  %v3660 = vadd.f32 %v3213, %v3511
  %v3661 = vadd.f32 %v3216, %v3514
  %v3662 = vadd.f32 %v3218, %v3516
  %v3663 = vadd.f32 %v3221, %v3519
  %v3664 = vadd.f32 %v3223, %v3521
  %v3665 = vadd.f32 %v3226, %v3524
  %v3666 = vadd.f32 %v3228, %v3526
  %v3667 = vadd.f32 %v3231, %v3529
  %v3668 = vadd.f32 %v3233, %v3531
  %v3669 = vadd.f32 %v3236, %v3534
  %v3670 = vadd.f32 %v3238, %v3536
  %v3671 = vadd.f32 %v3241, %v3539
  %v3672 = vadd.f32 %v3243, %v3541
  %v3673 = vadd.f32 %v3246, %v3544
  %v3674 = vadd.f32 %v3248, %v3546
  %v3675 = vadd.f32 %v3251, %v3549
  %v3676 = vadd.f32 %v3253, %v3551
  %v3677 = vadd.f32 %v3256, %v3554
  %v3678 = vadd.f32 %v3258, %v3556
  %v3679 = vadd.f32 %v3261, %v3559
  %v3680 = vadd.f32 %v3263, %v3561
  %v3681 = vadd.f32 %v3266, %v3564
  %v3682 = vadd.f32 %v3268, %v3566
  %v3683 = vadd.f32 %v3271, %v3569
  %v3684 = vadd.f32 %v3273, %v3571
  %v3685 = vadd.f32 %v3276, %v3574
  %v3686 = vadd.f32 %v3278, %v3576
  %v3687 = vadd.f32 %v3281, %v3579
  %v3688 = vadd.f32 %v3283, %v3581
  %v3689 = vadd.f32 %v3286, %v3584
  %v3690 = vadd.f32 %v3288, %v3586
  %v3691 = vadd.f32 %v3291, %v3589
  %v3692 = vadd.f32 %v3293, %v3591
  %v3693 = vadd.f32 %v3296, %v3594
  %v3694 = vadd.f32 %v3298, %v3596
  %v3695 = vadd.f32 %v3301, %v3599
  %v3696 = vadd.f32 %v3303, %v3601
  %v3697 = vadd.f32 %v3306, %v3604
  %v3698 = vadd.f32 %v3308, %v3606
  %v3699 = vadd.f32 %v3311, %v3609
  %v3700 = vadd.f32 %v3313, %v3611
  %v3701 = vadd.f32 %v3316, %v3614
  %v3702 = vadd.f32 %v3318, %v3616
  %v3703 = vadd.f32 %v3321, %v3619
  %v3704 = vadd.f32 %v3323, %v3621
  %v3705 = vadd.f32 %v3326, %v3624
  %v3706 = vadd.f32 %v3328, %v3626
  %v3707 = vadd.f32 %v3331, %v3629
  %v3708 = vadd.f32 %v3333, %v3631
  %v3709 = vadd.f32 %v3336, %v3634
  %v3710 = vadd.f32 %v3338, %v3636
  %v3711 = vadd.f32 %v3341, %v3639
  %v3712 = vadd.f32 %v3343, %v3641
  %v3713 = vadd.f32 %v3346, %v3644
  %v3714 = vadd.f32 %v3348, %v3646
  %v3715 = vadd.f32 %v3351, %v3649
  %v3716 = vadd.f32 %v3353, %v3651
  %v3717 = vpack.c.bf16 %v2519, %v2517
  %v3718 = vpack.c.bf16 %v2523, %v2521
  %v3719 = vpack.c.bf16 %v2527, %v2525
  %v3720 = vpack.c.bf16 0.0, %v2529
  %v3721 = vpack.c.bf16 %v2551, %v2549
  %v3722 = vpack.c.bf16 %v2555, %v2553
  %v3723 = vpack.c.bf16 %v2559, %v2557
  %v3724 = vpack.c.bf16 0.0, %v2561
  %v3725 = vpack.c.bf16 %v2583, %v2581
  %v3726 = vpack.c.bf16 %v2587, %v2585
  %v3727 = vpack.c.bf16 %v2591, %v2589
  %v3728 = vpack.c.bf16 0.0, %v2593
  %v3729 = vpack.c.bf16 %v2615, %v2613
  %v3730 = vpack.c.bf16 %v2619, %v2617
  %v3731 = vpack.c.bf16 %v2623, %v2621
  %v3732 = vpack.c.bf16 0.0, %v2625
  %v3733 = vpack.c.bf16 %v2647, %v2645
  %v3734 = vpack.c.bf16 %v2651, %v2649
  %v3735 = vpack.c.bf16 %v2655, %v2653
  %v3736 = vpack.c.bf16 0.0, %v2657
  %v3737 = vpack.c.bf16 %v2679, %v2677
  %v3738 = vpack.c.bf16 %v2683, %v2681
  %v3739 = vpack.c.bf16 %v2687, %v2685
  %v3740 = vpack.c.bf16 0.0, %v2689
  %v3741 = vpack.c.bf16 %v2711, %v2709
  %v3742 = vpack.c.bf16 %v2715, %v2713
  %v3743 = vpack.c.bf16 %v2719, %v2717
  %v3744 = vpack.c.bf16 0.0, %v2721
  %s3745 = scalar_lea.vmem %s2, 48
  %v3746 = vld [vmem:[%s3745] sm:$0xf]
  %v3747 = vld [vmem:[%s3745 + $0x4] sm:$0xf]
  %v3748 = vld [vmem:[%s3745 + $0x8] sm:$0xf]
  %v3749 = vld [vmem:[%s3745 + $0xc] sm:$0xf]
  %v3754 = vunpack.c.l.b16 %v3746
  %v3755 = vunpack.c.l.b16 %v3747
  %v3756 = vunpack.c.l.b16 %v3748
  %v3757 = vunpack.c.l.b16 %v3749
  %v3758 = vpack.c.b16 %v3755, %v3754
  %v3759 = vpack.c.b16 %v3757, %v3756
  %v3763 = vsel %vm2833, %v3717, 0
  %v3766 = vsel %vm2833, %v3718, 0
  %v3769 = vsel %vm2833, %v3719, 0
  %v3772 = vsel %vm2833, %v3720, 0
  %v3775 = vsel %vm2833, %v3721, 0
  %v3778 = vsel %vm2833, %v3722, 0
  %v3781 = vsel %vm2833, %v3723, 0
  %v3784 = vsel %vm2833, %v3724, 0
  %v3787 = vsel %vm2833, %v3725, 0
  %v3790 = vsel %vm2833, %v3726, 0
  %v3793 = vsel %vm2833, %v3727, 0
  %v3796 = vsel %vm2833, %v3728, 0
  %v3799 = vsel %vm2833, %v3729, 0
  %v3802 = vsel %vm2833, %v3730, 0
  %v3805 = vsel %vm2833, %v3731, 0
  %v3808 = vsel %vm2833, %v3732, 0
  %v3811 = vsel %vm2833, %v3733, 0
  %v3814 = vsel %vm2833, %v3734, 0
  %v3817 = vsel %vm2833, %v3735, 0
  %v3820 = vsel %vm2833, %v3736, 0
  %v3823 = vsel %vm2833, %v3737, 0
  %v3826 = vsel %vm2833, %v3738, 0
  %v3829 = vsel %vm2833, %v3739, 0
  %v3832 = vsel %vm2833, %v3740, 0
  %v3835 = vsel %vm2833, %v3741, 0
  %v3838 = vsel %vm2833, %v3742, 0
  %v3841 = vsel %vm2833, %v3743, 0
  %v3844 = vsel %vm2833, %v3744, 0
  %3846 = vmatpush.bf16.msra.mxu0 0
  %3847 = vmatpush.bf16.msra.mxu0 0
  %3848 = vmatpush.bf16.msra.mxu0 0
  %3849 = vmatpush.bf16.msra.mxu0 0
  %3850 = vmatpush.bf16.msra.mxu0 0
  %3851 = vmatpush.bf16.msra.mxu0 0
  %3852 = vmatpush.bf16.msra.mxu0 %v3759
  %3853 = vmatpush.bf16.msra.mxu0 %v3758
  %3854 = vmatmul.bf16.gmra.mxu0 %v2835
  %v3855 = vpop.f32.mrf.mxu0
  %v3856 = vadd.f32 0.0, %v3855
  %v3857 = vpop.f32.mrf.mxu0
  %v3858 = vadd.f32 0.0, %v3857
  %3859 = vmatmul.bf16.gmra.mxu0 %v2835
  %v3860 = vpop.f32.mrf.mxu0
  %v3861 = vadd.f32 0.0, %v3860
  %v3862 = vpop.f32.mrf.mxu0
  %v3863 = vadd.f32 0.0, %v3862
  %3864 = vmatmul.bf16.gmra.mxu0 %v2835
  %v3865 = vpop.f32.mrf.mxu0
  %v3866 = vadd.f32 0.0, %v3865
  %v3867 = vpop.f32.mrf.mxu0
  %v3868 = vadd.f32 0.0, %v3867
  %3869 = vmatmul.bf16.gmra.mxu0 %v2835
  %v3870 = vpop.f32.mrf.mxu0
  %v3871 = vadd.f32 0.0, %v3870
  %v3872 = vpop.f32.mrf.mxu0
  %v3873 = vadd.f32 0.0, %v3872
  %3874 = vmatmul.bf16.gmra.mxu0 %v3763
  %v3875 = vpop.f32.mrf.mxu0
  %v3876 = vadd.f32 0.0, %v3875
  %v3877 = vpop.f32.mrf.mxu0
  %v3878 = vadd.f32 0.0, %v3877
  %3879 = vmatmul.bf16.gmra.mxu0 %v3766
  %v3880 = vpop.f32.mrf.mxu0
  %v3881 = vadd.f32 0.0, %v3880
  %v3882 = vpop.f32.mrf.mxu0
  %v3883 = vadd.f32 0.0, %v3882
  %3884 = vmatmul.bf16.gmra.mxu0 %v3769
  %v3885 = vpop.f32.mrf.mxu0
  %v3886 = vadd.f32 0.0, %v3885
  %v3887 = vpop.f32.mrf.mxu0
  %v3888 = vadd.f32 0.0, %v3887
  %3889 = vmatmul.bf16.gmra.mxu0 %v3772
  %v3890 = vpop.f32.mrf.mxu0
  %v3891 = vadd.f32 0.0, %v3890
  %v3892 = vpop.f32.mrf.mxu0
  %v3893 = vadd.f32 0.0, %v3892
  %3894 = vmatmul.bf16.gmra.mxu0 %v3775
  %v3895 = vpop.f32.mrf.mxu0
  %v3896 = vadd.f32 0.0, %v3895
  %v3897 = vpop.f32.mrf.mxu0
  %v3898 = vadd.f32 0.0, %v3897
  %3899 = vmatmul.bf16.gmra.mxu0 %v3778
  %v3900 = vpop.f32.mrf.mxu0
  %v3901 = vadd.f32 0.0, %v3900
  %v3902 = vpop.f32.mrf.mxu0
  %v3903 = vadd.f32 0.0, %v3902
  %3904 = vmatmul.bf16.gmra.mxu0 %v3781
  %v3905 = vpop.f32.mrf.mxu0
  %v3906 = vadd.f32 0.0, %v3905
  %v3907 = vpop.f32.mrf.mxu0
  %v3908 = vadd.f32 0.0, %v3907
  %3909 = vmatmul.bf16.gmra.mxu0 %v3784
  %v3910 = vpop.f32.mrf.mxu0
  %v3911 = vadd.f32 0.0, %v3910
  %v3912 = vpop.f32.mrf.mxu0
  %v3913 = vadd.f32 0.0, %v3912
  %3914 = vmatmul.bf16.gmra.mxu0 %v3787
  %v3915 = vpop.f32.mrf.mxu0
  %v3916 = vadd.f32 0.0, %v3915
  %v3917 = vpop.f32.mrf.mxu0
  %v3918 = vadd.f32 0.0, %v3917
  %3919 = vmatmul.bf16.gmra.mxu0 %v3790
  %v3920 = vpop.f32.mrf.mxu0
  %v3921 = vadd.f32 0.0, %v3920
  %v3922 = vpop.f32.mrf.mxu0
  %v3923 = vadd.f32 0.0, %v3922
  %3924 = vmatmul.bf16.gmra.mxu0 %v3793
  %v3925 = vpop.f32.mrf.mxu0
  %v3926 = vadd.f32 0.0, %v3925
  %v3927 = vpop.f32.mrf.mxu0
  %v3928 = vadd.f32 0.0, %v3927
  %3929 = vmatmul.bf16.gmra.mxu0 %v3796
  %v3930 = vpop.f32.mrf.mxu0
  %v3931 = vadd.f32 0.0, %v3930
  %v3932 = vpop.f32.mrf.mxu0
  %v3933 = vadd.f32 0.0, %v3932
  %3934 = vmatmul.bf16.gmra.mxu0 %v3799
  %v3935 = vpop.f32.mrf.mxu0
  %v3936 = vadd.f32 0.0, %v3935
  %v3937 = vpop.f32.mrf.mxu0
  %v3938 = vadd.f32 0.0, %v3937
  %3939 = vmatmul.bf16.gmra.mxu0 %v3802
  %v3940 = vpop.f32.mrf.mxu0
  %v3941 = vadd.f32 0.0, %v3940
  %v3942 = vpop.f32.mrf.mxu0
  %v3943 = vadd.f32 0.0, %v3942
  %3944 = vmatmul.bf16.gmra.mxu0 %v3805
  %v3945 = vpop.f32.mrf.mxu0
  %v3946 = vadd.f32 0.0, %v3945
  %v3947 = vpop.f32.mrf.mxu0
  %v3948 = vadd.f32 0.0, %v3947
  %3949 = vmatmul.bf16.gmra.mxu0 %v3808
  %v3950 = vpop.f32.mrf.mxu0
  %v3951 = vadd.f32 0.0, %v3950
  %v3952 = vpop.f32.mrf.mxu0
  %v3953 = vadd.f32 0.0, %v3952
  %3954 = vmatmul.bf16.gmra.mxu0 %v3811
  %v3955 = vpop.f32.mrf.mxu0
  %v3956 = vadd.f32 0.0, %v3955
  %v3957 = vpop.f32.mrf.mxu0
  %v3958 = vadd.f32 0.0, %v3957
  %3959 = vmatmul.bf16.gmra.mxu0 %v3814
  %v3960 = vpop.f32.mrf.mxu0
  %v3961 = vadd.f32 0.0, %v3960
  %v3962 = vpop.f32.mrf.mxu0
  %v3963 = vadd.f32 0.0, %v3962
  %3964 = vmatmul.bf16.gmra.mxu0 %v3817
  %v3965 = vpop.f32.mrf.mxu0
  %v3966 = vadd.f32 0.0, %v3965
  %v3967 = vpop.f32.mrf.mxu0
  %v3968 = vadd.f32 0.0, %v3967
  %3969 = vmatmul.bf16.gmra.mxu0 %v3820
  %v3970 = vpop.f32.mrf.mxu0
  %v3971 = vadd.f32 0.0, %v3970
  %v3972 = vpop.f32.mrf.mxu0
  %v3973 = vadd.f32 0.0, %v3972
  %3974 = vmatmul.bf16.gmra.mxu0 %v3823
  %v3975 = vpop.f32.mrf.mxu0
  %v3976 = vadd.f32 0.0, %v3975
  %v3977 = vpop.f32.mrf.mxu0
  %v3978 = vadd.f32 0.0, %v3977
  %3979 = vmatmul.bf16.gmra.mxu0 %v3826
  %v3980 = vpop.f32.mrf.mxu0
  %v3981 = vadd.f32 0.0, %v3980
  %v3982 = vpop.f32.mrf.mxu0
  %v3983 = vadd.f32 0.0, %v3982
  %3984 = vmatmul.bf16.gmra.mxu0 %v3829
  %v3985 = vpop.f32.mrf.mxu0
  %v3986 = vadd.f32 0.0, %v3985
  %v3987 = vpop.f32.mrf.mxu0
  %v3988 = vadd.f32 0.0, %v3987
  %3989 = vmatmul.bf16.gmra.mxu0 %v3832
  %v3990 = vpop.f32.mrf.mxu0
  %v3991 = vadd.f32 0.0, %v3990
  %v3992 = vpop.f32.mrf.mxu0
  %v3993 = vadd.f32 0.0, %v3992
  %3994 = vmatmul.bf16.gmra.mxu0 %v3835
  %v3995 = vpop.f32.mrf.mxu0
  %v3996 = vadd.f32 0.0, %v3995
  %v3997 = vpop.f32.mrf.mxu0
  %v3998 = vadd.f32 0.0, %v3997
  %3999 = vmatmul.bf16.gmra.mxu0 %v3838
  %v4000 = vpop.f32.mrf.mxu0
  %v4001 = vadd.f32 0.0, %v4000
  %v4002 = vpop.f32.mrf.mxu0
  %v4003 = vadd.f32 0.0, %v4002
  %4004 = vmatmul.bf16.gmra.mxu0 %v3841
  %v4005 = vpop.f32.mrf.mxu0
  %v4006 = vadd.f32 0.0, %v4005
  %v4007 = vpop.f32.mrf.mxu0
  %v4008 = vadd.f32 0.0, %v4007
  %4009 = vmatmul.bf16.gmra.mxu0 %v3844
  %v4010 = vpop.f32.mrf.mxu0
  %v4011 = vadd.f32 0.0, %v4010
  %v4012 = vpop.f32.mrf.mxu0
  %v4013 = vadd.f32 0.0, %v4012
  %4014 = vdwg.mxu0
  %v4015 = vadd.f32 %v3653, %v3856
  %v4016 = vadd.f32 %v3654, %v3858
  %v4017 = vadd.f32 %v3655, %v3861
  %v4018 = vadd.f32 %v3656, %v3863
  %v4019 = vadd.f32 %v3657, %v3866
  %v4020 = vadd.f32 %v3658, %v3868
  %v4021 = vadd.f32 %v3659, %v3871
  %v4022 = vadd.f32 %v3660, %v3873
  %v4023 = vadd.f32 %v3661, %v3876
  %v4024 = vadd.f32 %v3662, %v3878
  %v4025 = vadd.f32 %v3663, %v3881
  %v4026 = vadd.f32 %v3664, %v3883
  %v4027 = vadd.f32 %v3665, %v3886
  %v4028 = vadd.f32 %v3666, %v3888
  %v4029 = vadd.f32 %v3667, %v3891
  %v4030 = vadd.f32 %v3668, %v3893
  %v4031 = vadd.f32 %v3669, %v3896
  %v4032 = vadd.f32 %v3670, %v3898
  %v4033 = vadd.f32 %v3671, %v3901
  %v4034 = vadd.f32 %v3672, %v3903
  %v4035 = vadd.f32 %v3673, %v3906
  %v4036 = vadd.f32 %v3674, %v3908
  %v4037 = vadd.f32 %v3675, %v3911
  %v4038 = vadd.f32 %v3676, %v3913
  %v4039 = vadd.f32 %v3677, %v3916
  %v4040 = vadd.f32 %v3678, %v3918
  %v4041 = vadd.f32 %v3679, %v3921
  %v4042 = vadd.f32 %v3680, %v3923
  %v4043 = vadd.f32 %v3681, %v3926
  %v4044 = vadd.f32 %v3682, %v3928
  %v4045 = vadd.f32 %v3683, %v3931
  %v4046 = vadd.f32 %v3684, %v3933
  %v4047 = vadd.f32 %v3685, %v3936
  %v4048 = vadd.f32 %v3686, %v3938
  %v4049 = vadd.f32 %v3687, %v3941
  %v4050 = vadd.f32 %v3688, %v3943
  %v4051 = vadd.f32 %v3689, %v3946
  %v4052 = vadd.f32 %v3690, %v3948
  %v4053 = vadd.f32 %v3691, %v3951
  %v4054 = vadd.f32 %v3692, %v3953
  %v4055 = vadd.f32 %v3693, %v3956
  %v4056 = vadd.f32 %v3694, %v3958
  %v4057 = vadd.f32 %v3695, %v3961
  %v4058 = vadd.f32 %v3696, %v3963
  %v4059 = vadd.f32 %v3697, %v3966
  %v4060 = vadd.f32 %v3698, %v3968
  %v4061 = vadd.f32 %v3699, %v3971
  %v4062 = vadd.f32 %v3700, %v3973
  %v4063 = vadd.f32 %v3701, %v3976
  %v4064 = vadd.f32 %v3702, %v3978
  %v4065 = vadd.f32 %v3703, %v3981
  %v4066 = vadd.f32 %v3704, %v3983
  %v4067 = vadd.f32 %v3705, %v3986
  %v4068 = vadd.f32 %v3706, %v3988
  %v4069 = vadd.f32 %v3707, %v3991
  %v4070 = vadd.f32 %v3708, %v3993
  %v4071 = vadd.f32 %v3709, %v3996
  %v4072 = vadd.f32 %v3710, %v3998
  %v4073 = vadd.f32 %v3711, %v4001
  %v4074 = vadd.f32 %v3712, %v4003
  %v4075 = vadd.f32 %v3713, %v4006
  %v4076 = vadd.f32 %v3714, %v4008
  %v4077 = vadd.f32 %v3715, %v4011
  %v4078 = vadd.f32 %v3716, %v4013
  %v4079 = vpack.c.bf16 %v2500, 0.0
  %v4080 = vpack.c.bf16 %v2504, %v2502
  %v4081 = vpack.c.bf16 %v2508, %v2506
  %v4082 = vpack.c.bf16 %v2512, %v2510
  %v4083 = vpack.c.bf16 %v2532, 0.0
  %v4084 = vpack.c.bf16 %v2536, %v2534
  %v4085 = vpack.c.bf16 %v2540, %v2538
  %v4086 = vpack.c.bf16 %v2544, %v2542
  %v4087 = vpack.c.bf16 %v2564, 0.0
  %v4088 = vpack.c.bf16 %v2568, %v2566
  %v4089 = vpack.c.bf16 %v2572, %v2570
  %v4090 = vpack.c.bf16 %v2576, %v2574
  %v4091 = vpack.c.bf16 %v2596, 0.0
  %v4092 = vpack.c.bf16 %v2600, %v2598
  %v4093 = vpack.c.bf16 %v2604, %v2602
  %v4094 = vpack.c.bf16 %v2608, %v2606
  %v4095 = vpack.c.bf16 %v2628, 0.0
  %v4096 = vpack.c.bf16 %v2632, %v2630
  %v4097 = vpack.c.bf16 %v2636, %v2634
  %v4098 = vpack.c.bf16 %v2640, %v2638
  %v4099 = vpack.c.bf16 %v2660, 0.0
  %v4100 = vpack.c.bf16 %v2664, %v2662
  %v4101 = vpack.c.bf16 %v2668, %v2666
  %v4102 = vpack.c.bf16 %v2672, %v2670
  %v4103 = vpack.c.bf16 %v2692, 0.0
  %v4104 = vpack.c.bf16 %v2696, %v2694
  %v4105 = vpack.c.bf16 %v2700, %v2698
  %v4106 = vpack.c.bf16 %v2704, %v2702
  %v4107 = vpack.c.bf16 %v2724, 0.0
  %v4108 = vpack.c.bf16 %v2728, %v2726
  %v4109 = vpack.c.bf16 %v2732, %v2730
  %v4110 = vpack.c.bf16 %v2736, %v2734
  %s4111 = scalar_lea.vmem %s2, 64
  %v4112 = vld [vmem:[%s4111] sm:$0xf]
  %v4113 = vld [vmem:[%s4111 + $0x4] sm:$0xf]
  %v4114 = vld [vmem:[%s4111 + $0x8] sm:$0xf]
  %v4115 = vld [vmem:[%s4111 + $0xc] sm:$0xf]
  %v4120 = vunpack.c.l.b16 %v4112
  %v4121 = vunpack.c.l.b16 %v4113
  %v4122 = vunpack.c.l.b16 %v4114
  %v4123 = vunpack.c.l.b16 %v4115
  %v4124 = vpack.c.b16 %v4121, %v4120
  %v4125 = vpack.c.b16 %v4123, %v4122
  %v4129 = vsel %vm2833, %v4079, 0
  %v4132 = vsel %vm2833, %v4080, 0
  %v4135 = vsel %vm2833, %v4081, 0
  %v4138 = vsel %vm2833, %v4082, 0
  %v4141 = vsel %vm2833, %v4083, 0
  %v4144 = vsel %vm2833, %v4084, 0
  %v4147 = vsel %vm2833, %v4085, 0
  %v4150 = vsel %vm2833, %v4086, 0
  %v4153 = vsel %vm2833, %v4087, 0
  %v4156 = vsel %vm2833, %v4088, 0
  %v4159 = vsel %vm2833, %v4089, 0
  %v4162 = vsel %vm2833, %v4090, 0
  %v4165 = vsel %vm2833, %v4091, 0
  %v4168 = vsel %vm2833, %v4092, 0
  %v4171 = vsel %vm2833, %v4093, 0
  %v4174 = vsel %vm2833, %v4094, 0
  %v4177 = vsel %vm2833, %v4095, 0
  %v4180 = vsel %vm2833, %v4096, 0
  %v4183 = vsel %vm2833, %v4097, 0
  %v4186 = vsel %vm2833, %v4098, 0
  %v4189 = vsel %vm2833, %v4099, 0
  %v4192 = vsel %vm2833, %v4100, 0
  %v4195 = vsel %vm2833, %v4101, 0
  %v4198 = vsel %vm2833, %v4102, 0
  %v4201 = vsel %vm2833, %v4103, 0
  %v4204 = vsel %vm2833, %v4104, 0
  %v4207 = vsel %vm2833, %v4105, 0
  %v4210 = vsel %vm2833, %v4106, 0
  %v4213 = vsel %vm2833, %v4107, 0
  %v4216 = vsel %vm2833, %v4108, 0
  %v4219 = vsel %vm2833, %v4109, 0
  %v4222 = vsel %vm2833, %v4110, 0
  %4224 = vmatpush.bf16.msra.mxu0 0
  %4225 = vmatpush.bf16.msra.mxu0 0
  %4226 = vmatpush.bf16.msra.mxu0 0
  %4227 = vmatpush.bf16.msra.mxu0 0
  %4228 = vmatpush.bf16.msra.mxu0 0
  %4229 = vmatpush.bf16.msra.mxu0 0
  %4230 = vmatpush.bf16.msra.mxu0 %v4125
  %4231 = vmatpush.bf16.msra.mxu0 %v4124
  %4232 = vmatmul.bf16.gmra.mxu0 %v4129
  %v4233 = vpop.f32.mrf.mxu0
  %v4234 = vadd.f32 0.0, %v4233
  %v4235 = vpop.f32.mrf.mxu0
  %v4236 = vadd.f32 0.0, %v4235
  %4237 = vmatmul.bf16.gmra.mxu0 %v4132
  %v4238 = vpop.f32.mrf.mxu0
  %v4239 = vadd.f32 0.0, %v4238
  %v4240 = vpop.f32.mrf.mxu0
  %v4241 = vadd.f32 0.0, %v4240
  %4242 = vmatmul.bf16.gmra.mxu0 %v4135
  %v4243 = vpop.f32.mrf.mxu0
  %v4244 = vadd.f32 0.0, %v4243
  %v4245 = vpop.f32.mrf.mxu0
  %v4246 = vadd.f32 0.0, %v4245
  %4247 = vmatmul.bf16.gmra.mxu0 %v4138
  %v4248 = vpop.f32.mrf.mxu0
  %v4249 = vadd.f32 0.0, %v4248
  %v4250 = vpop.f32.mrf.mxu0
  %v4251 = vadd.f32 0.0, %v4250
  %4252 = vmatmul.bf16.gmra.mxu0 %v4141
  %v4253 = vpop.f32.mrf.mxu0
  %v4254 = vadd.f32 0.0, %v4253
  %v4255 = vpop.f32.mrf.mxu0
  %v4256 = vadd.f32 0.0, %v4255
  %4257 = vmatmul.bf16.gmra.mxu0 %v4144
  %v4258 = vpop.f32.mrf.mxu0
  %v4259 = vadd.f32 0.0, %v4258
  %v4260 = vpop.f32.mrf.mxu0
  %v4261 = vadd.f32 0.0, %v4260
  %4262 = vmatmul.bf16.gmra.mxu0 %v4147
  %v4263 = vpop.f32.mrf.mxu0
  %v4264 = vadd.f32 0.0, %v4263
  %v4265 = vpop.f32.mrf.mxu0
  %v4266 = vadd.f32 0.0, %v4265
  %4267 = vmatmul.bf16.gmra.mxu0 %v4150
  %v4268 = vpop.f32.mrf.mxu0
  %v4269 = vadd.f32 0.0, %v4268
  %v4270 = vpop.f32.mrf.mxu0
  %v4271 = vadd.f32 0.0, %v4270
  %4272 = vmatmul.bf16.gmra.mxu0 %v4153
  %v4273 = vpop.f32.mrf.mxu0
  %v4274 = vadd.f32 0.0, %v4273
  %v4275 = vpop.f32.mrf.mxu0
  %v4276 = vadd.f32 0.0, %v4275
  %4277 = vmatmul.bf16.gmra.mxu0 %v4156
  %v4278 = vpop.f32.mrf.mxu0
  %v4279 = vadd.f32 0.0, %v4278
  %v4280 = vpop.f32.mrf.mxu0
  %v4281 = vadd.f32 0.0, %v4280
  %4282 = vmatmul.bf16.gmra.mxu0 %v4159
  %v4283 = vpop.f32.mrf.mxu0
  %v4284 = vadd.f32 0.0, %v4283
  %v4285 = vpop.f32.mrf.mxu0
  %v4286 = vadd.f32 0.0, %v4285
  %4287 = vmatmul.bf16.gmra.mxu0 %v4162
  %v4288 = vpop.f32.mrf.mxu0
  %v4289 = vadd.f32 0.0, %v4288
  %v4290 = vpop.f32.mrf.mxu0
  %v4291 = vadd.f32 0.0, %v4290
  %4292 = vmatmul.bf16.gmra.mxu0 %v4165
  %v4293 = vpop.f32.mrf.mxu0
  %v4294 = vadd.f32 0.0, %v4293
  %v4295 = vpop.f32.mrf.mxu0
  %v4296 = vadd.f32 0.0, %v4295
  %4297 = vmatmul.bf16.gmra.mxu0 %v4168
  %v4298 = vpop.f32.mrf.mxu0
  %v4299 = vadd.f32 0.0, %v4298
  %v4300 = vpop.f32.mrf.mxu0
  %v4301 = vadd.f32 0.0, %v4300
  %4302 = vmatmul.bf16.gmra.mxu0 %v4171
  %v4303 = vpop.f32.mrf.mxu0
  %v4304 = vadd.f32 0.0, %v4303
  %v4305 = vpop.f32.mrf.mxu0
  %v4306 = vadd.f32 0.0, %v4305
  %4307 = vmatmul.bf16.gmra.mxu0 %v4174
  %v4308 = vpop.f32.mrf.mxu0
  %v4309 = vadd.f32 0.0, %v4308
  %v4310 = vpop.f32.mrf.mxu0
  %v4311 = vadd.f32 0.0, %v4310
  %4312 = vmatmul.bf16.gmra.mxu0 %v4177
  %v4313 = vpop.f32.mrf.mxu0
  %v4314 = vadd.f32 0.0, %v4313
  %v4315 = vpop.f32.mrf.mxu0
  %v4316 = vadd.f32 0.0, %v4315
  %4317 = vmatmul.bf16.gmra.mxu0 %v4180
  %v4318 = vpop.f32.mrf.mxu0
  %v4319 = vadd.f32 0.0, %v4318
  %v4320 = vpop.f32.mrf.mxu0
  %v4321 = vadd.f32 0.0, %v4320
  %4322 = vmatmul.bf16.gmra.mxu0 %v4183
  %v4323 = vpop.f32.mrf.mxu0
  %v4324 = vadd.f32 0.0, %v4323
  %v4325 = vpop.f32.mrf.mxu0
  %v4326 = vadd.f32 0.0, %v4325
  %4327 = vmatmul.bf16.gmra.mxu0 %v4186
  %v4328 = vpop.f32.mrf.mxu0
  %v4329 = vadd.f32 0.0, %v4328
  %v4330 = vpop.f32.mrf.mxu0
  %v4331 = vadd.f32 0.0, %v4330
  %4332 = vmatmul.bf16.gmra.mxu0 %v4189
  %v4333 = vpop.f32.mrf.mxu0
  %v4334 = vadd.f32 0.0, %v4333
  %v4335 = vpop.f32.mrf.mxu0
  %v4336 = vadd.f32 0.0, %v4335
  %4337 = vmatmul.bf16.gmra.mxu0 %v4192
  %v4338 = vpop.f32.mrf.mxu0
  %v4339 = vadd.f32 0.0, %v4338
  %v4340 = vpop.f32.mrf.mxu0
  %v4341 = vadd.f32 0.0, %v4340
  %4342 = vmatmul.bf16.gmra.mxu0 %v4195
  %v4343 = vpop.f32.mrf.mxu0
  %v4344 = vadd.f32 0.0, %v4343
  %v4345 = vpop.f32.mrf.mxu0
  %v4346 = vadd.f32 0.0, %v4345
  %4347 = vmatmul.bf16.gmra.mxu0 %v4198
  %v4348 = vpop.f32.mrf.mxu0
  %v4349 = vadd.f32 0.0, %v4348
  %v4350 = vpop.f32.mrf.mxu0
  %v4351 = vadd.f32 0.0, %v4350
  %4352 = vmatmul.bf16.gmra.mxu0 %v4201
  %v4353 = vpop.f32.mrf.mxu0
  %v4354 = vadd.f32 0.0, %v4353
  %v4355 = vpop.f32.mrf.mxu0
  %v4356 = vadd.f32 0.0, %v4355
  %4357 = vmatmul.bf16.gmra.mxu0 %v4204
  %v4358 = vpop.f32.mrf.mxu0
  %v4359 = vadd.f32 0.0, %v4358
  %v4360 = vpop.f32.mrf.mxu0
  %v4361 = vadd.f32 0.0, %v4360
  %4362 = vmatmul.bf16.gmra.mxu0 %v4207
  %v4363 = vpop.f32.mrf.mxu0
  %v4364 = vadd.f32 0.0, %v4363
  %v4365 = vpop.f32.mrf.mxu0
  %v4366 = vadd.f32 0.0, %v4365
  %4367 = vmatmul.bf16.gmra.mxu0 %v4210
  %v4368 = vpop.f32.mrf.mxu0
  %v4369 = vadd.f32 0.0, %v4368
  %v4370 = vpop.f32.mrf.mxu0
  %v4371 = vadd.f32 0.0, %v4370
  %4372 = vmatmul.bf16.gmra.mxu0 %v4213
  %v4373 = vpop.f32.mrf.mxu0
  %v4374 = vadd.f32 0.0, %v4373
  %v4375 = vpop.f32.mrf.mxu0
  %v4376 = vadd.f32 0.0, %v4375
  %4377 = vmatmul.bf16.gmra.mxu0 %v4216
  %v4378 = vpop.f32.mrf.mxu0
  %v4379 = vadd.f32 0.0, %v4378
  %v4380 = vpop.f32.mrf.mxu0
  %v4381 = vadd.f32 0.0, %v4380
  %4382 = vmatmul.bf16.gmra.mxu0 %v4219
  %v4383 = vpop.f32.mrf.mxu0
  %v4384 = vadd.f32 0.0, %v4383
  %v4385 = vpop.f32.mrf.mxu0
  %v4386 = vadd.f32 0.0, %v4385
  %4387 = vmatmul.bf16.gmra.mxu0 %v4222
  %v4388 = vpop.f32.mrf.mxu0
  %v4389 = vadd.f32 0.0, %v4388
  %v4390 = vpop.f32.mrf.mxu0
  %v4391 = vadd.f32 0.0, %v4390
  %4392 = vdwg.mxu0
  %v4393 = vadd.f32 %v4015, %v4234
  %v4394 = vadd.f32 %v4016, %v4236
  %v4395 = vadd.f32 %v4017, %v4239
  %v4396 = vadd.f32 %v4018, %v4241
  %v4397 = vadd.f32 %v4019, %v4244
  %v4398 = vadd.f32 %v4020, %v4246
  %v4399 = vadd.f32 %v4021, %v4249
  %v4400 = vadd.f32 %v4022, %v4251
  %v4401 = vadd.f32 %v4023, %v4254
  %v4402 = vadd.f32 %v4024, %v4256
  %v4403 = vadd.f32 %v4025, %v4259
  %v4404 = vadd.f32 %v4026, %v4261
  %v4405 = vadd.f32 %v4027, %v4264
  %v4406 = vadd.f32 %v4028, %v4266
  %v4407 = vadd.f32 %v4029, %v4269
  %v4408 = vadd.f32 %v4030, %v4271
  %v4409 = vadd.f32 %v4031, %v4274
  %v4410 = vadd.f32 %v4032, %v4276
  %v4411 = vadd.f32 %v4033, %v4279
  %v4412 = vadd.f32 %v4034, %v4281
  %v4413 = vadd.f32 %v4035, %v4284
  %v4414 = vadd.f32 %v4036, %v4286
  %v4415 = vadd.f32 %v4037, %v4289
  %v4416 = vadd.f32 %v4038, %v4291
  %v4417 = vadd.f32 %v4039, %v4294
  %v4418 = vadd.f32 %v4040, %v4296
  %v4419 = vadd.f32 %v4041, %v4299
  %v4420 = vadd.f32 %v4042, %v4301
  %v4421 = vadd.f32 %v4043, %v4304
  %v4422 = vadd.f32 %v4044, %v4306
  %v4423 = vadd.f32 %v4045, %v4309
  %v4424 = vadd.f32 %v4046, %v4311
  %v4425 = vadd.f32 %v4047, %v4314
  %v4426 = vadd.f32 %v4048, %v4316
  %v4427 = vadd.f32 %v4049, %v4319
  %v4428 = vadd.f32 %v4050, %v4321
  %v4429 = vadd.f32 %v4051, %v4324
  %v4430 = vadd.f32 %v4052, %v4326
  %v4431 = vadd.f32 %v4053, %v4329
  %v4432 = vadd.f32 %v4054, %v4331
  %v4433 = vadd.f32 %v4055, %v4334
  %v4434 = vadd.f32 %v4056, %v4336
  %v4435 = vadd.f32 %v4057, %v4339
  %v4436 = vadd.f32 %v4058, %v4341
  %v4437 = vadd.f32 %v4059, %v4344
  %v4438 = vadd.f32 %v4060, %v4346
  %v4439 = vadd.f32 %v4061, %v4349
  %v4440 = vadd.f32 %v4062, %v4351
  %v4441 = vadd.f32 %v4063, %v4354
  %v4442 = vadd.f32 %v4064, %v4356
  %v4443 = vadd.f32 %v4065, %v4359
  %v4444 = vadd.f32 %v4066, %v4361
  %v4445 = vadd.f32 %v4067, %v4364
  %v4446 = vadd.f32 %v4068, %v4366
  %v4447 = vadd.f32 %v4069, %v4369
  %v4448 = vadd.f32 %v4070, %v4371
  %v4449 = vadd.f32 %v4071, %v4374
  %v4450 = vadd.f32 %v4072, %v4376
  %v4451 = vadd.f32 %v4073, %v4379
  %v4452 = vadd.f32 %v4074, %v4381
  %v4453 = vadd.f32 %v4075, %v4384
  %v4454 = vadd.f32 %v4076, %v4386
  %v4455 = vadd.f32 %v4077, %v4389
  %v4456 = vadd.f32 %v4078, %v4391
  %v4457 = vpack.c.bf16 %v2501, %v2499
  %v4458 = vpack.c.bf16 %v2505, %v2503
  %v4459 = vpack.c.bf16 %v2509, %v2507
  %v4460 = vpack.c.bf16 %v2513, %v2511
  %v4461 = vpack.c.bf16 %v2533, %v2531
  %v4462 = vpack.c.bf16 %v2537, %v2535
  %v4463 = vpack.c.bf16 %v2541, %v2539
  %v4464 = vpack.c.bf16 %v2545, %v2543
  %v4465 = vpack.c.bf16 %v2565, %v2563
  %v4466 = vpack.c.bf16 %v2569, %v2567
  %v4467 = vpack.c.bf16 %v2573, %v2571
  %v4468 = vpack.c.bf16 %v2577, %v2575
  %v4469 = vpack.c.bf16 %v2597, %v2595
  %v4470 = vpack.c.bf16 %v2601, %v2599
  %v4471 = vpack.c.bf16 %v2605, %v2603
  %v4472 = vpack.c.bf16 %v2609, %v2607
  %v4473 = vpack.c.bf16 %v2629, %v2627
  %v4474 = vpack.c.bf16 %v2633, %v2631
  %v4475 = vpack.c.bf16 %v2637, %v2635
  %v4476 = vpack.c.bf16 %v2641, %v2639
  %v4477 = vpack.c.bf16 %v2661, %v2659
  %v4478 = vpack.c.bf16 %v2665, %v2663
  %v4479 = vpack.c.bf16 %v2669, %v2667
  %v4480 = vpack.c.bf16 %v2673, %v2671
  %v4481 = vpack.c.bf16 %v2693, %v2691
  %v4482 = vpack.c.bf16 %v2697, %v2695
  %v4483 = vpack.c.bf16 %v2701, %v2699
  %v4484 = vpack.c.bf16 %v2705, %v2703
  %v4485 = vpack.c.bf16 %v2725, %v2723
  %v4486 = vpack.c.bf16 %v2729, %v2727
  %v4487 = vpack.c.bf16 %v2733, %v2731
  %v4488 = vpack.c.bf16 %v2737, %v2735
  %s4489 = scalar_lea.vmem %s2, 80
  %v4490 = vld [vmem:[%s4489] sm:$0xf]
  %v4491 = vld [vmem:[%s4489 + $0x4] sm:$0xf]
  %v4492 = vld [vmem:[%s4489 + $0x8] sm:$0xf]
  %v4493 = vld [vmem:[%s4489 + $0xc] sm:$0xf]
  %v4498 = vunpack.c.l.b16 %v4490
  %v4499 = vunpack.c.l.b16 %v4491
  %v4500 = vunpack.c.l.b16 %v4492
  %v4501 = vunpack.c.l.b16 %v4493
  %v4502 = vpack.c.b16 %v4499, %v4498
  %v4503 = vpack.c.b16 %v4501, %v4500
  %v4507 = vsel %vm2833, %v4457, 0
  %v4510 = vsel %vm2833, %v4458, 0
  %v4513 = vsel %vm2833, %v4459, 0
  %v4516 = vsel %vm2833, %v4460, 0
  %v4519 = vsel %vm2833, %v4461, 0
  %v4522 = vsel %vm2833, %v4462, 0
  %v4525 = vsel %vm2833, %v4463, 0
  %v4528 = vsel %vm2833, %v4464, 0
  %v4531 = vsel %vm2833, %v4465, 0
  %v4534 = vsel %vm2833, %v4466, 0
  %v4537 = vsel %vm2833, %v4467, 0
  %v4540 = vsel %vm2833, %v4468, 0
  %v4543 = vsel %vm2833, %v4469, 0
  %v4546 = vsel %vm2833, %v4470, 0
  %v4549 = vsel %vm2833, %v4471, 0
  %v4552 = vsel %vm2833, %v4472, 0
  %v4555 = vsel %vm2833, %v4473, 0
  %v4558 = vsel %vm2833, %v4474, 0
  %v4561 = vsel %vm2833, %v4475, 0
  %v4564 = vsel %vm2833, %v4476, 0
  %v4567 = vsel %vm2833, %v4477, 0
  %v4570 = vsel %vm2833, %v4478, 0
  %v4573 = vsel %vm2833, %v4479, 0
  %v4576 = vsel %vm2833, %v4480, 0
  %v4579 = vsel %vm2833, %v4481, 0
  %v4582 = vsel %vm2833, %v4482, 0
  %v4585 = vsel %vm2833, %v4483, 0
  %v4588 = vsel %vm2833, %v4484, 0
  %v4591 = vsel %vm2833, %v4485, 0
  %v4594 = vsel %vm2833, %v4486, 0
  %v4597 = vsel %vm2833, %v4487, 0
  %v4600 = vsel %vm2833, %v4488, 0
  %4602 = vmatpush.bf16.msra.mxu0 0
  %4603 = vmatpush.bf16.msra.mxu0 0
  %4604 = vmatpush.bf16.msra.mxu0 0
  %4605 = vmatpush.bf16.msra.mxu0 0
  %4606 = vmatpush.bf16.msra.mxu0 0
  %4607 = vmatpush.bf16.msra.mxu0 0
  %4608 = vmatpush.bf16.msra.mxu0 %v4503
  %4609 = vmatpush.bf16.msra.mxu0 %v4502
  %4610 = vmatmul.bf16.gmra.mxu0 %v4507
  %v4611 = vpop.f32.mrf.mxu0
  %v4612 = vadd.f32 0.0, %v4611
  %v4613 = vpop.f32.mrf.mxu0
  %v4614 = vadd.f32 0.0, %v4613
  %4615 = vmatmul.bf16.gmra.mxu0 %v4510
  %v4616 = vpop.f32.mrf.mxu0
  %v4617 = vadd.f32 0.0, %v4616
  %v4618 = vpop.f32.mrf.mxu0
  %v4619 = vadd.f32 0.0, %v4618
  %4620 = vmatmul.bf16.gmra.mxu0 %v4513
  %v4621 = vpop.f32.mrf.mxu0
  %v4622 = vadd.f32 0.0, %v4621
  %v4623 = vpop.f32.mrf.mxu0
  %v4624 = vadd.f32 0.0, %v4623
  %4625 = vmatmul.bf16.gmra.mxu0 %v4516
  %v4626 = vpop.f32.mrf.mxu0
  %v4627 = vadd.f32 0.0, %v4626
  %v4628 = vpop.f32.mrf.mxu0
  %v4629 = vadd.f32 0.0, %v4628
  %4630 = vmatmul.bf16.gmra.mxu0 %v4519
  %v4631 = vpop.f32.mrf.mxu0
  %v4632 = vadd.f32 0.0, %v4631
  %v4633 = vpop.f32.mrf.mxu0
  %v4634 = vadd.f32 0.0, %v4633
  %4635 = vmatmul.bf16.gmra.mxu0 %v4522
  %v4636 = vpop.f32.mrf.mxu0
  %v4637 = vadd.f32 0.0, %v4636
  %v4638 = vpop.f32.mrf.mxu0
  %v4639 = vadd.f32 0.0, %v4638
  %4640 = vmatmul.bf16.gmra.mxu0 %v4525
  %v4641 = vpop.f32.mrf.mxu0
  %v4642 = vadd.f32 0.0, %v4641
  %v4643 = vpop.f32.mrf.mxu0
  %v4644 = vadd.f32 0.0, %v4643
  %4645 = vmatmul.bf16.gmra.mxu0 %v4528
  %v4646 = vpop.f32.mrf.mxu0
  %v4647 = vadd.f32 0.0, %v4646
  %v4648 = vpop.f32.mrf.mxu0
  %v4649 = vadd.f32 0.0, %v4648
  %4650 = vmatmul.bf16.gmra.mxu0 %v4531
  %v4651 = vpop.f32.mrf.mxu0
  %v4652 = vadd.f32 0.0, %v4651
  %v4653 = vpop.f32.mrf.mxu0
  %v4654 = vadd.f32 0.0, %v4653
  %4655 = vmatmul.bf16.gmra.mxu0 %v4534
  %v4656 = vpop.f32.mrf.mxu0
  %v4657 = vadd.f32 0.0, %v4656
  %v4658 = vpop.f32.mrf.mxu0
  %v4659 = vadd.f32 0.0, %v4658
  %4660 = vmatmul.bf16.gmra.mxu0 %v4537
  %v4661 = vpop.f32.mrf.mxu0
  %v4662 = vadd.f32 0.0, %v4661
  %v4663 = vpop.f32.mrf.mxu0
  %v4664 = vadd.f32 0.0, %v4663
  %4665 = vmatmul.bf16.gmra.mxu0 %v4540
  %v4666 = vpop.f32.mrf.mxu0
  %v4667 = vadd.f32 0.0, %v4666
  %v4668 = vpop.f32.mrf.mxu0
  %v4669 = vadd.f32 0.0, %v4668
  %4670 = vmatmul.bf16.gmra.mxu0 %v4543
  %v4671 = vpop.f32.mrf.mxu0
  %v4672 = vadd.f32 0.0, %v4671
  %v4673 = vpop.f32.mrf.mxu0
  %v4674 = vadd.f32 0.0, %v4673
  %4675 = vmatmul.bf16.gmra.mxu0 %v4546
  %v4676 = vpop.f32.mrf.mxu0
  %v4677 = vadd.f32 0.0, %v4676
  %v4678 = vpop.f32.mrf.mxu0
  %v4679 = vadd.f32 0.0, %v4678
  %4680 = vmatmul.bf16.gmra.mxu0 %v4549
  %v4681 = vpop.f32.mrf.mxu0
  %v4682 = vadd.f32 0.0, %v4681
  %v4683 = vpop.f32.mrf.mxu0
  %v4684 = vadd.f32 0.0, %v4683
  %4685 = vmatmul.bf16.gmra.mxu0 %v4552
  %v4686 = vpop.f32.mrf.mxu0
  %v4687 = vadd.f32 0.0, %v4686
  %v4688 = vpop.f32.mrf.mxu0
  %v4689 = vadd.f32 0.0, %v4688
  %4690 = vmatmul.bf16.gmra.mxu0 %v4555
  %v4691 = vpop.f32.mrf.mxu0
  %v4692 = vadd.f32 0.0, %v4691
  %v4693 = vpop.f32.mrf.mxu0
  %v4694 = vadd.f32 0.0, %v4693
  %4695 = vmatmul.bf16.gmra.mxu0 %v4558
  %v4696 = vpop.f32.mrf.mxu0
  %v4697 = vadd.f32 0.0, %v4696
  %v4698 = vpop.f32.mrf.mxu0
  %v4699 = vadd.f32 0.0, %v4698
  %4700 = vmatmul.bf16.gmra.mxu0 %v4561
  %v4701 = vpop.f32.mrf.mxu0
  %v4702 = vadd.f32 0.0, %v4701
  %v4703 = vpop.f32.mrf.mxu0
  %v4704 = vadd.f32 0.0, %v4703
  %4705 = vmatmul.bf16.gmra.mxu0 %v4564
  %v4706 = vpop.f32.mrf.mxu0
  %v4707 = vadd.f32 0.0, %v4706
  %v4708 = vpop.f32.mrf.mxu0
  %v4709 = vadd.f32 0.0, %v4708
  %4710 = vmatmul.bf16.gmra.mxu0 %v4567
  %v4711 = vpop.f32.mrf.mxu0
  %v4712 = vadd.f32 0.0, %v4711
  %v4713 = vpop.f32.mrf.mxu0
  %v4714 = vadd.f32 0.0, %v4713
  %4715 = vmatmul.bf16.gmra.mxu0 %v4570
  %v4716 = vpop.f32.mrf.mxu0
  %v4717 = vadd.f32 0.0, %v4716
  %v4718 = vpop.f32.mrf.mxu0
  %v4719 = vadd.f32 0.0, %v4718
  %4720 = vmatmul.bf16.gmra.mxu0 %v4573
  %v4721 = vpop.f32.mrf.mxu0
  %v4722 = vadd.f32 0.0, %v4721
  %v4723 = vpop.f32.mrf.mxu0
  %v4724 = vadd.f32 0.0, %v4723
  %4725 = vmatmul.bf16.gmra.mxu0 %v4576
  %v4726 = vpop.f32.mrf.mxu0
  %v4727 = vadd.f32 0.0, %v4726
  %v4728 = vpop.f32.mrf.mxu0
  %v4729 = vadd.f32 0.0, %v4728
  %4730 = vmatmul.bf16.gmra.mxu0 %v4579
  %v4731 = vpop.f32.mrf.mxu0
  %v4732 = vadd.f32 0.0, %v4731
  %v4733 = vpop.f32.mrf.mxu0
  %v4734 = vadd.f32 0.0, %v4733
  %4735 = vmatmul.bf16.gmra.mxu0 %v4582
  %v4736 = vpop.f32.mrf.mxu0
  %v4737 = vadd.f32 0.0, %v4736
  %v4738 = vpop.f32.mrf.mxu0
  %v4739 = vadd.f32 0.0, %v4738
  %4740 = vmatmul.bf16.gmra.mxu0 %v4585
  %v4741 = vpop.f32.mrf.mxu0
  %v4742 = vadd.f32 0.0, %v4741
  %v4743 = vpop.f32.mrf.mxu0
  %v4744 = vadd.f32 0.0, %v4743
  %4745 = vmatmul.bf16.gmra.mxu0 %v4588
  %v4746 = vpop.f32.mrf.mxu0
  %v4747 = vadd.f32 0.0, %v4746
  %v4748 = vpop.f32.mrf.mxu0
  %v4749 = vadd.f32 0.0, %v4748
  %4750 = vmatmul.bf16.gmra.mxu0 %v4591
  %v4751 = vpop.f32.mrf.mxu0
  %v4752 = vadd.f32 0.0, %v4751
  %v4753 = vpop.f32.mrf.mxu0
  %v4754 = vadd.f32 0.0, %v4753
  %4755 = vmatmul.bf16.gmra.mxu0 %v4594
  %v4756 = vpop.f32.mrf.mxu0
  %v4757 = vadd.f32 0.0, %v4756
  %v4758 = vpop.f32.mrf.mxu0
  %v4759 = vadd.f32 0.0, %v4758
  %4760 = vmatmul.bf16.gmra.mxu0 %v4597
  %v4761 = vpop.f32.mrf.mxu0
  %v4762 = vadd.f32 0.0, %v4761
  %v4763 = vpop.f32.mrf.mxu0
  %v4764 = vadd.f32 0.0, %v4763
  %4765 = vmatmul.bf16.gmra.mxu0 %v4600
  %v4766 = vpop.f32.mrf.mxu0
  %v4767 = vadd.f32 0.0, %v4766
  %v4768 = vpop.f32.mrf.mxu0
  %v4769 = vadd.f32 0.0, %v4768
  %4770 = vdwg.mxu0
  %v4771 = vadd.f32 %v4393, %v4612
  %v4772 = vadd.f32 %v4394, %v4614
  %v4773 = vadd.f32 %v4395, %v4617
  %v4774 = vadd.f32 %v4396, %v4619
  %v4775 = vadd.f32 %v4397, %v4622
  %v4776 = vadd.f32 %v4398, %v4624
  %v4777 = vadd.f32 %v4399, %v4627
  %v4778 = vadd.f32 %v4400, %v4629
  %v4779 = vadd.f32 %v4401, %v4632
  %v4780 = vadd.f32 %v4402, %v4634
  %v4781 = vadd.f32 %v4403, %v4637
  %v4782 = vadd.f32 %v4404, %v4639
  %v4783 = vadd.f32 %v4405, %v4642
  %v4784 = vadd.f32 %v4406, %v4644
  %v4785 = vadd.f32 %v4407, %v4647
  %v4786 = vadd.f32 %v4408, %v4649
  %v4787 = vadd.f32 %v4409, %v4652
  %v4788 = vadd.f32 %v4410, %v4654
  %v4789 = vadd.f32 %v4411, %v4657
  %v4790 = vadd.f32 %v4412, %v4659
  %v4791 = vadd.f32 %v4413, %v4662
  %v4792 = vadd.f32 %v4414, %v4664
  %v4793 = vadd.f32 %v4415, %v4667
  %v4794 = vadd.f32 %v4416, %v4669
  %v4795 = vadd.f32 %v4417, %v4672
  %v4796 = vadd.f32 %v4418, %v4674
  %v4797 = vadd.f32 %v4419, %v4677
  %v4798 = vadd.f32 %v4420, %v4679
  %v4799 = vadd.f32 %v4421, %v4682
  %v4800 = vadd.f32 %v4422, %v4684
  %v4801 = vadd.f32 %v4423, %v4687
  %v4802 = vadd.f32 %v4424, %v4689
  %v4803 = vadd.f32 %v4425, %v4692
  %v4804 = vadd.f32 %v4426, %v4694
  %v4805 = vadd.f32 %v4427, %v4697
  %v4806 = vadd.f32 %v4428, %v4699
  %v4807 = vadd.f32 %v4429, %v4702
  %v4808 = vadd.f32 %v4430, %v4704
  %v4809 = vadd.f32 %v4431, %v4707
  %v4810 = vadd.f32 %v4432, %v4709
  %v4811 = vadd.f32 %v4433, %v4712
  %v4812 = vadd.f32 %v4434, %v4714
  %v4813 = vadd.f32 %v4435, %v4717
  %v4814 = vadd.f32 %v4436, %v4719
  %v4815 = vadd.f32 %v4437, %v4722
  %v4816 = vadd.f32 %v4438, %v4724
  %v4817 = vadd.f32 %v4439, %v4727
  %v4818 = vadd.f32 %v4440, %v4729
  %v4819 = vadd.f32 %v4441, %v4732
  %v4820 = vadd.f32 %v4442, %v4734
  %v4821 = vadd.f32 %v4443, %v4737
  %v4822 = vadd.f32 %v4444, %v4739
  %v4823 = vadd.f32 %v4445, %v4742
  %v4824 = vadd.f32 %v4446, %v4744
  %v4825 = vadd.f32 %v4447, %v4747
  %v4826 = vadd.f32 %v4448, %v4749
  %v4827 = vadd.f32 %v4449, %v4752
  %v4828 = vadd.f32 %v4450, %v4754
  %v4829 = vadd.f32 %v4451, %v4757
  %v4830 = vadd.f32 %v4452, %v4759
  %v4831 = vadd.f32 %v4453, %v4762
  %v4832 = vadd.f32 %v4454, %v4764
  %v4833 = vadd.f32 %v4455, %v4767
  %v4834 = vadd.f32 %v4456, %v4769
  %v4835 = vpack.c.bf16 %v2502, %v2500
  %v4836 = vpack.c.bf16 %v2506, %v2504
  %v4837 = vpack.c.bf16 %v2510, %v2508
  %v4838 = vpack.c.bf16 %v2514, %v2512
  %v4839 = vpack.c.bf16 %v2534, %v2532
  %v4840 = vpack.c.bf16 %v2538, %v2536
  %v4841 = vpack.c.bf16 %v2542, %v2540
  %v4842 = vpack.c.bf16 %v2546, %v2544
  %v4843 = vpack.c.bf16 %v2566, %v2564
  %v4844 = vpack.c.bf16 %v2570, %v2568
  %v4845 = vpack.c.bf16 %v2574, %v2572
  %v4846 = vpack.c.bf16 %v2578, %v2576
  %v4847 = vpack.c.bf16 %v2598, %v2596
  %v4848 = vpack.c.bf16 %v2602, %v2600
  %v4849 = vpack.c.bf16 %v2606, %v2604
  %v4850 = vpack.c.bf16 %v2610, %v2608
  %v4851 = vpack.c.bf16 %v2630, %v2628
  %v4852 = vpack.c.bf16 %v2634, %v2632
  %v4853 = vpack.c.bf16 %v2638, %v2636
  %v4854 = vpack.c.bf16 %v2642, %v2640
  %v4855 = vpack.c.bf16 %v2662, %v2660
  %v4856 = vpack.c.bf16 %v2666, %v2664
  %v4857 = vpack.c.bf16 %v2670, %v2668
  %v4858 = vpack.c.bf16 %v2674, %v2672
  %v4859 = vpack.c.bf16 %v2694, %v2692
  %v4860 = vpack.c.bf16 %v2698, %v2696
  %v4861 = vpack.c.bf16 %v2702, %v2700
  %v4862 = vpack.c.bf16 %v2706, %v2704
  %v4863 = vpack.c.bf16 %v2726, %v2724
  %v4864 = vpack.c.bf16 %v2730, %v2728
  %v4865 = vpack.c.bf16 %v2734, %v2732
  %v4866 = vpack.c.bf16 %v2738, %v2736
  %s4867 = scalar_lea.vmem %s2, 96
  %v4868 = vld [vmem:[%s4867] sm:$0xf]
  %v4869 = vld [vmem:[%s4867 + $0x4] sm:$0xf]
  %v4870 = vld [vmem:[%s4867 + $0x8] sm:$0xf]
  %v4871 = vld [vmem:[%s4867 + $0xc] sm:$0xf]
  %v4876 = vunpack.c.l.b16 %v4868
  %v4877 = vunpack.c.l.b16 %v4869
  %v4878 = vunpack.c.l.b16 %v4870
  %v4879 = vunpack.c.l.b16 %v4871
  %v4880 = vpack.c.b16 %v4877, %v4876
  %v4881 = vpack.c.b16 %v4879, %v4878
  %v4885 = vsel %vm2833, %v4835, 0
  %v4888 = vsel %vm2833, %v4836, 0
  %v4891 = vsel %vm2833, %v4837, 0
  %v4894 = vsel %vm2833, %v4838, 0
  %v4897 = vsel %vm2833, %v4839, 0
  %v4900 = vsel %vm2833, %v4840, 0
  %v4903 = vsel %vm2833, %v4841, 0
  %v4906 = vsel %vm2833, %v4842, 0
  %v4909 = vsel %vm2833, %v4843, 0
  %v4912 = vsel %vm2833, %v4844, 0
  %v4915 = vsel %vm2833, %v4845, 0
  %v4918 = vsel %vm2833, %v4846, 0
  %v4921 = vsel %vm2833, %v4847, 0
  %v4924 = vsel %vm2833, %v4848, 0
  %v4927 = vsel %vm2833, %v4849, 0
  %v4930 = vsel %vm2833, %v4850, 0
  %v4933 = vsel %vm2833, %v4851, 0
  %v4936 = vsel %vm2833, %v4852, 0
  %v4939 = vsel %vm2833, %v4853, 0
  %v4942 = vsel %vm2833, %v4854, 0
  %v4945 = vsel %vm2833, %v4855, 0
  %v4948 = vsel %vm2833, %v4856, 0
  %v4951 = vsel %vm2833, %v4857, 0
  %v4954 = vsel %vm2833, %v4858, 0
  %v4957 = vsel %vm2833, %v4859, 0
  %v4960 = vsel %vm2833, %v4860, 0
  %v4963 = vsel %vm2833, %v4861, 0
  %v4966 = vsel %vm2833, %v4862, 0
  %v4969 = vsel %vm2833, %v4863, 0
  %v4972 = vsel %vm2833, %v4864, 0
  %v4975 = vsel %vm2833, %v4865, 0
  %v4978 = vsel %vm2833, %v4866, 0
  %4980 = vmatpush.bf16.msra.mxu0 0
  %4981 = vmatpush.bf16.msra.mxu0 0
  %4982 = vmatpush.bf16.msra.mxu0 0
  %4983 = vmatpush.bf16.msra.mxu0 0
  %4984 = vmatpush.bf16.msra.mxu0 0
  %4985 = vmatpush.bf16.msra.mxu0 0
  %4986 = vmatpush.bf16.msra.mxu0 %v4881
  %4987 = vmatpush.bf16.msra.mxu0 %v4880
  %4988 = vmatmul.bf16.gmra.mxu0 %v4885
  %v4989 = vpop.f32.mrf.mxu0
  %v4990 = vadd.f32 0.0, %v4989
  %v4991 = vpop.f32.mrf.mxu0
  %v4992 = vadd.f32 0.0, %v4991
  %4993 = vmatmul.bf16.gmra.mxu0 %v4888
  %v4994 = vpop.f32.mrf.mxu0
  %v4995 = vadd.f32 0.0, %v4994
  %v4996 = vpop.f32.mrf.mxu0
  %v4997 = vadd.f32 0.0, %v4996
  %4998 = vmatmul.bf16.gmra.mxu0 %v4891
  %v4999 = vpop.f32.mrf.mxu0
  %v5000 = vadd.f32 0.0, %v4999
  %v5001 = vpop.f32.mrf.mxu0
  %v5002 = vadd.f32 0.0, %v5001
  %5003 = vmatmul.bf16.gmra.mxu0 %v4894
  %v5004 = vpop.f32.mrf.mxu0
  %v5005 = vadd.f32 0.0, %v5004
  %v5006 = vpop.f32.mrf.mxu0
  %v5007 = vadd.f32 0.0, %v5006
  %5008 = vmatmul.bf16.gmra.mxu0 %v4897
  %v5009 = vpop.f32.mrf.mxu0
  %v5010 = vadd.f32 0.0, %v5009
  %v5011 = vpop.f32.mrf.mxu0
  %v5012 = vadd.f32 0.0, %v5011
  %5013 = vmatmul.bf16.gmra.mxu0 %v4900
  %v5014 = vpop.f32.mrf.mxu0
  %v5015 = vadd.f32 0.0, %v5014
  %v5016 = vpop.f32.mrf.mxu0
  %v5017 = vadd.f32 0.0, %v5016
  %5018 = vmatmul.bf16.gmra.mxu0 %v4903
  %v5019 = vpop.f32.mrf.mxu0
  %v5020 = vadd.f32 0.0, %v5019
  %v5021 = vpop.f32.mrf.mxu0
  %v5022 = vadd.f32 0.0, %v5021
  %5023 = vmatmul.bf16.gmra.mxu0 %v4906
  %v5024 = vpop.f32.mrf.mxu0
  %v5025 = vadd.f32 0.0, %v5024
  %v5026 = vpop.f32.mrf.mxu0
  %v5027 = vadd.f32 0.0, %v5026
  %5028 = vmatmul.bf16.gmra.mxu0 %v4909
  %v5029 = vpop.f32.mrf.mxu0
  %v5030 = vadd.f32 0.0, %v5029
  %v5031 = vpop.f32.mrf.mxu0
  %v5032 = vadd.f32 0.0, %v5031
  %5033 = vmatmul.bf16.gmra.mxu0 %v4912
  %v5034 = vpop.f32.mrf.mxu0
  %v5035 = vadd.f32 0.0, %v5034
  %v5036 = vpop.f32.mrf.mxu0
  %v5037 = vadd.f32 0.0, %v5036
  %5038 = vmatmul.bf16.gmra.mxu0 %v4915
  %v5039 = vpop.f32.mrf.mxu0
  %v5040 = vadd.f32 0.0, %v5039
  %v5041 = vpop.f32.mrf.mxu0
  %v5042 = vadd.f32 0.0, %v5041
  %5043 = vmatmul.bf16.gmra.mxu0 %v4918
  %v5044 = vpop.f32.mrf.mxu0
  %v5045 = vadd.f32 0.0, %v5044
  %v5046 = vpop.f32.mrf.mxu0
  %v5047 = vadd.f32 0.0, %v5046
  %5048 = vmatmul.bf16.gmra.mxu0 %v4921
  %v5049 = vpop.f32.mrf.mxu0
  %v5050 = vadd.f32 0.0, %v5049
  %v5051 = vpop.f32.mrf.mxu0
  %v5052 = vadd.f32 0.0, %v5051
  %5053 = vmatmul.bf16.gmra.mxu0 %v4924
  %v5054 = vpop.f32.mrf.mxu0
  %v5055 = vadd.f32 0.0, %v5054
  %v5056 = vpop.f32.mrf.mxu0
  %v5057 = vadd.f32 0.0, %v5056
  %5058 = vmatmul.bf16.gmra.mxu0 %v4927
  %v5059 = vpop.f32.mrf.mxu0
  %v5060 = vadd.f32 0.0, %v5059
  %v5061 = vpop.f32.mrf.mxu0
  %v5062 = vadd.f32 0.0, %v5061
  %5063 = vmatmul.bf16.gmra.mxu0 %v4930
  %v5064 = vpop.f32.mrf.mxu0
  %v5065 = vadd.f32 0.0, %v5064
  %v5066 = vpop.f32.mrf.mxu0
  %v5067 = vadd.f32 0.0, %v5066
  %5068 = vmatmul.bf16.gmra.mxu0 %v4933
  %v5069 = vpop.f32.mrf.mxu0
  %v5070 = vadd.f32 0.0, %v5069
  %v5071 = vpop.f32.mrf.mxu0
  %v5072 = vadd.f32 0.0, %v5071
  %5073 = vmatmul.bf16.gmra.mxu0 %v4936
  %v5074 = vpop.f32.mrf.mxu0
  %v5075 = vadd.f32 0.0, %v5074
  %v5076 = vpop.f32.mrf.mxu0
  %v5077 = vadd.f32 0.0, %v5076
  %5078 = vmatmul.bf16.gmra.mxu0 %v4939
  %v5079 = vpop.f32.mrf.mxu0
  %v5080 = vadd.f32 0.0, %v5079
  %v5081 = vpop.f32.mrf.mxu0
  %v5082 = vadd.f32 0.0, %v5081
  %5083 = vmatmul.bf16.gmra.mxu0 %v4942
  %v5084 = vpop.f32.mrf.mxu0
  %v5085 = vadd.f32 0.0, %v5084
  %v5086 = vpop.f32.mrf.mxu0
  %v5087 = vadd.f32 0.0, %v5086
  %5088 = vmatmul.bf16.gmra.mxu0 %v4945
  %v5089 = vpop.f32.mrf.mxu0
  %v5090 = vadd.f32 0.0, %v5089
  %v5091 = vpop.f32.mrf.mxu0
  %v5092 = vadd.f32 0.0, %v5091
  %5093 = vmatmul.bf16.gmra.mxu0 %v4948
  %v5094 = vpop.f32.mrf.mxu0
  %v5095 = vadd.f32 0.0, %v5094
  %v5096 = vpop.f32.mrf.mxu0
  %v5097 = vadd.f32 0.0, %v5096
  %5098 = vmatmul.bf16.gmra.mxu0 %v4951
  %v5099 = vpop.f32.mrf.mxu0
  %v5100 = vadd.f32 0.0, %v5099
  %v5101 = vpop.f32.mrf.mxu0
  %v5102 = vadd.f32 0.0, %v5101
  %5103 = vmatmul.bf16.gmra.mxu0 %v4954
  %v5104 = vpop.f32.mrf.mxu0
  %v5105 = vadd.f32 0.0, %v5104
  %v5106 = vpop.f32.mrf.mxu0
  %v5107 = vadd.f32 0.0, %v5106
  %5108 = vmatmul.bf16.gmra.mxu0 %v4957
  %v5109 = vpop.f32.mrf.mxu0
  %v5110 = vadd.f32 0.0, %v5109
  %v5111 = vpop.f32.mrf.mxu0
  %v5112 = vadd.f32 0.0, %v5111
  %5113 = vmatmul.bf16.gmra.mxu0 %v4960
  %v5114 = vpop.f32.mrf.mxu0
  %v5115 = vadd.f32 0.0, %v5114
  %v5116 = vpop.f32.mrf.mxu0
  %v5117 = vadd.f32 0.0, %v5116
  %5118 = vmatmul.bf16.gmra.mxu0 %v4963
  %v5119 = vpop.f32.mrf.mxu0
  %v5120 = vadd.f32 0.0, %v5119
  %v5121 = vpop.f32.mrf.mxu0
  %v5122 = vadd.f32 0.0, %v5121
  %5123 = vmatmul.bf16.gmra.mxu0 %v4966
  %v5124 = vpop.f32.mrf.mxu0
  %v5125 = vadd.f32 0.0, %v5124
  %v5126 = vpop.f32.mrf.mxu0
  %v5127 = vadd.f32 0.0, %v5126
  %5128 = vmatmul.bf16.gmra.mxu0 %v4969
  %v5129 = vpop.f32.mrf.mxu0
  %v5130 = vadd.f32 0.0, %v5129
  %v5131 = vpop.f32.mrf.mxu0
  %v5132 = vadd.f32 0.0, %v5131
  %5133 = vmatmul.bf16.gmra.mxu0 %v4972
  %v5134 = vpop.f32.mrf.mxu0
  %v5135 = vadd.f32 0.0, %v5134
  %v5136 = vpop.f32.mrf.mxu0
  %v5137 = vadd.f32 0.0, %v5136
  %5138 = vmatmul.bf16.gmra.mxu0 %v4975
  %v5139 = vpop.f32.mrf.mxu0
  %v5140 = vadd.f32 0.0, %v5139
  %v5141 = vpop.f32.mrf.mxu0
  %v5142 = vadd.f32 0.0, %v5141
  %5143 = vmatmul.bf16.gmra.mxu0 %v4978
  %v5144 = vpop.f32.mrf.mxu0
  %v5145 = vadd.f32 0.0, %v5144
  %v5146 = vpop.f32.mrf.mxu0
  %v5147 = vadd.f32 0.0, %v5146
  %5148 = vdwg.mxu0
  %v5149 = vadd.f32 %v4771, %v4990
  %v5150 = vadd.f32 %v4772, %v4992
  %v5151 = vadd.f32 %v4773, %v4995
  %v5152 = vadd.f32 %v4774, %v4997
  %v5153 = vadd.f32 %v4775, %v5000
  %v5154 = vadd.f32 %v4776, %v5002
  %v5155 = vadd.f32 %v4777, %v5005
  %v5156 = vadd.f32 %v4778, %v5007
  %v5157 = vadd.f32 %v4779, %v5010
  %v5158 = vadd.f32 %v4780, %v5012
  %v5159 = vadd.f32 %v4781, %v5015
  %v5160 = vadd.f32 %v4782, %v5017
  %v5161 = vadd.f32 %v4783, %v5020
  %v5162 = vadd.f32 %v4784, %v5022
  %v5163 = vadd.f32 %v4785, %v5025
  %v5164 = vadd.f32 %v4786, %v5027
  %v5165 = vadd.f32 %v4787, %v5030
  %v5166 = vadd.f32 %v4788, %v5032
  %v5167 = vadd.f32 %v4789, %v5035
  %v5168 = vadd.f32 %v4790, %v5037
  %v5169 = vadd.f32 %v4791, %v5040
  %v5170 = vadd.f32 %v4792, %v5042
  %v5171 = vadd.f32 %v4793, %v5045
  %v5172 = vadd.f32 %v4794, %v5047
  %v5173 = vadd.f32 %v4795, %v5050
  %v5174 = vadd.f32 %v4796, %v5052
  %v5175 = vadd.f32 %v4797, %v5055
  %v5176 = vadd.f32 %v4798, %v5057
  %v5177 = vadd.f32 %v4799, %v5060
  %v5178 = vadd.f32 %v4800, %v5062
  %v5179 = vadd.f32 %v4801, %v5065
  %v5180 = vadd.f32 %v4802, %v5067
  %v5181 = vadd.f32 %v4803, %v5070
  %v5182 = vadd.f32 %v4804, %v5072
  %v5183 = vadd.f32 %v4805, %v5075
  %v5184 = vadd.f32 %v4806, %v5077
  %v5185 = vadd.f32 %v4807, %v5080
  %v5186 = vadd.f32 %v4808, %v5082
  %v5187 = vadd.f32 %v4809, %v5085
  %v5188 = vadd.f32 %v4810, %v5087
  %v5189 = vadd.f32 %v4811, %v5090
  %v5190 = vadd.f32 %v4812, %v5092
  %v5191 = vadd.f32 %v4813, %v5095
  %v5192 = vadd.f32 %v4814, %v5097
  %v5193 = vadd.f32 %v4815, %v5100
  %v5194 = vadd.f32 %v4816, %v5102
  %v5195 = vadd.f32 %v4817, %v5105
  %v5196 = vadd.f32 %v4818, %v5107
  %v5197 = vadd.f32 %v4819, %v5110
  %v5198 = vadd.f32 %v4820, %v5112
  %v5199 = vadd.f32 %v4821, %v5115
  %v5200 = vadd.f32 %v4822, %v5117
  %v5201 = vadd.f32 %v4823, %v5120
  %v5202 = vadd.f32 %v4824, %v5122
  %v5203 = vadd.f32 %v4825, %v5125
  %v5204 = vadd.f32 %v4826, %v5127
  %v5205 = vadd.f32 %v4827, %v5130
  %v5206 = vadd.f32 %v4828, %v5132
  %v5207 = vadd.f32 %v4829, %v5135
  %v5208 = vadd.f32 %v4830, %v5137
  %v5209 = vadd.f32 %v4831, %v5140
  %v5210 = vadd.f32 %v4832, %v5142
  %v5211 = vadd.f32 %v4833, %v5145
  %v5212 = vadd.f32 %v4834, %v5147
  %v5213 = vpack.c.bf16 %v2503, %v2501
  %v5214 = vpack.c.bf16 %v2507, %v2505
  %v5215 = vpack.c.bf16 %v2511, %v2509
  %v5216 = vpack.c.bf16 0.0, %v2513
  %v5217 = vpack.c.bf16 %v2535, %v2533
  %v5218 = vpack.c.bf16 %v2539, %v2537
  %v5219 = vpack.c.bf16 %v2543, %v2541
  %v5220 = vpack.c.bf16 0.0, %v2545
  %v5221 = vpack.c.bf16 %v2567, %v2565
  %v5222 = vpack.c.bf16 %v2571, %v2569
  %v5223 = vpack.c.bf16 %v2575, %v2573
  %v5224 = vpack.c.bf16 0.0, %v2577
  %v5225 = vpack.c.bf16 %v2599, %v2597
  %v5226 = vpack.c.bf16 %v2603, %v2601
  %v5227 = vpack.c.bf16 %v2607, %v2605
  %v5228 = vpack.c.bf16 0.0, %v2609
  %v5229 = vpack.c.bf16 %v2631, %v2629
  %v5230 = vpack.c.bf16 %v2635, %v2633
  %v5231 = vpack.c.bf16 %v2639, %v2637
  %v5232 = vpack.c.bf16 0.0, %v2641
  %v5233 = vpack.c.bf16 %v2663, %v2661
  %v5234 = vpack.c.bf16 %v2667, %v2665
  %v5235 = vpack.c.bf16 %v2671, %v2669
  %v5236 = vpack.c.bf16 0.0, %v2673
  %v5237 = vpack.c.bf16 %v2695, %v2693
  %v5238 = vpack.c.bf16 %v2699, %v2697
  %v5239 = vpack.c.bf16 %v2703, %v2701
  %v5240 = vpack.c.bf16 0.0, %v2705
  %v5241 = vpack.c.bf16 %v2727, %v2725
  %v5242 = vpack.c.bf16 %v2731, %v2729
  %v5243 = vpack.c.bf16 %v2735, %v2733
  %v5244 = vpack.c.bf16 0.0, %v2737
  %s5245 = scalar_lea.vmem %s2, 112
  %v5246 = vld [vmem:[%s5245] sm:$0xf]
  %v5247 = vld [vmem:[%s5245 + $0x4] sm:$0xf]
  %v5248 = vld [vmem:[%s5245 + $0x8] sm:$0xf]
  %v5249 = vld [vmem:[%s5245 + $0xc] sm:$0xf]
  %v5254 = vunpack.c.l.b16 %v5246
  %v5255 = vunpack.c.l.b16 %v5247
  %v5256 = vunpack.c.l.b16 %v5248
  %v5257 = vunpack.c.l.b16 %v5249
  %v5258 = vpack.c.b16 %v5255, %v5254
  %v5259 = vpack.c.b16 %v5257, %v5256
  %v5263 = vsel %vm2833, %v5213, 0
  %v5266 = vsel %vm2833, %v5214, 0
  %v5269 = vsel %vm2833, %v5215, 0
  %v5272 = vsel %vm2833, %v5216, 0
  %v5275 = vsel %vm2833, %v5217, 0
  %v5278 = vsel %vm2833, %v5218, 0
  %v5281 = vsel %vm2833, %v5219, 0
  %v5284 = vsel %vm2833, %v5220, 0
  %v5287 = vsel %vm2833, %v5221, 0
  %v5290 = vsel %vm2833, %v5222, 0
  %v5293 = vsel %vm2833, %v5223, 0
  %v5296 = vsel %vm2833, %v5224, 0
  %v5299 = vsel %vm2833, %v5225, 0
  %v5302 = vsel %vm2833, %v5226, 0
  %v5305 = vsel %vm2833, %v5227, 0
  %v5308 = vsel %vm2833, %v5228, 0
  %v5311 = vsel %vm2833, %v5229, 0
  %v5314 = vsel %vm2833, %v5230, 0
  %v5317 = vsel %vm2833, %v5231, 0
  %v5320 = vsel %vm2833, %v5232, 0
  %v5323 = vsel %vm2833, %v5233, 0
  %v5326 = vsel %vm2833, %v5234, 0
  %v5329 = vsel %vm2833, %v5235, 0
  %v5332 = vsel %vm2833, %v5236, 0
  %v5335 = vsel %vm2833, %v5237, 0
  %v5338 = vsel %vm2833, %v5238, 0
  %v5341 = vsel %vm2833, %v5239, 0
  %v5344 = vsel %vm2833, %v5240, 0
  %v5347 = vsel %vm2833, %v5241, 0
  %v5350 = vsel %vm2833, %v5242, 0
  %v5353 = vsel %vm2833, %v5243, 0
  %v5356 = vsel %vm2833, %v5244, 0
  %5358 = vmatpush.bf16.msra.mxu0 0
  %5359 = vmatpush.bf16.msra.mxu0 0
  %5360 = vmatpush.bf16.msra.mxu0 0
  %5361 = vmatpush.bf16.msra.mxu0 0
  %5362 = vmatpush.bf16.msra.mxu0 0
  %5363 = vmatpush.bf16.msra.mxu0 0
  %5364 = vmatpush.bf16.msra.mxu0 %v5259
  %5365 = vmatpush.bf16.msra.mxu0 %v5258
  %5366 = vmatmul.bf16.gmra.mxu0 %v5263
  %v5367 = vpop.f32.mrf.mxu0
  %v5368 = vadd.f32 0.0, %v5367
  %v5369 = vpop.f32.mrf.mxu0
  %v5370 = vadd.f32 0.0, %v5369
  %5371 = vmatmul.bf16.gmra.mxu0 %v5266
  %v5372 = vpop.f32.mrf.mxu0
  %v5373 = vadd.f32 0.0, %v5372
  %v5374 = vpop.f32.mrf.mxu0
  %v5375 = vadd.f32 0.0, %v5374
  %5376 = vmatmul.bf16.gmra.mxu0 %v5269
  %v5377 = vpop.f32.mrf.mxu0
  %v5378 = vadd.f32 0.0, %v5377
  %v5379 = vpop.f32.mrf.mxu0
  %v5380 = vadd.f32 0.0, %v5379
  %5381 = vmatmul.bf16.gmra.mxu0 %v5272
  %v5382 = vpop.f32.mrf.mxu0
  %v5383 = vadd.f32 0.0, %v5382
  %v5384 = vpop.f32.mrf.mxu0
  %v5385 = vadd.f32 0.0, %v5384
  %5386 = vmatmul.bf16.gmra.mxu0 %v5275
  %v5387 = vpop.f32.mrf.mxu0
  %v5388 = vadd.f32 0.0, %v5387
  %v5389 = vpop.f32.mrf.mxu0
  %v5390 = vadd.f32 0.0, %v5389
  %5391 = vmatmul.bf16.gmra.mxu0 %v5278
  %v5392 = vpop.f32.mrf.mxu0
  %v5393 = vadd.f32 0.0, %v5392
  %v5394 = vpop.f32.mrf.mxu0
  %v5395 = vadd.f32 0.0, %v5394
  %5396 = vmatmul.bf16.gmra.mxu0 %v5281
  %v5397 = vpop.f32.mrf.mxu0
  %v5398 = vadd.f32 0.0, %v5397
  %v5399 = vpop.f32.mrf.mxu0
  %v5400 = vadd.f32 0.0, %v5399
  %5401 = vmatmul.bf16.gmra.mxu0 %v5284
  %v5402 = vpop.f32.mrf.mxu0
  %v5403 = vadd.f32 0.0, %v5402
  %v5404 = vpop.f32.mrf.mxu0
  %v5405 = vadd.f32 0.0, %v5404
  %5406 = vmatmul.bf16.gmra.mxu0 %v5287
  %v5407 = vpop.f32.mrf.mxu0
  %v5408 = vadd.f32 0.0, %v5407
  %v5409 = vpop.f32.mrf.mxu0
  %v5410 = vadd.f32 0.0, %v5409
  %5411 = vmatmul.bf16.gmra.mxu0 %v5290
  %v5412 = vpop.f32.mrf.mxu0
  %v5413 = vadd.f32 0.0, %v5412
  %v5414 = vpop.f32.mrf.mxu0
  %v5415 = vadd.f32 0.0, %v5414
  %5416 = vmatmul.bf16.gmra.mxu0 %v5293
  %v5417 = vpop.f32.mrf.mxu0
  %v5418 = vadd.f32 0.0, %v5417
  %v5419 = vpop.f32.mrf.mxu0
  %v5420 = vadd.f32 0.0, %v5419
  %5421 = vmatmul.bf16.gmra.mxu0 %v5296
  %v5422 = vpop.f32.mrf.mxu0
  %v5423 = vadd.f32 0.0, %v5422
  %v5424 = vpop.f32.mrf.mxu0
  %v5425 = vadd.f32 0.0, %v5424
  %5426 = vmatmul.bf16.gmra.mxu0 %v5299
  %v5427 = vpop.f32.mrf.mxu0
  %v5428 = vadd.f32 0.0, %v5427
  %v5429 = vpop.f32.mrf.mxu0
  %v5430 = vadd.f32 0.0, %v5429
  %5431 = vmatmul.bf16.gmra.mxu0 %v5302
  %v5432 = vpop.f32.mrf.mxu0
  %v5433 = vadd.f32 0.0, %v5432
  %v5434 = vpop.f32.mrf.mxu0
  %v5435 = vadd.f32 0.0, %v5434
  %5436 = vmatmul.bf16.gmra.mxu0 %v5305
  %v5437 = vpop.f32.mrf.mxu0
  %v5438 = vadd.f32 0.0, %v5437
  %v5439 = vpop.f32.mrf.mxu0
  %v5440 = vadd.f32 0.0, %v5439
  %5441 = vmatmul.bf16.gmra.mxu0 %v5308
  %v5442 = vpop.f32.mrf.mxu0
  %v5443 = vadd.f32 0.0, %v5442
  %v5444 = vpop.f32.mrf.mxu0
  %v5445 = vadd.f32 0.0, %v5444
  %5446 = vmatmul.bf16.gmra.mxu0 %v5311
  %v5447 = vpop.f32.mrf.mxu0
  %v5448 = vadd.f32 0.0, %v5447
  %v5449 = vpop.f32.mrf.mxu0
  %v5450 = vadd.f32 0.0, %v5449
  %5451 = vmatmul.bf16.gmra.mxu0 %v5314
  %v5452 = vpop.f32.mrf.mxu0
  %v5453 = vadd.f32 0.0, %v5452
  %v5454 = vpop.f32.mrf.mxu0
  %v5455 = vadd.f32 0.0, %v5454
  %5456 = vmatmul.bf16.gmra.mxu0 %v5317
  %v5457 = vpop.f32.mrf.mxu0
  %v5458 = vadd.f32 0.0, %v5457
  %v5459 = vpop.f32.mrf.mxu0
  %v5460 = vadd.f32 0.0, %v5459
  %5461 = vmatmul.bf16.gmra.mxu0 %v5320
  %v5462 = vpop.f32.mrf.mxu0
  %v5463 = vadd.f32 0.0, %v5462
  %v5464 = vpop.f32.mrf.mxu0
  %v5465 = vadd.f32 0.0, %v5464
  %5466 = vmatmul.bf16.gmra.mxu0 %v5323
  %v5467 = vpop.f32.mrf.mxu0
  %v5468 = vadd.f32 0.0, %v5467
  %v5469 = vpop.f32.mrf.mxu0
  %v5470 = vadd.f32 0.0, %v5469
  %5471 = vmatmul.bf16.gmra.mxu0 %v5326
  %v5472 = vpop.f32.mrf.mxu0
  %v5473 = vadd.f32 0.0, %v5472
  %v5474 = vpop.f32.mrf.mxu0
  %v5475 = vadd.f32 0.0, %v5474
  %5476 = vmatmul.bf16.gmra.mxu0 %v5329
  %v5477 = vpop.f32.mrf.mxu0
  %v5478 = vadd.f32 0.0, %v5477
  %v5479 = vpop.f32.mrf.mxu0
  %v5480 = vadd.f32 0.0, %v5479
  %5481 = vmatmul.bf16.gmra.mxu0 %v5332
  %v5482 = vpop.f32.mrf.mxu0
  %v5483 = vadd.f32 0.0, %v5482
  %v5484 = vpop.f32.mrf.mxu0
  %v5485 = vadd.f32 0.0, %v5484
  %5486 = vmatmul.bf16.gmra.mxu0 %v5335
  %v5487 = vpop.f32.mrf.mxu0
  %v5488 = vadd.f32 0.0, %v5487
  %v5489 = vpop.f32.mrf.mxu0
  %v5490 = vadd.f32 0.0, %v5489
  %5491 = vmatmul.bf16.gmra.mxu0 %v5338
  %v5492 = vpop.f32.mrf.mxu0
  %v5493 = vadd.f32 0.0, %v5492
  %v5494 = vpop.f32.mrf.mxu0
  %v5495 = vadd.f32 0.0, %v5494
  %5496 = vmatmul.bf16.gmra.mxu0 %v5341
  %v5497 = vpop.f32.mrf.mxu0
  %v5498 = vadd.f32 0.0, %v5497
  %v5499 = vpop.f32.mrf.mxu0
  %v5500 = vadd.f32 0.0, %v5499
  %5501 = vmatmul.bf16.gmra.mxu0 %v5344
  %v5502 = vpop.f32.mrf.mxu0
  %v5503 = vadd.f32 0.0, %v5502
  %v5504 = vpop.f32.mrf.mxu0
  %v5505 = vadd.f32 0.0, %v5504
  %5506 = vmatmul.bf16.gmra.mxu0 %v5347
  %v5507 = vpop.f32.mrf.mxu0
  %v5508 = vadd.f32 0.0, %v5507
  %v5509 = vpop.f32.mrf.mxu0
  %v5510 = vadd.f32 0.0, %v5509
  %5511 = vmatmul.bf16.gmra.mxu0 %v5350
  %v5512 = vpop.f32.mrf.mxu0
  %v5513 = vadd.f32 0.0, %v5512
  %v5514 = vpop.f32.mrf.mxu0
  %v5515 = vadd.f32 0.0, %v5514
  %5516 = vmatmul.bf16.gmra.mxu0 %v5353
  %v5517 = vpop.f32.mrf.mxu0
  %v5518 = vadd.f32 0.0, %v5517
  %v5519 = vpop.f32.mrf.mxu0
  %v5520 = vadd.f32 0.0, %v5519
  %5521 = vmatmul.bf16.gmra.mxu0 %v5356
  %v5522 = vpop.f32.mrf.mxu0
  %v5523 = vadd.f32 0.0, %v5522
  %v5524 = vpop.f32.mrf.mxu0
  %v5525 = vadd.f32 0.0, %v5524
  %5526 = vdwg.mxu0
  %v5527 = vadd.f32 %v5149, %v5368
  %v5528 = vadd.f32 %v5150, %v5370
  %v5529 = vadd.f32 %v5151, %v5373
  %v5530 = vadd.f32 %v5152, %v5375
  %v5531 = vadd.f32 %v5153, %v5378
  %v5532 = vadd.f32 %v5154, %v5380
  %v5533 = vadd.f32 %v5155, %v5383
  %v5534 = vadd.f32 %v5156, %v5385
  %v5535 = vadd.f32 %v5157, %v5388
  %v5536 = vadd.f32 %v5158, %v5390
  %v5537 = vadd.f32 %v5159, %v5393
  %v5538 = vadd.f32 %v5160, %v5395
  %v5539 = vadd.f32 %v5161, %v5398
  %v5540 = vadd.f32 %v5162, %v5400
  %v5541 = vadd.f32 %v5163, %v5403
  %v5542 = vadd.f32 %v5164, %v5405
  %v5543 = vadd.f32 %v5165, %v5408
  %v5544 = vadd.f32 %v5166, %v5410
  %v5545 = vadd.f32 %v5167, %v5413
  %v5546 = vadd.f32 %v5168, %v5415
  %v5547 = vadd.f32 %v5169, %v5418
  %v5548 = vadd.f32 %v5170, %v5420
  %v5549 = vadd.f32 %v5171, %v5423
  %v5550 = vadd.f32 %v5172, %v5425
  %v5551 = vadd.f32 %v5173, %v5428
  %v5552 = vadd.f32 %v5174, %v5430
  %v5553 = vadd.f32 %v5175, %v5433
  %v5554 = vadd.f32 %v5176, %v5435
  %v5555 = vadd.f32 %v5177, %v5438
  %v5556 = vadd.f32 %v5178, %v5440
  %v5557 = vadd.f32 %v5179, %v5443
  %v5558 = vadd.f32 %v5180, %v5445
  %v5559 = vadd.f32 %v5181, %v5448
  %v5560 = vadd.f32 %v5182, %v5450
  %v5561 = vadd.f32 %v5183, %v5453
  %v5562 = vadd.f32 %v5184, %v5455
  %v5563 = vadd.f32 %v5185, %v5458
  %v5564 = vadd.f32 %v5186, %v5460
  %v5565 = vadd.f32 %v5187, %v5463
  %v5566 = vadd.f32 %v5188, %v5465
  %v5567 = vadd.f32 %v5189, %v5468
  %v5568 = vadd.f32 %v5190, %v5470
  %v5569 = vadd.f32 %v5191, %v5473
  %v5570 = vadd.f32 %v5192, %v5475
  %v5571 = vadd.f32 %v5193, %v5478
  %v5572 = vadd.f32 %v5194, %v5480
  %v5573 = vadd.f32 %v5195, %v5483
  %v5574 = vadd.f32 %v5196, %v5485
  %v5575 = vadd.f32 %v5197, %v5488
  %v5576 = vadd.f32 %v5198, %v5490
  %v5577 = vadd.f32 %v5199, %v5493
  %v5578 = vadd.f32 %v5200, %v5495
  %v5579 = vadd.f32 %v5201, %v5498
  %v5580 = vadd.f32 %v5202, %v5500
  %v5581 = vadd.f32 %v5203, %v5503
  %v5582 = vadd.f32 %v5204, %v5505
  %v5583 = vadd.f32 %v5205, %v5508
  %v5584 = vadd.f32 %v5206, %v5510
  %v5585 = vadd.f32 %v5207, %v5513
  %v5586 = vadd.f32 %v5208, %v5515
  %v5587 = vadd.f32 %v5209, %v5518
  %v5588 = vadd.f32 %v5210, %v5520
  %v5589 = vadd.f32 %v5211, %v5523
  %v5590 = vadd.f32 %v5212, %v5525
  %v5591 = vpack.c.bf16 %v2740, 0.0
  %v5592 = vpack.c.bf16 %v2744, %v2742
  %v5593 = vpack.c.bf16 %v2748, %v2746
  %v5594 = vpack.c.bf16 %v2752, %v2750
  %s5595 = scalar_lea.vmem %s2, 128
  %v5596 = vld [vmem:[%s5595] sm:$0xf]
  %v5597 = vld [vmem:[%s5595 + $0x4] sm:$0xf]
  %v5598 = vld [vmem:[%s5595 + $0x8] sm:$0xf]
  %v5599 = vld [vmem:[%s5595 + $0xc] sm:$0xf]
  %v5604 = vunpack.c.l.b16 %v5596
  %v5605 = vunpack.c.l.b16 %v5597
  %v5606 = vunpack.c.l.b16 %v5598
  %v5607 = vunpack.c.l.b16 %v5599
  %v5608 = vpack.c.b16 %v5605, %v5604
  %v5609 = vpack.c.b16 %v5607, %v5606
  %v5613 = vsel %vm2833, %v5591, 0
  %v5616 = vsel %vm2833, %v5592, 0
  %v5619 = vsel %vm2833, %v5593, 0
  %v5622 = vsel %vm2833, %v5594, 0
  %5624 = vmatpush.bf16.msra.mxu0 0
  %5625 = vmatpush.bf16.msra.mxu0 0
  %5626 = vmatpush.bf16.msra.mxu0 0
  %5627 = vmatpush.bf16.msra.mxu0 0
  %5628 = vmatpush.bf16.msra.mxu0 0
  %5629 = vmatpush.bf16.msra.mxu0 0
  %5630 = vmatpush.bf16.msra.mxu0 %v5609
  %5631 = vmatpush.bf16.msra.mxu0 %v5608
  %5632 = vmatmul.bf16.gmra.mxu0 %v3103
  %v5633 = vpop.f32.mrf.mxu0
  %v5634 = vadd.f32 0.0, %v5633
  %v5635 = vpop.f32.mrf.mxu0
  %v5636 = vadd.f32 0.0, %v5635
  %5637 = vmatmul.bf16.gmra.mxu0 %v3106
  %v5638 = vpop.f32.mrf.mxu0
  %v5639 = vadd.f32 0.0, %v5638
  %v5640 = vpop.f32.mrf.mxu0
  %v5641 = vadd.f32 0.0, %v5640
  %5642 = vmatmul.bf16.gmra.mxu0 %v3109
  %v5643 = vpop.f32.mrf.mxu0
  %v5644 = vadd.f32 0.0, %v5643
  %v5645 = vpop.f32.mrf.mxu0
  %v5646 = vadd.f32 0.0, %v5645
  %5647 = vmatmul.bf16.gmra.mxu0 %v3112
  %v5648 = vpop.f32.mrf.mxu0
  %v5649 = vadd.f32 0.0, %v5648
  %v5650 = vpop.f32.mrf.mxu0
  %v5651 = vadd.f32 0.0, %v5650
  %5652 = vmatmul.bf16.gmra.mxu0 %v3115
  %v5653 = vpop.f32.mrf.mxu0
  %v5654 = vadd.f32 0.0, %v5653
  %v5655 = vpop.f32.mrf.mxu0
  %v5656 = vadd.f32 0.0, %v5655
  %5657 = vmatmul.bf16.gmra.mxu0 %v3118
  %v5658 = vpop.f32.mrf.mxu0
  %v5659 = vadd.f32 0.0, %v5658
  %v5660 = vpop.f32.mrf.mxu0
  %v5661 = vadd.f32 0.0, %v5660
  %5662 = vmatmul.bf16.gmra.mxu0 %v3121
  %v5663 = vpop.f32.mrf.mxu0
  %v5664 = vadd.f32 0.0, %v5663
  %v5665 = vpop.f32.mrf.mxu0
  %v5666 = vadd.f32 0.0, %v5665
  %5667 = vmatmul.bf16.gmra.mxu0 %v3124
  %v5668 = vpop.f32.mrf.mxu0
  %v5669 = vadd.f32 0.0, %v5668
  %v5670 = vpop.f32.mrf.mxu0
  %v5671 = vadd.f32 0.0, %v5670
  %5672 = vmatmul.bf16.gmra.mxu0 %v3127
  %v5673 = vpop.f32.mrf.mxu0
  %v5674 = vadd.f32 0.0, %v5673
  %v5675 = vpop.f32.mrf.mxu0
  %v5676 = vadd.f32 0.0, %v5675
  %5677 = vmatmul.bf16.gmra.mxu0 %v3130
  %v5678 = vpop.f32.mrf.mxu0
  %v5679 = vadd.f32 0.0, %v5678
  %v5680 = vpop.f32.mrf.mxu0
  %v5681 = vadd.f32 0.0, %v5680
  %5682 = vmatmul.bf16.gmra.mxu0 %v3133
  %v5683 = vpop.f32.mrf.mxu0
  %v5684 = vadd.f32 0.0, %v5683
  %v5685 = vpop.f32.mrf.mxu0
  %v5686 = vadd.f32 0.0, %v5685
  %5687 = vmatmul.bf16.gmra.mxu0 %v3136
  %v5688 = vpop.f32.mrf.mxu0
  %v5689 = vadd.f32 0.0, %v5688
  %v5690 = vpop.f32.mrf.mxu0
  %v5691 = vadd.f32 0.0, %v5690
  %5692 = vmatmul.bf16.gmra.mxu0 %v3139
  %v5693 = vpop.f32.mrf.mxu0
  %v5694 = vadd.f32 0.0, %v5693
  %v5695 = vpop.f32.mrf.mxu0
  %v5696 = vadd.f32 0.0, %v5695
  %5697 = vmatmul.bf16.gmra.mxu0 %v3142
  %v5698 = vpop.f32.mrf.mxu0
  %v5699 = vadd.f32 0.0, %v5698
  %v5700 = vpop.f32.mrf.mxu0
  %v5701 = vadd.f32 0.0, %v5700
  %5702 = vmatmul.bf16.gmra.mxu0 %v3145
  %v5703 = vpop.f32.mrf.mxu0
  %v5704 = vadd.f32 0.0, %v5703
  %v5705 = vpop.f32.mrf.mxu0
  %v5706 = vadd.f32 0.0, %v5705
  %5707 = vmatmul.bf16.gmra.mxu0 %v3148
  %v5708 = vpop.f32.mrf.mxu0
  %v5709 = vadd.f32 0.0, %v5708
  %v5710 = vpop.f32.mrf.mxu0
  %v5711 = vadd.f32 0.0, %v5710
  %5712 = vmatmul.bf16.gmra.mxu0 %v3151
  %v5713 = vpop.f32.mrf.mxu0
  %v5714 = vadd.f32 0.0, %v5713
  %v5715 = vpop.f32.mrf.mxu0
  %v5716 = vadd.f32 0.0, %v5715
  %5717 = vmatmul.bf16.gmra.mxu0 %v3154
  %v5718 = vpop.f32.mrf.mxu0
  %v5719 = vadd.f32 0.0, %v5718
  %v5720 = vpop.f32.mrf.mxu0
  %v5721 = vadd.f32 0.0, %v5720
  %5722 = vmatmul.bf16.gmra.mxu0 %v3157
  %v5723 = vpop.f32.mrf.mxu0
  %v5724 = vadd.f32 0.0, %v5723
  %v5725 = vpop.f32.mrf.mxu0
  %v5726 = vadd.f32 0.0, %v5725
  %5727 = vmatmul.bf16.gmra.mxu0 %v3160
  %v5728 = vpop.f32.mrf.mxu0
  %v5729 = vadd.f32 0.0, %v5728
  %v5730 = vpop.f32.mrf.mxu0
  %v5731 = vadd.f32 0.0, %v5730
  %5732 = vmatmul.bf16.gmra.mxu0 %v3163
  %v5733 = vpop.f32.mrf.mxu0
  %v5734 = vadd.f32 0.0, %v5733
  %v5735 = vpop.f32.mrf.mxu0
  %v5736 = vadd.f32 0.0, %v5735
  %5737 = vmatmul.bf16.gmra.mxu0 %v3166
  %v5738 = vpop.f32.mrf.mxu0
  %v5739 = vadd.f32 0.0, %v5738
  %v5740 = vpop.f32.mrf.mxu0
  %v5741 = vadd.f32 0.0, %v5740
  %5742 = vmatmul.bf16.gmra.mxu0 %v3169
  %v5743 = vpop.f32.mrf.mxu0
  %v5744 = vadd.f32 0.0, %v5743
  %v5745 = vpop.f32.mrf.mxu0
  %v5746 = vadd.f32 0.0, %v5745
  %5747 = vmatmul.bf16.gmra.mxu0 %v3172
  %v5748 = vpop.f32.mrf.mxu0
  %v5749 = vadd.f32 0.0, %v5748
  %v5750 = vpop.f32.mrf.mxu0
  %v5751 = vadd.f32 0.0, %v5750
  %5752 = vmatmul.bf16.gmra.mxu0 %v3175
  %v5753 = vpop.f32.mrf.mxu0
  %v5754 = vadd.f32 0.0, %v5753
  %v5755 = vpop.f32.mrf.mxu0
  %v5756 = vadd.f32 0.0, %v5755
  %5757 = vmatmul.bf16.gmra.mxu0 %v3178
  %v5758 = vpop.f32.mrf.mxu0
  %v5759 = vadd.f32 0.0, %v5758
  %v5760 = vpop.f32.mrf.mxu0
  %v5761 = vadd.f32 0.0, %v5760
  %5762 = vmatmul.bf16.gmra.mxu0 %v3181
  %v5763 = vpop.f32.mrf.mxu0
  %v5764 = vadd.f32 0.0, %v5763
  %v5765 = vpop.f32.mrf.mxu0
  %v5766 = vadd.f32 0.0, %v5765
  %5767 = vmatmul.bf16.gmra.mxu0 %v3184
  %v5768 = vpop.f32.mrf.mxu0
  %v5769 = vadd.f32 0.0, %v5768
  %v5770 = vpop.f32.mrf.mxu0
  %v5771 = vadd.f32 0.0, %v5770
  %5772 = vmatmul.bf16.gmra.mxu0 %v5613
  %v5773 = vpop.f32.mrf.mxu0
  %v5774 = vadd.f32 0.0, %v5773
  %v5775 = vpop.f32.mrf.mxu0
  %v5776 = vadd.f32 0.0, %v5775
  %5777 = vmatmul.bf16.gmra.mxu0 %v5616
  %v5778 = vpop.f32.mrf.mxu0
  %v5779 = vadd.f32 0.0, %v5778
  %v5780 = vpop.f32.mrf.mxu0
  %v5781 = vadd.f32 0.0, %v5780
  %5782 = vmatmul.bf16.gmra.mxu0 %v5619
  %v5783 = vpop.f32.mrf.mxu0
  %v5784 = vadd.f32 0.0, %v5783
  %v5785 = vpop.f32.mrf.mxu0
  %v5786 = vadd.f32 0.0, %v5785
  %5787 = vmatmul.bf16.gmra.mxu0 %v5622
  %v5788 = vpop.f32.mrf.mxu0
  %v5789 = vadd.f32 0.0, %v5788
  %v5790 = vpop.f32.mrf.mxu0
  %v5791 = vadd.f32 0.0, %v5790
  %5792 = vdwg.mxu0
  %v5793 = vadd.f32 %v5527, %v5634
  %v5794 = vadd.f32 %v5528, %v5636
  %v5795 = vadd.f32 %v5529, %v5639
  %v5796 = vadd.f32 %v5530, %v5641
  %v5797 = vadd.f32 %v5531, %v5644
  %v5798 = vadd.f32 %v5532, %v5646
  %v5799 = vadd.f32 %v5533, %v5649
  %v5800 = vadd.f32 %v5534, %v5651
  %v5801 = vadd.f32 %v5535, %v5654
  %v5802 = vadd.f32 %v5536, %v5656
  %v5803 = vadd.f32 %v5537, %v5659
  %v5804 = vadd.f32 %v5538, %v5661
  %v5805 = vadd.f32 %v5539, %v5664
  %v5806 = vadd.f32 %v5540, %v5666
  %v5807 = vadd.f32 %v5541, %v5669
  %v5808 = vadd.f32 %v5542, %v5671
  %v5809 = vadd.f32 %v5543, %v5674
  %v5810 = vadd.f32 %v5544, %v5676
  %v5811 = vadd.f32 %v5545, %v5679
  %v5812 = vadd.f32 %v5546, %v5681
  %v5813 = vadd.f32 %v5547, %v5684
  %v5814 = vadd.f32 %v5548, %v5686
  %v5815 = vadd.f32 %v5549, %v5689
  %v5816 = vadd.f32 %v5550, %v5691
  %v5817 = vadd.f32 %v5551, %v5694
  %v5818 = vadd.f32 %v5552, %v5696
  %v5819 = vadd.f32 %v5553, %v5699
  %v5820 = vadd.f32 %v5554, %v5701
  %v5821 = vadd.f32 %v5555, %v5704
  %v5822 = vadd.f32 %v5556, %v5706
  %v5823 = vadd.f32 %v5557, %v5709
  %v5824 = vadd.f32 %v5558, %v5711
  %v5825 = vadd.f32 %v5559, %v5714
  %v5826 = vadd.f32 %v5560, %v5716
  %v5827 = vadd.f32 %v5561, %v5719
  %v5828 = vadd.f32 %v5562, %v5721
  %v5829 = vadd.f32 %v5563, %v5724
  %v5830 = vadd.f32 %v5564, %v5726
  %v5831 = vadd.f32 %v5565, %v5729
  %v5832 = vadd.f32 %v5566, %v5731
  %v5833 = vadd.f32 %v5567, %v5734
  %v5834 = vadd.f32 %v5568, %v5736
  %v5835 = vadd.f32 %v5569, %v5739
  %v5836 = vadd.f32 %v5570, %v5741
  %v5837 = vadd.f32 %v5571, %v5744
  %v5838 = vadd.f32 %v5572, %v5746
  %v5839 = vadd.f32 %v5573, %v5749
  %v5840 = vadd.f32 %v5574, %v5751
  %v5841 = vadd.f32 %v5575, %v5754
  %v5842 = vadd.f32 %v5576, %v5756
  %v5843 = vadd.f32 %v5577, %v5759
  %v5844 = vadd.f32 %v5578, %v5761
  %v5845 = vadd.f32 %v5579, %v5764
  %v5846 = vadd.f32 %v5580, %v5766
  %v5847 = vadd.f32 %v5581, %v5769
  %v5848 = vadd.f32 %v5582, %v5771
  %v5849 = vadd.f32 %v5583, %v5774
  %v5850 = vadd.f32 %v5584, %v5776
  %v5851 = vadd.f32 %v5585, %v5779
  %v5852 = vadd.f32 %v5586, %v5781
  %v5853 = vadd.f32 %v5587, %v5784
  %v5854 = vadd.f32 %v5588, %v5786
  %v5855 = vadd.f32 %v5589, %v5789
  %v5856 = vadd.f32 %v5590, %v5791
  %v5857 = vpack.c.bf16 %v2741, %v2739
  %v5858 = vpack.c.bf16 %v2745, %v2743
  %v5859 = vpack.c.bf16 %v2749, %v2747
  %v5860 = vpack.c.bf16 %v2753, %v2751
  %s5861 = scalar_lea.vmem %s2, 144
  %v5862 = vld [vmem:[%s5861] sm:$0xf]
  %v5863 = vld [vmem:[%s5861 + $0x4] sm:$0xf]
  %v5864 = vld [vmem:[%s5861 + $0x8] sm:$0xf]
  %v5865 = vld [vmem:[%s5861 + $0xc] sm:$0xf]
  %v5870 = vunpack.c.l.b16 %v5862
  %v5871 = vunpack.c.l.b16 %v5863
  %v5872 = vunpack.c.l.b16 %v5864
  %v5873 = vunpack.c.l.b16 %v5865
  %v5874 = vpack.c.b16 %v5871, %v5870
  %v5875 = vpack.c.b16 %v5873, %v5872
  %v5879 = vsel %vm2833, %v5857, 0
  %v5882 = vsel %vm2833, %v5858, 0
  %v5885 = vsel %vm2833, %v5859, 0
  %v5888 = vsel %vm2833, %v5860, 0
  %5890 = vmatpush.bf16.msra.mxu0 0
  %5891 = vmatpush.bf16.msra.mxu0 0
  %5892 = vmatpush.bf16.msra.mxu0 0
  %5893 = vmatpush.bf16.msra.mxu0 0
  %5894 = vmatpush.bf16.msra.mxu0 0
  %5895 = vmatpush.bf16.msra.mxu0 0
  %5896 = vmatpush.bf16.msra.mxu0 %v5875
  %5897 = vmatpush.bf16.msra.mxu0 %v5874
  %5898 = vmatmul.bf16.gmra.mxu0 %v2838
  %v5899 = vpop.f32.mrf.mxu0
  %v5900 = vadd.f32 0.0, %v5899
  %v5901 = vpop.f32.mrf.mxu0
  %v5902 = vadd.f32 0.0, %v5901
  %5903 = vmatmul.bf16.gmra.mxu0 %v2841
  %v5904 = vpop.f32.mrf.mxu0
  %v5905 = vadd.f32 0.0, %v5904
  %v5906 = vpop.f32.mrf.mxu0
  %v5907 = vadd.f32 0.0, %v5906
  %5908 = vmatmul.bf16.gmra.mxu0 %v2844
  %v5909 = vpop.f32.mrf.mxu0
  %v5910 = vadd.f32 0.0, %v5909
  %v5911 = vpop.f32.mrf.mxu0
  %v5912 = vadd.f32 0.0, %v5911
  %5913 = vmatmul.bf16.gmra.mxu0 %v2847
  %v5914 = vpop.f32.mrf.mxu0
  %v5915 = vadd.f32 0.0, %v5914
  %v5916 = vpop.f32.mrf.mxu0
  %v5917 = vadd.f32 0.0, %v5916
  %5918 = vmatmul.bf16.gmra.mxu0 %v2850
  %v5919 = vpop.f32.mrf.mxu0
  %v5920 = vadd.f32 0.0, %v5919
  %v5921 = vpop.f32.mrf.mxu0
  %v5922 = vadd.f32 0.0, %v5921
  %5923 = vmatmul.bf16.gmra.mxu0 %v2853
  %v5924 = vpop.f32.mrf.mxu0
  %v5925 = vadd.f32 0.0, %v5924
  %v5926 = vpop.f32.mrf.mxu0
  %v5927 = vadd.f32 0.0, %v5926
  %5928 = vmatmul.bf16.gmra.mxu0 %v2856
  %v5929 = vpop.f32.mrf.mxu0
  %v5930 = vadd.f32 0.0, %v5929
  %v5931 = vpop.f32.mrf.mxu0
  %v5932 = vadd.f32 0.0, %v5931
  %5933 = vmatmul.bf16.gmra.mxu0 %v2859
  %v5934 = vpop.f32.mrf.mxu0
  %v5935 = vadd.f32 0.0, %v5934
  %v5936 = vpop.f32.mrf.mxu0
  %v5937 = vadd.f32 0.0, %v5936
  %5938 = vmatmul.bf16.gmra.mxu0 %v2862
  %v5939 = vpop.f32.mrf.mxu0
  %v5940 = vadd.f32 0.0, %v5939
  %v5941 = vpop.f32.mrf.mxu0
  %v5942 = vadd.f32 0.0, %v5941
  %5943 = vmatmul.bf16.gmra.mxu0 %v2865
  %v5944 = vpop.f32.mrf.mxu0
  %v5945 = vadd.f32 0.0, %v5944
  %v5946 = vpop.f32.mrf.mxu0
  %v5947 = vadd.f32 0.0, %v5946
  %5948 = vmatmul.bf16.gmra.mxu0 %v2868
  %v5949 = vpop.f32.mrf.mxu0
  %v5950 = vadd.f32 0.0, %v5949
  %v5951 = vpop.f32.mrf.mxu0
  %v5952 = vadd.f32 0.0, %v5951
  %5953 = vmatmul.bf16.gmra.mxu0 %v2871
  %v5954 = vpop.f32.mrf.mxu0
  %v5955 = vadd.f32 0.0, %v5954
  %v5956 = vpop.f32.mrf.mxu0
  %v5957 = vadd.f32 0.0, %v5956
  %5958 = vmatmul.bf16.gmra.mxu0 %v2874
  %v5959 = vpop.f32.mrf.mxu0
  %v5960 = vadd.f32 0.0, %v5959
  %v5961 = vpop.f32.mrf.mxu0
  %v5962 = vadd.f32 0.0, %v5961
  %5963 = vmatmul.bf16.gmra.mxu0 %v2877
  %v5964 = vpop.f32.mrf.mxu0
  %v5965 = vadd.f32 0.0, %v5964
  %v5966 = vpop.f32.mrf.mxu0
  %v5967 = vadd.f32 0.0, %v5966
  %5968 = vmatmul.bf16.gmra.mxu0 %v2880
  %v5969 = vpop.f32.mrf.mxu0
  %v5970 = vadd.f32 0.0, %v5969
  %v5971 = vpop.f32.mrf.mxu0
  %v5972 = vadd.f32 0.0, %v5971
  %5973 = vmatmul.bf16.gmra.mxu0 %v2883
  %v5974 = vpop.f32.mrf.mxu0
  %v5975 = vadd.f32 0.0, %v5974
  %v5976 = vpop.f32.mrf.mxu0
  %v5977 = vadd.f32 0.0, %v5976
  %5978 = vmatmul.bf16.gmra.mxu0 %v2886
  %v5979 = vpop.f32.mrf.mxu0
  %v5980 = vadd.f32 0.0, %v5979
  %v5981 = vpop.f32.mrf.mxu0
  %v5982 = vadd.f32 0.0, %v5981
  %5983 = vmatmul.bf16.gmra.mxu0 %v2889
  %v5984 = vpop.f32.mrf.mxu0
  %v5985 = vadd.f32 0.0, %v5984
  %v5986 = vpop.f32.mrf.mxu0
  %v5987 = vadd.f32 0.0, %v5986
  %5988 = vmatmul.bf16.gmra.mxu0 %v2892
  %v5989 = vpop.f32.mrf.mxu0
  %v5990 = vadd.f32 0.0, %v5989
  %v5991 = vpop.f32.mrf.mxu0
  %v5992 = vadd.f32 0.0, %v5991
  %5993 = vmatmul.bf16.gmra.mxu0 %v2895
  %v5994 = vpop.f32.mrf.mxu0
  %v5995 = vadd.f32 0.0, %v5994
  %v5996 = vpop.f32.mrf.mxu0
  %v5997 = vadd.f32 0.0, %v5996
  %5998 = vmatmul.bf16.gmra.mxu0 %v2898
  %v5999 = vpop.f32.mrf.mxu0
  %v6000 = vadd.f32 0.0, %v5999
  %v6001 = vpop.f32.mrf.mxu0
  %v6002 = vadd.f32 0.0, %v6001
  %6003 = vmatmul.bf16.gmra.mxu0 %v2901
  %v6004 = vpop.f32.mrf.mxu0
  %v6005 = vadd.f32 0.0, %v6004
  %v6006 = vpop.f32.mrf.mxu0
  %v6007 = vadd.f32 0.0, %v6006
  %6008 = vmatmul.bf16.gmra.mxu0 %v2904
  %v6009 = vpop.f32.mrf.mxu0
  %v6010 = vadd.f32 0.0, %v6009
  %v6011 = vpop.f32.mrf.mxu0
  %v6012 = vadd.f32 0.0, %v6011
  %6013 = vmatmul.bf16.gmra.mxu0 %v2907
  %v6014 = vpop.f32.mrf.mxu0
  %v6015 = vadd.f32 0.0, %v6014
  %v6016 = vpop.f32.mrf.mxu0
  %v6017 = vadd.f32 0.0, %v6016
  %6018 = vmatmul.bf16.gmra.mxu0 %v2910
  %v6019 = vpop.f32.mrf.mxu0
  %v6020 = vadd.f32 0.0, %v6019
  %v6021 = vpop.f32.mrf.mxu0
  %v6022 = vadd.f32 0.0, %v6021
  %6023 = vmatmul.bf16.gmra.mxu0 %v2913
  %v6024 = vpop.f32.mrf.mxu0
  %v6025 = vadd.f32 0.0, %v6024
  %v6026 = vpop.f32.mrf.mxu0
  %v6027 = vadd.f32 0.0, %v6026
  %6028 = vmatmul.bf16.gmra.mxu0 %v2916
  %v6029 = vpop.f32.mrf.mxu0
  %v6030 = vadd.f32 0.0, %v6029
  %v6031 = vpop.f32.mrf.mxu0
  %v6032 = vadd.f32 0.0, %v6031
  %6033 = vmatmul.bf16.gmra.mxu0 %v2919
  %v6034 = vpop.f32.mrf.mxu0
  %v6035 = vadd.f32 0.0, %v6034
  %v6036 = vpop.f32.mrf.mxu0
  %v6037 = vadd.f32 0.0, %v6036
  %6038 = vmatmul.bf16.gmra.mxu0 %v5879
  %v6039 = vpop.f32.mrf.mxu0
  %v6040 = vadd.f32 0.0, %v6039
  %v6041 = vpop.f32.mrf.mxu0
  %v6042 = vadd.f32 0.0, %v6041
  %6043 = vmatmul.bf16.gmra.mxu0 %v5882
  %v6044 = vpop.f32.mrf.mxu0
  %v6045 = vadd.f32 0.0, %v6044
  %v6046 = vpop.f32.mrf.mxu0
  %v6047 = vadd.f32 0.0, %v6046
  %6048 = vmatmul.bf16.gmra.mxu0 %v5885
  %v6049 = vpop.f32.mrf.mxu0
  %v6050 = vadd.f32 0.0, %v6049
  %v6051 = vpop.f32.mrf.mxu0
  %v6052 = vadd.f32 0.0, %v6051
  %6053 = vmatmul.bf16.gmra.mxu0 %v5888
  %v6054 = vpop.f32.mrf.mxu0
  %v6055 = vadd.f32 0.0, %v6054
  %v6056 = vpop.f32.mrf.mxu0
  %v6057 = vadd.f32 0.0, %v6056
  %6058 = vdwg.mxu0
  %v6059 = vadd.f32 %v5793, %v5900
  %v6060 = vadd.f32 %v5794, %v5902
  %v6061 = vadd.f32 %v5795, %v5905
  %v6062 = vadd.f32 %v5796, %v5907
  %v6063 = vadd.f32 %v5797, %v5910
  %v6064 = vadd.f32 %v5798, %v5912
  %v6065 = vadd.f32 %v5799, %v5915
  %v6066 = vadd.f32 %v5800, %v5917
  %v6067 = vadd.f32 %v5801, %v5920
  %v6068 = vadd.f32 %v5802, %v5922
  %v6069 = vadd.f32 %v5803, %v5925
  %v6070 = vadd.f32 %v5804, %v5927
  %v6071 = vadd.f32 %v5805, %v5930
  %v6072 = vadd.f32 %v5806, %v5932
  %v6073 = vadd.f32 %v5807, %v5935
  %v6074 = vadd.f32 %v5808, %v5937
  %v6075 = vadd.f32 %v5809, %v5940
  %v6076 = vadd.f32 %v5810, %v5942
  %v6077 = vadd.f32 %v5811, %v5945
  %v6078 = vadd.f32 %v5812, %v5947
  %v6079 = vadd.f32 %v5813, %v5950
  %v6080 = vadd.f32 %v5814, %v5952
  %v6081 = vadd.f32 %v5815, %v5955
  %v6082 = vadd.f32 %v5816, %v5957
  %v6083 = vadd.f32 %v5817, %v5960
  %v6084 = vadd.f32 %v5818, %v5962
  %v6085 = vadd.f32 %v5819, %v5965
  %v6086 = vadd.f32 %v5820, %v5967
  %v6087 = vadd.f32 %v5821, %v5970
  %v6088 = vadd.f32 %v5822, %v5972
  %v6089 = vadd.f32 %v5823, %v5975
  %v6090 = vadd.f32 %v5824, %v5977
  %v6091 = vadd.f32 %v5825, %v5980
  %v6092 = vadd.f32 %v5826, %v5982
  %v6093 = vadd.f32 %v5827, %v5985
  %v6094 = vadd.f32 %v5828, %v5987
  %v6095 = vadd.f32 %v5829, %v5990
  %v6096 = vadd.f32 %v5830, %v5992
  %v6097 = vadd.f32 %v5831, %v5995
  %v6098 = vadd.f32 %v5832, %v5997
  %v6099 = vadd.f32 %v5833, %v6000
  %v6100 = vadd.f32 %v5834, %v6002
  %v6101 = vadd.f32 %v5835, %v6005
  %v6102 = vadd.f32 %v5836, %v6007
  %v6103 = vadd.f32 %v5837, %v6010
  %v6104 = vadd.f32 %v5838, %v6012
  %v6105 = vadd.f32 %v5839, %v6015
  %v6106 = vadd.f32 %v5840, %v6017
  %v6107 = vadd.f32 %v5841, %v6020
  %v6108 = vadd.f32 %v5842, %v6022
  %v6109 = vadd.f32 %v5843, %v6025
  %v6110 = vadd.f32 %v5844, %v6027
  %v6111 = vadd.f32 %v5845, %v6030
  %v6112 = vadd.f32 %v5846, %v6032
  %v6113 = vadd.f32 %v5847, %v6035
  %v6114 = vadd.f32 %v5848, %v6037
  %v6115 = vadd.f32 %v5849, %v6040
  %v6116 = vadd.f32 %v5850, %v6042
  %v6117 = vadd.f32 %v5851, %v6045
  %v6118 = vadd.f32 %v5852, %v6047
  %v6119 = vadd.f32 %v5853, %v6050
  %v6120 = vadd.f32 %v5854, %v6052
  %v6121 = vadd.f32 %v5855, %v6055
  %v6122 = vadd.f32 %v5856, %v6057
  %v6123 = vpack.c.bf16 %v2742, %v2740
  %v6124 = vpack.c.bf16 %v2746, %v2744
  %v6125 = vpack.c.bf16 %v2750, %v2748
  %v6126 = vpack.c.bf16 %v2754, %v2752
  %s6127 = scalar_lea.vmem %s2, 160
  %v6128 = vld [vmem:[%s6127] sm:$0xf]
  %v6129 = vld [vmem:[%s6127 + $0x4] sm:$0xf]
  %v6130 = vld [vmem:[%s6127 + $0x8] sm:$0xf]
  %v6131 = vld [vmem:[%s6127 + $0xc] sm:$0xf]
  %v6136 = vunpack.c.l.b16 %v6128
  %v6137 = vunpack.c.l.b16 %v6129
  %v6138 = vunpack.c.l.b16 %v6130
  %v6139 = vunpack.c.l.b16 %v6131
  %v6140 = vpack.c.b16 %v6137, %v6136
  %v6141 = vpack.c.b16 %v6139, %v6138
  %v6145 = vsel %vm2833, %v6123, 0
  %v6148 = vsel %vm2833, %v6124, 0
  %v6151 = vsel %vm2833, %v6125, 0
  %v6154 = vsel %vm2833, %v6126, 0
  %6156 = vmatpush.bf16.msra.mxu0 0
  %6157 = vmatpush.bf16.msra.mxu0 0
  %6158 = vmatpush.bf16.msra.mxu0 0
  %6159 = vmatpush.bf16.msra.mxu0 0
  %6160 = vmatpush.bf16.msra.mxu0 0
  %6161 = vmatpush.bf16.msra.mxu0 0
  %6162 = vmatpush.bf16.msra.mxu0 %v6141
  %6163 = vmatpush.bf16.msra.mxu0 %v6140
  %6164 = vmatmul.bf16.gmra.mxu0 %v3401
  %v6165 = vpop.f32.mrf.mxu0
  %v6166 = vadd.f32 0.0, %v6165
  %v6167 = vpop.f32.mrf.mxu0
  %v6168 = vadd.f32 0.0, %v6167
  %6169 = vmatmul.bf16.gmra.mxu0 %v3404
  %v6170 = vpop.f32.mrf.mxu0
  %v6171 = vadd.f32 0.0, %v6170
  %v6172 = vpop.f32.mrf.mxu0
  %v6173 = vadd.f32 0.0, %v6172
  %6174 = vmatmul.bf16.gmra.mxu0 %v3407
  %v6175 = vpop.f32.mrf.mxu0
  %v6176 = vadd.f32 0.0, %v6175
  %v6177 = vpop.f32.mrf.mxu0
  %v6178 = vadd.f32 0.0, %v6177
  %6179 = vmatmul.bf16.gmra.mxu0 %v3410
  %v6180 = vpop.f32.mrf.mxu0
  %v6181 = vadd.f32 0.0, %v6180
  %v6182 = vpop.f32.mrf.mxu0
  %v6183 = vadd.f32 0.0, %v6182
  %6184 = vmatmul.bf16.gmra.mxu0 %v3413
  %v6185 = vpop.f32.mrf.mxu0
  %v6186 = vadd.f32 0.0, %v6185
  %v6187 = vpop.f32.mrf.mxu0
  %v6188 = vadd.f32 0.0, %v6187
  %6189 = vmatmul.bf16.gmra.mxu0 %v3416
  %v6190 = vpop.f32.mrf.mxu0
  %v6191 = vadd.f32 0.0, %v6190
  %v6192 = vpop.f32.mrf.mxu0
  %v6193 = vadd.f32 0.0, %v6192
  %6194 = vmatmul.bf16.gmra.mxu0 %v3419
  %v6195 = vpop.f32.mrf.mxu0
  %v6196 = vadd.f32 0.0, %v6195
  %v6197 = vpop.f32.mrf.mxu0
  %v6198 = vadd.f32 0.0, %v6197
  %6199 = vmatmul.bf16.gmra.mxu0 %v3422
  %v6200 = vpop.f32.mrf.mxu0
  %v6201 = vadd.f32 0.0, %v6200
  %v6202 = vpop.f32.mrf.mxu0
  %v6203 = vadd.f32 0.0, %v6202
  %6204 = vmatmul.bf16.gmra.mxu0 %v3425
  %v6205 = vpop.f32.mrf.mxu0
  %v6206 = vadd.f32 0.0, %v6205
  %v6207 = vpop.f32.mrf.mxu0
  %v6208 = vadd.f32 0.0, %v6207
  %6209 = vmatmul.bf16.gmra.mxu0 %v3428
  %v6210 = vpop.f32.mrf.mxu0
  %v6211 = vadd.f32 0.0, %v6210
  %v6212 = vpop.f32.mrf.mxu0
  %v6213 = vadd.f32 0.0, %v6212
  %6214 = vmatmul.bf16.gmra.mxu0 %v3431
  %v6215 = vpop.f32.mrf.mxu0
  %v6216 = vadd.f32 0.0, %v6215
  %v6217 = vpop.f32.mrf.mxu0
  %v6218 = vadd.f32 0.0, %v6217
  %6219 = vmatmul.bf16.gmra.mxu0 %v3434
  %v6220 = vpop.f32.mrf.mxu0
  %v6221 = vadd.f32 0.0, %v6220
  %v6222 = vpop.f32.mrf.mxu0
  %v6223 = vadd.f32 0.0, %v6222
  %6224 = vmatmul.bf16.gmra.mxu0 %v3437
  %v6225 = vpop.f32.mrf.mxu0
  %v6226 = vadd.f32 0.0, %v6225
  %v6227 = vpop.f32.mrf.mxu0
  %v6228 = vadd.f32 0.0, %v6227
  %6229 = vmatmul.bf16.gmra.mxu0 %v3440
  %v6230 = vpop.f32.mrf.mxu0
  %v6231 = vadd.f32 0.0, %v6230
  %v6232 = vpop.f32.mrf.mxu0
  %v6233 = vadd.f32 0.0, %v6232
  %6234 = vmatmul.bf16.gmra.mxu0 %v3443
  %v6235 = vpop.f32.mrf.mxu0
  %v6236 = vadd.f32 0.0, %v6235
  %v6237 = vpop.f32.mrf.mxu0
  %v6238 = vadd.f32 0.0, %v6237
  %6239 = vmatmul.bf16.gmra.mxu0 %v3446
  %v6240 = vpop.f32.mrf.mxu0
  %v6241 = vadd.f32 0.0, %v6240
  %v6242 = vpop.f32.mrf.mxu0
  %v6243 = vadd.f32 0.0, %v6242
  %6244 = vmatmul.bf16.gmra.mxu0 %v3449
  %v6245 = vpop.f32.mrf.mxu0
  %v6246 = vadd.f32 0.0, %v6245
  %v6247 = vpop.f32.mrf.mxu0
  %v6248 = vadd.f32 0.0, %v6247
  %6249 = vmatmul.bf16.gmra.mxu0 %v3452
  %v6250 = vpop.f32.mrf.mxu0
  %v6251 = vadd.f32 0.0, %v6250
  %v6252 = vpop.f32.mrf.mxu0
  %v6253 = vadd.f32 0.0, %v6252
  %6254 = vmatmul.bf16.gmra.mxu0 %v3455
  %v6255 = vpop.f32.mrf.mxu0
  %v6256 = vadd.f32 0.0, %v6255
  %v6257 = vpop.f32.mrf.mxu0
  %v6258 = vadd.f32 0.0, %v6257
  %6259 = vmatmul.bf16.gmra.mxu0 %v3458
  %v6260 = vpop.f32.mrf.mxu0
  %v6261 = vadd.f32 0.0, %v6260
  %v6262 = vpop.f32.mrf.mxu0
  %v6263 = vadd.f32 0.0, %v6262
  %6264 = vmatmul.bf16.gmra.mxu0 %v3461
  %v6265 = vpop.f32.mrf.mxu0
  %v6266 = vadd.f32 0.0, %v6265
  %v6267 = vpop.f32.mrf.mxu0
  %v6268 = vadd.f32 0.0, %v6267
  %6269 = vmatmul.bf16.gmra.mxu0 %v3464
  %v6270 = vpop.f32.mrf.mxu0
  %v6271 = vadd.f32 0.0, %v6270
  %v6272 = vpop.f32.mrf.mxu0
  %v6273 = vadd.f32 0.0, %v6272
  %6274 = vmatmul.bf16.gmra.mxu0 %v3467
  %v6275 = vpop.f32.mrf.mxu0
  %v6276 = vadd.f32 0.0, %v6275
  %v6277 = vpop.f32.mrf.mxu0
  %v6278 = vadd.f32 0.0, %v6277
  %6279 = vmatmul.bf16.gmra.mxu0 %v3470
  %v6280 = vpop.f32.mrf.mxu0
  %v6281 = vadd.f32 0.0, %v6280
  %v6282 = vpop.f32.mrf.mxu0
  %v6283 = vadd.f32 0.0, %v6282
  %6284 = vmatmul.bf16.gmra.mxu0 %v3473
  %v6285 = vpop.f32.mrf.mxu0
  %v6286 = vadd.f32 0.0, %v6285
  %v6287 = vpop.f32.mrf.mxu0
  %v6288 = vadd.f32 0.0, %v6287
  %6289 = vmatmul.bf16.gmra.mxu0 %v3476
  %v6290 = vpop.f32.mrf.mxu0
  %v6291 = vadd.f32 0.0, %v6290
  %v6292 = vpop.f32.mrf.mxu0
  %v6293 = vadd.f32 0.0, %v6292
  %6294 = vmatmul.bf16.gmra.mxu0 %v3479
  %v6295 = vpop.f32.mrf.mxu0
  %v6296 = vadd.f32 0.0, %v6295
  %v6297 = vpop.f32.mrf.mxu0
  %v6298 = vadd.f32 0.0, %v6297
  %6299 = vmatmul.bf16.gmra.mxu0 %v3482
  %v6300 = vpop.f32.mrf.mxu0
  %v6301 = vadd.f32 0.0, %v6300
  %v6302 = vpop.f32.mrf.mxu0
  %v6303 = vadd.f32 0.0, %v6302
  %6304 = vmatmul.bf16.gmra.mxu0 %v6145
  %v6305 = vpop.f32.mrf.mxu0
  %v6306 = vadd.f32 0.0, %v6305
  %v6307 = vpop.f32.mrf.mxu0
  %v6308 = vadd.f32 0.0, %v6307
  %6309 = vmatmul.bf16.gmra.mxu0 %v6148
  %v6310 = vpop.f32.mrf.mxu0
  %v6311 = vadd.f32 0.0, %v6310
  %v6312 = vpop.f32.mrf.mxu0
  %v6313 = vadd.f32 0.0, %v6312
  %6314 = vmatmul.bf16.gmra.mxu0 %v6151
  %v6315 = vpop.f32.mrf.mxu0
  %v6316 = vadd.f32 0.0, %v6315
  %v6317 = vpop.f32.mrf.mxu0
  %v6318 = vadd.f32 0.0, %v6317
  %6319 = vmatmul.bf16.gmra.mxu0 %v6154
  %v6320 = vpop.f32.mrf.mxu0
  %v6321 = vadd.f32 0.0, %v6320
  %v6322 = vpop.f32.mrf.mxu0
  %v6323 = vadd.f32 0.0, %v6322
  %6324 = vdwg.mxu0
  %v6325 = vadd.f32 %v6059, %v6166
  %v6326 = vadd.f32 %v6060, %v6168
  %v6327 = vadd.f32 %v6061, %v6171
  %v6328 = vadd.f32 %v6062, %v6173
  %v6329 = vadd.f32 %v6063, %v6176
  %v6330 = vadd.f32 %v6064, %v6178
  %v6331 = vadd.f32 %v6065, %v6181
  %v6332 = vadd.f32 %v6066, %v6183
  %v6333 = vadd.f32 %v6067, %v6186
  %v6334 = vadd.f32 %v6068, %v6188
  %v6335 = vadd.f32 %v6069, %v6191
  %v6336 = vadd.f32 %v6070, %v6193
  %v6337 = vadd.f32 %v6071, %v6196
  %v6338 = vadd.f32 %v6072, %v6198
  %v6339 = vadd.f32 %v6073, %v6201
  %v6340 = vadd.f32 %v6074, %v6203
  %v6341 = vadd.f32 %v6075, %v6206
  %v6342 = vadd.f32 %v6076, %v6208
  %v6343 = vadd.f32 %v6077, %v6211
  %v6344 = vadd.f32 %v6078, %v6213
  %v6345 = vadd.f32 %v6079, %v6216
  %v6346 = vadd.f32 %v6080, %v6218
  %v6347 = vadd.f32 %v6081, %v6221
  %v6348 = vadd.f32 %v6082, %v6223
  %v6349 = vadd.f32 %v6083, %v6226
  %v6350 = vadd.f32 %v6084, %v6228
  %v6351 = vadd.f32 %v6085, %v6231
  %v6352 = vadd.f32 %v6086, %v6233
  %v6353 = vadd.f32 %v6087, %v6236
  %v6354 = vadd.f32 %v6088, %v6238
  %v6355 = vadd.f32 %v6089, %v6241
  %v6356 = vadd.f32 %v6090, %v6243
  %v6357 = vadd.f32 %v6091, %v6246
  %v6358 = vadd.f32 %v6092, %v6248
  %v6359 = vadd.f32 %v6093, %v6251
  %v6360 = vadd.f32 %v6094, %v6253
  %v6361 = vadd.f32 %v6095, %v6256
  %v6362 = vadd.f32 %v6096, %v6258
  %v6363 = vadd.f32 %v6097, %v6261
  %v6364 = vadd.f32 %v6098, %v6263
  %v6365 = vadd.f32 %v6099, %v6266
  %v6366 = vadd.f32 %v6100, %v6268
  %v6367 = vadd.f32 %v6101, %v6271
  %v6368 = vadd.f32 %v6102, %v6273
  %v6369 = vadd.f32 %v6103, %v6276
  %v6370 = vadd.f32 %v6104, %v6278
  %v6371 = vadd.f32 %v6105, %v6281
  %v6372 = vadd.f32 %v6106, %v6283
  %v6373 = vadd.f32 %v6107, %v6286
  %v6374 = vadd.f32 %v6108, %v6288
  %v6375 = vadd.f32 %v6109, %v6291
  %v6376 = vadd.f32 %v6110, %v6293
  %v6377 = vadd.f32 %v6111, %v6296
  %v6378 = vadd.f32 %v6112, %v6298
  %v6379 = vadd.f32 %v6113, %v6301
  %v6380 = vadd.f32 %v6114, %v6303
  %v6381 = vadd.f32 %v6115, %v6306
  %v6382 = vadd.f32 %v6116, %v6308
  %v6383 = vadd.f32 %v6117, %v6311
  %v6384 = vadd.f32 %v6118, %v6313
  %v6385 = vadd.f32 %v6119, %v6316
  %v6386 = vadd.f32 %v6120, %v6318
  %v6387 = vadd.f32 %v6121, %v6321
  %v6388 = vadd.f32 %v6122, %v6323
  %v6389 = vpack.c.bf16 %v2743, %v2741
  %v6390 = vpack.c.bf16 %v2747, %v2745
  %v6391 = vpack.c.bf16 %v2751, %v2749
  %v6392 = vpack.c.bf16 0.0, %v2753
  %s6393 = scalar_lea.vmem %s2, 176
  %v6394 = vld [vmem:[%s6393] sm:$0xf]
  %v6395 = vld [vmem:[%s6393 + $0x4] sm:$0xf]
  %v6396 = vld [vmem:[%s6393 + $0x8] sm:$0xf]
  %v6397 = vld [vmem:[%s6393 + $0xc] sm:$0xf]
  %v6402 = vunpack.c.l.b16 %v6394
  %v6403 = vunpack.c.l.b16 %v6395
  %v6404 = vunpack.c.l.b16 %v6396
  %v6405 = vunpack.c.l.b16 %v6397
  %v6406 = vpack.c.b16 %v6403, %v6402
  %v6407 = vpack.c.b16 %v6405, %v6404
  %v6411 = vsel %vm2833, %v6389, 0
  %v6414 = vsel %vm2833, %v6390, 0
  %v6417 = vsel %vm2833, %v6391, 0
  %v6420 = vsel %vm2833, %v6392, 0
  %6422 = vmatpush.bf16.msra.mxu0 0
  %6423 = vmatpush.bf16.msra.mxu0 0
  %6424 = vmatpush.bf16.msra.mxu0 0
  %6425 = vmatpush.bf16.msra.mxu0 0
  %6426 = vmatpush.bf16.msra.mxu0 0
  %6427 = vmatpush.bf16.msra.mxu0 0
  %6428 = vmatpush.bf16.msra.mxu0 %v6407
  %6429 = vmatpush.bf16.msra.mxu0 %v6406
  %6430 = vmatmul.bf16.gmra.mxu0 %v3763
  %v6431 = vpop.f32.mrf.mxu0
  %v6432 = vadd.f32 0.0, %v6431
  %v6433 = vpop.f32.mrf.mxu0
  %v6434 = vadd.f32 0.0, %v6433
  %6435 = vmatmul.bf16.gmra.mxu0 %v3766
  %v6436 = vpop.f32.mrf.mxu0
  %v6437 = vadd.f32 0.0, %v6436
  %v6438 = vpop.f32.mrf.mxu0
  %v6439 = vadd.f32 0.0, %v6438
  %6440 = vmatmul.bf16.gmra.mxu0 %v3769
  %v6441 = vpop.f32.mrf.mxu0
  %v6442 = vadd.f32 0.0, %v6441
  %v6443 = vpop.f32.mrf.mxu0
  %v6444 = vadd.f32 0.0, %v6443
  %6445 = vmatmul.bf16.gmra.mxu0 %v3772
  %v6446 = vpop.f32.mrf.mxu0
  %v6447 = vadd.f32 0.0, %v6446
  %v6448 = vpop.f32.mrf.mxu0
  %v6449 = vadd.f32 0.0, %v6448
  %6450 = vmatmul.bf16.gmra.mxu0 %v3775
  %v6451 = vpop.f32.mrf.mxu0
  %v6452 = vadd.f32 0.0, %v6451
  %v6453 = vpop.f32.mrf.mxu0
  %v6454 = vadd.f32 0.0, %v6453
  %6455 = vmatmul.bf16.gmra.mxu0 %v3778
  %v6456 = vpop.f32.mrf.mxu0
  %v6457 = vadd.f32 0.0, %v6456
  %v6458 = vpop.f32.mrf.mxu0
  %v6459 = vadd.f32 0.0, %v6458
  %6460 = vmatmul.bf16.gmra.mxu0 %v3781
  %v6461 = vpop.f32.mrf.mxu0
  %v6462 = vadd.f32 0.0, %v6461
  %v6463 = vpop.f32.mrf.mxu0
  %v6464 = vadd.f32 0.0, %v6463
  %6465 = vmatmul.bf16.gmra.mxu0 %v3784
  %v6466 = vpop.f32.mrf.mxu0
  %v6467 = vadd.f32 0.0, %v6466
  %v6468 = vpop.f32.mrf.mxu0
  %v6469 = vadd.f32 0.0, %v6468
  %6470 = vmatmul.bf16.gmra.mxu0 %v3787
  %v6471 = vpop.f32.mrf.mxu0
  %v6472 = vadd.f32 0.0, %v6471
  %v6473 = vpop.f32.mrf.mxu0
  %v6474 = vadd.f32 0.0, %v6473
  %6475 = vmatmul.bf16.gmra.mxu0 %v3790
  %v6476 = vpop.f32.mrf.mxu0
  %v6477 = vadd.f32 0.0, %v6476
  %v6478 = vpop.f32.mrf.mxu0
  %v6479 = vadd.f32 0.0, %v6478
  %6480 = vmatmul.bf16.gmra.mxu0 %v3793
  %v6481 = vpop.f32.mrf.mxu0
  %v6482 = vadd.f32 0.0, %v6481
  %v6483 = vpop.f32.mrf.mxu0
  %v6484 = vadd.f32 0.0, %v6483
  %6485 = vmatmul.bf16.gmra.mxu0 %v3796
  %v6486 = vpop.f32.mrf.mxu0
  %v6487 = vadd.f32 0.0, %v6486
  %v6488 = vpop.f32.mrf.mxu0
  %v6489 = vadd.f32 0.0, %v6488
  %6490 = vmatmul.bf16.gmra.mxu0 %v3799
  %v6491 = vpop.f32.mrf.mxu0
  %v6492 = vadd.f32 0.0, %v6491
  %v6493 = vpop.f32.mrf.mxu0
  %v6494 = vadd.f32 0.0, %v6493
  %6495 = vmatmul.bf16.gmra.mxu0 %v3802
  %v6496 = vpop.f32.mrf.mxu0
  %v6497 = vadd.f32 0.0, %v6496
  %v6498 = vpop.f32.mrf.mxu0
  %v6499 = vadd.f32 0.0, %v6498
  %6500 = vmatmul.bf16.gmra.mxu0 %v3805
  %v6501 = vpop.f32.mrf.mxu0
  %v6502 = vadd.f32 0.0, %v6501
  %v6503 = vpop.f32.mrf.mxu0
  %v6504 = vadd.f32 0.0, %v6503
  %6505 = vmatmul.bf16.gmra.mxu0 %v3808
  %v6506 = vpop.f32.mrf.mxu0
  %v6507 = vadd.f32 0.0, %v6506
  %v6508 = vpop.f32.mrf.mxu0
  %v6509 = vadd.f32 0.0, %v6508
  %6510 = vmatmul.bf16.gmra.mxu0 %v3811
  %v6511 = vpop.f32.mrf.mxu0
  %v6512 = vadd.f32 0.0, %v6511
  %v6513 = vpop.f32.mrf.mxu0
  %v6514 = vadd.f32 0.0, %v6513
  %6515 = vmatmul.bf16.gmra.mxu0 %v3814
  %v6516 = vpop.f32.mrf.mxu0
  %v6517 = vadd.f32 0.0, %v6516
  %v6518 = vpop.f32.mrf.mxu0
  %v6519 = vadd.f32 0.0, %v6518
  %6520 = vmatmul.bf16.gmra.mxu0 %v3817
  %v6521 = vpop.f32.mrf.mxu0
  %v6522 = vadd.f32 0.0, %v6521
  %v6523 = vpop.f32.mrf.mxu0
  %v6524 = vadd.f32 0.0, %v6523
  %6525 = vmatmul.bf16.gmra.mxu0 %v3820
  %v6526 = vpop.f32.mrf.mxu0
  %v6527 = vadd.f32 0.0, %v6526
  %v6528 = vpop.f32.mrf.mxu0
  %v6529 = vadd.f32 0.0, %v6528
  %6530 = vmatmul.bf16.gmra.mxu0 %v3823
  %v6531 = vpop.f32.mrf.mxu0
  %v6532 = vadd.f32 0.0, %v6531
  %v6533 = vpop.f32.mrf.mxu0
  %v6534 = vadd.f32 0.0, %v6533
  %6535 = vmatmul.bf16.gmra.mxu0 %v3826
  %v6536 = vpop.f32.mrf.mxu0
  %v6537 = vadd.f32 0.0, %v6536
  %v6538 = vpop.f32.mrf.mxu0
  %v6539 = vadd.f32 0.0, %v6538
  %6540 = vmatmul.bf16.gmra.mxu0 %v3829
  %v6541 = vpop.f32.mrf.mxu0
  %v6542 = vadd.f32 0.0, %v6541
  %v6543 = vpop.f32.mrf.mxu0
  %v6544 = vadd.f32 0.0, %v6543
  %6545 = vmatmul.bf16.gmra.mxu0 %v3832
  %v6546 = vpop.f32.mrf.mxu0
  %v6547 = vadd.f32 0.0, %v6546
  %v6548 = vpop.f32.mrf.mxu0
  %v6549 = vadd.f32 0.0, %v6548
  %6550 = vmatmul.bf16.gmra.mxu0 %v3835
  %v6551 = vpop.f32.mrf.mxu0
  %v6552 = vadd.f32 0.0, %v6551
  %v6553 = vpop.f32.mrf.mxu0
  %v6554 = vadd.f32 0.0, %v6553
  %6555 = vmatmul.bf16.gmra.mxu0 %v3838
  %v6556 = vpop.f32.mrf.mxu0
  %v6557 = vadd.f32 0.0, %v6556
  %v6558 = vpop.f32.mrf.mxu0
  %v6559 = vadd.f32 0.0, %v6558
  %6560 = vmatmul.bf16.gmra.mxu0 %v3841
  %v6561 = vpop.f32.mrf.mxu0
  %v6562 = vadd.f32 0.0, %v6561
  %v6563 = vpop.f32.mrf.mxu0
  %v6564 = vadd.f32 0.0, %v6563
  %6565 = vmatmul.bf16.gmra.mxu0 %v3844
  %v6566 = vpop.f32.mrf.mxu0
  %v6567 = vadd.f32 0.0, %v6566
  %v6568 = vpop.f32.mrf.mxu0
  %v6569 = vadd.f32 0.0, %v6568
  %6570 = vmatmul.bf16.gmra.mxu0 %v6411
  %v6571 = vpop.f32.mrf.mxu0
  %v6572 = vadd.f32 0.0, %v6571
  %v6573 = vpop.f32.mrf.mxu0
  %v6574 = vadd.f32 0.0, %v6573
  %6575 = vmatmul.bf16.gmra.mxu0 %v6414
  %v6576 = vpop.f32.mrf.mxu0
  %v6577 = vadd.f32 0.0, %v6576
  %v6578 = vpop.f32.mrf.mxu0
  %v6579 = vadd.f32 0.0, %v6578
  %6580 = vmatmul.bf16.gmra.mxu0 %v6417
  %v6581 = vpop.f32.mrf.mxu0
  %v6582 = vadd.f32 0.0, %v6581
  %v6583 = vpop.f32.mrf.mxu0
  %v6584 = vadd.f32 0.0, %v6583
  %6585 = vmatmul.bf16.gmra.mxu0 %v6420
  %v6586 = vpop.f32.mrf.mxu0
  %v6587 = vadd.f32 0.0, %v6586
  %v6588 = vpop.f32.mrf.mxu0
  %v6589 = vadd.f32 0.0, %v6588
  %6590 = vdwg.mxu0
  %v6591 = vadd.f32 %v6325, %v6432
  %v6592 = vadd.f32 %v6326, %v6434
  %v6593 = vadd.f32 %v6327, %v6437
  %v6594 = vadd.f32 %v6328, %v6439
  %v6595 = vadd.f32 %v6329, %v6442
  %v6596 = vadd.f32 %v6330, %v6444
  %v6597 = vadd.f32 %v6331, %v6447
  %v6598 = vadd.f32 %v6332, %v6449
  %v6599 = vadd.f32 %v6333, %v6452
  %v6600 = vadd.f32 %v6334, %v6454
  %v6601 = vadd.f32 %v6335, %v6457
  %v6602 = vadd.f32 %v6336, %v6459
  %v6603 = vadd.f32 %v6337, %v6462
  %v6604 = vadd.f32 %v6338, %v6464
  %v6605 = vadd.f32 %v6339, %v6467
  %v6606 = vadd.f32 %v6340, %v6469
  %v6607 = vadd.f32 %v6341, %v6472
  %v6608 = vadd.f32 %v6342, %v6474
  %v6609 = vadd.f32 %v6343, %v6477
  %v6610 = vadd.f32 %v6344, %v6479
  %v6611 = vadd.f32 %v6345, %v6482
  %v6612 = vadd.f32 %v6346, %v6484
  %v6613 = vadd.f32 %v6347, %v6487
  %v6614 = vadd.f32 %v6348, %v6489
  %v6615 = vadd.f32 %v6349, %v6492
  %v6616 = vadd.f32 %v6350, %v6494
  %v6617 = vadd.f32 %v6351, %v6497
  %v6618 = vadd.f32 %v6352, %v6499
  %v6619 = vadd.f32 %v6353, %v6502
  %v6620 = vadd.f32 %v6354, %v6504
  %v6621 = vadd.f32 %v6355, %v6507
  %v6622 = vadd.f32 %v6356, %v6509
  %v6623 = vadd.f32 %v6357, %v6512
  %v6624 = vadd.f32 %v6358, %v6514
  %v6625 = vadd.f32 %v6359, %v6517
  %v6626 = vadd.f32 %v6360, %v6519
  %v6627 = vadd.f32 %v6361, %v6522
  %v6628 = vadd.f32 %v6362, %v6524
  %v6629 = vadd.f32 %v6363, %v6527
  %v6630 = vadd.f32 %v6364, %v6529
  %v6631 = vadd.f32 %v6365, %v6532
  %v6632 = vadd.f32 %v6366, %v6534
  %v6633 = vadd.f32 %v6367, %v6537
  %v6634 = vadd.f32 %v6368, %v6539
  %v6635 = vadd.f32 %v6369, %v6542
  %v6636 = vadd.f32 %v6370, %v6544
  %v6637 = vadd.f32 %v6371, %v6547
  %v6638 = vadd.f32 %v6372, %v6549
  %v6639 = vadd.f32 %v6373, %v6552
  %v6640 = vadd.f32 %v6374, %v6554
  %v6641 = vadd.f32 %v6375, %v6557
  %v6642 = vadd.f32 %v6376, %v6559
  %v6643 = vadd.f32 %v6377, %v6562
  %v6644 = vadd.f32 %v6378, %v6564
  %v6645 = vadd.f32 %v6379, %v6567
  %v6646 = vadd.f32 %v6380, %v6569
  %v6647 = vadd.f32 %v6381, %v6572
  %v6648 = vadd.f32 %v6382, %v6574
  %v6649 = vadd.f32 %v6383, %v6577
  %v6650 = vadd.f32 %v6384, %v6579
  %v6651 = vadd.f32 %v6385, %v6582
  %v6652 = vadd.f32 %v6386, %v6584
  %v6653 = vadd.f32 %v6387, %v6587
  %v6654 = vadd.f32 %v6388, %v6589
  %s6655 = scalar_lea.vmem %s2, 192
  %v6656 = vld [vmem:[%s6655] sm:$0xf]
  %v6657 = vld [vmem:[%s6655 + $0x4] sm:$0xf]
  %v6658 = vld [vmem:[%s6655 + $0x8] sm:$0xf]
  %v6659 = vld [vmem:[%s6655 + $0xc] sm:$0xf]
  %v6664 = vunpack.c.l.b16 %v6656
  %v6665 = vunpack.c.l.b16 %v6657
  %v6666 = vunpack.c.l.b16 %v6658
  %v6667 = vunpack.c.l.b16 %v6659
  %v6668 = vpack.c.b16 %v6665, %v6664
  %v6669 = vpack.c.b16 %v6667, %v6666
  %6672 = vmatpush.bf16.msra.mxu0 0
  %6673 = vmatpush.bf16.msra.mxu0 0
  %6674 = vmatpush.bf16.msra.mxu0 0
  %6675 = vmatpush.bf16.msra.mxu0 0
  %6676 = vmatpush.bf16.msra.mxu0 0
  %6677 = vmatpush.bf16.msra.mxu0 0
  %6678 = vmatpush.bf16.msra.mxu0 %v6669
  %6679 = vmatpush.bf16.msra.mxu0 %v6668
  %6680 = vmatmul.bf16.gmra.mxu0 %v4141
  %v6681 = vpop.f32.mrf.mxu0
  %v6682 = vadd.f32 0.0, %v6681
  %v6683 = vpop.f32.mrf.mxu0
  %v6684 = vadd.f32 0.0, %v6683
  %6685 = vmatmul.bf16.gmra.mxu0 %v4144
  %v6686 = vpop.f32.mrf.mxu0
  %v6687 = vadd.f32 0.0, %v6686
  %v6688 = vpop.f32.mrf.mxu0
  %v6689 = vadd.f32 0.0, %v6688
  %6690 = vmatmul.bf16.gmra.mxu0 %v4147
  %v6691 = vpop.f32.mrf.mxu0
  %v6692 = vadd.f32 0.0, %v6691
  %v6693 = vpop.f32.mrf.mxu0
  %v6694 = vadd.f32 0.0, %v6693
  %6695 = vmatmul.bf16.gmra.mxu0 %v4150
  %v6696 = vpop.f32.mrf.mxu0
  %v6697 = vadd.f32 0.0, %v6696
  %v6698 = vpop.f32.mrf.mxu0
  %v6699 = vadd.f32 0.0, %v6698
  %6700 = vmatmul.bf16.gmra.mxu0 %v4153
  %v6701 = vpop.f32.mrf.mxu0
  %v6702 = vadd.f32 0.0, %v6701
  %v6703 = vpop.f32.mrf.mxu0
  %v6704 = vadd.f32 0.0, %v6703
  %6705 = vmatmul.bf16.gmra.mxu0 %v4156
  %v6706 = vpop.f32.mrf.mxu0
  %v6707 = vadd.f32 0.0, %v6706
  %v6708 = vpop.f32.mrf.mxu0
  %v6709 = vadd.f32 0.0, %v6708
  %6710 = vmatmul.bf16.gmra.mxu0 %v4159
  %v6711 = vpop.f32.mrf.mxu0
  %v6712 = vadd.f32 0.0, %v6711
  %v6713 = vpop.f32.mrf.mxu0
  %v6714 = vadd.f32 0.0, %v6713
  %6715 = vmatmul.bf16.gmra.mxu0 %v4162
  %v6716 = vpop.f32.mrf.mxu0
  %v6717 = vadd.f32 0.0, %v6716
  %v6718 = vpop.f32.mrf.mxu0
  %v6719 = vadd.f32 0.0, %v6718
  %6720 = vmatmul.bf16.gmra.mxu0 %v4165
  %v6721 = vpop.f32.mrf.mxu0
  %v6722 = vadd.f32 0.0, %v6721
  %v6723 = vpop.f32.mrf.mxu0
  %v6724 = vadd.f32 0.0, %v6723
  %6725 = vmatmul.bf16.gmra.mxu0 %v4168
  %v6726 = vpop.f32.mrf.mxu0
  %v6727 = vadd.f32 0.0, %v6726
  %v6728 = vpop.f32.mrf.mxu0
  %v6729 = vadd.f32 0.0, %v6728
  %6730 = vmatmul.bf16.gmra.mxu0 %v4171
  %v6731 = vpop.f32.mrf.mxu0
  %v6732 = vadd.f32 0.0, %v6731
  %v6733 = vpop.f32.mrf.mxu0
  %v6734 = vadd.f32 0.0, %v6733
  %6735 = vmatmul.bf16.gmra.mxu0 %v4174
  %v6736 = vpop.f32.mrf.mxu0
  %v6737 = vadd.f32 0.0, %v6736
  %v6738 = vpop.f32.mrf.mxu0
  %v6739 = vadd.f32 0.0, %v6738
  %6740 = vmatmul.bf16.gmra.mxu0 %v4177
  %v6741 = vpop.f32.mrf.mxu0
  %v6742 = vadd.f32 0.0, %v6741
  %v6743 = vpop.f32.mrf.mxu0
  %v6744 = vadd.f32 0.0, %v6743
  %6745 = vmatmul.bf16.gmra.mxu0 %v4180
  %v6746 = vpop.f32.mrf.mxu0
  %v6747 = vadd.f32 0.0, %v6746
  %v6748 = vpop.f32.mrf.mxu0
  %v6749 = vadd.f32 0.0, %v6748
  %6750 = vmatmul.bf16.gmra.mxu0 %v4183
  %v6751 = vpop.f32.mrf.mxu0
  %v6752 = vadd.f32 0.0, %v6751
  %v6753 = vpop.f32.mrf.mxu0
  %v6754 = vadd.f32 0.0, %v6753
  %6755 = vmatmul.bf16.gmra.mxu0 %v4186
  %v6756 = vpop.f32.mrf.mxu0
  %v6757 = vadd.f32 0.0, %v6756
  %v6758 = vpop.f32.mrf.mxu0
  %v6759 = vadd.f32 0.0, %v6758
  %6760 = vmatmul.bf16.gmra.mxu0 %v4189
  %v6761 = vpop.f32.mrf.mxu0
  %v6762 = vadd.f32 0.0, %v6761
  %v6763 = vpop.f32.mrf.mxu0
  %v6764 = vadd.f32 0.0, %v6763
  %6765 = vmatmul.bf16.gmra.mxu0 %v4192
  %v6766 = vpop.f32.mrf.mxu0
  %v6767 = vadd.f32 0.0, %v6766
  %v6768 = vpop.f32.mrf.mxu0
  %v6769 = vadd.f32 0.0, %v6768
  %6770 = vmatmul.bf16.gmra.mxu0 %v4195
  %v6771 = vpop.f32.mrf.mxu0
  %v6772 = vadd.f32 0.0, %v6771
  %v6773 = vpop.f32.mrf.mxu0
  %v6774 = vadd.f32 0.0, %v6773
  %6775 = vmatmul.bf16.gmra.mxu0 %v4198
  %v6776 = vpop.f32.mrf.mxu0
  %v6777 = vadd.f32 0.0, %v6776
  %v6778 = vpop.f32.mrf.mxu0
  %v6779 = vadd.f32 0.0, %v6778
  %6780 = vmatmul.bf16.gmra.mxu0 %v4201
  %v6781 = vpop.f32.mrf.mxu0
  %v6782 = vadd.f32 0.0, %v6781
  %v6783 = vpop.f32.mrf.mxu0
  %v6784 = vadd.f32 0.0, %v6783
  %6785 = vmatmul.bf16.gmra.mxu0 %v4204
  %v6786 = vpop.f32.mrf.mxu0
  %v6787 = vadd.f32 0.0, %v6786
  %v6788 = vpop.f32.mrf.mxu0
  %v6789 = vadd.f32 0.0, %v6788
  %6790 = vmatmul.bf16.gmra.mxu0 %v4207
  %v6791 = vpop.f32.mrf.mxu0
  %v6792 = vadd.f32 0.0, %v6791
  %v6793 = vpop.f32.mrf.mxu0
  %v6794 = vadd.f32 0.0, %v6793
  %6795 = vmatmul.bf16.gmra.mxu0 %v4210
  %v6796 = vpop.f32.mrf.mxu0
  %v6797 = vadd.f32 0.0, %v6796
  %v6798 = vpop.f32.mrf.mxu0
  %v6799 = vadd.f32 0.0, %v6798
  %6800 = vmatmul.bf16.gmra.mxu0 %v4213
  %v6801 = vpop.f32.mrf.mxu0
  %v6802 = vadd.f32 0.0, %v6801
  %v6803 = vpop.f32.mrf.mxu0
  %v6804 = vadd.f32 0.0, %v6803
  %6805 = vmatmul.bf16.gmra.mxu0 %v4216
  %v6806 = vpop.f32.mrf.mxu0
  %v6807 = vadd.f32 0.0, %v6806
  %v6808 = vpop.f32.mrf.mxu0
  %v6809 = vadd.f32 0.0, %v6808
  %6810 = vmatmul.bf16.gmra.mxu0 %v4219
  %v6811 = vpop.f32.mrf.mxu0
  %v6812 = vadd.f32 0.0, %v6811
  %v6813 = vpop.f32.mrf.mxu0
  %v6814 = vadd.f32 0.0, %v6813
  %6815 = vmatmul.bf16.gmra.mxu0 %v4222
  %v6816 = vpop.f32.mrf.mxu0
  %v6817 = vadd.f32 0.0, %v6816
  %v6818 = vpop.f32.mrf.mxu0
  %v6819 = vadd.f32 0.0, %v6818
  %6820 = vmatmul.bf16.gmra.mxu0 %v2835
  %v6821 = vpop.f32.mrf.mxu0
  %v6822 = vadd.f32 0.0, %v6821
  %v6823 = vpop.f32.mrf.mxu0
  %v6824 = vadd.f32 0.0, %v6823
  %6825 = vmatmul.bf16.gmra.mxu0 %v2835
  %v6826 = vpop.f32.mrf.mxu0
  %v6827 = vadd.f32 0.0, %v6826
  %v6828 = vpop.f32.mrf.mxu0
  %v6829 = vadd.f32 0.0, %v6828
  %6830 = vmatmul.bf16.gmra.mxu0 %v2835
  %v6831 = vpop.f32.mrf.mxu0
  %v6832 = vadd.f32 0.0, %v6831
  %v6833 = vpop.f32.mrf.mxu0
  %v6834 = vadd.f32 0.0, %v6833
  %6835 = vmatmul.bf16.gmra.mxu0 %v2835
  %v6836 = vpop.f32.mrf.mxu0
  %v6837 = vadd.f32 0.0, %v6836
  %v6838 = vpop.f32.mrf.mxu0
  %v6839 = vadd.f32 0.0, %v6838
  %6840 = vdwg.mxu0
  %v6841 = vadd.f32 %v6591, %v6682
  %v6842 = vadd.f32 %v6592, %v6684
  %v6843 = vadd.f32 %v6593, %v6687
  %v6844 = vadd.f32 %v6594, %v6689
  %v6845 = vadd.f32 %v6595, %v6692
  %v6846 = vadd.f32 %v6596, %v6694
  %v6847 = vadd.f32 %v6597, %v6697
  %v6848 = vadd.f32 %v6598, %v6699
  %v6849 = vadd.f32 %v6599, %v6702
  %v6850 = vadd.f32 %v6600, %v6704
  %v6851 = vadd.f32 %v6601, %v6707
  %v6852 = vadd.f32 %v6602, %v6709
  %v6853 = vadd.f32 %v6603, %v6712
  %v6854 = vadd.f32 %v6604, %v6714
  %v6855 = vadd.f32 %v6605, %v6717
  %v6856 = vadd.f32 %v6606, %v6719
  %v6857 = vadd.f32 %v6607, %v6722
  %v6858 = vadd.f32 %v6608, %v6724
  %v6859 = vadd.f32 %v6609, %v6727
  %v6860 = vadd.f32 %v6610, %v6729
  %v6861 = vadd.f32 %v6611, %v6732
  %v6862 = vadd.f32 %v6612, %v6734
  %v6863 = vadd.f32 %v6613, %v6737
  %v6864 = vadd.f32 %v6614, %v6739
  %v6865 = vadd.f32 %v6615, %v6742
  %v6866 = vadd.f32 %v6616, %v6744
  %v6867 = vadd.f32 %v6617, %v6747
  %v6868 = vadd.f32 %v6618, %v6749
  %v6869 = vadd.f32 %v6619, %v6752
  %v6870 = vadd.f32 %v6620, %v6754
  %v6871 = vadd.f32 %v6621, %v6757
  %v6872 = vadd.f32 %v6622, %v6759
  %v6873 = vadd.f32 %v6623, %v6762
  %v6874 = vadd.f32 %v6624, %v6764
  %v6875 = vadd.f32 %v6625, %v6767
  %v6876 = vadd.f32 %v6626, %v6769
  %v6877 = vadd.f32 %v6627, %v6772
  %v6878 = vadd.f32 %v6628, %v6774
  %v6879 = vadd.f32 %v6629, %v6777
  %v6880 = vadd.f32 %v6630, %v6779
  %v6881 = vadd.f32 %v6631, %v6782
  %v6882 = vadd.f32 %v6632, %v6784
  %v6883 = vadd.f32 %v6633, %v6787
  %v6884 = vadd.f32 %v6634, %v6789
  %v6885 = vadd.f32 %v6635, %v6792
  %v6886 = vadd.f32 %v6636, %v6794
  %v6887 = vadd.f32 %v6637, %v6797
  %v6888 = vadd.f32 %v6638, %v6799
  %v6889 = vadd.f32 %v6639, %v6802
  %v6890 = vadd.f32 %v6640, %v6804
  %v6891 = vadd.f32 %v6641, %v6807
  %v6892 = vadd.f32 %v6642, %v6809
  %v6893 = vadd.f32 %v6643, %v6812
  %v6894 = vadd.f32 %v6644, %v6814
  %v6895 = vadd.f32 %v6645, %v6817
  %v6896 = vadd.f32 %v6646, %v6819
  %v6897 = vadd.f32 %v6647, %v6822
  %v6898 = vadd.f32 %v6648, %v6824
  %v6899 = vadd.f32 %v6649, %v6827
  %v6900 = vadd.f32 %v6650, %v6829
  %v6901 = vadd.f32 %v6651, %v6832
  %v6902 = vadd.f32 %v6652, %v6834
  %v6903 = vadd.f32 %v6653, %v6837
  %v6904 = vadd.f32 %v6654, %v6839
  %s6905 = scalar_lea.vmem %s2, 208
  %v6906 = vld [vmem:[%s6905] sm:$0xf]
  %v6907 = vld [vmem:[%s6905 + $0x4] sm:$0xf]
  %v6908 = vld [vmem:[%s6905 + $0x8] sm:$0xf]
  %v6909 = vld [vmem:[%s6905 + $0xc] sm:$0xf]
  %v6914 = vunpack.c.l.b16 %v6906
  %v6915 = vunpack.c.l.b16 %v6907
  %v6916 = vunpack.c.l.b16 %v6908
  %v6917 = vunpack.c.l.b16 %v6909
  %v6918 = vpack.c.b16 %v6915, %v6914
  %v6919 = vpack.c.b16 %v6917, %v6916
  %6922 = vmatpush.bf16.msra.mxu0 0
  %6923 = vmatpush.bf16.msra.mxu0 0
  %6924 = vmatpush.bf16.msra.mxu0 0
  %6925 = vmatpush.bf16.msra.mxu0 0
  %6926 = vmatpush.bf16.msra.mxu0 0
  %6927 = vmatpush.bf16.msra.mxu0 0
  %6928 = vmatpush.bf16.msra.mxu0 %v6919
  %6929 = vmatpush.bf16.msra.mxu0 %v6918
  %6930 = vmatmul.bf16.gmra.mxu0 %v4519
  %v6931 = vpop.f32.mrf.mxu0
  %v6932 = vadd.f32 0.0, %v6931
  %v6933 = vpop.f32.mrf.mxu0
  %v6934 = vadd.f32 0.0, %v6933
  %6935 = vmatmul.bf16.gmra.mxu0 %v4522
  %v6936 = vpop.f32.mrf.mxu0
  %v6937 = vadd.f32 0.0, %v6936
  %v6938 = vpop.f32.mrf.mxu0
  %v6939 = vadd.f32 0.0, %v6938
  %6940 = vmatmul.bf16.gmra.mxu0 %v4525
  %v6941 = vpop.f32.mrf.mxu0
  %v6942 = vadd.f32 0.0, %v6941
  %v6943 = vpop.f32.mrf.mxu0
  %v6944 = vadd.f32 0.0, %v6943
  %6945 = vmatmul.bf16.gmra.mxu0 %v4528
  %v6946 = vpop.f32.mrf.mxu0
  %v6947 = vadd.f32 0.0, %v6946
  %v6948 = vpop.f32.mrf.mxu0
  %v6949 = vadd.f32 0.0, %v6948
  %6950 = vmatmul.bf16.gmra.mxu0 %v4531
  %v6951 = vpop.f32.mrf.mxu0
  %v6952 = vadd.f32 0.0, %v6951
  %v6953 = vpop.f32.mrf.mxu0
  %v6954 = vadd.f32 0.0, %v6953
  %6955 = vmatmul.bf16.gmra.mxu0 %v4534
  %v6956 = vpop.f32.mrf.mxu0
  %v6957 = vadd.f32 0.0, %v6956
  %v6958 = vpop.f32.mrf.mxu0
  %v6959 = vadd.f32 0.0, %v6958
  %6960 = vmatmul.bf16.gmra.mxu0 %v4537
  %v6961 = vpop.f32.mrf.mxu0
  %v6962 = vadd.f32 0.0, %v6961
  %v6963 = vpop.f32.mrf.mxu0
  %v6964 = vadd.f32 0.0, %v6963
  %6965 = vmatmul.bf16.gmra.mxu0 %v4540
  %v6966 = vpop.f32.mrf.mxu0
  %v6967 = vadd.f32 0.0, %v6966
  %v6968 = vpop.f32.mrf.mxu0
  %v6969 = vadd.f32 0.0, %v6968
  %6970 = vmatmul.bf16.gmra.mxu0 %v4543
  %v6971 = vpop.f32.mrf.mxu0
  %v6972 = vadd.f32 0.0, %v6971
  %v6973 = vpop.f32.mrf.mxu0
  %v6974 = vadd.f32 0.0, %v6973
  %6975 = vmatmul.bf16.gmra.mxu0 %v4546
  %v6976 = vpop.f32.mrf.mxu0
  %v6977 = vadd.f32 0.0, %v6976
  %v6978 = vpop.f32.mrf.mxu0
  %v6979 = vadd.f32 0.0, %v6978
  %6980 = vmatmul.bf16.gmra.mxu0 %v4549
  %v6981 = vpop.f32.mrf.mxu0
  %v6982 = vadd.f32 0.0, %v6981
  %v6983 = vpop.f32.mrf.mxu0
  %v6984 = vadd.f32 0.0, %v6983
  %6985 = vmatmul.bf16.gmra.mxu0 %v4552
  %v6986 = vpop.f32.mrf.mxu0
  %v6987 = vadd.f32 0.0, %v6986
  %v6988 = vpop.f32.mrf.mxu0
  %v6989 = vadd.f32 0.0, %v6988
  %6990 = vmatmul.bf16.gmra.mxu0 %v4555
  %v6991 = vpop.f32.mrf.mxu0
  %v6992 = vadd.f32 0.0, %v6991
  %v6993 = vpop.f32.mrf.mxu0
  %v6994 = vadd.f32 0.0, %v6993
  %6995 = vmatmul.bf16.gmra.mxu0 %v4558
  %v6996 = vpop.f32.mrf.mxu0
  %v6997 = vadd.f32 0.0, %v6996
  %v6998 = vpop.f32.mrf.mxu0
  %v6999 = vadd.f32 0.0, %v6998
  %7000 = vmatmul.bf16.gmra.mxu0 %v4561
  %v7001 = vpop.f32.mrf.mxu0
  %v7002 = vadd.f32 0.0, %v7001
  %v7003 = vpop.f32.mrf.mxu0
  %v7004 = vadd.f32 0.0, %v7003
  %7005 = vmatmul.bf16.gmra.mxu0 %v4564
  %v7006 = vpop.f32.mrf.mxu0
  %v7007 = vadd.f32 0.0, %v7006
  %v7008 = vpop.f32.mrf.mxu0
  %v7009 = vadd.f32 0.0, %v7008
  %7010 = vmatmul.bf16.gmra.mxu0 %v4567
  %v7011 = vpop.f32.mrf.mxu0
  %v7012 = vadd.f32 0.0, %v7011
  %v7013 = vpop.f32.mrf.mxu0
  %v7014 = vadd.f32 0.0, %v7013
  %7015 = vmatmul.bf16.gmra.mxu0 %v4570
  %v7016 = vpop.f32.mrf.mxu0
  %v7017 = vadd.f32 0.0, %v7016
  %v7018 = vpop.f32.mrf.mxu0
  %v7019 = vadd.f32 0.0, %v7018
  %7020 = vmatmul.bf16.gmra.mxu0 %v4573
  %v7021 = vpop.f32.mrf.mxu0
  %v7022 = vadd.f32 0.0, %v7021
  %v7023 = vpop.f32.mrf.mxu0
  %v7024 = vadd.f32 0.0, %v7023
  %7025 = vmatmul.bf16.gmra.mxu0 %v4576
  %v7026 = vpop.f32.mrf.mxu0
  %v7027 = vadd.f32 0.0, %v7026
  %v7028 = vpop.f32.mrf.mxu0
  %v7029 = vadd.f32 0.0, %v7028
  %7030 = vmatmul.bf16.gmra.mxu0 %v4579
  %v7031 = vpop.f32.mrf.mxu0
  %v7032 = vadd.f32 0.0, %v7031
  %v7033 = vpop.f32.mrf.mxu0
  %v7034 = vadd.f32 0.0, %v7033
  %7035 = vmatmul.bf16.gmra.mxu0 %v4582
  %v7036 = vpop.f32.mrf.mxu0
  %v7037 = vadd.f32 0.0, %v7036
  %v7038 = vpop.f32.mrf.mxu0
  %v7039 = vadd.f32 0.0, %v7038
  %7040 = vmatmul.bf16.gmra.mxu0 %v4585
  %v7041 = vpop.f32.mrf.mxu0
  %v7042 = vadd.f32 0.0, %v7041
  %v7043 = vpop.f32.mrf.mxu0
  %v7044 = vadd.f32 0.0, %v7043
  %7045 = vmatmul.bf16.gmra.mxu0 %v4588
  %v7046 = vpop.f32.mrf.mxu0
  %v7047 = vadd.f32 0.0, %v7046
  %v7048 = vpop.f32.mrf.mxu0
  %v7049 = vadd.f32 0.0, %v7048
  %7050 = vmatmul.bf16.gmra.mxu0 %v4591
  %v7051 = vpop.f32.mrf.mxu0
  %v7052 = vadd.f32 0.0, %v7051
  %v7053 = vpop.f32.mrf.mxu0
  %v7054 = vadd.f32 0.0, %v7053
  %7055 = vmatmul.bf16.gmra.mxu0 %v4594
  %v7056 = vpop.f32.mrf.mxu0
  %v7057 = vadd.f32 0.0, %v7056
  %v7058 = vpop.f32.mrf.mxu0
  %v7059 = vadd.f32 0.0, %v7058
  %7060 = vmatmul.bf16.gmra.mxu0 %v4597
  %v7061 = vpop.f32.mrf.mxu0
  %v7062 = vadd.f32 0.0, %v7061
  %v7063 = vpop.f32.mrf.mxu0
  %v7064 = vadd.f32 0.0, %v7063
  %7065 = vmatmul.bf16.gmra.mxu0 %v4600
  %v7066 = vpop.f32.mrf.mxu0
  %v7067 = vadd.f32 0.0, %v7066
  %v7068 = vpop.f32.mrf.mxu0
  %v7069 = vadd.f32 0.0, %v7068
  %7070 = vmatmul.bf16.gmra.mxu0 %v2835
  %v7071 = vpop.f32.mrf.mxu0
  %v7072 = vadd.f32 0.0, %v7071
  %v7073 = vpop.f32.mrf.mxu0
  %v7074 = vadd.f32 0.0, %v7073
  %7075 = vmatmul.bf16.gmra.mxu0 %v2835
  %v7076 = vpop.f32.mrf.mxu0
  %v7077 = vadd.f32 0.0, %v7076
  %v7078 = vpop.f32.mrf.mxu0
  %v7079 = vadd.f32 0.0, %v7078
  %7080 = vmatmul.bf16.gmra.mxu0 %v2835
  %v7081 = vpop.f32.mrf.mxu0
  %v7082 = vadd.f32 0.0, %v7081
  %v7083 = vpop.f32.mrf.mxu0
  %v7084 = vadd.f32 0.0, %v7083
  %7085 = vmatmul.bf16.gmra.mxu0 %v2835
  %v7086 = vpop.f32.mrf.mxu0
  %v7087 = vadd.f32 0.0, %v7086
  %v7088 = vpop.f32.mrf.mxu0
  %v7089 = vadd.f32 0.0, %v7088
  %7090 = vdwg.mxu0
  %v7091 = vadd.f32 %v6841, %v6932
  %v7092 = vadd.f32 %v6842, %v6934
  %v7093 = vadd.f32 %v6843, %v6937
  %v7094 = vadd.f32 %v6844, %v6939
  %v7095 = vadd.f32 %v6845, %v6942
  %v7096 = vadd.f32 %v6846, %v6944
  %v7097 = vadd.f32 %v6847, %v6947
  %v7098 = vadd.f32 %v6848, %v6949
  %v7099 = vadd.f32 %v6849, %v6952
  %v7100 = vadd.f32 %v6850, %v6954
  %v7101 = vadd.f32 %v6851, %v6957
  %v7102 = vadd.f32 %v6852, %v6959
  %v7103 = vadd.f32 %v6853, %v6962
  %v7104 = vadd.f32 %v6854, %v6964
  %v7105 = vadd.f32 %v6855, %v6967
  %v7106 = vadd.f32 %v6856, %v6969
  %v7107 = vadd.f32 %v6857, %v6972
  %v7108 = vadd.f32 %v6858, %v6974
  %v7109 = vadd.f32 %v6859, %v6977
  %v7110 = vadd.f32 %v6860, %v6979
  %v7111 = vadd.f32 %v6861, %v6982
  %v7112 = vadd.f32 %v6862, %v6984
  %v7113 = vadd.f32 %v6863, %v6987
  %v7114 = vadd.f32 %v6864, %v6989
  %v7115 = vadd.f32 %v6865, %v6992
  %v7116 = vadd.f32 %v6866, %v6994
  %v7117 = vadd.f32 %v6867, %v6997
  %v7118 = vadd.f32 %v6868, %v6999
  %v7119 = vadd.f32 %v6869, %v7002
  %v7120 = vadd.f32 %v6870, %v7004
  %v7121 = vadd.f32 %v6871, %v7007
  %v7122 = vadd.f32 %v6872, %v7009
  %v7123 = vadd.f32 %v6873, %v7012
  %v7124 = vadd.f32 %v6874, %v7014
  %v7125 = vadd.f32 %v6875, %v7017
  %v7126 = vadd.f32 %v6876, %v7019
  %v7127 = vadd.f32 %v6877, %v7022
  %v7128 = vadd.f32 %v6878, %v7024
  %v7129 = vadd.f32 %v6879, %v7027
  %v7130 = vadd.f32 %v6880, %v7029
  %v7131 = vadd.f32 %v6881, %v7032
  %v7132 = vadd.f32 %v6882, %v7034
  %v7133 = vadd.f32 %v6883, %v7037
  %v7134 = vadd.f32 %v6884, %v7039
  %v7135 = vadd.f32 %v6885, %v7042
  %v7136 = vadd.f32 %v6886, %v7044
  %v7137 = vadd.f32 %v6887, %v7047
  %v7138 = vadd.f32 %v6888, %v7049
  %v7139 = vadd.f32 %v6889, %v7052
  %v7140 = vadd.f32 %v6890, %v7054
  %v7141 = vadd.f32 %v6891, %v7057
  %v7142 = vadd.f32 %v6892, %v7059
  %v7143 = vadd.f32 %v6893, %v7062
  %v7144 = vadd.f32 %v6894, %v7064
  %v7145 = vadd.f32 %v6895, %v7067
  %v7146 = vadd.f32 %v6896, %v7069
  %v7147 = vadd.f32 %v6897, %v7072
  %v7148 = vadd.f32 %v6898, %v7074
  %v7149 = vadd.f32 %v6899, %v7077
  %v7150 = vadd.f32 %v6900, %v7079
  %v7151 = vadd.f32 %v6901, %v7082
  %v7152 = vadd.f32 %v6902, %v7084
  %v7153 = vadd.f32 %v6903, %v7087
  %v7154 = vadd.f32 %v6904, %v7089
  %s7155 = scalar_lea.vmem %s2, 224
  %v7156 = vld [vmem:[%s7155] sm:$0xf]
  %v7157 = vld [vmem:[%s7155 + $0x4] sm:$0xf]
  %v7158 = vld [vmem:[%s7155 + $0x8] sm:$0xf]
  %v7159 = vld [vmem:[%s7155 + $0xc] sm:$0xf]
  %v7164 = vunpack.c.l.b16 %v7156
  %v7165 = vunpack.c.l.b16 %v7157
  %v7166 = vunpack.c.l.b16 %v7158
  %v7167 = vunpack.c.l.b16 %v7159
  %v7168 = vpack.c.b16 %v7165, %v7164
  %v7169 = vpack.c.b16 %v7167, %v7166
  %7172 = vmatpush.bf16.msra.mxu0 0
  %7173 = vmatpush.bf16.msra.mxu0 0
  %7174 = vmatpush.bf16.msra.mxu0 0
  %7175 = vmatpush.bf16.msra.mxu0 0
  %7176 = vmatpush.bf16.msra.mxu0 0
  %7177 = vmatpush.bf16.msra.mxu0 0
  %7178 = vmatpush.bf16.msra.mxu0 %v7169
  %7179 = vmatpush.bf16.msra.mxu0 %v7168
  %7180 = vmatmul.bf16.gmra.mxu0 %v4897
  %v7181 = vpop.f32.mrf.mxu0
  %v7182 = vadd.f32 0.0, %v7181
  %v7183 = vpop.f32.mrf.mxu0
  %v7184 = vadd.f32 0.0, %v7183
  %7185 = vmatmul.bf16.gmra.mxu0 %v4900
  %v7186 = vpop.f32.mrf.mxu0
  %v7187 = vadd.f32 0.0, %v7186
  %v7188 = vpop.f32.mrf.mxu0
  %v7189 = vadd.f32 0.0, %v7188
  %7190 = vmatmul.bf16.gmra.mxu0 %v4903
  %v7191 = vpop.f32.mrf.mxu0
  %v7192 = vadd.f32 0.0, %v7191
  %v7193 = vpop.f32.mrf.mxu0
  %v7194 = vadd.f32 0.0, %v7193
  %7195 = vmatmul.bf16.gmra.mxu0 %v4906
  %v7196 = vpop.f32.mrf.mxu0
  %v7197 = vadd.f32 0.0, %v7196
  %v7198 = vpop.f32.mrf.mxu0
  %v7199 = vadd.f32 0.0, %v7198
  %7200 = vmatmul.bf16.gmra.mxu0 %v4909
  %v7201 = vpop.f32.mrf.mxu0
  %v7202 = vadd.f32 0.0, %v7201
  %v7203 = vpop.f32.mrf.mxu0
  %v7204 = vadd.f32 0.0, %v7203
  %7205 = vmatmul.bf16.gmra.mxu0 %v4912
  %v7206 = vpop.f32.mrf.mxu0
  %v7207 = vadd.f32 0.0, %v7206
  %v7208 = vpop.f32.mrf.mxu0
  %v7209 = vadd.f32 0.0, %v7208
  %7210 = vmatmul.bf16.gmra.mxu0 %v4915
  %v7211 = vpop.f32.mrf.mxu0
  %v7212 = vadd.f32 0.0, %v7211
  %v7213 = vpop.f32.mrf.mxu0
  %v7214 = vadd.f32 0.0, %v7213
  %7215 = vmatmul.bf16.gmra.mxu0 %v4918
  %v7216 = vpop.f32.mrf.mxu0
  %v7217 = vadd.f32 0.0, %v7216
  %v7218 = vpop.f32.mrf.mxu0
  %v7219 = vadd.f32 0.0, %v7218
  %7220 = vmatmul.bf16.gmra.mxu0 %v4921
  %v7221 = vpop.f32.mrf.mxu0
  %v7222 = vadd.f32 0.0, %v7221
  %v7223 = vpop.f32.mrf.mxu0
  %v7224 = vadd.f32 0.0, %v7223
  %7225 = vmatmul.bf16.gmra.mxu0 %v4924
  %v7226 = vpop.f32.mrf.mxu0
  %v7227 = vadd.f32 0.0, %v7226
  %v7228 = vpop.f32.mrf.mxu0
  %v7229 = vadd.f32 0.0, %v7228
  %7230 = vmatmul.bf16.gmra.mxu0 %v4927
  %v7231 = vpop.f32.mrf.mxu0
  %v7232 = vadd.f32 0.0, %v7231
  %v7233 = vpop.f32.mrf.mxu0
  %v7234 = vadd.f32 0.0, %v7233
  %7235 = vmatmul.bf16.gmra.mxu0 %v4930
  %v7236 = vpop.f32.mrf.mxu0
  %v7237 = vadd.f32 0.0, %v7236
  %v7238 = vpop.f32.mrf.mxu0
  %v7239 = vadd.f32 0.0, %v7238
  %7240 = vmatmul.bf16.gmra.mxu0 %v4933
  %v7241 = vpop.f32.mrf.mxu0
  %v7242 = vadd.f32 0.0, %v7241
  %v7243 = vpop.f32.mrf.mxu0
  %v7244 = vadd.f32 0.0, %v7243
  %7245 = vmatmul.bf16.gmra.mxu0 %v4936
  %v7246 = vpop.f32.mrf.mxu0
  %v7247 = vadd.f32 0.0, %v7246
  %v7248 = vpop.f32.mrf.mxu0
  %v7249 = vadd.f32 0.0, %v7248
  %7250 = vmatmul.bf16.gmra.mxu0 %v4939
  %v7251 = vpop.f32.mrf.mxu0
  %v7252 = vadd.f32 0.0, %v7251
  %v7253 = vpop.f32.mrf.mxu0
  %v7254 = vadd.f32 0.0, %v7253
  %7255 = vmatmul.bf16.gmra.mxu0 %v4942
  %v7256 = vpop.f32.mrf.mxu0
  %v7257 = vadd.f32 0.0, %v7256
  %v7258 = vpop.f32.mrf.mxu0
  %v7259 = vadd.f32 0.0, %v7258
  %7260 = vmatmul.bf16.gmra.mxu0 %v4945
  %v7261 = vpop.f32.mrf.mxu0
  %v7262 = vadd.f32 0.0, %v7261
  %v7263 = vpop.f32.mrf.mxu0
  %v7264 = vadd.f32 0.0, %v7263
  %7265 = vmatmul.bf16.gmra.mxu0 %v4948
  %v7266 = vpop.f32.mrf.mxu0
  %v7267 = vadd.f32 0.0, %v7266
  %v7268 = vpop.f32.mrf.mxu0
  %v7269 = vadd.f32 0.0, %v7268
  %7270 = vmatmul.bf16.gmra.mxu0 %v4951
  %v7271 = vpop.f32.mrf.mxu0
  %v7272 = vadd.f32 0.0, %v7271
  %v7273 = vpop.f32.mrf.mxu0
  %v7274 = vadd.f32 0.0, %v7273
  %7275 = vmatmul.bf16.gmra.mxu0 %v4954
  %v7276 = vpop.f32.mrf.mxu0
  %v7277 = vadd.f32 0.0, %v7276
  %v7278 = vpop.f32.mrf.mxu0
  %v7279 = vadd.f32 0.0, %v7278
  %7280 = vmatmul.bf16.gmra.mxu0 %v4957
  %v7281 = vpop.f32.mrf.mxu0
  %v7282 = vadd.f32 0.0, %v7281
  %v7283 = vpop.f32.mrf.mxu0
  %v7284 = vadd.f32 0.0, %v7283
  %7285 = vmatmul.bf16.gmra.mxu0 %v4960
  %v7286 = vpop.f32.mrf.mxu0
  %v7287 = vadd.f32 0.0, %v7286
  %v7288 = vpop.f32.mrf.mxu0
  %v7289 = vadd.f32 0.0, %v7288
  %7290 = vmatmul.bf16.gmra.mxu0 %v4963
  %v7291 = vpop.f32.mrf.mxu0
  %v7292 = vadd.f32 0.0, %v7291
  %v7293 = vpop.f32.mrf.mxu0
  %v7294 = vadd.f32 0.0, %v7293
  %7295 = vmatmul.bf16.gmra.mxu0 %v4966
  %v7296 = vpop.f32.mrf.mxu0
  %v7297 = vadd.f32 0.0, %v7296
  %v7298 = vpop.f32.mrf.mxu0
  %v7299 = vadd.f32 0.0, %v7298
  %7300 = vmatmul.bf16.gmra.mxu0 %v4969
  %v7301 = vpop.f32.mrf.mxu0
  %v7302 = vadd.f32 0.0, %v7301
  %v7303 = vpop.f32.mrf.mxu0
  %v7304 = vadd.f32 0.0, %v7303
  %7305 = vmatmul.bf16.gmra.mxu0 %v4972
  %v7306 = vpop.f32.mrf.mxu0
  %v7307 = vadd.f32 0.0, %v7306
  %v7308 = vpop.f32.mrf.mxu0
  %v7309 = vadd.f32 0.0, %v7308
  %7310 = vmatmul.bf16.gmra.mxu0 %v4975
  %v7311 = vpop.f32.mrf.mxu0
  %v7312 = vadd.f32 0.0, %v7311
  %v7313 = vpop.f32.mrf.mxu0
  %v7314 = vadd.f32 0.0, %v7313
  %7315 = vmatmul.bf16.gmra.mxu0 %v4978
  %v7316 = vpop.f32.mrf.mxu0
  %v7317 = vadd.f32 0.0, %v7316
  %v7318 = vpop.f32.mrf.mxu0
  %v7319 = vadd.f32 0.0, %v7318
  %7320 = vmatmul.bf16.gmra.mxu0 %v2835
  %v7321 = vpop.f32.mrf.mxu0
  %v7322 = vadd.f32 0.0, %v7321
  %v7323 = vpop.f32.mrf.mxu0
  %v7324 = vadd.f32 0.0, %v7323
  %7325 = vmatmul.bf16.gmra.mxu0 %v2835
  %v7326 = vpop.f32.mrf.mxu0
  %v7327 = vadd.f32 0.0, %v7326
  %v7328 = vpop.f32.mrf.mxu0
  %v7329 = vadd.f32 0.0, %v7328
  %7330 = vmatmul.bf16.gmra.mxu0 %v2835
  %v7331 = vpop.f32.mrf.mxu0
  %v7332 = vadd.f32 0.0, %v7331
  %v7333 = vpop.f32.mrf.mxu0
  %v7334 = vadd.f32 0.0, %v7333
  %7335 = vmatmul.bf16.gmra.mxu0 %v2835
  %v7336 = vpop.f32.mrf.mxu0
  %v7337 = vadd.f32 0.0, %v7336
  %v7338 = vpop.f32.mrf.mxu0
  %v7339 = vadd.f32 0.0, %v7338
  %7340 = vdwg.mxu0
  %v7341 = vadd.f32 %v7091, %v7182
  %v7342 = vadd.f32 %v7092, %v7184
  %v7343 = vadd.f32 %v7093, %v7187
  %v7344 = vadd.f32 %v7094, %v7189
  %v7345 = vadd.f32 %v7095, %v7192
  %v7346 = vadd.f32 %v7096, %v7194
  %v7347 = vadd.f32 %v7097, %v7197
  %v7348 = vadd.f32 %v7098, %v7199
  %v7349 = vadd.f32 %v7099, %v7202
  %v7350 = vadd.f32 %v7100, %v7204
  %v7351 = vadd.f32 %v7101, %v7207
  %v7352 = vadd.f32 %v7102, %v7209
  %v7353 = vadd.f32 %v7103, %v7212
  %v7354 = vadd.f32 %v7104, %v7214
  %v7355 = vadd.f32 %v7105, %v7217
  %v7356 = vadd.f32 %v7106, %v7219
  %v7357 = vadd.f32 %v7107, %v7222
  %v7358 = vadd.f32 %v7108, %v7224
  %v7359 = vadd.f32 %v7109, %v7227
  %v7360 = vadd.f32 %v7110, %v7229
  %v7361 = vadd.f32 %v7111, %v7232
  %v7362 = vadd.f32 %v7112, %v7234
  %v7363 = vadd.f32 %v7113, %v7237
  %v7364 = vadd.f32 %v7114, %v7239
  %v7365 = vadd.f32 %v7115, %v7242
  %v7366 = vadd.f32 %v7116, %v7244
  %v7367 = vadd.f32 %v7117, %v7247
  %v7368 = vadd.f32 %v7118, %v7249
  %v7369 = vadd.f32 %v7119, %v7252
  %v7370 = vadd.f32 %v7120, %v7254
  %v7371 = vadd.f32 %v7121, %v7257
  %v7372 = vadd.f32 %v7122, %v7259
  %v7373 = vadd.f32 %v7123, %v7262
  %v7374 = vadd.f32 %v7124, %v7264
  %v7375 = vadd.f32 %v7125, %v7267
  %v7376 = vadd.f32 %v7126, %v7269
  %v7377 = vadd.f32 %v7127, %v7272
  %v7378 = vadd.f32 %v7128, %v7274
  %v7379 = vadd.f32 %v7129, %v7277
  %v7380 = vadd.f32 %v7130, %v7279
  %v7381 = vadd.f32 %v7131, %v7282
  %v7382 = vadd.f32 %v7132, %v7284
  %v7383 = vadd.f32 %v7133, %v7287
  %v7384 = vadd.f32 %v7134, %v7289
  %v7385 = vadd.f32 %v7135, %v7292
  %v7386 = vadd.f32 %v7136, %v7294
  %v7387 = vadd.f32 %v7137, %v7297
  %v7388 = vadd.f32 %v7138, %v7299
  %v7389 = vadd.f32 %v7139, %v7302
  %v7390 = vadd.f32 %v7140, %v7304
  %v7391 = vadd.f32 %v7141, %v7307
  %v7392 = vadd.f32 %v7142, %v7309
  %v7393 = vadd.f32 %v7143, %v7312
  %v7394 = vadd.f32 %v7144, %v7314
  %v7395 = vadd.f32 %v7145, %v7317
  %v7396 = vadd.f32 %v7146, %v7319
  %v7397 = vadd.f32 %v7147, %v7322
  %v7398 = vadd.f32 %v7148, %v7324
  %v7399 = vadd.f32 %v7149, %v7327
  %v7400 = vadd.f32 %v7150, %v7329
  %v7401 = vadd.f32 %v7151, %v7332
  %v7402 = vadd.f32 %v7152, %v7334
  %v7403 = vadd.f32 %v7153, %v7337
  %v7404 = vadd.f32 %v7154, %v7339
  %s7405 = scalar_lea.vmem %s2, 240
  %v7406 = vld [vmem:[%s7405] sm:$0xf]
  %v7407 = vld [vmem:[%s7405 + $0x4] sm:$0xf]
  %v7408 = vld [vmem:[%s7405 + $0x8] sm:$0xf]
  %v7409 = vld [vmem:[%s7405 + $0xc] sm:$0xf]
  %v7414 = vunpack.c.l.b16 %v7406
  %v7415 = vunpack.c.l.b16 %v7407
  %v7416 = vunpack.c.l.b16 %v7408
  %v7417 = vunpack.c.l.b16 %v7409
  %v7418 = vpack.c.b16 %v7415, %v7414
  %v7419 = vpack.c.b16 %v7417, %v7416
  %7422 = vmatpush.bf16.msra.mxu0 0
  %7423 = vmatpush.bf16.msra.mxu0 0
  %7424 = vmatpush.bf16.msra.mxu0 0
  %7425 = vmatpush.bf16.msra.mxu0 0
  %7426 = vmatpush.bf16.msra.mxu0 0
  %7427 = vmatpush.bf16.msra.mxu0 0
  %7428 = vmatpush.bf16.msra.mxu0 %v7419
  %7429 = vmatpush.bf16.msra.mxu0 %v7418
  %7430 = vmatmul.bf16.gmra.mxu0 %v5275
  %v7431 = vpop.f32.mrf.mxu0
  %v7432 = vadd.f32 0.0, %v7431
  %v7433 = vpop.f32.mrf.mxu0
  %v7434 = vadd.f32 0.0, %v7433
  %7435 = vmatmul.bf16.gmra.mxu0 %v5278
  %v7436 = vpop.f32.mrf.mxu0
  %v7437 = vadd.f32 0.0, %v7436
  %v7438 = vpop.f32.mrf.mxu0
  %v7439 = vadd.f32 0.0, %v7438
  %7440 = vmatmul.bf16.gmra.mxu0 %v5281
  %v7441 = vpop.f32.mrf.mxu0
  %v7442 = vadd.f32 0.0, %v7441
  %v7443 = vpop.f32.mrf.mxu0
  %v7444 = vadd.f32 0.0, %v7443
  %7445 = vmatmul.bf16.gmra.mxu0 %v5284
  %v7446 = vpop.f32.mrf.mxu0
  %v7447 = vadd.f32 0.0, %v7446
  %v7448 = vpop.f32.mrf.mxu0
  %v7449 = vadd.f32 0.0, %v7448
  %7450 = vmatmul.bf16.gmra.mxu0 %v5287
  %v7451 = vpop.f32.mrf.mxu0
  %v7452 = vadd.f32 0.0, %v7451
  %v7453 = vpop.f32.mrf.mxu0
  %v7454 = vadd.f32 0.0, %v7453
  %7455 = vmatmul.bf16.gmra.mxu0 %v5290
  %v7456 = vpop.f32.mrf.mxu0
  %v7457 = vadd.f32 0.0, %v7456
  %v7458 = vpop.f32.mrf.mxu0
  %v7459 = vadd.f32 0.0, %v7458
  %7460 = vmatmul.bf16.gmra.mxu0 %v5293
  %v7461 = vpop.f32.mrf.mxu0
  %v7462 = vadd.f32 0.0, %v7461
  %v7463 = vpop.f32.mrf.mxu0
  %v7464 = vadd.f32 0.0, %v7463
  %7465 = vmatmul.bf16.gmra.mxu0 %v5296
  %v7466 = vpop.f32.mrf.mxu0
  %v7467 = vadd.f32 0.0, %v7466
  %v7468 = vpop.f32.mrf.mxu0
  %v7469 = vadd.f32 0.0, %v7468
  %7470 = vmatmul.bf16.gmra.mxu0 %v5299
  %v7471 = vpop.f32.mrf.mxu0
  %v7472 = vadd.f32 0.0, %v7471
  %v7473 = vpop.f32.mrf.mxu0
  %v7474 = vadd.f32 0.0, %v7473
  %7475 = vmatmul.bf16.gmra.mxu0 %v5302
  %v7476 = vpop.f32.mrf.mxu0
  %v7477 = vadd.f32 0.0, %v7476
  %v7478 = vpop.f32.mrf.mxu0
  %v7479 = vadd.f32 0.0, %v7478
  %7480 = vmatmul.bf16.gmra.mxu0 %v5305
  %v7481 = vpop.f32.mrf.mxu0
  %v7482 = vadd.f32 0.0, %v7481
  %v7483 = vpop.f32.mrf.mxu0
  %v7484 = vadd.f32 0.0, %v7483
  %7485 = vmatmul.bf16.gmra.mxu0 %v5308
  %v7486 = vpop.f32.mrf.mxu0
  %v7487 = vadd.f32 0.0, %v7486
  %v7488 = vpop.f32.mrf.mxu0
  %v7489 = vadd.f32 0.0, %v7488
  %7490 = vmatmul.bf16.gmra.mxu0 %v5311
  %v7491 = vpop.f32.mrf.mxu0
  %v7492 = vadd.f32 0.0, %v7491
  %v7493 = vpop.f32.mrf.mxu0
  %v7494 = vadd.f32 0.0, %v7493
  %7495 = vmatmul.bf16.gmra.mxu0 %v5314
  %v7496 = vpop.f32.mrf.mxu0
  %v7497 = vadd.f32 0.0, %v7496
  %v7498 = vpop.f32.mrf.mxu0
  %v7499 = vadd.f32 0.0, %v7498
  %7500 = vmatmul.bf16.gmra.mxu0 %v5317
  %v7501 = vpop.f32.mrf.mxu0
  %v7502 = vadd.f32 0.0, %v7501
  %v7503 = vpop.f32.mrf.mxu0
  %v7504 = vadd.f32 0.0, %v7503
  %7505 = vmatmul.bf16.gmra.mxu0 %v5320
  %v7506 = vpop.f32.mrf.mxu0
  %v7507 = vadd.f32 0.0, %v7506
  %v7508 = vpop.f32.mrf.mxu0
  %v7509 = vadd.f32 0.0, %v7508
  %7510 = vmatmul.bf16.gmra.mxu0 %v5323
  %v7511 = vpop.f32.mrf.mxu0
  %v7512 = vadd.f32 0.0, %v7511
  %v7513 = vpop.f32.mrf.mxu0
  %v7514 = vadd.f32 0.0, %v7513
  %7515 = vmatmul.bf16.gmra.mxu0 %v5326
  %v7516 = vpop.f32.mrf.mxu0
  %v7517 = vadd.f32 0.0, %v7516
  %v7518 = vpop.f32.mrf.mxu0
  %v7519 = vadd.f32 0.0, %v7518
  %7520 = vmatmul.bf16.gmra.mxu0 %v5329
  %v7521 = vpop.f32.mrf.mxu0
  %v7522 = vadd.f32 0.0, %v7521
  %v7523 = vpop.f32.mrf.mxu0
  %v7524 = vadd.f32 0.0, %v7523
  %7525 = vmatmul.bf16.gmra.mxu0 %v5332
  %v7526 = vpop.f32.mrf.mxu0
  %v7527 = vadd.f32 0.0, %v7526
  %v7528 = vpop.f32.mrf.mxu0
  %v7529 = vadd.f32 0.0, %v7528
  %7530 = vmatmul.bf16.gmra.mxu0 %v5335
  %v7531 = vpop.f32.mrf.mxu0
  %v7532 = vadd.f32 0.0, %v7531
  %v7533 = vpop.f32.mrf.mxu0
  %v7534 = vadd.f32 0.0, %v7533
  %7535 = vmatmul.bf16.gmra.mxu0 %v5338
  %v7536 = vpop.f32.mrf.mxu0
  %v7537 = vadd.f32 0.0, %v7536
  %v7538 = vpop.f32.mrf.mxu0
  %v7539 = vadd.f32 0.0, %v7538
  %7540 = vmatmul.bf16.gmra.mxu0 %v5341
  %v7541 = vpop.f32.mrf.mxu0
  %v7542 = vadd.f32 0.0, %v7541
  %v7543 = vpop.f32.mrf.mxu0
  %v7544 = vadd.f32 0.0, %v7543
  %7545 = vmatmul.bf16.gmra.mxu0 %v5344
  %v7546 = vpop.f32.mrf.mxu0
  %v7547 = vadd.f32 0.0, %v7546
  %v7548 = vpop.f32.mrf.mxu0
  %v7549 = vadd.f32 0.0, %v7548
  %7550 = vmatmul.bf16.gmra.mxu0 %v5347
  %v7551 = vpop.f32.mrf.mxu0
  %v7552 = vadd.f32 0.0, %v7551
  %v7553 = vpop.f32.mrf.mxu0
  %v7554 = vadd.f32 0.0, %v7553
  %7555 = vmatmul.bf16.gmra.mxu0 %v5350
  %v7556 = vpop.f32.mrf.mxu0
  %v7557 = vadd.f32 0.0, %v7556
  %v7558 = vpop.f32.mrf.mxu0
  %v7559 = vadd.f32 0.0, %v7558
  %7560 = vmatmul.bf16.gmra.mxu0 %v5353
  %v7561 = vpop.f32.mrf.mxu0
  %v7562 = vadd.f32 0.0, %v7561
  %v7563 = vpop.f32.mrf.mxu0
  %v7564 = vadd.f32 0.0, %v7563
  %7565 = vmatmul.bf16.gmra.mxu0 %v5356
  %v7566 = vpop.f32.mrf.mxu0
  %v7567 = vadd.f32 0.0, %v7566
  %v7568 = vpop.f32.mrf.mxu0
  %v7569 = vadd.f32 0.0, %v7568
  %7570 = vmatmul.bf16.gmra.mxu0 %v2835
  %v7571 = vpop.f32.mrf.mxu0
  %v7572 = vadd.f32 0.0, %v7571
  %v7573 = vpop.f32.mrf.mxu0
  %v7574 = vadd.f32 0.0, %v7573
  %7575 = vmatmul.bf16.gmra.mxu0 %v2835
  %v7576 = vpop.f32.mrf.mxu0
  %v7577 = vadd.f32 0.0, %v7576
  %v7578 = vpop.f32.mrf.mxu0
  %v7579 = vadd.f32 0.0, %v7578
  %7580 = vmatmul.bf16.gmra.mxu0 %v2835
  %v7581 = vpop.f32.mrf.mxu0
  %v7582 = vadd.f32 0.0, %v7581
  %v7583 = vpop.f32.mrf.mxu0
  %v7584 = vadd.f32 0.0, %v7583
  %7585 = vmatmul.bf16.gmra.mxu0 %v2835
  %v7586 = vpop.f32.mrf.mxu0
  %v7587 = vadd.f32 0.0, %v7586
  %v7588 = vpop.f32.mrf.mxu0
  %v7589 = vadd.f32 0.0, %v7588
  %7590 = vdwg.mxu0
  %v7591 = vadd.f32 %v7341, %v7432
  %v7592 = vadd.f32 %v7342, %v7434
  %v7593 = vadd.f32 %v7343, %v7437
  %v7594 = vadd.f32 %v7344, %v7439
  %v7595 = vadd.f32 %v7345, %v7442
  %v7596 = vadd.f32 %v7346, %v7444
  %v7597 = vadd.f32 %v7347, %v7447
  %v7598 = vadd.f32 %v7348, %v7449
  %v7599 = vadd.f32 %v7349, %v7452
  %v7600 = vadd.f32 %v7350, %v7454
  %v7601 = vadd.f32 %v7351, %v7457
  %v7602 = vadd.f32 %v7352, %v7459
  %v7603 = vadd.f32 %v7353, %v7462
  %v7604 = vadd.f32 %v7354, %v7464
  %v7605 = vadd.f32 %v7355, %v7467
  %v7606 = vadd.f32 %v7356, %v7469
  %v7607 = vadd.f32 %v7357, %v7472
  %v7608 = vadd.f32 %v7358, %v7474
  %v7609 = vadd.f32 %v7359, %v7477
  %v7610 = vadd.f32 %v7360, %v7479
  %v7611 = vadd.f32 %v7361, %v7482
  %v7612 = vadd.f32 %v7362, %v7484
  %v7613 = vadd.f32 %v7363, %v7487
  %v7614 = vadd.f32 %v7364, %v7489
  %v7615 = vadd.f32 %v7365, %v7492
  %v7616 = vadd.f32 %v7366, %v7494
  %v7617 = vadd.f32 %v7367, %v7497
  %v7618 = vadd.f32 %v7368, %v7499
  %v7619 = vadd.f32 %v7369, %v7502
  %v7620 = vadd.f32 %v7370, %v7504
  %v7621 = vadd.f32 %v7371, %v7507
  %v7622 = vadd.f32 %v7372, %v7509
  %v7623 = vadd.f32 %v7373, %v7512
  %v7624 = vadd.f32 %v7374, %v7514
  %v7625 = vadd.f32 %v7375, %v7517
  %v7626 = vadd.f32 %v7376, %v7519
  %v7627 = vadd.f32 %v7377, %v7522
  %v7628 = vadd.f32 %v7378, %v7524
  %v7629 = vadd.f32 %v7379, %v7527
  %v7630 = vadd.f32 %v7380, %v7529
  %v7631 = vadd.f32 %v7381, %v7532
  %v7632 = vadd.f32 %v7382, %v7534
  %v7633 = vadd.f32 %v7383, %v7537
  %v7634 = vadd.f32 %v7384, %v7539
  %v7635 = vadd.f32 %v7385, %v7542
  %v7636 = vadd.f32 %v7386, %v7544
  %v7637 = vadd.f32 %v7387, %v7547
  %v7638 = vadd.f32 %v7388, %v7549
  %v7639 = vadd.f32 %v7389, %v7552
  %v7640 = vadd.f32 %v7390, %v7554
  %v7641 = vadd.f32 %v7391, %v7557
  %v7642 = vadd.f32 %v7392, %v7559
  %v7643 = vadd.f32 %v7393, %v7562
  %v7644 = vadd.f32 %v7394, %v7564
  %v7645 = vadd.f32 %v7395, %v7567
  %v7646 = vadd.f32 %v7396, %v7569
  %v7647 = vadd.f32 %v7397, %v7572
  %v7648 = vadd.f32 %v7398, %v7574
  %v7649 = vadd.f32 %v7399, %v7577
  %v7650 = vadd.f32 %v7400, %v7579
  %v7651 = vadd.f32 %v7401, %v7582
  %v7652 = vadd.f32 %v7402, %v7584
  %v7653 = vadd.f32 %v7403, %v7587
  %v7654 = vadd.f32 %v7404, %v7589
  %v7655 = vld [vmem:[%s3] sm:$0x1]
  %v7656 = vld [vmem:[%s3 + $0x1] sm:$0x1]
  %v7657 = vld [vmem:[%s3 + $0x2] sm:$0x1]
  %v7658 = vld [vmem:[%s3 + $0x3] sm:$0x1]
  %v7659 = vld [vmem:[%s3 + $0x4] sm:$0x1]
  %v7660 = vld [vmem:[%s3 + $0x5] sm:$0x1]
  %v7661 = vld [vmem:[%s3 + $0x6] sm:$0x1]
  %v7662 = vld [vmem:[%s3 + $0x7] sm:$0x1]
  %v7663 = vld [vmem:[%s3 + $0x8] sm:$0x1]
  %v7664 = vld [vmem:[%s3 + $0x9] sm:$0x1]
  %v7665 = vld [vmem:[%s3 + $0xa] sm:$0x1]
  %v7666 = vld [vmem:[%s3 + $0xb] sm:$0x1]
  %v7667 = vld [vmem:[%s3 + $0xc] sm:$0x1]
  %v7668 = vld [vmem:[%s3 + $0xd] sm:$0x1]
  %v7669 = vld [vmem:[%s3 + $0xe] sm:$0x1]
  %v7670 = vld [vmem:[%s3 + $0xf] sm:$0x1]
  %v7671 = vld [vmem:[%s3 + $0x10] sm:$0x1]
  %v7672 = vld [vmem:[%s3 + $0x11] sm:$0x1]
  %v7673 = vld [vmem:[%s3 + $0x12] sm:$0x1]
  %v7674 = vld [vmem:[%s3 + $0x13] sm:$0x1]
  %v7675 = vld [vmem:[%s3 + $0x14] sm:$0x1]
  %v7676 = vld [vmem:[%s3 + $0x15] sm:$0x1]
  %v7677 = vld [vmem:[%s3 + $0x16] sm:$0x1]
  %v7678 = vld [vmem:[%s3 + $0x17] sm:$0x1]
  %v7679 = vld [vmem:[%s3 + $0x18] sm:$0x1]
  %v7680 = vld [vmem:[%s3 + $0x19] sm:$0x1]
  %v7681 = vld [vmem:[%s3 + $0x1a] sm:$0x1]
  %v7682 = vld [vmem:[%s3 + $0x1b] sm:$0x1]
  %v7683 = vld [vmem:[%s3 + $0x1c] sm:$0x1]
  %v7684 = vld [vmem:[%s3 + $0x1d] sm:$0x1]
  %v7685 = vld [vmem:[%s3 + $0x1e] sm:$0x1]
  %v7686 = vld [vmem:[%s3 + $0x1f] sm:$0x1]
  %v7687 = vld [vmem:[%s3 + $0x20] sm:$0x1]
  %v7688 = vld [vmem:[%s3 + $0x21] sm:$0x1]
  %v7689 = vld [vmem:[%s3 + $0x22] sm:$0x1]
  %v7690 = vld [vmem:[%s3 + $0x23] sm:$0x1]
  %v7691 = vld [vmem:[%s3 + $0x24] sm:$0x1]
  %v7692 = vld [vmem:[%s3 + $0x25] sm:$0x1]
  %v7693 = vld [vmem:[%s3 + $0x26] sm:$0x1]
  %v7694 = vld [vmem:[%s3 + $0x27] sm:$0x1]
  %v7695 = vld [vmem:[%s3 + $0x28] sm:$0x1]
  %v7696 = vld [vmem:[%s3 + $0x29] sm:$0x1]
  %v7697 = vld [vmem:[%s3 + $0x2a] sm:$0x1]
  %v7698 = vld [vmem:[%s3 + $0x2b] sm:$0x1]
  %v7699 = vld [vmem:[%s3 + $0x2c] sm:$0x1]
  %v7700 = vld [vmem:[%s3 + $0x2d] sm:$0x1]
  %v7701 = vld [vmem:[%s3 + $0x2e] sm:$0x1]
  %v7702 = vld [vmem:[%s3 + $0x2f] sm:$0x1]
  %v7703 = vld [vmem:[%s3 + $0x30] sm:$0x1]
  %v7704 = vld [vmem:[%s3 + $0x31] sm:$0x1]
  %v7705 = vld [vmem:[%s3 + $0x32] sm:$0x1]
  %v7706 = vld [vmem:[%s3 + $0x33] sm:$0x1]
  %v7707 = vld [vmem:[%s3 + $0x34] sm:$0x1]
  %v7708 = vld [vmem:[%s3 + $0x35] sm:$0x1]
  %v7709 = vld [vmem:[%s3 + $0x36] sm:$0x1]
  %v7710 = vld [vmem:[%s3 + $0x37] sm:$0x1]
  %v7711 = vld [vmem:[%s3 + $0x38] sm:$0x1]
  %v7712 = vld [vmem:[%s3 + $0x39] sm:$0x1]
  %v7713 = vld [vmem:[%s3 + $0x3a] sm:$0x1]
  %v7714 = vld [vmem:[%s3 + $0x3b] sm:$0x1]
  %v7715 = vld [vmem:[%s3 + $0x3c] sm:$0x1]
  %v7716 = vld [vmem:[%s3 + $0x3d] sm:$0x1]
  %v7717 = vld [vmem:[%s3 + $0x3e] sm:$0x1]
  %v7718 = vld [vmem:[%s3 + $0x3f] sm:$0x1]
  %v7719 = vld [vmem:[%s4] sm:$0x1]
  %v7720 = vld [vmem:[%s4 + $0x1] sm:$0x1]
  %v7721 = vld [vmem:[%s4 + $0x2] sm:$0x1]
  %v7722 = vld [vmem:[%s4 + $0x3] sm:$0x1]
  %v7723 = vld [vmem:[%s4 + $0x4] sm:$0x1]
  %v7724 = vld [vmem:[%s4 + $0x5] sm:$0x1]
  %v7725 = vld [vmem:[%s4 + $0x6] sm:$0x1]
  %v7726 = vld [vmem:[%s4 + $0x7] sm:$0x1]
  %v7727 = vld [vmem:[%s4 + $0x8] sm:$0x1]
  %v7728 = vld [vmem:[%s4 + $0x9] sm:$0x1]
  %v7729 = vld [vmem:[%s4 + $0xa] sm:$0x1]
  %v7730 = vld [vmem:[%s4 + $0xb] sm:$0x1]
  %v7731 = vld [vmem:[%s4 + $0xc] sm:$0x1]
  %v7732 = vld [vmem:[%s4 + $0xd] sm:$0x1]
  %v7733 = vld [vmem:[%s4 + $0xe] sm:$0x1]
  %v7734 = vld [vmem:[%s4 + $0xf] sm:$0x1]
  %v7735 = vld [vmem:[%s4 + $0x10] sm:$0x1]
  %v7736 = vld [vmem:[%s4 + $0x11] sm:$0x1]
  %v7737 = vld [vmem:[%s4 + $0x12] sm:$0x1]
  %v7738 = vld [vmem:[%s4 + $0x13] sm:$0x1]
  %v7739 = vld [vmem:[%s4 + $0x14] sm:$0x1]
  %v7740 = vld [vmem:[%s4 + $0x15] sm:$0x1]
  %v7741 = vld [vmem:[%s4 + $0x16] sm:$0x1]
  %v7742 = vld [vmem:[%s4 + $0x17] sm:$0x1]
  %v7743 = vld [vmem:[%s4 + $0x18] sm:$0x1]
  %v7744 = vld [vmem:[%s4 + $0x19] sm:$0x1]
  %v7745 = vld [vmem:[%s4 + $0x1a] sm:$0x1]
  %v7746 = vld [vmem:[%s4 + $0x1b] sm:$0x1]
  %v7747 = vld [vmem:[%s4 + $0x1c] sm:$0x1]
  %v7748 = vld [vmem:[%s4 + $0x1d] sm:$0x1]
  %v7749 = vld [vmem:[%s4 + $0x1e] sm:$0x1]
  %v7750 = vld [vmem:[%s4 + $0x1f] sm:$0x1]
  %v7751 = vld [vmem:[%s4 + $0x20] sm:$0x1]
  %v7752 = vld [vmem:[%s4 + $0x21] sm:$0x1]
  %v7753 = vld [vmem:[%s4 + $0x22] sm:$0x1]
  %v7754 = vld [vmem:[%s4 + $0x23] sm:$0x1]
  %v7755 = vld [vmem:[%s4 + $0x24] sm:$0x1]
  %v7756 = vld [vmem:[%s4 + $0x25] sm:$0x1]
  %v7757 = vld [vmem:[%s4 + $0x26] sm:$0x1]
  %v7758 = vld [vmem:[%s4 + $0x27] sm:$0x1]
  %v7759 = vld [vmem:[%s4 + $0x28] sm:$0x1]
  %v7760 = vld [vmem:[%s4 + $0x29] sm:$0x1]
  %v7761 = vld [vmem:[%s4 + $0x2a] sm:$0x1]
  %v7762 = vld [vmem:[%s4 + $0x2b] sm:$0x1]
  %v7763 = vld [vmem:[%s4 + $0x2c] sm:$0x1]
  %v7764 = vld [vmem:[%s4 + $0x2d] sm:$0x1]
  %v7765 = vld [vmem:[%s4 + $0x2e] sm:$0x1]
  %v7766 = vld [vmem:[%s4 + $0x2f] sm:$0x1]
  %v7767 = vld [vmem:[%s4 + $0x30] sm:$0x1]
  %v7768 = vld [vmem:[%s4 + $0x31] sm:$0x1]
  %v7769 = vld [vmem:[%s4 + $0x32] sm:$0x1]
  %v7770 = vld [vmem:[%s4 + $0x33] sm:$0x1]
  %v7771 = vld [vmem:[%s4 + $0x34] sm:$0x1]
  %v7772 = vld [vmem:[%s4 + $0x35] sm:$0x1]
  %v7773 = vld [vmem:[%s4 + $0x36] sm:$0x1]
  %v7774 = vld [vmem:[%s4 + $0x37] sm:$0x1]
  %v7775 = vld [vmem:[%s4 + $0x38] sm:$0x1]
  %v7776 = vld [vmem:[%s4 + $0x39] sm:$0x1]
  %v7777 = vld [vmem:[%s4 + $0x3a] sm:$0x1]
  %v7778 = vld [vmem:[%s4 + $0x3b] sm:$0x1]
  %v7779 = vld [vmem:[%s4 + $0x3c] sm:$0x1]
  %v7780 = vld [vmem:[%s4 + $0x3d] sm:$0x1]
  %v7781 = vld [vmem:[%s4 + $0x3e] sm:$0x1]
  %v7782 = vld [vmem:[%s4 + $0x3f] sm:$0x1]
  %vm7783 = vcmask 523264
  %v7784 = vsel %vm7783, %v7591, 0.0
  %v7785 = vsel %vm7783, %v7592, 0.0
  %v7786 = vadd.f32 %v7784, %v7785
  %v7787 = vsel %vm7783, %v7593, 0.0
  %v7788 = vadd.f32 %v7786, %v7787
  %v7789 = vsel %vm7783, %v7594, 0.0
  %v7790 = vadd.f32 %v7788, %v7789
  %v7791 = vsel %vm7783, %v7595, 0.0
  %v7792 = vadd.f32 %v7790, %v7791
  %v7793 = vsel %vm7783, %v7596, 0.0
  %v7794 = vadd.f32 %v7792, %v7793
  %v7795 = vsel %vm7783, %v7597, 0.0
  %v7796 = vadd.f32 %v7794, %v7795
  %v7797 = vsel %vm7783, %v7598, 0.0
  %v7798 = vadd.f32 %v7796, %v7797
  %v7799 = vsel %vm7783, %v7599, 0.0
  %v7800 = vadd.f32 %v7798, %v7799
  %v7801 = vsel %vm7783, %v7600, 0.0
  %v7802 = vadd.f32 %v7800, %v7801
  %v7803 = vsel %vm7783, %v7601, 0.0
  %v7804 = vadd.f32 %v7802, %v7803
  %v7805 = vsel %vm7783, %v7602, 0.0
  %v7806 = vadd.f32 %v7804, %v7805
  %v7807 = vsel %vm7783, %v7603, 0.0
  %v7808 = vadd.f32 %v7806, %v7807
  %v7809 = vsel %vm7783, %v7604, 0.0
  %v7810 = vadd.f32 %v7808, %v7809
  %v7811 = vsel %vm7783, %v7605, 0.0
  %v7812 = vadd.f32 %v7810, %v7811
  %v7813 = vsel %vm7783, %v7606, 0.0
  %v7814 = vadd.f32 %v7812, %v7813
  %v7815 = vsel %vm7783, %v7607, 0.0
  %v7816 = vadd.f32 %v7814, %v7815
  %v7817 = vsel %vm7783, %v7608, 0.0
  %v7818 = vadd.f32 %v7816, %v7817
  %v7819 = vsel %vm7783, %v7609, 0.0
  %v7820 = vadd.f32 %v7818, %v7819
  %v7821 = vsel %vm7783, %v7610, 0.0
  %v7822 = vadd.f32 %v7820, %v7821
  %v7823 = vsel %vm7783, %v7611, 0.0
  %v7824 = vadd.f32 %v7822, %v7823
  %v7825 = vsel %vm7783, %v7612, 0.0
  %v7826 = vadd.f32 %v7824, %v7825
  %v7827 = vsel %vm7783, %v7613, 0.0
  %v7828 = vadd.f32 %v7826, %v7827
  %v7829 = vsel %vm7783, %v7614, 0.0
  %v7830 = vadd.f32 %v7828, %v7829
  %v7831 = vsel %vm7783, %v7615, 0.0
  %v7832 = vadd.f32 %v7830, %v7831
  %v7833 = vsel %vm7783, %v7616, 0.0
  %v7834 = vadd.f32 %v7832, %v7833
  %v7835 = vsel %vm7783, %v7617, 0.0
  %v7836 = vadd.f32 %v7834, %v7835
  %v7837 = vsel %vm7783, %v7618, 0.0
  %v7838 = vadd.f32 %v7836, %v7837
  %v7839 = vsel %vm7783, %v7619, 0.0
  %v7840 = vadd.f32 %v7838, %v7839
  %v7841 = vsel %vm7783, %v7620, 0.0
  %v7842 = vadd.f32 %v7840, %v7841
  %v7843 = vsel %vm7783, %v7621, 0.0
  %v7844 = vadd.f32 %v7842, %v7843
  %v7845 = vsel %vm7783, %v7622, 0.0
  %v7846 = vadd.f32 %v7844, %v7845
  %v7847 = vsel %vm7783, %v7623, 0.0
  %v7848 = vadd.f32 %v7846, %v7847
  %v7849 = vsel %vm7783, %v7624, 0.0
  %v7850 = vadd.f32 %v7848, %v7849
  %v7851 = vsel %vm7783, %v7625, 0.0
  %v7852 = vadd.f32 %v7850, %v7851
  %v7853 = vsel %vm7783, %v7626, 0.0
  %v7854 = vadd.f32 %v7852, %v7853
  %v7855 = vsel %vm7783, %v7627, 0.0
  %v7856 = vadd.f32 %v7854, %v7855
  %v7857 = vsel %vm7783, %v7628, 0.0
  %v7858 = vadd.f32 %v7856, %v7857
  %v7859 = vsel %vm7783, %v7629, 0.0
  %v7860 = vadd.f32 %v7858, %v7859
  %v7861 = vsel %vm7783, %v7630, 0.0
  %v7862 = vadd.f32 %v7860, %v7861
  %v7863 = vsel %vm7783, %v7631, 0.0
  %v7864 = vadd.f32 %v7862, %v7863
  %v7865 = vsel %vm7783, %v7632, 0.0
  %v7866 = vadd.f32 %v7864, %v7865
  %v7867 = vsel %vm7783, %v7633, 0.0
  %v7868 = vadd.f32 %v7866, %v7867
  %v7869 = vsel %vm7783, %v7634, 0.0
  %v7870 = vadd.f32 %v7868, %v7869
  %v7871 = vsel %vm7783, %v7635, 0.0
  %v7872 = vadd.f32 %v7870, %v7871
  %v7873 = vsel %vm7783, %v7636, 0.0
  %v7874 = vadd.f32 %v7872, %v7873
  %v7875 = vsel %vm7783, %v7637, 0.0
  %v7876 = vadd.f32 %v7874, %v7875
  %v7877 = vsel %vm7783, %v7638, 0.0
  %v7878 = vadd.f32 %v7876, %v7877
  %v7879 = vsel %vm7783, %v7639, 0.0
  %v7880 = vadd.f32 %v7878, %v7879
  %v7881 = vsel %vm7783, %v7640, 0.0
  %v7882 = vadd.f32 %v7880, %v7881
  %v7883 = vsel %vm7783, %v7641, 0.0
  %v7884 = vadd.f32 %v7882, %v7883
  %v7885 = vsel %vm7783, %v7642, 0.0
  %v7886 = vadd.f32 %v7884, %v7885
  %v7887 = vsel %vm7783, %v7643, 0.0
  %v7888 = vadd.f32 %v7886, %v7887
  %v7889 = vsel %vm7783, %v7644, 0.0
  %v7890 = vadd.f32 %v7888, %v7889
  %v7891 = vsel %vm7783, %v7645, 0.0
  %v7892 = vadd.f32 %v7890, %v7891
  %v7893 = vsel %vm7783, %v7646, 0.0
  %v7894 = vadd.f32 %v7892, %v7893
  %v7895 = vsel %vm7783, %v7647, 0.0
  %v7896 = vadd.f32 %v7894, %v7895
  %v7897 = vsel %vm7783, %v7648, 0.0
  %v7898 = vadd.f32 %v7896, %v7897
  %v7899 = vsel %vm7783, %v7649, 0.0
  %v7900 = vadd.f32 %v7898, %v7899
  %v7901 = vsel %vm7783, %v7650, 0.0
  %v7902 = vadd.f32 %v7900, %v7901
  %v7903 = vsel %vm7783, %v7651, 0.0
  %v7904 = vadd.f32 %v7902, %v7903
  %v7905 = vsel %vm7783, %v7652, 0.0
  %v7906 = vadd.f32 %v7904, %v7905
  %v7907 = vsel %vm7783, %v7653, 0.0
  %v7908 = vadd.f32 %v7906, %v7907
  %v7909 = vsel %vm7783, %v7654, 0.0
  %v7910 = vadd.f32 %v7908, %v7909
  %7911 = vadd.xlane.f32.xlu0 %v7910
  %v7912 = vpop.xlane.xlu0 %7911
  %v7913 = vrcp.pop 4096.0
  %v7914 = vmul.f32 4096.0, %v7913
  %v7915 = vsub.f32 1.0, %v7914
  %v7916 = vmul.f32 %v7913, %v7915
  %v7917 = vadd.f32 %v7913, %v7916
  %vm7918 = vweird.f32 %v7913
  %v7919 = vsel %vm7918, %v7913, %v7917
  %v7920 = vmul.f32 %v7912, %v7919
  %v7921 = vsub.f32 %v7591, %v7920
  %v7922 = vsub.f32 %v7592, %v7920
  %v7923 = vsub.f32 %v7593, %v7920
  %v7924 = vsub.f32 %v7594, %v7920
  %v7925 = vsub.f32 %v7595, %v7920
  %v7926 = vsub.f32 %v7596, %v7920
  %v7927 = vsub.f32 %v7597, %v7920
  %v7928 = vsub.f32 %v7598, %v7920
  %v7929 = vsub.f32 %v7599, %v7920
  %v7930 = vsub.f32 %v7600, %v7920
  %v7931 = vsub.f32 %v7601, %v7920
  %v7932 = vsub.f32 %v7602, %v7920
  %v7933 = vsub.f32 %v7603, %v7920
  %v7934 = vsub.f32 %v7604, %v7920
  %v7935 = vsub.f32 %v7605, %v7920
  %v7936 = vsub.f32 %v7606, %v7920
  %v7937 = vsub.f32 %v7607, %v7920
  %v7938 = vsub.f32 %v7608, %v7920
  %v7939 = vsub.f32 %v7609, %v7920
  %v7940 = vsub.f32 %v7610, %v7920
  %v7941 = vsub.f32 %v7611, %v7920
  %v7942 = vsub.f32 %v7612, %v7920
  %v7943 = vsub.f32 %v7613, %v7920
  %v7944 = vsub.f32 %v7614, %v7920
  %v7945 = vsub.f32 %v7615, %v7920
  %v7946 = vsub.f32 %v7616, %v7920
  %v7947 = vsub.f32 %v7617, %v7920
  %v7948 = vsub.f32 %v7618, %v7920
  %v7949 = vsub.f32 %v7619, %v7920
  %v7950 = vsub.f32 %v7620, %v7920
  %v7951 = vsub.f32 %v7621, %v7920
  %v7952 = vsub.f32 %v7622, %v7920
  %v7953 = vsub.f32 %v7623, %v7920
  %v7954 = vsub.f32 %v7624, %v7920
  %v7955 = vsub.f32 %v7625, %v7920
  %v7956 = vsub.f32 %v7626, %v7920
  %v7957 = vsub.f32 %v7627, %v7920
  %v7958 = vsub.f32 %v7628, %v7920
  %v7959 = vsub.f32 %v7629, %v7920
  %v7960 = vsub.f32 %v7630, %v7920
  %v7961 = vsub.f32 %v7631, %v7920
  %v7962 = vsub.f32 %v7632, %v7920
  %v7963 = vsub.f32 %v7633, %v7920
  %v7964 = vsub.f32 %v7634, %v7920
  %v7965 = vsub.f32 %v7635, %v7920
  %v7966 = vsub.f32 %v7636, %v7920
  %v7967 = vsub.f32 %v7637, %v7920
  %v7968 = vsub.f32 %v7638, %v7920
  %v7969 = vsub.f32 %v7639, %v7920
  %v7970 = vsub.f32 %v7640, %v7920
  %v7971 = vsub.f32 %v7641, %v7920
  %v7972 = vsub.f32 %v7642, %v7920
  %v7973 = vsub.f32 %v7643, %v7920
  %v7974 = vsub.f32 %v7644, %v7920
  %v7975 = vsub.f32 %v7645, %v7920
  %v7976 = vsub.f32 %v7646, %v7920
  %v7977 = vsub.f32 %v7647, %v7920
  %v7978 = vsub.f32 %v7648, %v7920
  %v7979 = vsub.f32 %v7649, %v7920
  %v7980 = vsub.f32 %v7650, %v7920
  %v7981 = vsub.f32 %v7651, %v7920
  %v7982 = vsub.f32 %v7652, %v7920
  %v7983 = vsub.f32 %v7653, %v7920
  %v7984 = vsub.f32 %v7654, %v7920
  %v7985 = vmul.f32 %v7921, %v7921
  %v7986 = vmul.f32 %v7922, %v7922
  %v7987 = vmul.f32 %v7923, %v7923
  %v7988 = vmul.f32 %v7924, %v7924
  %v7989 = vmul.f32 %v7925, %v7925
  %v7990 = vmul.f32 %v7926, %v7926
  %v7991 = vmul.f32 %v7927, %v7927
  %v7992 = vmul.f32 %v7928, %v7928
  %v7993 = vmul.f32 %v7929, %v7929
  %v7994 = vmul.f32 %v7930, %v7930
  %v7995 = vmul.f32 %v7931, %v7931
  %v7996 = vmul.f32 %v7932, %v7932
  %v7997 = vmul.f32 %v7933, %v7933
  %v7998 = vmul.f32 %v7934, %v7934
  %v7999 = vmul.f32 %v7935, %v7935
  %v8000 = vmul.f32 %v7936, %v7936
  %v8001 = vmul.f32 %v7937, %v7937
  %v8002 = vmul.f32 %v7938, %v7938
  %v8003 = vmul.f32 %v7939, %v7939
  %v8004 = vmul.f32 %v7940, %v7940
  %v8005 = vmul.f32 %v7941, %v7941
  %v8006 = vmul.f32 %v7942, %v7942
  %v8007 = vmul.f32 %v7943, %v7943
  %v8008 = vmul.f32 %v7944, %v7944
  %v8009 = vmul.f32 %v7945, %v7945
  %v8010 = vmul.f32 %v7946, %v7946
  %v8011 = vmul.f32 %v7947, %v7947
  %v8012 = vmul.f32 %v7948, %v7948
  %v8013 = vmul.f32 %v7949, %v7949
  %v8014 = vmul.f32 %v7950, %v7950
  %v8015 = vmul.f32 %v7951, %v7951
  %v8016 = vmul.f32 %v7952, %v7952
  %v8017 = vmul.f32 %v7953, %v7953
  %v8018 = vmul.f32 %v7954, %v7954
  %v8019 = vmul.f32 %v7955, %v7955
  %v8020 = vmul.f32 %v7956, %v7956
  %v8021 = vmul.f32 %v7957, %v7957
  %v8022 = vmul.f32 %v7958, %v7958
  %v8023 = vmul.f32 %v7959, %v7959
  %v8024 = vmul.f32 %v7960, %v7960
  %v8025 = vmul.f32 %v7961, %v7961
  %v8026 = vmul.f32 %v7962, %v7962
  %v8027 = vmul.f32 %v7963, %v7963
  %v8028 = vmul.f32 %v7964, %v7964
  %v8029 = vmul.f32 %v7965, %v7965
  %v8030 = vmul.f32 %v7966, %v7966
  %v8031 = vmul.f32 %v7967, %v7967
  %v8032 = vmul.f32 %v7968, %v7968
  %v8033 = vmul.f32 %v7969, %v7969
  %v8034 = vmul.f32 %v7970, %v7970
  %v8035 = vmul.f32 %v7971, %v7971
  %v8036 = vmul.f32 %v7972, %v7972
  %v8037 = vmul.f32 %v7973, %v7973
  %v8038 = vmul.f32 %v7974, %v7974
  %v8039 = vmul.f32 %v7975, %v7975
  %v8040 = vmul.f32 %v7976, %v7976
  %v8041 = vmul.f32 %v7977, %v7977
  %v8042 = vmul.f32 %v7978, %v7978
  %v8043 = vmul.f32 %v7979, %v7979
  %v8044 = vmul.f32 %v7980, %v7980
  %v8045 = vmul.f32 %v7981, %v7981
  %v8046 = vmul.f32 %v7982, %v7982
  %v8047 = vmul.f32 %v7983, %v7983
  %v8048 = vmul.f32 %v7984, %v7984
  %v8049 = vsel %vm7783, %v7985, 0.0
  %v8050 = vsel %vm7783, %v7986, 0.0
  %v8051 = vadd.f32 %v8049, %v8050
  %v8052 = vsel %vm7783, %v7987, 0.0
  %v8053 = vadd.f32 %v8051, %v8052
  %v8054 = vsel %vm7783, %v7988, 0.0
  %v8055 = vadd.f32 %v8053, %v8054
  %v8056 = vsel %vm7783, %v7989, 0.0
  %v8057 = vadd.f32 %v8055, %v8056
  %v8058 = vsel %vm7783, %v7990, 0.0
  %v8059 = vadd.f32 %v8057, %v8058
  %v8060 = vsel %vm7783, %v7991, 0.0
  %v8061 = vadd.f32 %v8059, %v8060
  %v8062 = vsel %vm7783, %v7992, 0.0
  %v8063 = vadd.f32 %v8061, %v8062
  %v8064 = vsel %vm7783, %v7993, 0.0
  %v8065 = vadd.f32 %v8063, %v8064
  %v8066 = vsel %vm7783, %v7994, 0.0
  %v8067 = vadd.f32 %v8065, %v8066
  %v8068 = vsel %vm7783, %v7995, 0.0
  %v8069 = vadd.f32 %v8067, %v8068
  %v8070 = vsel %vm7783, %v7996, 0.0
  %v8071 = vadd.f32 %v8069, %v8070
  %v8072 = vsel %vm7783, %v7997, 0.0
  %v8073 = vadd.f32 %v8071, %v8072
  %v8074 = vsel %vm7783, %v7998, 0.0
  %v8075 = vadd.f32 %v8073, %v8074
  %v8076 = vsel %vm7783, %v7999, 0.0
  %v8077 = vadd.f32 %v8075, %v8076
  %v8078 = vsel %vm7783, %v8000, 0.0
  %v8079 = vadd.f32 %v8077, %v8078
  %v8080 = vsel %vm7783, %v8001, 0.0
  %v8081 = vadd.f32 %v8079, %v8080
  %v8082 = vsel %vm7783, %v8002, 0.0
  %v8083 = vadd.f32 %v8081, %v8082
  %v8084 = vsel %vm7783, %v8003, 0.0
  %v8085 = vadd.f32 %v8083, %v8084
  %v8086 = vsel %vm7783, %v8004, 0.0
  %v8087 = vadd.f32 %v8085, %v8086
  %v8088 = vsel %vm7783, %v8005, 0.0
  %v8089 = vadd.f32 %v8087, %v8088
  %v8090 = vsel %vm7783, %v8006, 0.0
  %v8091 = vadd.f32 %v8089, %v8090
  %v8092 = vsel %vm7783, %v8007, 0.0
  %v8093 = vadd.f32 %v8091, %v8092
  %v8094 = vsel %vm7783, %v8008, 0.0
  %v8095 = vadd.f32 %v8093, %v8094
  %v8096 = vsel %vm7783, %v8009, 0.0
  %v8097 = vadd.f32 %v8095, %v8096
  %v8098 = vsel %vm7783, %v8010, 0.0
  %v8099 = vadd.f32 %v8097, %v8098
  %v8100 = vsel %vm7783, %v8011, 0.0
  %v8101 = vadd.f32 %v8099, %v8100
  %v8102 = vsel %vm7783, %v8012, 0.0
  %v8103 = vadd.f32 %v8101, %v8102
  %v8104 = vsel %vm7783, %v8013, 0.0
  %v8105 = vadd.f32 %v8103, %v8104
  %v8106 = vsel %vm7783, %v8014, 0.0
  %v8107 = vadd.f32 %v8105, %v8106
  %v8108 = vsel %vm7783, %v8015, 0.0
  %v8109 = vadd.f32 %v8107, %v8108
  %v8110 = vsel %vm7783, %v8016, 0.0
  %v8111 = vadd.f32 %v8109, %v8110
  %v8112 = vsel %vm7783, %v8017, 0.0
  %v8113 = vadd.f32 %v8111, %v8112
  %v8114 = vsel %vm7783, %v8018, 0.0
  %v8115 = vadd.f32 %v8113, %v8114
  %v8116 = vsel %vm7783, %v8019, 0.0
  %v8117 = vadd.f32 %v8115, %v8116
  %v8118 = vsel %vm7783, %v8020, 0.0
  %v8119 = vadd.f32 %v8117, %v8118
  %v8120 = vsel %vm7783, %v8021, 0.0
  %v8121 = vadd.f32 %v8119, %v8120
  %v8122 = vsel %vm7783, %v8022, 0.0
  %v8123 = vadd.f32 %v8121, %v8122
  %v8124 = vsel %vm7783, %v8023, 0.0
  %v8125 = vadd.f32 %v8123, %v8124
  %v8126 = vsel %vm7783, %v8024, 0.0
  %v8127 = vadd.f32 %v8125, %v8126
  %v8128 = vsel %vm7783, %v8025, 0.0
  %v8129 = vadd.f32 %v8127, %v8128
  %v8130 = vsel %vm7783, %v8026, 0.0
  %v8131 = vadd.f32 %v8129, %v8130
  %v8132 = vsel %vm7783, %v8027, 0.0
  %v8133 = vadd.f32 %v8131, %v8132
  %v8134 = vsel %vm7783, %v8028, 0.0
  %v8135 = vadd.f32 %v8133, %v8134
  %v8136 = vsel %vm7783, %v8029, 0.0
  %v8137 = vadd.f32 %v8135, %v8136
  %v8138 = vsel %vm7783, %v8030, 0.0
  %v8139 = vadd.f32 %v8137, %v8138
  %v8140 = vsel %vm7783, %v8031, 0.0
  %v8141 = vadd.f32 %v8139, %v8140
  %v8142 = vsel %vm7783, %v8032, 0.0
  %v8143 = vadd.f32 %v8141, %v8142
  %v8144 = vsel %vm7783, %v8033, 0.0
  %v8145 = vadd.f32 %v8143, %v8144
  %v8146 = vsel %vm7783, %v8034, 0.0
  %v8147 = vadd.f32 %v8145, %v8146
  %v8148 = vsel %vm7783, %v8035, 0.0
  %v8149 = vadd.f32 %v8147, %v8148
  %v8150 = vsel %vm7783, %v8036, 0.0
  %v8151 = vadd.f32 %v8149, %v8150
  %v8152 = vsel %vm7783, %v8037, 0.0
  %v8153 = vadd.f32 %v8151, %v8152
  %v8154 = vsel %vm7783, %v8038, 0.0
  %v8155 = vadd.f32 %v8153, %v8154
  %v8156 = vsel %vm7783, %v8039, 0.0
  %v8157 = vadd.f32 %v8155, %v8156
  %v8158 = vsel %vm7783, %v8040, 0.0
  %v8159 = vadd.f32 %v8157, %v8158
  %v8160 = vsel %vm7783, %v8041, 0.0
  %v8161 = vadd.f32 %v8159, %v8160
  %v8162 = vsel %vm7783, %v8042, 0.0
  %v8163 = vadd.f32 %v8161, %v8162
  %v8164 = vsel %vm7783, %v8043, 0.0
  %v8165 = vadd.f32 %v8163, %v8164
  %v8166 = vsel %vm7783, %v8044, 0.0
  %v8167 = vadd.f32 %v8165, %v8166
  %v8168 = vsel %vm7783, %v8045, 0.0
  %v8169 = vadd.f32 %v8167, %v8168
  %v8170 = vsel %vm7783, %v8046, 0.0
  %v8171 = vadd.f32 %v8169, %v8170
  %v8172 = vsel %vm7783, %v8047, 0.0
  %v8173 = vadd.f32 %v8171, %v8172
  %v8174 = vsel %vm7783, %v8048, 0.0
  %v8175 = vadd.f32 %v8173, %v8174
  %8176 = vadd.xlane.f32.xlu0 %v8175
  %v8177 = vpop.xlane.xlu0 %8176
  %v8178 = vmul.f32 %v8177, %v7919
  %v8179 = vadd.f32 %v8178, 1e-05
  %v8180 = vrsqrt.pop %v8179
  %v8181 = vmul.f32 %v8180, %v8179
  %v8182 = vmul.f32 %v8181, %v8180
  %v8183 = vmul.f32 0.5, %v8182
  %v8184 = vsub.f32 1.5, %v8183
  %v8185 = vmul.f32 %v8180, %v8184
  %vm8186 = vweird.f32 %v8179
  %vm8187 = vweird.f32 %v8180
  %vm8188 = vmor %vm8186, %vm8187
  %v8189 = vsel %vm8188, %v8180, %v8185
  %v8190 = vmul.f32 %v7921, %v8189
  %v8191 = vmul.f32 %v7922, %v8189
  %v8192 = vmul.f32 %v7923, %v8189
  %v8193 = vmul.f32 %v7924, %v8189
  %v8194 = vmul.f32 %v7925, %v8189
  %v8195 = vmul.f32 %v7926, %v8189
  %v8196 = vmul.f32 %v7927, %v8189
  %v8197 = vmul.f32 %v7928, %v8189
  %v8198 = vmul.f32 %v7929, %v8189
  %v8199 = vmul.f32 %v7930, %v8189
  %v8200 = vmul.f32 %v7931, %v8189
  %v8201 = vmul.f32 %v7932, %v8189
  %v8202 = vmul.f32 %v7933, %v8189
  %v8203 = vmul.f32 %v7934, %v8189
  %v8204 = vmul.f32 %v7935, %v8189
  %v8205 = vmul.f32 %v7936, %v8189
  %v8206 = vmul.f32 %v7937, %v8189
  %v8207 = vmul.f32 %v7938, %v8189
  %v8208 = vmul.f32 %v7939, %v8189
  %v8209 = vmul.f32 %v7940, %v8189
  %v8210 = vmul.f32 %v7941, %v8189
  %v8211 = vmul.f32 %v7942, %v8189
  %v8212 = vmul.f32 %v7943, %v8189
  %v8213 = vmul.f32 %v7944, %v8189
  %v8214 = vmul.f32 %v7945, %v8189
  %v8215 = vmul.f32 %v7946, %v8189
  %v8216 = vmul.f32 %v7947, %v8189
  %v8217 = vmul.f32 %v7948, %v8189
  %v8218 = vmul.f32 %v7949, %v8189
  %v8219 = vmul.f32 %v7950, %v8189
  %v8220 = vmul.f32 %v7951, %v8189
  %v8221 = vmul.f32 %v7952, %v8189
  %v8222 = vmul.f32 %v7953, %v8189
  %v8223 = vmul.f32 %v7954, %v8189
  %v8224 = vmul.f32 %v7955, %v8189
  %v8225 = vmul.f32 %v7956, %v8189
  %v8226 = vmul.f32 %v7957, %v8189
  %v8227 = vmul.f32 %v7958, %v8189
  %v8228 = vmul.f32 %v7959, %v8189
  %v8229 = vmul.f32 %v7960, %v8189
  %v8230 = vmul.f32 %v7961, %v8189
  %v8231 = vmul.f32 %v7962, %v8189
  %v8232 = vmul.f32 %v7963, %v8189
  %v8233 = vmul.f32 %v7964, %v8189
  %v8234 = vmul.f32 %v7965, %v8189
  %v8235 = vmul.f32 %v7966, %v8189
  %v8236 = vmul.f32 %v7967, %v8189
  %v8237 = vmul.f32 %v7968, %v8189
  %v8238 = vmul.f32 %v7969, %v8189
  %v8239 = vmul.f32 %v7970, %v8189
  %v8240 = vmul.f32 %v7971, %v8189
  %v8241 = vmul.f32 %v7972, %v8189
  %v8242 = vmul.f32 %v7973, %v8189
  %v8243 = vmul.f32 %v7974, %v8189
  %v8244 = vmul.f32 %v7975, %v8189
  %v8245 = vmul.f32 %v7976, %v8189
  %v8246 = vmul.f32 %v7977, %v8189
  %v8247 = vmul.f32 %v7978, %v8189
  %v8248 = vmul.f32 %v7979, %v8189
  %v8249 = vmul.f32 %v7980, %v8189
  %v8250 = vmul.f32 %v7981, %v8189
  %v8251 = vmul.f32 %v7982, %v8189
  %v8252 = vmul.f32 %v7983, %v8189
  %v8253 = vmul.f32 %v7984, %v8189
  %v8318 = vperm.slane %v7655, 0
  %v8319 = vperm.slane %v7656, 0
  %v8320 = vperm.slane %v7657, 0
  %v8321 = vperm.slane %v7658, 0
  %v8322 = vperm.slane %v7659, 0
  %v8323 = vperm.slane %v7660, 0
  %v8324 = vperm.slane %v7661, 0
  %v8325 = vperm.slane %v7662, 0
  %v8326 = vperm.slane %v7663, 0
  %v8327 = vperm.slane %v7664, 0
  %v8328 = vperm.slane %v7665, 0
  %v8329 = vperm.slane %v7666, 0
  %v8330 = vperm.slane %v7667, 0
  %v8331 = vperm.slane %v7668, 0
  %v8332 = vperm.slane %v7669, 0
  %v8333 = vperm.slane %v7670, 0
  %v8334 = vperm.slane %v7671, 0
  %v8335 = vperm.slane %v7672, 0
  %v8336 = vperm.slane %v7673, 0
  %v8337 = vperm.slane %v7674, 0
  %v8338 = vperm.slane %v7675, 0
  %v8339 = vperm.slane %v7676, 0
  %v8340 = vperm.slane %v7677, 0
  %v8341 = vperm.slane %v7678, 0
  %v8342 = vperm.slane %v7679, 0
  %v8343 = vperm.slane %v7680, 0
  %v8344 = vperm.slane %v7681, 0
  %v8345 = vperm.slane %v7682, 0
  %v8346 = vperm.slane %v7683, 0
  %v8347 = vperm.slane %v7684, 0
  %v8348 = vperm.slane %v7685, 0
  %v8349 = vperm.slane %v7686, 0
  %v8350 = vperm.slane %v7687, 0
  %v8351 = vperm.slane %v7688, 0
  %v8352 = vperm.slane %v7689, 0
  %v8353 = vperm.slane %v7690, 0
  %v8354 = vperm.slane %v7691, 0
  %v8355 = vperm.slane %v7692, 0
  %v8356 = vperm.slane %v7693, 0
  %v8357 = vperm.slane %v7694, 0
  %v8358 = vperm.slane %v7695, 0
  %v8359 = vperm.slane %v7696, 0
  %v8360 = vperm.slane %v7697, 0
  %v8361 = vperm.slane %v7698, 0
  %v8362 = vperm.slane %v7699, 0
  %v8363 = vperm.slane %v7700, 0
  %v8364 = vperm.slane %v7701, 0
  %v8365 = vperm.slane %v7702, 0
  %v8366 = vperm.slane %v7703, 0
  %v8367 = vperm.slane %v7704, 0
  %v8368 = vperm.slane %v7705, 0
  %v8369 = vperm.slane %v7706, 0
  %v8370 = vperm.slane %v7707, 0
  %v8371 = vperm.slane %v7708, 0
  %v8372 = vperm.slane %v7709, 0
  %v8373 = vperm.slane %v7710, 0
  %v8374 = vperm.slane %v7711, 0
  %v8375 = vperm.slane %v7712, 0
  %v8376 = vperm.slane %v7713, 0
  %v8377 = vperm.slane %v7714, 0
  %v8378 = vperm.slane %v7715, 0
  %v8379 = vperm.slane %v7716, 0
  %v8380 = vperm.slane %v7717, 0
  %v8381 = vperm.slane %v7718, 0
  %v8446 = vmul.f32 %v8190, %v8318
  %v8447 = vmul.f32 %v8191, %v8319
  %v8448 = vmul.f32 %v8192, %v8320
  %v8449 = vmul.f32 %v8193, %v8321
  %v8450 = vmul.f32 %v8194, %v8322
  %v8451 = vmul.f32 %v8195, %v8323
  %v8452 = vmul.f32 %v8196, %v8324
  %v8453 = vmul.f32 %v8197, %v8325
  %v8454 = vmul.f32 %v8198, %v8326
  %v8455 = vmul.f32 %v8199, %v8327
  %v8456 = vmul.f32 %v8200, %v8328
  %v8457 = vmul.f32 %v8201, %v8329
  %v8458 = vmul.f32 %v8202, %v8330
  %v8459 = vmul.f32 %v8203, %v8331
  %v8460 = vmul.f32 %v8204, %v8332
  %v8461 = vmul.f32 %v8205, %v8333
  %v8462 = vmul.f32 %v8206, %v8334
  %v8463 = vmul.f32 %v8207, %v8335
  %v8464 = vmul.f32 %v8208, %v8336
  %v8465 = vmul.f32 %v8209, %v8337
  %v8466 = vmul.f32 %v8210, %v8338
  %v8467 = vmul.f32 %v8211, %v8339
  %v8468 = vmul.f32 %v8212, %v8340
  %v8469 = vmul.f32 %v8213, %v8341
  %v8470 = vmul.f32 %v8214, %v8342
  %v8471 = vmul.f32 %v8215, %v8343
  %v8472 = vmul.f32 %v8216, %v8344
  %v8473 = vmul.f32 %v8217, %v8345
  %v8474 = vmul.f32 %v8218, %v8346
  %v8475 = vmul.f32 %v8219, %v8347
  %v8476 = vmul.f32 %v8220, %v8348
  %v8477 = vmul.f32 %v8221, %v8349
  %v8478 = vmul.f32 %v8222, %v8350
  %v8479 = vmul.f32 %v8223, %v8351
  %v8480 = vmul.f32 %v8224, %v8352
  %v8481 = vmul.f32 %v8225, %v8353
  %v8482 = vmul.f32 %v8226, %v8354
  %v8483 = vmul.f32 %v8227, %v8355
  %v8484 = vmul.f32 %v8228, %v8356
  %v8485 = vmul.f32 %v8229, %v8357
  %v8486 = vmul.f32 %v8230, %v8358
  %v8487 = vmul.f32 %v8231, %v8359
  %v8488 = vmul.f32 %v8232, %v8360
  %v8489 = vmul.f32 %v8233, %v8361
  %v8490 = vmul.f32 %v8234, %v8362
  %v8491 = vmul.f32 %v8235, %v8363
  %v8492 = vmul.f32 %v8236, %v8364
  %v8493 = vmul.f32 %v8237, %v8365
  %v8494 = vmul.f32 %v8238, %v8366
  %v8495 = vmul.f32 %v8239, %v8367
  %v8496 = vmul.f32 %v8240, %v8368
  %v8497 = vmul.f32 %v8241, %v8369
  %v8498 = vmul.f32 %v8242, %v8370
  %v8499 = vmul.f32 %v8243, %v8371
  %v8500 = vmul.f32 %v8244, %v8372
  %v8501 = vmul.f32 %v8245, %v8373
  %v8502 = vmul.f32 %v8246, %v8374
  %v8503 = vmul.f32 %v8247, %v8375
  %v8504 = vmul.f32 %v8248, %v8376
  %v8505 = vmul.f32 %v8249, %v8377
  %v8506 = vmul.f32 %v8250, %v8378
  %v8507 = vmul.f32 %v8251, %v8379
  %v8508 = vmul.f32 %v8252, %v8380
  %v8509 = vmul.f32 %v8253, %v8381
  %v8574 = vperm.slane %v7719, 0
  %v8575 = vperm.slane %v7720, 0
  %v8576 = vperm.slane %v7721, 0
  %v8577 = vperm.slane %v7722, 0
  %v8578 = vperm.slane %v7723, 0
  %v8579 = vperm.slane %v7724, 0
  %v8580 = vperm.slane %v7725, 0
  %v8581 = vperm.slane %v7726, 0
  %v8582 = vperm.slane %v7727, 0
  %v8583 = vperm.slane %v7728, 0
  %v8584 = vperm.slane %v7729, 0
  %v8585 = vperm.slane %v7730, 0
  %v8586 = vperm.slane %v7731, 0
  %v8587 = vperm.slane %v7732, 0
  %v8588 = vperm.slane %v7733, 0
  %v8589 = vperm.slane %v7734, 0
  %v8590 = vperm.slane %v7735, 0
  %v8591 = vperm.slane %v7736, 0
  %v8592 = vperm.slane %v7737, 0
  %v8593 = vperm.slane %v7738, 0
  %v8594 = vperm.slane %v7739, 0
  %v8595 = vperm.slane %v7740, 0
  %v8596 = vperm.slane %v7741, 0
  %v8597 = vperm.slane %v7742, 0
  %v8598 = vperm.slane %v7743, 0
  %v8599 = vperm.slane %v7744, 0
  %v8600 = vperm.slane %v7745, 0
  %v8601 = vperm.slane %v7746, 0
  %v8602 = vperm.slane %v7747, 0
  %v8603 = vperm.slane %v7748, 0
  %v8604 = vperm.slane %v7749, 0
  %v8605 = vperm.slane %v7750, 0
  %v8606 = vperm.slane %v7751, 0
  %v8607 = vperm.slane %v7752, 0
  %v8608 = vperm.slane %v7753, 0
  %v8609 = vperm.slane %v7754, 0
  %v8610 = vperm.slane %v7755, 0
  %v8611 = vperm.slane %v7756, 0
  %v8612 = vperm.slane %v7757, 0
  %v8613 = vperm.slane %v7758, 0
  %v8614 = vperm.slane %v7759, 0
  %v8615 = vperm.slane %v7760, 0
  %v8616 = vperm.slane %v7761, 0
  %v8617 = vperm.slane %v7762, 0
  %v8618 = vperm.slane %v7763, 0
  %v8619 = vperm.slane %v7764, 0
  %v8620 = vperm.slane %v7765, 0
  %v8621 = vperm.slane %v7766, 0
  %v8622 = vperm.slane %v7767, 0
  %v8623 = vperm.slane %v7768, 0
  %v8624 = vperm.slane %v7769, 0
  %v8625 = vperm.slane %v7770, 0
  %v8626 = vperm.slane %v7771, 0
  %v8627 = vperm.slane %v7772, 0
  %v8628 = vperm.slane %v7773, 0
  %v8629 = vperm.slane %v7774, 0
  %v8630 = vperm.slane %v7775, 0
  %v8631 = vperm.slane %v7776, 0
  %v8632 = vperm.slane %v7777, 0
  %v8633 = vperm.slane %v7778, 0
  %v8634 = vperm.slane %v7779, 0
  %v8635 = vperm.slane %v7780, 0
  %v8636 = vperm.slane %v7781, 0
  %v8637 = vperm.slane %v7782, 0
  %v8702 = vadd.f32 %v8446, %v8574
  %v8703 = vadd.f32 %v8447, %v8575
  %v8704 = vadd.f32 %v8448, %v8576
  %v8705 = vadd.f32 %v8449, %v8577
  %v8706 = vadd.f32 %v8450, %v8578
  %v8707 = vadd.f32 %v8451, %v8579
  %v8708 = vadd.f32 %v8452, %v8580
  %v8709 = vadd.f32 %v8453, %v8581
  %v8710 = vadd.f32 %v8454, %v8582
  %v8711 = vadd.f32 %v8455, %v8583
  %v8712 = vadd.f32 %v8456, %v8584
  %v8713 = vadd.f32 %v8457, %v8585
  %v8714 = vadd.f32 %v8458, %v8586
  %v8715 = vadd.f32 %v8459, %v8587
  %v8716 = vadd.f32 %v8460, %v8588
  %v8717 = vadd.f32 %v8461, %v8589
  %v8718 = vadd.f32 %v8462, %v8590
  %v8719 = vadd.f32 %v8463, %v8591
  %v8720 = vadd.f32 %v8464, %v8592
  %v8721 = vadd.f32 %v8465, %v8593
  %v8722 = vadd.f32 %v8466, %v8594
  %v8723 = vadd.f32 %v8467, %v8595
  %v8724 = vadd.f32 %v8468, %v8596
  %v8725 = vadd.f32 %v8469, %v8597
  %v8726 = vadd.f32 %v8470, %v8598
  %v8727 = vadd.f32 %v8471, %v8599
  %v8728 = vadd.f32 %v8472, %v8600
  %v8729 = vadd.f32 %v8473, %v8601
  %v8730 = vadd.f32 %v8474, %v8602
  %v8731 = vadd.f32 %v8475, %v8603
  %v8732 = vadd.f32 %v8476, %v8604
  %v8733 = vadd.f32 %v8477, %v8605
  %v8734 = vadd.f32 %v8478, %v8606
  %v8735 = vadd.f32 %v8479, %v8607
  %v8736 = vadd.f32 %v8480, %v8608
  %v8737 = vadd.f32 %v8481, %v8609
  %v8738 = vadd.f32 %v8482, %v8610
  %v8739 = vadd.f32 %v8483, %v8611
  %v8740 = vadd.f32 %v8484, %v8612
  %v8741 = vadd.f32 %v8485, %v8613
  %v8742 = vadd.f32 %v8486, %v8614
  %v8743 = vadd.f32 %v8487, %v8615
  %v8744 = vadd.f32 %v8488, %v8616
  %v8745 = vadd.f32 %v8489, %v8617
  %v8746 = vadd.f32 %v8490, %v8618
  %v8747 = vadd.f32 %v8491, %v8619
  %v8748 = vadd.f32 %v8492, %v8620
  %v8749 = vadd.f32 %v8493, %v8621
  %v8750 = vadd.f32 %v8494, %v8622
  %v8751 = vadd.f32 %v8495, %v8623
  %v8752 = vadd.f32 %v8496, %v8624
  %v8753 = vadd.f32 %v8497, %v8625
  %v8754 = vadd.f32 %v8498, %v8626
  %v8755 = vadd.f32 %v8499, %v8627
  %v8756 = vadd.f32 %v8500, %v8628
  %v8757 = vadd.f32 %v8501, %v8629
  %v8758 = vadd.f32 %v8502, %v8630
  %v8759 = vadd.f32 %v8503, %v8631
  %v8760 = vadd.f32 %v8504, %v8632
  %v8761 = vadd.f32 %v8505, %v8633
  %v8762 = vadd.f32 %v8506, %v8634
  %v8763 = vadd.f32 %v8507, %v8635
  %v8764 = vadd.f32 %v8508, %v8636
  %v8765 = vadd.f32 %v8509, %v8637
  %vm8766 = vcmp.ge.f32.partialorder %v8702, 0.0
  %vm8767 = vcmp.ge.f32.partialorder %v8703, 0.0
  %vm8768 = vcmp.ge.f32.partialorder %v8704, 0.0
  %vm8769 = vcmp.ge.f32.partialorder %v8705, 0.0
  %vm8770 = vcmp.ge.f32.partialorder %v8706, 0.0
  %vm8771 = vcmp.ge.f32.partialorder %v8707, 0.0
  %vm8772 = vcmp.ge.f32.partialorder %v8708, 0.0
  %vm8773 = vcmp.ge.f32.partialorder %v8709, 0.0
  %vm8774 = vcmp.ge.f32.partialorder %v8710, 0.0
  %vm8775 = vcmp.ge.f32.partialorder %v8711, 0.0
  %vm8776 = vcmp.ge.f32.partialorder %v8712, 0.0
  %vm8777 = vcmp.ge.f32.partialorder %v8713, 0.0
  %vm8778 = vcmp.ge.f32.partialorder %v8714, 0.0
  %vm8779 = vcmp.ge.f32.partialorder %v8715, 0.0
  %vm8780 = vcmp.ge.f32.partialorder %v8716, 0.0
  %vm8781 = vcmp.ge.f32.partialorder %v8717, 0.0
  %vm8782 = vcmp.ge.f32.partialorder %v8718, 0.0
  %vm8783 = vcmp.ge.f32.partialorder %v8719, 0.0
  %vm8784 = vcmp.ge.f32.partialorder %v8720, 0.0
  %vm8785 = vcmp.ge.f32.partialorder %v8721, 0.0
  %vm8786 = vcmp.ge.f32.partialorder %v8722, 0.0
  %vm8787 = vcmp.ge.f32.partialorder %v8723, 0.0
  %vm8788 = vcmp.ge.f32.partialorder %v8724, 0.0
  %vm8789 = vcmp.ge.f32.partialorder %v8725, 0.0
  %vm8790 = vcmp.ge.f32.partialorder %v8726, 0.0
  %vm8791 = vcmp.ge.f32.partialorder %v8727, 0.0
  %vm8792 = vcmp.ge.f32.partialorder %v8728, 0.0
  %vm8793 = vcmp.ge.f32.partialorder %v8729, 0.0
  %vm8794 = vcmp.ge.f32.partialorder %v8730, 0.0
  %vm8795 = vcmp.ge.f32.partialorder %v8731, 0.0
  %vm8796 = vcmp.ge.f32.partialorder %v8732, 0.0
  %vm8797 = vcmp.ge.f32.partialorder %v8733, 0.0
  %vm8798 = vcmp.ge.f32.partialorder %v8734, 0.0
  %vm8799 = vcmp.ge.f32.partialorder %v8735, 0.0
  %vm8800 = vcmp.ge.f32.partialorder %v8736, 0.0
  %vm8801 = vcmp.ge.f32.partialorder %v8737, 0.0
  %vm8802 = vcmp.ge.f32.partialorder %v8738, 0.0
  %vm8803 = vcmp.ge.f32.partialorder %v8739, 0.0
  %vm8804 = vcmp.ge.f32.partialorder %v8740, 0.0
  %vm8805 = vcmp.ge.f32.partialorder %v8741, 0.0
  %vm8806 = vcmp.ge.f32.partialorder %v8742, 0.0
  %vm8807 = vcmp.ge.f32.partialorder %v8743, 0.0
  %vm8808 = vcmp.ge.f32.partialorder %v8744, 0.0
  %vm8809 = vcmp.ge.f32.partialorder %v8745, 0.0
  %vm8810 = vcmp.ge.f32.partialorder %v8746, 0.0
  %vm8811 = vcmp.ge.f32.partialorder %v8747, 0.0
  %vm8812 = vcmp.ge.f32.partialorder %v8748, 0.0
  %vm8813 = vcmp.ge.f32.partialorder %v8749, 0.0
  %vm8814 = vcmp.ge.f32.partialorder %v8750, 0.0
  %vm8815 = vcmp.ge.f32.partialorder %v8751, 0.0
  %vm8816 = vcmp.ge.f32.partialorder %v8752, 0.0
  %vm8817 = vcmp.ge.f32.partialorder %v8753, 0.0
  %vm8818 = vcmp.ge.f32.partialorder %v8754, 0.0
  %vm8819 = vcmp.ge.f32.partialorder %v8755, 0.0
  %vm8820 = vcmp.ge.f32.partialorder %v8756, 0.0
  %vm8821 = vcmp.ge.f32.partialorder %v8757, 0.0
  %vm8822 = vcmp.ge.f32.partialorder %v8758, 0.0
  %vm8823 = vcmp.ge.f32.partialorder %v8759, 0.0
  %vm8824 = vcmp.ge.f32.partialorder %v8760, 0.0
  %vm8825 = vcmp.ge.f32.partialorder %v8761, 0.0
  %vm8826 = vcmp.ge.f32.partialorder %v8762, 0.0
  %vm8827 = vcmp.ge.f32.partialorder %v8763, 0.0
  %vm8828 = vcmp.ge.f32.partialorder %v8764, 0.0
  %vm8829 = vcmp.ge.f32.partialorder %v8765, 0.0
  %v8830 = vmul.f32 %v8702, 0.2
  %v8831 = vmul.f32 %v8703, 0.2
  %v8832 = vmul.f32 %v8704, 0.2
  %v8833 = vmul.f32 %v8705, 0.2
  %v8834 = vmul.f32 %v8706, 0.2
  %v8835 = vmul.f32 %v8707, 0.2
  %v8836 = vmul.f32 %v8708, 0.2
  %v8837 = vmul.f32 %v8709, 0.2
  %v8838 = vmul.f32 %v8710, 0.2
  %v8839 = vmul.f32 %v8711, 0.2
  %v8840 = vmul.f32 %v8712, 0.2
  %v8841 = vmul.f32 %v8713, 0.2
  %v8842 = vmul.f32 %v8714, 0.2
  %v8843 = vmul.f32 %v8715, 0.2
  %v8844 = vmul.f32 %v8716, 0.2
  %v8845 = vmul.f32 %v8717, 0.2
  %v8846 = vmul.f32 %v8718, 0.2
  %v8847 = vmul.f32 %v8719, 0.2
  %v8848 = vmul.f32 %v8720, 0.2
  %v8849 = vmul.f32 %v8721, 0.2
  %v8850 = vmul.f32 %v8722, 0.2
  %v8851 = vmul.f32 %v8723, 0.2
  %v8852 = vmul.f32 %v8724, 0.2
  %v8853 = vmul.f32 %v8725, 0.2
  %v8854 = vmul.f32 %v8726, 0.2
  %v8855 = vmul.f32 %v8727, 0.2
  %v8856 = vmul.f32 %v8728, 0.2
  %v8857 = vmul.f32 %v8729, 0.2
  %v8858 = vmul.f32 %v8730, 0.2
  %v8859 = vmul.f32 %v8731, 0.2
  %v8860 = vmul.f32 %v8732, 0.2
  %v8861 = vmul.f32 %v8733, 0.2
  %v8862 = vmul.f32 %v8734, 0.2
  %v8863 = vmul.f32 %v8735, 0.2
  %v8864 = vmul.f32 %v8736, 0.2
  %v8865 = vmul.f32 %v8737, 0.2
  %v8866 = vmul.f32 %v8738, 0.2
  %v8867 = vmul.f32 %v8739, 0.2
  %v8868 = vmul.f32 %v8740, 0.2
  %v8869 = vmul.f32 %v8741, 0.2
  %v8870 = vmul.f32 %v8742, 0.2
  %v8871 = vmul.f32 %v8743, 0.2
  %v8872 = vmul.f32 %v8744, 0.2
  %v8873 = vmul.f32 %v8745, 0.2
  %v8874 = vmul.f32 %v8746, 0.2
  %v8875 = vmul.f32 %v8747, 0.2
  %v8876 = vmul.f32 %v8748, 0.2
  %v8877 = vmul.f32 %v8749, 0.2
  %v8878 = vmul.f32 %v8750, 0.2
  %v8879 = vmul.f32 %v8751, 0.2
  %v8880 = vmul.f32 %v8752, 0.2
  %v8881 = vmul.f32 %v8753, 0.2
  %v8882 = vmul.f32 %v8754, 0.2
  %v8883 = vmul.f32 %v8755, 0.2
  %v8884 = vmul.f32 %v8756, 0.2
  %v8885 = vmul.f32 %v8757, 0.2
  %v8886 = vmul.f32 %v8758, 0.2
  %v8887 = vmul.f32 %v8759, 0.2
  %v8888 = vmul.f32 %v8760, 0.2
  %v8889 = vmul.f32 %v8761, 0.2
  %v8890 = vmul.f32 %v8762, 0.2
  %v8891 = vmul.f32 %v8763, 0.2
  %v8892 = vmul.f32 %v8764, 0.2
  %v8893 = vmul.f32 %v8765, 0.2
  %v8894 = vsel %vm8766, %v8702, %v8830
  %v8895 = vsel %vm8767, %v8703, %v8831
  %v8896 = vsel %vm8768, %v8704, %v8832
  %v8897 = vsel %vm8769, %v8705, %v8833
  %v8898 = vsel %vm8770, %v8706, %v8834
  %v8899 = vsel %vm8771, %v8707, %v8835
  %v8900 = vsel %vm8772, %v8708, %v8836
  %v8901 = vsel %vm8773, %v8709, %v8837
  %v8902 = vsel %vm8774, %v8710, %v8838
  %v8903 = vsel %vm8775, %v8711, %v8839
  %v8904 = vsel %vm8776, %v8712, %v8840
  %v8905 = vsel %vm8777, %v8713, %v8841
  %v8906 = vsel %vm8778, %v8714, %v8842
  %v8907 = vsel %vm8779, %v8715, %v8843
  %v8908 = vsel %vm8780, %v8716, %v8844
  %v8909 = vsel %vm8781, %v8717, %v8845
  %v8910 = vsel %vm8782, %v8718, %v8846
  %v8911 = vsel %vm8783, %v8719, %v8847
  %v8912 = vsel %vm8784, %v8720, %v8848
  %v8913 = vsel %vm8785, %v8721, %v8849
  %v8914 = vsel %vm8786, %v8722, %v8850
  %v8915 = vsel %vm8787, %v8723, %v8851
  %v8916 = vsel %vm8788, %v8724, %v8852
  %v8917 = vsel %vm8789, %v8725, %v8853
  %v8918 = vsel %vm8790, %v8726, %v8854
  %v8919 = vsel %vm8791, %v8727, %v8855
  %v8920 = vsel %vm8792, %v8728, %v8856
  %v8921 = vsel %vm8793, %v8729, %v8857
  %v8922 = vsel %vm8794, %v8730, %v8858
  %v8923 = vsel %vm8795, %v8731, %v8859
  %v8924 = vsel %vm8796, %v8732, %v8860
  %v8925 = vsel %vm8797, %v8733, %v8861
  %v8926 = vsel %vm8798, %v8734, %v8862
  %v8927 = vsel %vm8799, %v8735, %v8863
  %v8928 = vsel %vm8800, %v8736, %v8864
  %v8929 = vsel %vm8801, %v8737, %v8865
  %v8930 = vsel %vm8802, %v8738, %v8866
  %v8931 = vsel %vm8803, %v8739, %v8867
  %v8932 = vsel %vm8804, %v8740, %v8868
  %v8933 = vsel %vm8805, %v8741, %v8869
  %v8934 = vsel %vm8806, %v8742, %v8870
  %v8935 = vsel %vm8807, %v8743, %v8871
  %v8936 = vsel %vm8808, %v8744, %v8872
  %v8937 = vsel %vm8809, %v8745, %v8873
  %v8938 = vsel %vm8810, %v8746, %v8874
  %v8939 = vsel %vm8811, %v8747, %v8875
  %v8940 = vsel %vm8812, %v8748, %v8876
  %v8941 = vsel %vm8813, %v8749, %v8877
  %v8942 = vsel %vm8814, %v8750, %v8878
  %v8943 = vsel %vm8815, %v8751, %v8879
  %v8944 = vsel %vm8816, %v8752, %v8880
  %v8945 = vsel %vm8817, %v8753, %v8881
  %v8946 = vsel %vm8818, %v8754, %v8882
  %v8947 = vsel %vm8819, %v8755, %v8883
  %v8948 = vsel %vm8820, %v8756, %v8884
  %v8949 = vsel %vm8821, %v8757, %v8885
  %v8950 = vsel %vm8822, %v8758, %v8886
  %v8951 = vsel %vm8823, %v8759, %v8887
  %v8952 = vsel %vm8824, %v8760, %v8888
  %v8953 = vsel %vm8825, %v8761, %v8889
  %v8954 = vsel %vm8826, %v8762, %v8890
  %v8955 = vsel %vm8827, %v8763, %v8891
  %v8956 = vsel %vm8828, %v8764, %v8892
  %v8957 = vsel %vm8829, %v8765, %v8893
  %v8958 = vpack.c.bf16 %v8903, 0.0
  %v8959 = vpack.c.bf16 %v8907, %v8905
  %v8960 = vpack.c.bf16 %v8919, 0.0
  %v8961 = vpack.c.bf16 %v8923, %v8921
  %v8962 = vpack.c.bf16 %v8935, 0.0
  %v8963 = vpack.c.bf16 %v8939, %v8937
  %v8964 = vld [vmem:[%s5] sm:$0xf]
  %v8965 = vld [vmem:[%s5 + $0x4] sm:$0xf]
  %v8966 = vld [vmem:[%s5 + $0x8] sm:$0xf]
  %v8967 = vld [vmem:[%s5 + $0xc] sm:$0xf]
  %v8968 = vld [vmem:[%s5 + $0x10] sm:$0xf]
  %v8969 = vld [vmem:[%s5 + $0x14] sm:$0xf]
  %v8970 = vld [vmem:[%s5 + $0x18] sm:$0xf]
  %v8971 = vld [vmem:[%s5 + $0x1c] sm:$0xf]
  %v8972 = vpack.c.bf16 %v8904, %v8902
  %v8973 = vpack.c.bf16 %v8908, %v8906
  %v8974 = vpack.c.bf16 %v8920, %v8918
  %v8975 = vpack.c.bf16 %v8924, %v8922
  %v8976 = vpack.c.bf16 %v8936, %v8934
  %v8977 = vpack.c.bf16 %v8940, %v8938
  %s8978 = scalar_lea.vmem %s5, 32
  %v8979 = vld [vmem:[%s8978] sm:$0xf]
  %v8980 = vld [vmem:[%s8978 + $0x4] sm:$0xf]
  %v8981 = vld [vmem:[%s8978 + $0x8] sm:$0xf]
  %v8982 = vld [vmem:[%s8978 + $0xc] sm:$0xf]
  %v8983 = vld [vmem:[%s8978 + $0x10] sm:$0xf]
  %v8984 = vld [vmem:[%s8978 + $0x14] sm:$0xf]
  %v8985 = vld [vmem:[%s8978 + $0x18] sm:$0xf]
  %v8986 = vld [vmem:[%s8978 + $0x1c] sm:$0xf]
  %v8995 = vunpack.c.l.b16 %v8979
  %v8996 = vunpack.c.l.b16 %v8980
  %v8997 = vunpack.c.l.b16 %v8981
  %v8998 = vunpack.c.l.b16 %v8982
  %v8999 = vunpack.c.l.b16 %v8983
  %v9000 = vunpack.c.l.b16 %v8984
  %v9001 = vunpack.c.l.b16 %v8985
  %v9002 = vunpack.c.l.b16 %v8986
  %v9003 = vpack.c.b16 %v8996, %v8995
  %v9004 = vpack.c.b16 %v8998, %v8997
  %v9005 = vpack.c.b16 %v9000, %v8999
  %v9006 = vpack.c.b16 %v9002, %v9001
  %v9011 = vsel %vm7783, %v2755, 0
  %v9014 = vsel %vm7783, %v8972, 0
  %v9017 = vsel %vm7783, %v8973, 0
  %v9020 = vsel %vm7783, %v8974, 0
  %v9023 = vsel %vm7783, %v8975, 0
  %v9026 = vsel %vm7783, %v8976, 0
  %v9029 = vsel %vm7783, %v8977, 0
  %9031 = vmatpush.bf16.msra.mxu0 0
  %9032 = vmatpush.bf16.msra.mxu0 0
  %9033 = vmatpush.bf16.msra.mxu0 0
  %9034 = vmatpush.bf16.msra.mxu0 0
  %9035 = vmatpush.bf16.msra.mxu0 %v9006
  %9036 = vmatpush.bf16.msra.mxu0 %v9005
  %9037 = vmatpush.bf16.msra.mxu0 %v9004
  %9038 = vmatpush.bf16.msra.mxu0 %v9003
  %9039 = vmatmul.bf16.gmra.mxu0 %v9011
  %v9040 = vpop.f32.mrf.mxu0
  %v9041 = vadd.f32 0.0, %v9040
  %v9042 = vpop.f32.mrf.mxu0
  %v9043 = vadd.f32 0.0, %v9042
  %9044 = vmatmul.bf16.gmra.mxu0 %v9011
  %v9045 = vpop.f32.mrf.mxu0
  %v9046 = vadd.f32 0.0, %v9045
  %v9047 = vpop.f32.mrf.mxu0
  %v9048 = vadd.f32 0.0, %v9047
  %9049 = vmatmul.bf16.gmra.mxu0 %v9014
  %v9050 = vpop.f32.mrf.mxu0
  %v9051 = vadd.f32 0.0, %v9050
  %v9052 = vpop.f32.mrf.mxu0
  %v9053 = vadd.f32 0.0, %v9052
  %9054 = vmatmul.bf16.gmra.mxu0 %v9017
  %v9055 = vpop.f32.mrf.mxu0
  %v9056 = vadd.f32 0.0, %v9055
  %v9057 = vpop.f32.mrf.mxu0
  %v9058 = vadd.f32 0.0, %v9057
  %9059 = vmatmul.bf16.gmra.mxu0 %v9020
  %v9060 = vpop.f32.mrf.mxu0
  %v9061 = vadd.f32 0.0, %v9060
  %v9062 = vpop.f32.mrf.mxu0
  %v9063 = vadd.f32 0.0, %v9062
  %9064 = vmatmul.bf16.gmra.mxu0 %v9023
  %v9065 = vpop.f32.mrf.mxu0
  %v9066 = vadd.f32 0.0, %v9065
  %v9067 = vpop.f32.mrf.mxu0
  %v9068 = vadd.f32 0.0, %v9067
  %9069 = vmatmul.bf16.gmra.mxu0 %v9026
  %v9070 = vpop.f32.mrf.mxu0
  %v9071 = vadd.f32 0.0, %v9070
  %v9072 = vpop.f32.mrf.mxu0
  %v9073 = vadd.f32 0.0, %v9072
  %9074 = vmatmul.bf16.gmra.mxu0 %v9029
  %v9075 = vpop.f32.mrf.mxu0
  %v9076 = vadd.f32 0.0, %v9075
  %v9077 = vpop.f32.mrf.mxu0
  %v9078 = vadd.f32 0.0, %v9077
  %9079 = vdwg.mxu0
  %v9088 = vunpack.c.l.b16 %v8964
  %v9089 = vunpack.c.l.b16 %v8965
  %v9090 = vunpack.c.l.b16 %v8966
  %v9091 = vunpack.c.l.b16 %v8967
  %v9092 = vunpack.c.l.b16 %v8968
  %v9093 = vunpack.c.l.b16 %v8969
  %v9094 = vunpack.c.l.b16 %v8970
  %v9095 = vunpack.c.l.b16 %v8971
  %v9096 = vpack.c.b16 %v9089, %v9088
  %v9097 = vpack.c.b16 %v9091, %v9090
  %v9098 = vpack.c.b16 %v9093, %v9092
  %v9099 = vpack.c.b16 %v9095, %v9094
  %v9105 = vsel %vm7783, %v8958, 0
  %v9108 = vsel %vm7783, %v8959, 0
  %v9111 = vsel %vm7783, %v8960, 0
  %v9114 = vsel %vm7783, %v8961, 0
  %v9117 = vsel %vm7783, %v8962, 0
  %v9120 = vsel %vm7783, %v8963, 0
  %9122 = vmatpush.bf16.msra.mxu0 0
  %9123 = vmatpush.bf16.msra.mxu0 0
  %9124 = vmatpush.bf16.msra.mxu0 0
  %9125 = vmatpush.bf16.msra.mxu0 0
  %9126 = vmatpush.bf16.msra.mxu0 %v9099
  %9127 = vmatpush.bf16.msra.mxu0 %v9098
  %9128 = vmatpush.bf16.msra.mxu0 %v9097
  %9129 = vmatpush.bf16.msra.mxu0 %v9096
  %9130 = vmatmul.bf16.gmra.mxu0 %v9011
  %v9131 = vpop.f32.mrf.mxu0
  %v9132 = vadd.f32 %v9041, %v9131
  %v9133 = vpop.f32.mrf.mxu0
  %v9134 = vadd.f32 %v9043, %v9133
  %9135 = vmatmul.bf16.gmra.mxu0 %v9011
  %v9136 = vpop.f32.mrf.mxu0
  %v9137 = vadd.f32 %v9046, %v9136
  %v9138 = vpop.f32.mrf.mxu0
  %v9139 = vadd.f32 %v9048, %v9138
  %9140 = vmatmul.bf16.gmra.mxu0 %v9105
  %v9141 = vpop.f32.mrf.mxu0
  %v9142 = vadd.f32 %v9051, %v9141
  %v9143 = vpop.f32.mrf.mxu0
  %v9144 = vadd.f32 %v9053, %v9143
  %9145 = vmatmul.bf16.gmra.mxu0 %v9108
  %v9146 = vpop.f32.mrf.mxu0
  %v9147 = vadd.f32 %v9056, %v9146
  %v9148 = vpop.f32.mrf.mxu0
  %v9149 = vadd.f32 %v9058, %v9148
  %9150 = vmatmul.bf16.gmra.mxu0 %v9111
  %v9151 = vpop.f32.mrf.mxu0
  %v9152 = vadd.f32 %v9061, %v9151
  %v9153 = vpop.f32.mrf.mxu0
  %v9154 = vadd.f32 %v9063, %v9153
  %9155 = vmatmul.bf16.gmra.mxu0 %v9114
  %v9156 = vpop.f32.mrf.mxu0
  %v9157 = vadd.f32 %v9066, %v9156
  %v9158 = vpop.f32.mrf.mxu0
  %v9159 = vadd.f32 %v9068, %v9158
  %9160 = vmatmul.bf16.gmra.mxu0 %v9117
  %v9161 = vpop.f32.mrf.mxu0
  %v9162 = vadd.f32 %v9071, %v9161
  %v9163 = vpop.f32.mrf.mxu0
  %v9164 = vadd.f32 %v9073, %v9163
  %9165 = vmatmul.bf16.gmra.mxu0 %v9120
  %v9166 = vpop.f32.mrf.mxu0
  %v9167 = vadd.f32 %v9076, %v9166
  %v9168 = vpop.f32.mrf.mxu0
  %v9169 = vadd.f32 %v9078, %v9168
  %9170 = vdwg.mxu0
  %v9171 = vpack.c.bf16 %v8905, %v8903
  %v9172 = vpack.c.bf16 %v8909, %v8907
  %v9173 = vpack.c.bf16 %v8921, %v8919
  %v9174 = vpack.c.bf16 %v8925, %v8923
  %v9175 = vpack.c.bf16 %v8937, %v8935
  %v9176 = vpack.c.bf16 %v8941, %v8939
  %s9177 = scalar_lea.vmem %s5, 64
  %v9178 = vld [vmem:[%s9177] sm:$0xf]
  %v9179 = vld [vmem:[%s9177 + $0x4] sm:$0xf]
  %v9180 = vld [vmem:[%s9177 + $0x8] sm:$0xf]
  %v9181 = vld [vmem:[%s9177 + $0xc] sm:$0xf]
  %v9182 = vld [vmem:[%s9177 + $0x10] sm:$0xf]
  %v9183 = vld [vmem:[%s9177 + $0x14] sm:$0xf]
  %v9184 = vld [vmem:[%s9177 + $0x18] sm:$0xf]
  %v9185 = vld [vmem:[%s9177 + $0x1c] sm:$0xf]
  %v9194 = vunpack.c.l.b16 %v9178
  %v9195 = vunpack.c.l.b16 %v9179
  %v9196 = vunpack.c.l.b16 %v9180
  %v9197 = vunpack.c.l.b16 %v9181
  %v9198 = vunpack.c.l.b16 %v9182
  %v9199 = vunpack.c.l.b16 %v9183
  %v9200 = vunpack.c.l.b16 %v9184
  %v9201 = vunpack.c.l.b16 %v9185
  %v9202 = vpack.c.b16 %v9195, %v9194
  %v9203 = vpack.c.b16 %v9197, %v9196
  %v9204 = vpack.c.b16 %v9199, %v9198
  %v9205 = vpack.c.b16 %v9201, %v9200
  %v9211 = vsel %vm7783, %v9171, 0
  %v9214 = vsel %vm7783, %v9172, 0
  %v9217 = vsel %vm7783, %v9173, 0
  %v9220 = vsel %vm7783, %v9174, 0
  %v9223 = vsel %vm7783, %v9175, 0
  %v9226 = vsel %vm7783, %v9176, 0
  %9228 = vmatpush.bf16.msra.mxu0 0
  %9229 = vmatpush.bf16.msra.mxu0 0
  %9230 = vmatpush.bf16.msra.mxu0 0
  %9231 = vmatpush.bf16.msra.mxu0 0
  %9232 = vmatpush.bf16.msra.mxu0 %v9205
  %9233 = vmatpush.bf16.msra.mxu0 %v9204
  %9234 = vmatpush.bf16.msra.mxu0 %v9203
  %9235 = vmatpush.bf16.msra.mxu0 %v9202
  %9236 = vmatmul.bf16.gmra.mxu0 %v9011
  %v9237 = vpop.f32.mrf.mxu0
  %v9238 = vadd.f32 0.0, %v9237
  %v9239 = vpop.f32.mrf.mxu0
  %v9240 = vadd.f32 0.0, %v9239
  %9241 = vmatmul.bf16.gmra.mxu0 %v9011
  %v9242 = vpop.f32.mrf.mxu0
  %v9243 = vadd.f32 0.0, %v9242
  %v9244 = vpop.f32.mrf.mxu0
  %v9245 = vadd.f32 0.0, %v9244
  %9246 = vmatmul.bf16.gmra.mxu0 %v9211
  %v9247 = vpop.f32.mrf.mxu0
  %v9248 = vadd.f32 0.0, %v9247
  %v9249 = vpop.f32.mrf.mxu0
  %v9250 = vadd.f32 0.0, %v9249
  %9251 = vmatmul.bf16.gmra.mxu0 %v9214
  %v9252 = vpop.f32.mrf.mxu0
  %v9253 = vadd.f32 0.0, %v9252
  %v9254 = vpop.f32.mrf.mxu0
  %v9255 = vadd.f32 0.0, %v9254
  %9256 = vmatmul.bf16.gmra.mxu0 %v9217
  %v9257 = vpop.f32.mrf.mxu0
  %v9258 = vadd.f32 0.0, %v9257
  %v9259 = vpop.f32.mrf.mxu0
  %v9260 = vadd.f32 0.0, %v9259
  %9261 = vmatmul.bf16.gmra.mxu0 %v9220
  %v9262 = vpop.f32.mrf.mxu0
  %v9263 = vadd.f32 0.0, %v9262
  %v9264 = vpop.f32.mrf.mxu0
  %v9265 = vadd.f32 0.0, %v9264
  %9266 = vmatmul.bf16.gmra.mxu0 %v9223
  %v9267 = vpop.f32.mrf.mxu0
  %v9268 = vadd.f32 0.0, %v9267
  %v9269 = vpop.f32.mrf.mxu0
  %v9270 = vadd.f32 0.0, %v9269
  %9271 = vmatmul.bf16.gmra.mxu0 %v9226
  %v9272 = vpop.f32.mrf.mxu0
  %v9273 = vadd.f32 0.0, %v9272
  %v9274 = vpop.f32.mrf.mxu0
  %v9275 = vadd.f32 0.0, %v9274
  %9276 = vdwg.mxu0
  %v9277 = vadd.f32 %v9132, %v9238
  %v9278 = vadd.f32 %v9134, %v9240
  %v9279 = vadd.f32 %v9137, %v9243
  %v9280 = vadd.f32 %v9139, %v9245
  %v9281 = vadd.f32 %v9142, %v9248
  %v9282 = vadd.f32 %v9144, %v9250
  %v9283 = vadd.f32 %v9147, %v9253
  %v9284 = vadd.f32 %v9149, %v9255
  %v9285 = vadd.f32 %v9152, %v9258
  %v9286 = vadd.f32 %v9154, %v9260
  %v9287 = vadd.f32 %v9157, %v9263
  %v9288 = vadd.f32 %v9159, %v9265
  %v9289 = vadd.f32 %v9162, %v9268
  %v9290 = vadd.f32 %v9164, %v9270
  %v9291 = vadd.f32 %v9167, %v9273
  %v9292 = vadd.f32 %v9169, %v9275
  %v9293 = vpack.c.bf16 %v8906, %v8904
  %v9294 = vpack.c.bf16 0.0, %v8908
  %v9295 = vpack.c.bf16 %v8922, %v8920
  %v9296 = vpack.c.bf16 0.0, %v8924
  %v9297 = vpack.c.bf16 %v8938, %v8936
  %v9298 = vpack.c.bf16 0.0, %v8940
  %s9299 = scalar_lea.vmem %s5, 96
  %v9300 = vld [vmem:[%s9299] sm:$0xf]
  %v9301 = vld [vmem:[%s9299 + $0x4] sm:$0xf]
  %v9302 = vld [vmem:[%s9299 + $0x8] sm:$0xf]
  %v9303 = vld [vmem:[%s9299 + $0xc] sm:$0xf]
  %v9304 = vld [vmem:[%s9299 + $0x10] sm:$0xf]
  %v9305 = vld [vmem:[%s9299 + $0x14] sm:$0xf]
  %v9306 = vld [vmem:[%s9299 + $0x18] sm:$0xf]
  %v9307 = vld [vmem:[%s9299 + $0x1c] sm:$0xf]
  %v9316 = vunpack.c.l.b16 %v9300
  %v9317 = vunpack.c.l.b16 %v9301
  %v9318 = vunpack.c.l.b16 %v9302
  %v9319 = vunpack.c.l.b16 %v9303
  %v9320 = vunpack.c.l.b16 %v9304
  %v9321 = vunpack.c.l.b16 %v9305
  %v9322 = vunpack.c.l.b16 %v9306
  %v9323 = vunpack.c.l.b16 %v9307
  %v9324 = vpack.c.b16 %v9317, %v9316
  %v9325 = vpack.c.b16 %v9319, %v9318
  %v9326 = vpack.c.b16 %v9321, %v9320
  %v9327 = vpack.c.b16 %v9323, %v9322
  %v9333 = vsel %vm7783, %v9293, 0
  %v9336 = vsel %vm7783, %v9294, 0
  %v9339 = vsel %vm7783, %v9295, 0
  %v9342 = vsel %vm7783, %v9296, 0
  %v9345 = vsel %vm7783, %v9297, 0
  %v9348 = vsel %vm7783, %v9298, 0
  %9350 = vmatpush.bf16.msra.mxu0 0
  %9351 = vmatpush.bf16.msra.mxu0 0
  %9352 = vmatpush.bf16.msra.mxu0 0
  %9353 = vmatpush.bf16.msra.mxu0 0
  %9354 = vmatpush.bf16.msra.mxu0 %v9327
  %9355 = vmatpush.bf16.msra.mxu0 %v9326
  %9356 = vmatpush.bf16.msra.mxu0 %v9325
  %9357 = vmatpush.bf16.msra.mxu0 %v9324
  %9358 = vmatmul.bf16.gmra.mxu0 %v9011
  %v9359 = vpop.f32.mrf.mxu0
  %v9360 = vadd.f32 0.0, %v9359
  %v9361 = vpop.f32.mrf.mxu0
  %v9362 = vadd.f32 0.0, %v9361
  %9363 = vmatmul.bf16.gmra.mxu0 %v9011
  %v9364 = vpop.f32.mrf.mxu0
  %v9365 = vadd.f32 0.0, %v9364
  %v9366 = vpop.f32.mrf.mxu0
  %v9367 = vadd.f32 0.0, %v9366
  %9368 = vmatmul.bf16.gmra.mxu0 %v9333
  %v9369 = vpop.f32.mrf.mxu0
  %v9370 = vadd.f32 0.0, %v9369
  %v9371 = vpop.f32.mrf.mxu0
  %v9372 = vadd.f32 0.0, %v9371
  %9373 = vmatmul.bf16.gmra.mxu0 %v9336
  %v9374 = vpop.f32.mrf.mxu0
  %v9375 = vadd.f32 0.0, %v9374
  %v9376 = vpop.f32.mrf.mxu0
  %v9377 = vadd.f32 0.0, %v9376
  %9378 = vmatmul.bf16.gmra.mxu0 %v9339
  %v9379 = vpop.f32.mrf.mxu0
  %v9380 = vadd.f32 0.0, %v9379
  %v9381 = vpop.f32.mrf.mxu0
  %v9382 = vadd.f32 0.0, %v9381
  %9383 = vmatmul.bf16.gmra.mxu0 %v9342
  %v9384 = vpop.f32.mrf.mxu0
  %v9385 = vadd.f32 0.0, %v9384
  %v9386 = vpop.f32.mrf.mxu0
  %v9387 = vadd.f32 0.0, %v9386
  %9388 = vmatmul.bf16.gmra.mxu0 %v9345
  %v9389 = vpop.f32.mrf.mxu0
  %v9390 = vadd.f32 0.0, %v9389
  %v9391 = vpop.f32.mrf.mxu0
  %v9392 = vadd.f32 0.0, %v9391
  %9393 = vmatmul.bf16.gmra.mxu0 %v9348
  %v9394 = vpop.f32.mrf.mxu0
  %v9395 = vadd.f32 0.0, %v9394
  %v9396 = vpop.f32.mrf.mxu0
  %v9397 = vadd.f32 0.0, %v9396
  %9398 = vdwg.mxu0
  %v9399 = vadd.f32 %v9277, %v9360
  %v9400 = vadd.f32 %v9278, %v9362
  %v9401 = vadd.f32 %v9279, %v9365
  %v9402 = vadd.f32 %v9280, %v9367
  %v9403 = vadd.f32 %v9281, %v9370
  %v9404 = vadd.f32 %v9282, %v9372
  %v9405 = vadd.f32 %v9283, %v9375
  %v9406 = vadd.f32 %v9284, %v9377
  %v9407 = vadd.f32 %v9285, %v9380
  %v9408 = vadd.f32 %v9286, %v9382
  %v9409 = vadd.f32 %v9287, %v9385
  %v9410 = vadd.f32 %v9288, %v9387
  %v9411 = vadd.f32 %v9289, %v9390
  %v9412 = vadd.f32 %v9290, %v9392
  %v9413 = vadd.f32 %v9291, %v9395
  %v9414 = vadd.f32 %v9292, %v9397
  %v9415 = vpack.c.bf16 %v8895, 0.0
  %v9416 = vpack.c.bf16 %v8899, %v8897
  %v9417 = vpack.c.bf16 %v8911, 0.0
  %v9418 = vpack.c.bf16 %v8915, %v8913
  %v9419 = vpack.c.bf16 %v8927, 0.0
  %v9420 = vpack.c.bf16 %v8931, %v8929
  %v9421 = vpack.c.bf16 %v8943, 0.0
  %v9422 = vpack.c.bf16 %v8947, %v8945
  %s9423 = scalar_lea.vmem %s5, 128
  %v9424 = vld [vmem:[%s9423] sm:$0xf]
  %v9425 = vld [vmem:[%s9423 + $0x4] sm:$0xf]
  %v9426 = vld [vmem:[%s9423 + $0x8] sm:$0xf]
  %v9427 = vld [vmem:[%s9423 + $0xc] sm:$0xf]
  %v9428 = vld [vmem:[%s9423 + $0x10] sm:$0xf]
  %v9429 = vld [vmem:[%s9423 + $0x14] sm:$0xf]
  %v9430 = vld [vmem:[%s9423 + $0x18] sm:$0xf]
  %v9431 = vld [vmem:[%s9423 + $0x1c] sm:$0xf]
  %v9440 = vunpack.c.l.b16 %v9424
  %v9441 = vunpack.c.l.b16 %v9425
  %v9442 = vunpack.c.l.b16 %v9426
  %v9443 = vunpack.c.l.b16 %v9427
  %v9444 = vunpack.c.l.b16 %v9428
  %v9445 = vunpack.c.l.b16 %v9429
  %v9446 = vunpack.c.l.b16 %v9430
  %v9447 = vunpack.c.l.b16 %v9431
  %v9448 = vpack.c.b16 %v9441, %v9440
  %v9449 = vpack.c.b16 %v9443, %v9442
  %v9450 = vpack.c.b16 %v9445, %v9444
  %v9451 = vpack.c.b16 %v9447, %v9446
  %v9457 = vsel %vm7783, %v9415, 0
  %v9460 = vsel %vm7783, %v9416, 0
  %v9463 = vsel %vm7783, %v9417, 0
  %v9466 = vsel %vm7783, %v9418, 0
  %v9469 = vsel %vm7783, %v9419, 0
  %v9472 = vsel %vm7783, %v9420, 0
  %v9475 = vsel %vm7783, %v9421, 0
  %v9478 = vsel %vm7783, %v9422, 0
  %9480 = vmatpush.bf16.msra.mxu0 0
  %9481 = vmatpush.bf16.msra.mxu0 0
  %9482 = vmatpush.bf16.msra.mxu0 0
  %9483 = vmatpush.bf16.msra.mxu0 0
  %9484 = vmatpush.bf16.msra.mxu0 %v9451
  %9485 = vmatpush.bf16.msra.mxu0 %v9450
  %9486 = vmatpush.bf16.msra.mxu0 %v9449
  %9487 = vmatpush.bf16.msra.mxu0 %v9448
  %9488 = vmatmul.bf16.gmra.mxu0 %v9457
  %v9489 = vpop.f32.mrf.mxu0
  %v9490 = vadd.f32 0.0, %v9489
  %v9491 = vpop.f32.mrf.mxu0
  %v9492 = vadd.f32 0.0, %v9491
  %9493 = vmatmul.bf16.gmra.mxu0 %v9460
  %v9494 = vpop.f32.mrf.mxu0
  %v9495 = vadd.f32 0.0, %v9494
  %v9496 = vpop.f32.mrf.mxu0
  %v9497 = vadd.f32 0.0, %v9496
  %9498 = vmatmul.bf16.gmra.mxu0 %v9463
  %v9499 = vpop.f32.mrf.mxu0
  %v9500 = vadd.f32 0.0, %v9499
  %v9501 = vpop.f32.mrf.mxu0
  %v9502 = vadd.f32 0.0, %v9501
  %9503 = vmatmul.bf16.gmra.mxu0 %v9466
  %v9504 = vpop.f32.mrf.mxu0
  %v9505 = vadd.f32 0.0, %v9504
  %v9506 = vpop.f32.mrf.mxu0
  %v9507 = vadd.f32 0.0, %v9506
  %9508 = vmatmul.bf16.gmra.mxu0 %v9469
  %v9509 = vpop.f32.mrf.mxu0
  %v9510 = vadd.f32 0.0, %v9509
  %v9511 = vpop.f32.mrf.mxu0
  %v9512 = vadd.f32 0.0, %v9511
  %9513 = vmatmul.bf16.gmra.mxu0 %v9472
  %v9514 = vpop.f32.mrf.mxu0
  %v9515 = vadd.f32 0.0, %v9514
  %v9516 = vpop.f32.mrf.mxu0
  %v9517 = vadd.f32 0.0, %v9516
  %9518 = vmatmul.bf16.gmra.mxu0 %v9475
  %v9519 = vpop.f32.mrf.mxu0
  %v9520 = vadd.f32 0.0, %v9519
  %v9521 = vpop.f32.mrf.mxu0
  %v9522 = vadd.f32 0.0, %v9521
  %9523 = vmatmul.bf16.gmra.mxu0 %v9478
  %v9524 = vpop.f32.mrf.mxu0
  %v9525 = vadd.f32 0.0, %v9524
  %v9526 = vpop.f32.mrf.mxu0
  %v9527 = vadd.f32 0.0, %v9526
  %9528 = vdwg.mxu0
  %v9529 = vadd.f32 %v9399, %v9490
  %v9530 = vadd.f32 %v9400, %v9492
  %v9531 = vadd.f32 %v9401, %v9495
  %v9532 = vadd.f32 %v9402, %v9497
  %v9533 = vadd.f32 %v9403, %v9500
  %v9534 = vadd.f32 %v9404, %v9502
  %v9535 = vadd.f32 %v9405, %v9505
  %v9536 = vadd.f32 %v9406, %v9507
  %v9537 = vadd.f32 %v9407, %v9510
  %v9538 = vadd.f32 %v9408, %v9512
  %v9539 = vadd.f32 %v9409, %v9515
  %v9540 = vadd.f32 %v9410, %v9517
  %v9541 = vadd.f32 %v9411, %v9520
  %v9542 = vadd.f32 %v9412, %v9522
  %v9543 = vadd.f32 %v9413, %v9525
  %v9544 = vadd.f32 %v9414, %v9527
  %v9545 = vpack.c.bf16 %v8896, %v8894
  %v9546 = vpack.c.bf16 %v8900, %v8898
  %v9547 = vpack.c.bf16 %v8912, %v8910
  %v9548 = vpack.c.bf16 %v8916, %v8914
  %v9549 = vpack.c.bf16 %v8928, %v8926
  %v9550 = vpack.c.bf16 %v8932, %v8930
  %v9551 = vpack.c.bf16 %v8944, %v8942
  %v9552 = vpack.c.bf16 %v8948, %v8946
  %s9553 = scalar_lea.vmem %s5, 160
  %v9554 = vld [vmem:[%s9553] sm:$0xf]
  %v9555 = vld [vmem:[%s9553 + $0x4] sm:$0xf]
  %v9556 = vld [vmem:[%s9553 + $0x8] sm:$0xf]
  %v9557 = vld [vmem:[%s9553 + $0xc] sm:$0xf]
  %v9558 = vld [vmem:[%s9553 + $0x10] sm:$0xf]
  %v9559 = vld [vmem:[%s9553 + $0x14] sm:$0xf]
  %v9560 = vld [vmem:[%s9553 + $0x18] sm:$0xf]
  %v9561 = vld [vmem:[%s9553 + $0x1c] sm:$0xf]
  %v9570 = vunpack.c.l.b16 %v9554
  %v9571 = vunpack.c.l.b16 %v9555
  %v9572 = vunpack.c.l.b16 %v9556
  %v9573 = vunpack.c.l.b16 %v9557
  %v9574 = vunpack.c.l.b16 %v9558
  %v9575 = vunpack.c.l.b16 %v9559
  %v9576 = vunpack.c.l.b16 %v9560
  %v9577 = vunpack.c.l.b16 %v9561
  %v9578 = vpack.c.b16 %v9571, %v9570
  %v9579 = vpack.c.b16 %v9573, %v9572
  %v9580 = vpack.c.b16 %v9575, %v9574
  %v9581 = vpack.c.b16 %v9577, %v9576
  %v9587 = vsel %vm7783, %v9545, 0
  %v9590 = vsel %vm7783, %v9546, 0
  %v9593 = vsel %vm7783, %v9547, 0
  %v9596 = vsel %vm7783, %v9548, 0
  %v9599 = vsel %vm7783, %v9549, 0
  %v9602 = vsel %vm7783, %v9550, 0
  %v9605 = vsel %vm7783, %v9551, 0
  %v9608 = vsel %vm7783, %v9552, 0
  %9610 = vmatpush.bf16.msra.mxu0 0
  %9611 = vmatpush.bf16.msra.mxu0 0
  %9612 = vmatpush.bf16.msra.mxu0 0
  %9613 = vmatpush.bf16.msra.mxu0 0
  %9614 = vmatpush.bf16.msra.mxu0 %v9581
  %9615 = vmatpush.bf16.msra.mxu0 %v9580
  %9616 = vmatpush.bf16.msra.mxu0 %v9579
  %9617 = vmatpush.bf16.msra.mxu0 %v9578
  %9618 = vmatmul.bf16.gmra.mxu0 %v9587
  %v9619 = vpop.f32.mrf.mxu0
  %v9620 = vadd.f32 0.0, %v9619
  %v9621 = vpop.f32.mrf.mxu0
  %v9622 = vadd.f32 0.0, %v9621
  %9623 = vmatmul.bf16.gmra.mxu0 %v9590
  %v9624 = vpop.f32.mrf.mxu0
  %v9625 = vadd.f32 0.0, %v9624
  %v9626 = vpop.f32.mrf.mxu0
  %v9627 = vadd.f32 0.0, %v9626
  %9628 = vmatmul.bf16.gmra.mxu0 %v9593
  %v9629 = vpop.f32.mrf.mxu0
  %v9630 = vadd.f32 0.0, %v9629
  %v9631 = vpop.f32.mrf.mxu0
  %v9632 = vadd.f32 0.0, %v9631
  %9633 = vmatmul.bf16.gmra.mxu0 %v9596
  %v9634 = vpop.f32.mrf.mxu0
  %v9635 = vadd.f32 0.0, %v9634
  %v9636 = vpop.f32.mrf.mxu0
  %v9637 = vadd.f32 0.0, %v9636
  %9638 = vmatmul.bf16.gmra.mxu0 %v9599
  %v9639 = vpop.f32.mrf.mxu0
  %v9640 = vadd.f32 0.0, %v9639
  %v9641 = vpop.f32.mrf.mxu0
  %v9642 = vadd.f32 0.0, %v9641
  %9643 = vmatmul.bf16.gmra.mxu0 %v9602
  %v9644 = vpop.f32.mrf.mxu0
  %v9645 = vadd.f32 0.0, %v9644
  %v9646 = vpop.f32.mrf.mxu0
  %v9647 = vadd.f32 0.0, %v9646
  %9648 = vmatmul.bf16.gmra.mxu0 %v9605
  %v9649 = vpop.f32.mrf.mxu0
  %v9650 = vadd.f32 0.0, %v9649
  %v9651 = vpop.f32.mrf.mxu0
  %v9652 = vadd.f32 0.0, %v9651
  %9653 = vmatmul.bf16.gmra.mxu0 %v9608
  %v9654 = vpop.f32.mrf.mxu0
  %v9655 = vadd.f32 0.0, %v9654
  %v9656 = vpop.f32.mrf.mxu0
  %v9657 = vadd.f32 0.0, %v9656
  %9658 = vdwg.mxu0
  %v9659 = vadd.f32 %v9529, %v9620
  %v9660 = vadd.f32 %v9530, %v9622
  %v9661 = vadd.f32 %v9531, %v9625
  %v9662 = vadd.f32 %v9532, %v9627
  %v9663 = vadd.f32 %v9533, %v9630
  %v9664 = vadd.f32 %v9534, %v9632
  %v9665 = vadd.f32 %v9535, %v9635
  %v9666 = vadd.f32 %v9536, %v9637
  %v9667 = vadd.f32 %v9537, %v9640
  %v9668 = vadd.f32 %v9538, %v9642
  %v9669 = vadd.f32 %v9539, %v9645
  %v9670 = vadd.f32 %v9540, %v9647
  %v9671 = vadd.f32 %v9541, %v9650
  %v9672 = vadd.f32 %v9542, %v9652
  %v9673 = vadd.f32 %v9543, %v9655
  %v9674 = vadd.f32 %v9544, %v9657
  %v9675 = vpack.c.bf16 %v8897, %v8895
  %v9676 = vpack.c.bf16 %v8901, %v8899
  %v9677 = vpack.c.bf16 %v8913, %v8911
  %v9678 = vpack.c.bf16 %v8917, %v8915
  %v9679 = vpack.c.bf16 %v8929, %v8927
  %v9680 = vpack.c.bf16 %v8933, %v8931
  %v9681 = vpack.c.bf16 %v8945, %v8943
  %v9682 = vpack.c.bf16 %v8949, %v8947
  %s9683 = scalar_lea.vmem %s5, 192
  %v9684 = vld [vmem:[%s9683] sm:$0xf]
  %v9685 = vld [vmem:[%s9683 + $0x4] sm:$0xf]
  %v9686 = vld [vmem:[%s9683 + $0x8] sm:$0xf]
  %v9687 = vld [vmem:[%s9683 + $0xc] sm:$0xf]
  %v9688 = vld [vmem:[%s9683 + $0x10] sm:$0xf]
  %v9689 = vld [vmem:[%s9683 + $0x14] sm:$0xf]
  %v9690 = vld [vmem:[%s9683 + $0x18] sm:$0xf]
  %v9691 = vld [vmem:[%s9683 + $0x1c] sm:$0xf]
  %v9700 = vunpack.c.l.b16 %v9684
  %v9701 = vunpack.c.l.b16 %v9685
  %v9702 = vunpack.c.l.b16 %v9686
  %v9703 = vunpack.c.l.b16 %v9687
  %v9704 = vunpack.c.l.b16 %v9688
  %v9705 = vunpack.c.l.b16 %v9689
  %v9706 = vunpack.c.l.b16 %v9690
  %v9707 = vunpack.c.l.b16 %v9691
  %v9708 = vpack.c.b16 %v9701, %v9700
  %v9709 = vpack.c.b16 %v9703, %v9702
  %v9710 = vpack.c.b16 %v9705, %v9704
  %v9711 = vpack.c.b16 %v9707, %v9706
  %v9717 = vsel %vm7783, %v9675, 0
  %v9720 = vsel %vm7783, %v9676, 0
  %v9723 = vsel %vm7783, %v9677, 0
  %v9726 = vsel %vm7783, %v9678, 0
  %v9729 = vsel %vm7783, %v9679, 0
  %v9732 = vsel %vm7783, %v9680, 0
  %v9735 = vsel %vm7783, %v9681, 0
  %v9738 = vsel %vm7783, %v9682, 0
  %9740 = vmatpush.bf16.msra.mxu0 0
  %9741 = vmatpush.bf16.msra.mxu0 0
  %9742 = vmatpush.bf16.msra.mxu0 0
  %9743 = vmatpush.bf16.msra.mxu0 0
  %9744 = vmatpush.bf16.msra.mxu0 %v9711
  %9745 = vmatpush.bf16.msra.mxu0 %v9710
  %9746 = vmatpush.bf16.msra.mxu0 %v9709
  %9747 = vmatpush.bf16.msra.mxu0 %v9708
  %9748 = vmatmul.bf16.gmra.mxu0 %v9717
  %v9749 = vpop.f32.mrf.mxu0
  %v9750 = vadd.f32 0.0, %v9749
  %v9751 = vpop.f32.mrf.mxu0
  %v9752 = vadd.f32 0.0, %v9751
  %9753 = vmatmul.bf16.gmra.mxu0 %v9720
  %v9754 = vpop.f32.mrf.mxu0
  %v9755 = vadd.f32 0.0, %v9754
  %v9756 = vpop.f32.mrf.mxu0
  %v9757 = vadd.f32 0.0, %v9756
  %9758 = vmatmul.bf16.gmra.mxu0 %v9723
  %v9759 = vpop.f32.mrf.mxu0
  %v9760 = vadd.f32 0.0, %v9759
  %v9761 = vpop.f32.mrf.mxu0
  %v9762 = vadd.f32 0.0, %v9761
  %9763 = vmatmul.bf16.gmra.mxu0 %v9726
  %v9764 = vpop.f32.mrf.mxu0
  %v9765 = vadd.f32 0.0, %v9764
  %v9766 = vpop.f32.mrf.mxu0
  %v9767 = vadd.f32 0.0, %v9766
  %9768 = vmatmul.bf16.gmra.mxu0 %v9729
  %v9769 = vpop.f32.mrf.mxu0
  %v9770 = vadd.f32 0.0, %v9769
  %v9771 = vpop.f32.mrf.mxu0
  %v9772 = vadd.f32 0.0, %v9771
  %9773 = vmatmul.bf16.gmra.mxu0 %v9732
  %v9774 = vpop.f32.mrf.mxu0
  %v9775 = vadd.f32 0.0, %v9774
  %v9776 = vpop.f32.mrf.mxu0
  %v9777 = vadd.f32 0.0, %v9776
  %9778 = vmatmul.bf16.gmra.mxu0 %v9735
  %v9779 = vpop.f32.mrf.mxu0
  %v9780 = vadd.f32 0.0, %v9779
  %v9781 = vpop.f32.mrf.mxu0
  %v9782 = vadd.f32 0.0, %v9781
  %9783 = vmatmul.bf16.gmra.mxu0 %v9738
  %v9784 = vpop.f32.mrf.mxu0
  %v9785 = vadd.f32 0.0, %v9784
  %v9786 = vpop.f32.mrf.mxu0
  %v9787 = vadd.f32 0.0, %v9786
  %9788 = vdwg.mxu0
  %v9789 = vadd.f32 %v9659, %v9750
  %v9790 = vadd.f32 %v9660, %v9752
  %v9791 = vadd.f32 %v9661, %v9755
  %v9792 = vadd.f32 %v9662, %v9757
  %v9793 = vadd.f32 %v9663, %v9760
  %v9794 = vadd.f32 %v9664, %v9762
  %v9795 = vadd.f32 %v9665, %v9765
  %v9796 = vadd.f32 %v9666, %v9767
  %v9797 = vadd.f32 %v9667, %v9770
  %v9798 = vadd.f32 %v9668, %v9772
  %v9799 = vadd.f32 %v9669, %v9775
  %v9800 = vadd.f32 %v9670, %v9777
  %v9801 = vadd.f32 %v9671, %v9780
  %v9802 = vadd.f32 %v9672, %v9782
  %v9803 = vadd.f32 %v9673, %v9785
  %v9804 = vadd.f32 %v9674, %v9787
  %v9805 = vpack.c.bf16 %v8898, %v8896
  %v9806 = vpack.c.bf16 0.0, %v8900
  %v9807 = vpack.c.bf16 %v8914, %v8912
  %v9808 = vpack.c.bf16 0.0, %v8916
  %v9809 = vpack.c.bf16 %v8930, %v8928
  %v9810 = vpack.c.bf16 0.0, %v8932
  %v9811 = vpack.c.bf16 %v8946, %v8944
  %v9812 = vpack.c.bf16 0.0, %v8948
  %s9813 = scalar_lea.vmem %s5, 224
  %v9814 = vld [vmem:[%s9813] sm:$0xf]
  %v9815 = vld [vmem:[%s9813 + $0x4] sm:$0xf]
  %v9816 = vld [vmem:[%s9813 + $0x8] sm:$0xf]
  %v9817 = vld [vmem:[%s9813 + $0xc] sm:$0xf]
  %v9818 = vld [vmem:[%s9813 + $0x10] sm:$0xf]
  %v9819 = vld [vmem:[%s9813 + $0x14] sm:$0xf]
  %v9820 = vld [vmem:[%s9813 + $0x18] sm:$0xf]
  %v9821 = vld [vmem:[%s9813 + $0x1c] sm:$0xf]
  %v9830 = vunpack.c.l.b16 %v9814
  %v9831 = vunpack.c.l.b16 %v9815
  %v9832 = vunpack.c.l.b16 %v9816
  %v9833 = vunpack.c.l.b16 %v9817
  %v9834 = vunpack.c.l.b16 %v9818
  %v9835 = vunpack.c.l.b16 %v9819
  %v9836 = vunpack.c.l.b16 %v9820
  %v9837 = vunpack.c.l.b16 %v9821
  %v9838 = vpack.c.b16 %v9831, %v9830
  %v9839 = vpack.c.b16 %v9833, %v9832
  %v9840 = vpack.c.b16 %v9835, %v9834
  %v9841 = vpack.c.b16 %v9837, %v9836
  %v9847 = vsel %vm7783, %v9805, 0
  %v9850 = vsel %vm7783, %v9806, 0
  %v9853 = vsel %vm7783, %v9807, 0
  %v9856 = vsel %vm7783, %v9808, 0
  %v9859 = vsel %vm7783, %v9809, 0
  %v9862 = vsel %vm7783, %v9810, 0
  %v9865 = vsel %vm7783, %v9811, 0
  %v9868 = vsel %vm7783, %v9812, 0
  %9870 = vmatpush.bf16.msra.mxu0 0
  %9871 = vmatpush.bf16.msra.mxu0 0
  %9872 = vmatpush.bf16.msra.mxu0 0
  %9873 = vmatpush.bf16.msra.mxu0 0
  %9874 = vmatpush.bf16.msra.mxu0 %v9841
  %9875 = vmatpush.bf16.msra.mxu0 %v9840
  %9876 = vmatpush.bf16.msra.mxu0 %v9839
  %9877 = vmatpush.bf16.msra.mxu0 %v9838
  %9878 = vmatmul.bf16.gmra.mxu0 %v9847
  %v9879 = vpop.f32.mrf.mxu0
  %v9880 = vadd.f32 0.0, %v9879
  %v9881 = vpop.f32.mrf.mxu0
  %v9882 = vadd.f32 0.0, %v9881
  %9883 = vmatmul.bf16.gmra.mxu0 %v9850
  %v9884 = vpop.f32.mrf.mxu0
  %v9885 = vadd.f32 0.0, %v9884
  %v9886 = vpop.f32.mrf.mxu0
  %v9887 = vadd.f32 0.0, %v9886
  %9888 = vmatmul.bf16.gmra.mxu0 %v9853
  %v9889 = vpop.f32.mrf.mxu0
  %v9890 = vadd.f32 0.0, %v9889
  %v9891 = vpop.f32.mrf.mxu0
  %v9892 = vadd.f32 0.0, %v9891
  %9893 = vmatmul.bf16.gmra.mxu0 %v9856
  %v9894 = vpop.f32.mrf.mxu0
  %v9895 = vadd.f32 0.0, %v9894
  %v9896 = vpop.f32.mrf.mxu0
  %v9897 = vadd.f32 0.0, %v9896
  %9898 = vmatmul.bf16.gmra.mxu0 %v9859
  %v9899 = vpop.f32.mrf.mxu0
  %v9900 = vadd.f32 0.0, %v9899
  %v9901 = vpop.f32.mrf.mxu0
  %v9902 = vadd.f32 0.0, %v9901
  %9903 = vmatmul.bf16.gmra.mxu0 %v9862
  %v9904 = vpop.f32.mrf.mxu0
  %v9905 = vadd.f32 0.0, %v9904
  %v9906 = vpop.f32.mrf.mxu0
  %v9907 = vadd.f32 0.0, %v9906
  %9908 = vmatmul.bf16.gmra.mxu0 %v9865
  %v9909 = vpop.f32.mrf.mxu0
  %v9910 = vadd.f32 0.0, %v9909
  %v9911 = vpop.f32.mrf.mxu0
  %v9912 = vadd.f32 0.0, %v9911
  %9913 = vmatmul.bf16.gmra.mxu0 %v9868
  %v9914 = vpop.f32.mrf.mxu0
  %v9915 = vadd.f32 0.0, %v9914
  %v9916 = vpop.f32.mrf.mxu0
  %v9917 = vadd.f32 0.0, %v9916
  %9918 = vdwg.mxu0
  %v9919 = vadd.f32 %v9789, %v9880
  %v9920 = vadd.f32 %v9790, %v9882
  %v9921 = vadd.f32 %v9791, %v9885
  %v9922 = vadd.f32 %v9792, %v9887
  %v9923 = vadd.f32 %v9793, %v9890
  %v9924 = vadd.f32 %v9794, %v9892
  %v9925 = vadd.f32 %v9795, %v9895
  %v9926 = vadd.f32 %v9796, %v9897
  %v9927 = vadd.f32 %v9797, %v9900
  %v9928 = vadd.f32 %v9798, %v9902
  %v9929 = vadd.f32 %v9799, %v9905
  %v9930 = vadd.f32 %v9800, %v9907
  %v9931 = vadd.f32 %v9801, %v9910
  %v9932 = vadd.f32 %v9802, %v9912
  %v9933 = vadd.f32 %v9803, %v9915
  %v9934 = vadd.f32 %v9804, %v9917
  %v9935 = vpack.c.bf16 %v8951, 0.0
  %v9936 = vpack.c.bf16 %v8955, %v8953
  %s9937 = scalar_lea.vmem %s5, 256
  %v9938 = vld [vmem:[%s9937] sm:$0xf]
  %v9939 = vld [vmem:[%s9937 + $0x4] sm:$0xf]
  %v9940 = vld [vmem:[%s9937 + $0x8] sm:$0xf]
  %v9941 = vld [vmem:[%s9937 + $0xc] sm:$0xf]
  %v9942 = vld [vmem:[%s9937 + $0x10] sm:$0xf]
  %v9943 = vld [vmem:[%s9937 + $0x14] sm:$0xf]
  %v9944 = vld [vmem:[%s9937 + $0x18] sm:$0xf]
  %v9945 = vld [vmem:[%s9937 + $0x1c] sm:$0xf]
  %v9954 = vunpack.c.l.b16 %v9938
  %v9955 = vunpack.c.l.b16 %v9939
  %v9956 = vunpack.c.l.b16 %v9940
  %v9957 = vunpack.c.l.b16 %v9941
  %v9958 = vunpack.c.l.b16 %v9942
  %v9959 = vunpack.c.l.b16 %v9943
  %v9960 = vunpack.c.l.b16 %v9944
  %v9961 = vunpack.c.l.b16 %v9945
  %v9962 = vpack.c.b16 %v9955, %v9954
  %v9963 = vpack.c.b16 %v9957, %v9956
  %v9964 = vpack.c.b16 %v9959, %v9958
  %v9965 = vpack.c.b16 %v9961, %v9960
  %v9971 = vsel %vm7783, %v9935, 0
  %v9974 = vsel %vm7783, %v9936, 0
  %9976 = vmatpush.bf16.msra.mxu0 0
  %9977 = vmatpush.bf16.msra.mxu0 0
  %9978 = vmatpush.bf16.msra.mxu0 0
  %9979 = vmatpush.bf16.msra.mxu0 0
  %9980 = vmatpush.bf16.msra.mxu0 %v9965
  %9981 = vmatpush.bf16.msra.mxu0 %v9964
  %9982 = vmatpush.bf16.msra.mxu0 %v9963
  %9983 = vmatpush.bf16.msra.mxu0 %v9962
  %9984 = vmatmul.bf16.gmra.mxu0 %v9105
  %v9985 = vpop.f32.mrf.mxu0
  %v9986 = vadd.f32 0.0, %v9985
  %v9987 = vpop.f32.mrf.mxu0
  %v9988 = vadd.f32 0.0, %v9987
  %9989 = vmatmul.bf16.gmra.mxu0 %v9108
  %v9990 = vpop.f32.mrf.mxu0
  %v9991 = vadd.f32 0.0, %v9990
  %v9992 = vpop.f32.mrf.mxu0
  %v9993 = vadd.f32 0.0, %v9992
  %9994 = vmatmul.bf16.gmra.mxu0 %v9111
  %v9995 = vpop.f32.mrf.mxu0
  %v9996 = vadd.f32 0.0, %v9995
  %v9997 = vpop.f32.mrf.mxu0
  %v9998 = vadd.f32 0.0, %v9997
  %9999 = vmatmul.bf16.gmra.mxu0 %v9114
  %v10000 = vpop.f32.mrf.mxu0
  %v10001 = vadd.f32 0.0, %v10000
  %v10002 = vpop.f32.mrf.mxu0
  %v10003 = vadd.f32 0.0, %v10002
  %10004 = vmatmul.bf16.gmra.mxu0 %v9117
  %v10005 = vpop.f32.mrf.mxu0
  %v10006 = vadd.f32 0.0, %v10005
  %v10007 = vpop.f32.mrf.mxu0
  %v10008 = vadd.f32 0.0, %v10007
  %10009 = vmatmul.bf16.gmra.mxu0 %v9120
  %v10010 = vpop.f32.mrf.mxu0
  %v10011 = vadd.f32 0.0, %v10010
  %v10012 = vpop.f32.mrf.mxu0
  %v10013 = vadd.f32 0.0, %v10012
  %10014 = vmatmul.bf16.gmra.mxu0 %v9971
  %v10015 = vpop.f32.mrf.mxu0
  %v10016 = vadd.f32 0.0, %v10015
  %v10017 = vpop.f32.mrf.mxu0
  %v10018 = vadd.f32 0.0, %v10017
  %10019 = vmatmul.bf16.gmra.mxu0 %v9974
  %v10020 = vpop.f32.mrf.mxu0
  %v10021 = vadd.f32 0.0, %v10020
  %v10022 = vpop.f32.mrf.mxu0
  %v10023 = vadd.f32 0.0, %v10022
  %10024 = vdwg.mxu0
  %v10025 = vadd.f32 %v9919, %v9986
  %v10026 = vadd.f32 %v9920, %v9988
  %v10027 = vadd.f32 %v9921, %v9991
  %v10028 = vadd.f32 %v9922, %v9993
  %v10029 = vadd.f32 %v9923, %v9996
  %v10030 = vadd.f32 %v9924, %v9998
  %v10031 = vadd.f32 %v9925, %v10001
  %v10032 = vadd.f32 %v9926, %v10003
  %v10033 = vadd.f32 %v9927, %v10006
  %v10034 = vadd.f32 %v9928, %v10008
  %v10035 = vadd.f32 %v9929, %v10011
  %v10036 = vadd.f32 %v9930, %v10013
  %v10037 = vadd.f32 %v9931, %v10016
  %v10038 = vadd.f32 %v9932, %v10018
  %v10039 = vadd.f32 %v9933, %v10021
  %v10040 = vadd.f32 %v9934, %v10023
  %v10041 = vpack.c.bf16 %v8952, %v8950
  %v10042 = vpack.c.bf16 %v8956, %v8954
  %s10043 = scalar_lea.vmem %s5, 288
  %v10044 = vld [vmem:[%s10043] sm:$0xf]
  %v10045 = vld [vmem:[%s10043 + $0x4] sm:$0xf]
  %v10046 = vld [vmem:[%s10043 + $0x8] sm:$0xf]
  %v10047 = vld [vmem:[%s10043 + $0xc] sm:$0xf]
  %v10048 = vld [vmem:[%s10043 + $0x10] sm:$0xf]
  %v10049 = vld [vmem:[%s10043 + $0x14] sm:$0xf]
  %v10050 = vld [vmem:[%s10043 + $0x18] sm:$0xf]
  %v10051 = vld [vmem:[%s10043 + $0x1c] sm:$0xf]
  %v10060 = vunpack.c.l.b16 %v10044
  %v10061 = vunpack.c.l.b16 %v10045
  %v10062 = vunpack.c.l.b16 %v10046
  %v10063 = vunpack.c.l.b16 %v10047
  %v10064 = vunpack.c.l.b16 %v10048
  %v10065 = vunpack.c.l.b16 %v10049
  %v10066 = vunpack.c.l.b16 %v10050
  %v10067 = vunpack.c.l.b16 %v10051
  %v10068 = vpack.c.b16 %v10061, %v10060
  %v10069 = vpack.c.b16 %v10063, %v10062
  %v10070 = vpack.c.b16 %v10065, %v10064
  %v10071 = vpack.c.b16 %v10067, %v10066
  %v10077 = vsel %vm7783, %v10041, 0
  %v10080 = vsel %vm7783, %v10042, 0
  %10082 = vmatpush.bf16.msra.mxu0 0
  %10083 = vmatpush.bf16.msra.mxu0 0
  %10084 = vmatpush.bf16.msra.mxu0 0
  %10085 = vmatpush.bf16.msra.mxu0 0
  %10086 = vmatpush.bf16.msra.mxu0 %v10071
  %10087 = vmatpush.bf16.msra.mxu0 %v10070
  %10088 = vmatpush.bf16.msra.mxu0 %v10069
  %10089 = vmatpush.bf16.msra.mxu0 %v10068
  %10090 = vmatmul.bf16.gmra.mxu0 %v9014
  %v10091 = vpop.f32.mrf.mxu0
  %v10092 = vadd.f32 0.0, %v10091
  %v10093 = vpop.f32.mrf.mxu0
  %v10094 = vadd.f32 0.0, %v10093
  %10095 = vmatmul.bf16.gmra.mxu0 %v9017
  %v10096 = vpop.f32.mrf.mxu0
  %v10097 = vadd.f32 0.0, %v10096
  %v10098 = vpop.f32.mrf.mxu0
  %v10099 = vadd.f32 0.0, %v10098
  %10100 = vmatmul.bf16.gmra.mxu0 %v9020
  %v10101 = vpop.f32.mrf.mxu0
  %v10102 = vadd.f32 0.0, %v10101
  %v10103 = vpop.f32.mrf.mxu0
  %v10104 = vadd.f32 0.0, %v10103
  %10105 = vmatmul.bf16.gmra.mxu0 %v9023
  %v10106 = vpop.f32.mrf.mxu0
  %v10107 = vadd.f32 0.0, %v10106
  %v10108 = vpop.f32.mrf.mxu0
  %v10109 = vadd.f32 0.0, %v10108
  %10110 = vmatmul.bf16.gmra.mxu0 %v9026
  %v10111 = vpop.f32.mrf.mxu0
  %v10112 = vadd.f32 0.0, %v10111
  %v10113 = vpop.f32.mrf.mxu0
  %v10114 = vadd.f32 0.0, %v10113
  %10115 = vmatmul.bf16.gmra.mxu0 %v9029
  %v10116 = vpop.f32.mrf.mxu0
  %v10117 = vadd.f32 0.0, %v10116
  %v10118 = vpop.f32.mrf.mxu0
  %v10119 = vadd.f32 0.0, %v10118
  %10120 = vmatmul.bf16.gmra.mxu0 %v10077
  %v10121 = vpop.f32.mrf.mxu0
  %v10122 = vadd.f32 0.0, %v10121
  %v10123 = vpop.f32.mrf.mxu0
  %v10124 = vadd.f32 0.0, %v10123
  %10125 = vmatmul.bf16.gmra.mxu0 %v10080
  %v10126 = vpop.f32.mrf.mxu0
  %v10127 = vadd.f32 0.0, %v10126
  %v10128 = vpop.f32.mrf.mxu0
  %v10129 = vadd.f32 0.0, %v10128
  %10130 = vdwg.mxu0
  %v10131 = vadd.f32 %v10025, %v10092
  %v10132 = vadd.f32 %v10026, %v10094
  %v10133 = vadd.f32 %v10027, %v10097
  %v10134 = vadd.f32 %v10028, %v10099
  %v10135 = vadd.f32 %v10029, %v10102
  %v10136 = vadd.f32 %v10030, %v10104
  %v10137 = vadd.f32 %v10031, %v10107
  %v10138 = vadd.f32 %v10032, %v10109
  %v10139 = vadd.f32 %v10033, %v10112
  %v10140 = vadd.f32 %v10034, %v10114
  %v10141 = vadd.f32 %v10035, %v10117
  %v10142 = vadd.f32 %v10036, %v10119
  %v10143 = vadd.f32 %v10037, %v10122
  %v10144 = vadd.f32 %v10038, %v10124
  %v10145 = vadd.f32 %v10039, %v10127
  %v10146 = vadd.f32 %v10040, %v10129
  %v10147 = vpack.c.bf16 %v8953, %v8951
  %v10148 = vpack.c.bf16 %v8957, %v8955
  %s10149 = scalar_lea.vmem %s5, 320
  %v10150 = vld [vmem:[%s10149] sm:$0xf]
  %v10151 = vld [vmem:[%s10149 + $0x4] sm:$0xf]
  %v10152 = vld [vmem:[%s10149 + $0x8] sm:$0xf]
  %v10153 = vld [vmem:[%s10149 + $0xc] sm:$0xf]
  %v10154 = vld [vmem:[%s10149 + $0x10] sm:$0xf]
  %v10155 = vld [vmem:[%s10149 + $0x14] sm:$0xf]
  %v10156 = vld [vmem:[%s10149 + $0x18] sm:$0xf]
  %v10157 = vld [vmem:[%s10149 + $0x1c] sm:$0xf]
  %v10166 = vunpack.c.l.b16 %v10150
  %v10167 = vunpack.c.l.b16 %v10151
  %v10168 = vunpack.c.l.b16 %v10152
  %v10169 = vunpack.c.l.b16 %v10153
  %v10170 = vunpack.c.l.b16 %v10154
  %v10171 = vunpack.c.l.b16 %v10155
  %v10172 = vunpack.c.l.b16 %v10156
  %v10173 = vunpack.c.l.b16 %v10157
  %v10174 = vpack.c.b16 %v10167, %v10166
  %v10175 = vpack.c.b16 %v10169, %v10168
  %v10176 = vpack.c.b16 %v10171, %v10170
  %v10177 = vpack.c.b16 %v10173, %v10172
  %v10183 = vsel %vm7783, %v10147, 0
  %v10186 = vsel %vm7783, %v10148, 0
  %10188 = vmatpush.bf16.msra.mxu0 0
  %10189 = vmatpush.bf16.msra.mxu0 0
  %10190 = vmatpush.bf16.msra.mxu0 0
  %10191 = vmatpush.bf16.msra.mxu0 0
  %10192 = vmatpush.bf16.msra.mxu0 %v10177
  %10193 = vmatpush.bf16.msra.mxu0 %v10176
  %10194 = vmatpush.bf16.msra.mxu0 %v10175
  %10195 = vmatpush.bf16.msra.mxu0 %v10174
  %10196 = vmatmul.bf16.gmra.mxu0 %v9211
  %v10197 = vpop.f32.mrf.mxu0
  %v10198 = vadd.f32 0.0, %v10197
  %v10199 = vpop.f32.mrf.mxu0
  %v10200 = vadd.f32 0.0, %v10199
  %10201 = vmatmul.bf16.gmra.mxu0 %v9214
  %v10202 = vpop.f32.mrf.mxu0
  %v10203 = vadd.f32 0.0, %v10202
  %v10204 = vpop.f32.mrf.mxu0
  %v10205 = vadd.f32 0.0, %v10204
  %10206 = vmatmul.bf16.gmra.mxu0 %v9217
  %v10207 = vpop.f32.mrf.mxu0
  %v10208 = vadd.f32 0.0, %v10207
  %v10209 = vpop.f32.mrf.mxu0
  %v10210 = vadd.f32 0.0, %v10209
  %10211 = vmatmul.bf16.gmra.mxu0 %v9220
  %v10212 = vpop.f32.mrf.mxu0
  %v10213 = vadd.f32 0.0, %v10212
  %v10214 = vpop.f32.mrf.mxu0
  %v10215 = vadd.f32 0.0, %v10214
  %10216 = vmatmul.bf16.gmra.mxu0 %v9223
  %v10217 = vpop.f32.mrf.mxu0
  %v10218 = vadd.f32 0.0, %v10217
  %v10219 = vpop.f32.mrf.mxu0
  %v10220 = vadd.f32 0.0, %v10219
  %10221 = vmatmul.bf16.gmra.mxu0 %v9226
  %v10222 = vpop.f32.mrf.mxu0
  %v10223 = vadd.f32 0.0, %v10222
  %v10224 = vpop.f32.mrf.mxu0
  %v10225 = vadd.f32 0.0, %v10224
  %10226 = vmatmul.bf16.gmra.mxu0 %v10183
  %v10227 = vpop.f32.mrf.mxu0
  %v10228 = vadd.f32 0.0, %v10227
  %v10229 = vpop.f32.mrf.mxu0
  %v10230 = vadd.f32 0.0, %v10229
  %10231 = vmatmul.bf16.gmra.mxu0 %v10186
  %v10232 = vpop.f32.mrf.mxu0
  %v10233 = vadd.f32 0.0, %v10232
  %v10234 = vpop.f32.mrf.mxu0
  %v10235 = vadd.f32 0.0, %v10234
  %10236 = vdwg.mxu0
  %v10237 = vadd.f32 %v10131, %v10198
  %v10238 = vadd.f32 %v10132, %v10200
  %v10239 = vadd.f32 %v10133, %v10203
  %v10240 = vadd.f32 %v10134, %v10205
  %v10241 = vadd.f32 %v10135, %v10208
  %v10242 = vadd.f32 %v10136, %v10210
  %v10243 = vadd.f32 %v10137, %v10213
  %v10244 = vadd.f32 %v10138, %v10215
  %v10245 = vadd.f32 %v10139, %v10218
  %v10246 = vadd.f32 %v10140, %v10220
  %v10247 = vadd.f32 %v10141, %v10223
  %v10248 = vadd.f32 %v10142, %v10225
  %v10249 = vadd.f32 %v10143, %v10228
  %v10250 = vadd.f32 %v10144, %v10230
  %v10251 = vadd.f32 %v10145, %v10233
  %v10252 = vadd.f32 %v10146, %v10235
  %v10253 = vpack.c.bf16 %v8954, %v8952
  %v10254 = vpack.c.bf16 0.0, %v8956
  %s10255 = scalar_lea.vmem %s5, 352
  %v10256 = vld [vmem:[%s10255] sm:$0xf]
  %v10257 = vld [vmem:[%s10255 + $0x4] sm:$0xf]
  %v10258 = vld [vmem:[%s10255 + $0x8] sm:$0xf]
  %v10259 = vld [vmem:[%s10255 + $0xc] sm:$0xf]
  %v10260 = vld [vmem:[%s10255 + $0x10] sm:$0xf]
  %v10261 = vld [vmem:[%s10255 + $0x14] sm:$0xf]
  %v10262 = vld [vmem:[%s10255 + $0x18] sm:$0xf]
  %v10263 = vld [vmem:[%s10255 + $0x1c] sm:$0xf]
  %v10272 = vunpack.c.l.b16 %v10256
  %v10273 = vunpack.c.l.b16 %v10257
  %v10274 = vunpack.c.l.b16 %v10258
  %v10275 = vunpack.c.l.b16 %v10259
  %v10276 = vunpack.c.l.b16 %v10260
  %v10277 = vunpack.c.l.b16 %v10261
  %v10278 = vunpack.c.l.b16 %v10262
  %v10279 = vunpack.c.l.b16 %v10263
  %v10280 = vpack.c.b16 %v10273, %v10272
  %v10281 = vpack.c.b16 %v10275, %v10274
  %v10282 = vpack.c.b16 %v10277, %v10276
  %v10283 = vpack.c.b16 %v10279, %v10278
  %v10289 = vsel %vm7783, %v10253, 0
  %v10292 = vsel %vm7783, %v10254, 0
  %10294 = vmatpush.bf16.msra.mxu0 0
  %10295 = vmatpush.bf16.msra.mxu0 0
  %10296 = vmatpush.bf16.msra.mxu0 0
  %10297 = vmatpush.bf16.msra.mxu0 0
  %10298 = vmatpush.bf16.msra.mxu0 %v10283
  %10299 = vmatpush.bf16.msra.mxu0 %v10282
  %10300 = vmatpush.bf16.msra.mxu0 %v10281
  %10301 = vmatpush.bf16.msra.mxu0 %v10280
  %10302 = vmatmul.bf16.gmra.mxu0 %v9333
  %v10303 = vpop.f32.mrf.mxu0
  %v10304 = vadd.f32 0.0, %v10303
  %v10305 = vpop.f32.mrf.mxu0
  %v10306 = vadd.f32 0.0, %v10305
  %10307 = vmatmul.bf16.gmra.mxu0 %v9336
  %v10308 = vpop.f32.mrf.mxu0
  %v10309 = vadd.f32 0.0, %v10308
  %v10310 = vpop.f32.mrf.mxu0
  %v10311 = vadd.f32 0.0, %v10310
  %10312 = vmatmul.bf16.gmra.mxu0 %v9339
  %v10313 = vpop.f32.mrf.mxu0
  %v10314 = vadd.f32 0.0, %v10313
  %v10315 = vpop.f32.mrf.mxu0
  %v10316 = vadd.f32 0.0, %v10315
  %10317 = vmatmul.bf16.gmra.mxu0 %v9342
  %v10318 = vpop.f32.mrf.mxu0
  %v10319 = vadd.f32 0.0, %v10318
  %v10320 = vpop.f32.mrf.mxu0
  %v10321 = vadd.f32 0.0, %v10320
  %10322 = vmatmul.bf16.gmra.mxu0 %v9345
  %v10323 = vpop.f32.mrf.mxu0
  %v10324 = vadd.f32 0.0, %v10323
  %v10325 = vpop.f32.mrf.mxu0
  %v10326 = vadd.f32 0.0, %v10325
  %10327 = vmatmul.bf16.gmra.mxu0 %v9348
  %v10328 = vpop.f32.mrf.mxu0
  %v10329 = vadd.f32 0.0, %v10328
  %v10330 = vpop.f32.mrf.mxu0
  %v10331 = vadd.f32 0.0, %v10330
  %10332 = vmatmul.bf16.gmra.mxu0 %v10289
  %v10333 = vpop.f32.mrf.mxu0
  %v10334 = vadd.f32 0.0, %v10333
  %v10335 = vpop.f32.mrf.mxu0
  %v10336 = vadd.f32 0.0, %v10335
  %10337 = vmatmul.bf16.gmra.mxu0 %v10292
  %v10338 = vpop.f32.mrf.mxu0
  %v10339 = vadd.f32 0.0, %v10338
  %v10340 = vpop.f32.mrf.mxu0
  %v10341 = vadd.f32 0.0, %v10340
  %10342 = vdwg.mxu0
  %v10343 = vadd.f32 %v10237, %v10304
  %v10344 = vadd.f32 %v10238, %v10306
  %v10345 = vadd.f32 %v10239, %v10309
  %v10346 = vadd.f32 %v10240, %v10311
  %v10347 = vadd.f32 %v10241, %v10314
  %v10348 = vadd.f32 %v10242, %v10316
  %v10349 = vadd.f32 %v10243, %v10319
  %v10350 = vadd.f32 %v10244, %v10321
  %v10351 = vadd.f32 %v10245, %v10324
  %v10352 = vadd.f32 %v10246, %v10326
  %v10353 = vadd.f32 %v10247, %v10329
  %v10354 = vadd.f32 %v10248, %v10331
  %v10355 = vadd.f32 %v10249, %v10334
  %v10356 = vadd.f32 %v10250, %v10336
  %v10357 = vadd.f32 %v10251, %v10339
  %v10358 = vadd.f32 %v10252, %v10341
  %s10359 = scalar_lea.vmem %s5, 384
  %v10360 = vld [vmem:[%s10359] sm:$0xf]
  %v10361 = vld [vmem:[%s10359 + $0x4] sm:$0xf]
  %v10362 = vld [vmem:[%s10359 + $0x8] sm:$0xf]
  %v10363 = vld [vmem:[%s10359 + $0xc] sm:$0xf]
  %v10364 = vld [vmem:[%s10359 + $0x10] sm:$0xf]
  %v10365 = vld [vmem:[%s10359 + $0x14] sm:$0xf]
  %v10366 = vld [vmem:[%s10359 + $0x18] sm:$0xf]
  %v10367 = vld [vmem:[%s10359 + $0x1c] sm:$0xf]
  %v10376 = vunpack.c.l.b16 %v10360
  %v10377 = vunpack.c.l.b16 %v10361
  %v10378 = vunpack.c.l.b16 %v10362
  %v10379 = vunpack.c.l.b16 %v10363
  %v10380 = vunpack.c.l.b16 %v10364
  %v10381 = vunpack.c.l.b16 %v10365
  %v10382 = vunpack.c.l.b16 %v10366
  %v10383 = vunpack.c.l.b16 %v10367
  %v10384 = vpack.c.b16 %v10377, %v10376
  %v10385 = vpack.c.b16 %v10379, %v10378
  %v10386 = vpack.c.b16 %v10381, %v10380
  %v10387 = vpack.c.b16 %v10383, %v10382
  %10392 = vmatpush.bf16.msra.mxu0 0
  %10393 = vmatpush.bf16.msra.mxu0 0
  %10394 = vmatpush.bf16.msra.mxu0 0
  %10395 = vmatpush.bf16.msra.mxu0 0
  %10396 = vmatpush.bf16.msra.mxu0 %v10387
  %10397 = vmatpush.bf16.msra.mxu0 %v10386
  %10398 = vmatpush.bf16.msra.mxu0 %v10385
  %10399 = vmatpush.bf16.msra.mxu0 %v10384
  %10400 = vmatmul.bf16.gmra.mxu0 %v9463
  %v10401 = vpop.f32.mrf.mxu0
  %v10402 = vadd.f32 0.0, %v10401
  %v10403 = vpop.f32.mrf.mxu0
  %v10404 = vadd.f32 0.0, %v10403
  %10405 = vmatmul.bf16.gmra.mxu0 %v9466
  %v10406 = vpop.f32.mrf.mxu0
  %v10407 = vadd.f32 0.0, %v10406
  %v10408 = vpop.f32.mrf.mxu0
  %v10409 = vadd.f32 0.0, %v10408
  %10410 = vmatmul.bf16.gmra.mxu0 %v9469
  %v10411 = vpop.f32.mrf.mxu0
  %v10412 = vadd.f32 0.0, %v10411
  %v10413 = vpop.f32.mrf.mxu0
  %v10414 = vadd.f32 0.0, %v10413
  %10415 = vmatmul.bf16.gmra.mxu0 %v9472
  %v10416 = vpop.f32.mrf.mxu0
  %v10417 = vadd.f32 0.0, %v10416
  %v10418 = vpop.f32.mrf.mxu0
  %v10419 = vadd.f32 0.0, %v10418
  %10420 = vmatmul.bf16.gmra.mxu0 %v9475
  %v10421 = vpop.f32.mrf.mxu0
  %v10422 = vadd.f32 0.0, %v10421
  %v10423 = vpop.f32.mrf.mxu0
  %v10424 = vadd.f32 0.0, %v10423
  %10425 = vmatmul.bf16.gmra.mxu0 %v9478
  %v10426 = vpop.f32.mrf.mxu0
  %v10427 = vadd.f32 0.0, %v10426
  %v10428 = vpop.f32.mrf.mxu0
  %v10429 = vadd.f32 0.0, %v10428
  %10430 = vmatmul.bf16.gmra.mxu0 %v9011
  %v10431 = vpop.f32.mrf.mxu0
  %v10432 = vadd.f32 0.0, %v10431
  %v10433 = vpop.f32.mrf.mxu0
  %v10434 = vadd.f32 0.0, %v10433
  %10435 = vmatmul.bf16.gmra.mxu0 %v9011
  %v10436 = vpop.f32.mrf.mxu0
  %v10437 = vadd.f32 0.0, %v10436
  %v10438 = vpop.f32.mrf.mxu0
  %v10439 = vadd.f32 0.0, %v10438
  %10440 = vdwg.mxu0
  %v10441 = vadd.f32 %v10343, %v10402
  %v10442 = vadd.f32 %v10344, %v10404
  %v10443 = vadd.f32 %v10345, %v10407
  %v10444 = vadd.f32 %v10346, %v10409
  %v10445 = vadd.f32 %v10347, %v10412
  %v10446 = vadd.f32 %v10348, %v10414
  %v10447 = vadd.f32 %v10349, %v10417
  %v10448 = vadd.f32 %v10350, %v10419
  %v10449 = vadd.f32 %v10351, %v10422
  %v10450 = vadd.f32 %v10352, %v10424
  %v10451 = vadd.f32 %v10353, %v10427
  %v10452 = vadd.f32 %v10354, %v10429
  %v10453 = vadd.f32 %v10355, %v10432
  %v10454 = vadd.f32 %v10356, %v10434
  %v10455 = vadd.f32 %v10357, %v10437
  %v10456 = vadd.f32 %v10358, %v10439
  %s10457 = scalar_lea.vmem %s5, 416
  %v10458 = vld [vmem:[%s10457] sm:$0xf]
  %v10459 = vld [vmem:[%s10457 + $0x4] sm:$0xf]
  %v10460 = vld [vmem:[%s10457 + $0x8] sm:$0xf]
  %v10461 = vld [vmem:[%s10457 + $0xc] sm:$0xf]
  %v10462 = vld [vmem:[%s10457 + $0x10] sm:$0xf]
  %v10463 = vld [vmem:[%s10457 + $0x14] sm:$0xf]
  %v10464 = vld [vmem:[%s10457 + $0x18] sm:$0xf]
  %v10465 = vld [vmem:[%s10457 + $0x1c] sm:$0xf]
  %v10474 = vunpack.c.l.b16 %v10458
  %v10475 = vunpack.c.l.b16 %v10459
  %v10476 = vunpack.c.l.b16 %v10460
  %v10477 = vunpack.c.l.b16 %v10461
  %v10478 = vunpack.c.l.b16 %v10462
  %v10479 = vunpack.c.l.b16 %v10463
  %v10480 = vunpack.c.l.b16 %v10464
  %v10481 = vunpack.c.l.b16 %v10465
  %v10482 = vpack.c.b16 %v10475, %v10474
  %v10483 = vpack.c.b16 %v10477, %v10476
  %v10484 = vpack.c.b16 %v10479, %v10478
  %v10485 = vpack.c.b16 %v10481, %v10480
  %10490 = vmatpush.bf16.msra.mxu0 0
  %10491 = vmatpush.bf16.msra.mxu0 0
  %10492 = vmatpush.bf16.msra.mxu0 0
  %10493 = vmatpush.bf16.msra.mxu0 0
  %10494 = vmatpush.bf16.msra.mxu0 %v10485
  %10495 = vmatpush.bf16.msra.mxu0 %v10484
  %10496 = vmatpush.bf16.msra.mxu0 %v10483
  %10497 = vmatpush.bf16.msra.mxu0 %v10482
  %10498 = vmatmul.bf16.gmra.mxu0 %v9593
  %v10499 = vpop.f32.mrf.mxu0
  %v10500 = vadd.f32 0.0, %v10499
  %v10501 = vpop.f32.mrf.mxu0
  %v10502 = vadd.f32 0.0, %v10501
  %10503 = vmatmul.bf16.gmra.mxu0 %v9596
  %v10504 = vpop.f32.mrf.mxu0
  %v10505 = vadd.f32 0.0, %v10504
  %v10506 = vpop.f32.mrf.mxu0
  %v10507 = vadd.f32 0.0, %v10506
  %10508 = vmatmul.bf16.gmra.mxu0 %v9599
  %v10509 = vpop.f32.mrf.mxu0
  %v10510 = vadd.f32 0.0, %v10509
  %v10511 = vpop.f32.mrf.mxu0
  %v10512 = vadd.f32 0.0, %v10511
  %10513 = vmatmul.bf16.gmra.mxu0 %v9602
  %v10514 = vpop.f32.mrf.mxu0
  %v10515 = vadd.f32 0.0, %v10514
  %v10516 = vpop.f32.mrf.mxu0
  %v10517 = vadd.f32 0.0, %v10516
  %10518 = vmatmul.bf16.gmra.mxu0 %v9605
  %v10519 = vpop.f32.mrf.mxu0
  %v10520 = vadd.f32 0.0, %v10519
  %v10521 = vpop.f32.mrf.mxu0
  %v10522 = vadd.f32 0.0, %v10521
  %10523 = vmatmul.bf16.gmra.mxu0 %v9608
  %v10524 = vpop.f32.mrf.mxu0
  %v10525 = vadd.f32 0.0, %v10524
  %v10526 = vpop.f32.mrf.mxu0
  %v10527 = vadd.f32 0.0, %v10526
  %10528 = vmatmul.bf16.gmra.mxu0 %v9011
  %v10529 = vpop.f32.mrf.mxu0
  %v10530 = vadd.f32 0.0, %v10529
  %v10531 = vpop.f32.mrf.mxu0
  %v10532 = vadd.f32 0.0, %v10531
  %10533 = vmatmul.bf16.gmra.mxu0 %v9011
  %v10534 = vpop.f32.mrf.mxu0
  %v10535 = vadd.f32 0.0, %v10534
  %v10536 = vpop.f32.mrf.mxu0
  %v10537 = vadd.f32 0.0, %v10536
  %10538 = vdwg.mxu0
  %v10539 = vadd.f32 %v10441, %v10500
  %v10540 = vadd.f32 %v10442, %v10502
  %v10541 = vadd.f32 %v10443, %v10505
  %v10542 = vadd.f32 %v10444, %v10507
  %v10543 = vadd.f32 %v10445, %v10510
  %v10544 = vadd.f32 %v10446, %v10512
  %v10545 = vadd.f32 %v10447, %v10515
  %v10546 = vadd.f32 %v10448, %v10517
  %v10547 = vadd.f32 %v10449, %v10520
  %v10548 = vadd.f32 %v10450, %v10522
  %v10549 = vadd.f32 %v10451, %v10525
  %v10550 = vadd.f32 %v10452, %v10527
  %v10551 = vadd.f32 %v10453, %v10530
  %v10552 = vadd.f32 %v10454, %v10532
  %v10553 = vadd.f32 %v10455, %v10535
  %v10554 = vadd.f32 %v10456, %v10537
  %s10555 = scalar_lea.vmem %s5, 448
  %v10556 = vld [vmem:[%s10555] sm:$0xf]
  %v10557 = vld [vmem:[%s10555 + $0x4] sm:$0xf]
  %v10558 = vld [vmem:[%s10555 + $0x8] sm:$0xf]
  %v10559 = vld [vmem:[%s10555 + $0xc] sm:$0xf]
  %v10560 = vld [vmem:[%s10555 + $0x10] sm:$0xf]
  %v10561 = vld [vmem:[%s10555 + $0x14] sm:$0xf]
  %v10562 = vld [vmem:[%s10555 + $0x18] sm:$0xf]
  %v10563 = vld [vmem:[%s10555 + $0x1c] sm:$0xf]
  %v10572 = vunpack.c.l.b16 %v10556
  %v10573 = vunpack.c.l.b16 %v10557
  %v10574 = vunpack.c.l.b16 %v10558
  %v10575 = vunpack.c.l.b16 %v10559
  %v10576 = vunpack.c.l.b16 %v10560
  %v10577 = vunpack.c.l.b16 %v10561
  %v10578 = vunpack.c.l.b16 %v10562
  %v10579 = vunpack.c.l.b16 %v10563
  %v10580 = vpack.c.b16 %v10573, %v10572
  %v10581 = vpack.c.b16 %v10575, %v10574
  %v10582 = vpack.c.b16 %v10577, %v10576
  %v10583 = vpack.c.b16 %v10579, %v10578
  %10588 = vmatpush.bf16.msra.mxu0 0
  %10589 = vmatpush.bf16.msra.mxu0 0
  %10590 = vmatpush.bf16.msra.mxu0 0
  %10591 = vmatpush.bf16.msra.mxu0 0
  %10592 = vmatpush.bf16.msra.mxu0 %v10583
  %10593 = vmatpush.bf16.msra.mxu0 %v10582
  %10594 = vmatpush.bf16.msra.mxu0 %v10581
  %10595 = vmatpush.bf16.msra.mxu0 %v10580
  %10596 = vmatmul.bf16.gmra.mxu0 %v9723
  %v10597 = vpop.f32.mrf.mxu0
  %v10598 = vadd.f32 0.0, %v10597
  %v10599 = vpop.f32.mrf.mxu0
  %v10600 = vadd.f32 0.0, %v10599
  %10601 = vmatmul.bf16.gmra.mxu0 %v9726
  %v10602 = vpop.f32.mrf.mxu0
  %v10603 = vadd.f32 0.0, %v10602
  %v10604 = vpop.f32.mrf.mxu0
  %v10605 = vadd.f32 0.0, %v10604
  %10606 = vmatmul.bf16.gmra.mxu0 %v9729
  %v10607 = vpop.f32.mrf.mxu0
  %v10608 = vadd.f32 0.0, %v10607
  %v10609 = vpop.f32.mrf.mxu0
  %v10610 = vadd.f32 0.0, %v10609
  %10611 = vmatmul.bf16.gmra.mxu0 %v9732
  %v10612 = vpop.f32.mrf.mxu0
  %v10613 = vadd.f32 0.0, %v10612
  %v10614 = vpop.f32.mrf.mxu0
  %v10615 = vadd.f32 0.0, %v10614
  %10616 = vmatmul.bf16.gmra.mxu0 %v9735
  %v10617 = vpop.f32.mrf.mxu0
  %v10618 = vadd.f32 0.0, %v10617
  %v10619 = vpop.f32.mrf.mxu0
  %v10620 = vadd.f32 0.0, %v10619
  %10621 = vmatmul.bf16.gmra.mxu0 %v9738
  %v10622 = vpop.f32.mrf.mxu0
  %v10623 = vadd.f32 0.0, %v10622
  %v10624 = vpop.f32.mrf.mxu0
  %v10625 = vadd.f32 0.0, %v10624
  %10626 = vmatmul.bf16.gmra.mxu0 %v9011
  %v10627 = vpop.f32.mrf.mxu0
  %v10628 = vadd.f32 0.0, %v10627
  %v10629 = vpop.f32.mrf.mxu0
  %v10630 = vadd.f32 0.0, %v10629
  %10631 = vmatmul.bf16.gmra.mxu0 %v9011
  %v10632 = vpop.f32.mrf.mxu0
  %v10633 = vadd.f32 0.0, %v10632
  %v10634 = vpop.f32.mrf.mxu0
  %v10635 = vadd.f32 0.0, %v10634
  %10636 = vdwg.mxu0
  %v10637 = vadd.f32 %v10539, %v10598
  %v10638 = vadd.f32 %v10540, %v10600
  %v10639 = vadd.f32 %v10541, %v10603
  %v10640 = vadd.f32 %v10542, %v10605
  %v10641 = vadd.f32 %v10543, %v10608
  %v10642 = vadd.f32 %v10544, %v10610
  %v10643 = vadd.f32 %v10545, %v10613
  %v10644 = vadd.f32 %v10546, %v10615
  %v10645 = vadd.f32 %v10547, %v10618
  %v10646 = vadd.f32 %v10548, %v10620
  %v10647 = vadd.f32 %v10549, %v10623
  %v10648 = vadd.f32 %v10550, %v10625
  %v10649 = vadd.f32 %v10551, %v10628
  %v10650 = vadd.f32 %v10552, %v10630
  %v10651 = vadd.f32 %v10553, %v10633
  %v10652 = vadd.f32 %v10554, %v10635
  %s10653 = scalar_lea.vmem %s5, 480
  %v10654 = vld [vmem:[%s10653] sm:$0xf]
  %v10655 = vld [vmem:[%s10653 + $0x4] sm:$0xf]
  %v10656 = vld [vmem:[%s10653 + $0x8] sm:$0xf]
  %v10657 = vld [vmem:[%s10653 + $0xc] sm:$0xf]
  %v10658 = vld [vmem:[%s10653 + $0x10] sm:$0xf]
  %v10659 = vld [vmem:[%s10653 + $0x14] sm:$0xf]
  %v10660 = vld [vmem:[%s10653 + $0x18] sm:$0xf]
  %v10661 = vld [vmem:[%s10653 + $0x1c] sm:$0xf]
  %v10670 = vunpack.c.l.b16 %v10654
  %v10671 = vunpack.c.l.b16 %v10655
  %v10672 = vunpack.c.l.b16 %v10656
  %v10673 = vunpack.c.l.b16 %v10657
  %v10674 = vunpack.c.l.b16 %v10658
  %v10675 = vunpack.c.l.b16 %v10659
  %v10676 = vunpack.c.l.b16 %v10660
  %v10677 = vunpack.c.l.b16 %v10661
  %v10678 = vpack.c.b16 %v10671, %v10670
  %v10679 = vpack.c.b16 %v10673, %v10672
  %v10680 = vpack.c.b16 %v10675, %v10674
  %v10681 = vpack.c.b16 %v10677, %v10676
  %10686 = vmatpush.bf16.msra.mxu0 0
  %10687 = vmatpush.bf16.msra.mxu0 0
  %10688 = vmatpush.bf16.msra.mxu0 0
  %10689 = vmatpush.bf16.msra.mxu0 0
  %10690 = vmatpush.bf16.msra.mxu0 %v10681
  %10691 = vmatpush.bf16.msra.mxu0 %v10680
  %10692 = vmatpush.bf16.msra.mxu0 %v10679
  %10693 = vmatpush.bf16.msra.mxu0 %v10678
  %10694 = vmatmul.bf16.gmra.mxu0 %v9853
  %v10695 = vpop.f32.mrf.mxu0
  %v10696 = vadd.f32 0.0, %v10695
  %v10697 = vpop.f32.mrf.mxu0
  %v10698 = vadd.f32 0.0, %v10697
  %10699 = vmatmul.bf16.gmra.mxu0 %v9856
  %v10700 = vpop.f32.mrf.mxu0
  %v10701 = vadd.f32 0.0, %v10700
  %v10702 = vpop.f32.mrf.mxu0
  %v10703 = vadd.f32 0.0, %v10702
  %10704 = vmatmul.bf16.gmra.mxu0 %v9859
  %v10705 = vpop.f32.mrf.mxu0
  %v10706 = vadd.f32 0.0, %v10705
  %v10707 = vpop.f32.mrf.mxu0
  %v10708 = vadd.f32 0.0, %v10707
  %10709 = vmatmul.bf16.gmra.mxu0 %v9862
  %v10710 = vpop.f32.mrf.mxu0
  %v10711 = vadd.f32 0.0, %v10710
  %v10712 = vpop.f32.mrf.mxu0
  %v10713 = vadd.f32 0.0, %v10712
  %10714 = vmatmul.bf16.gmra.mxu0 %v9865
  %v10715 = vpop.f32.mrf.mxu0
  %v10716 = vadd.f32 0.0, %v10715
  %v10717 = vpop.f32.mrf.mxu0
  %v10718 = vadd.f32 0.0, %v10717
  %10719 = vmatmul.bf16.gmra.mxu0 %v9868
  %v10720 = vpop.f32.mrf.mxu0
  %v10721 = vadd.f32 0.0, %v10720
  %v10722 = vpop.f32.mrf.mxu0
  %v10723 = vadd.f32 0.0, %v10722
  %10724 = vmatmul.bf16.gmra.mxu0 %v9011
  %v10725 = vpop.f32.mrf.mxu0
  %v10726 = vadd.f32 0.0, %v10725
  %v10727 = vpop.f32.mrf.mxu0
  %v10728 = vadd.f32 0.0, %v10727
  %10729 = vmatmul.bf16.gmra.mxu0 %v9011
  %v10730 = vpop.f32.mrf.mxu0
  %v10731 = vadd.f32 0.0, %v10730
  %v10732 = vpop.f32.mrf.mxu0
  %v10733 = vadd.f32 0.0, %v10732
  %10734 = vdwg.mxu0
  %v10735 = vadd.f32 %v10637, %v10696
  %v10736 = vadd.f32 %v10638, %v10698
  %v10737 = vadd.f32 %v10639, %v10701
  %v10738 = vadd.f32 %v10640, %v10703
  %v10739 = vadd.f32 %v10641, %v10706
  %v10740 = vadd.f32 %v10642, %v10708
  %v10741 = vadd.f32 %v10643, %v10711
  %v10742 = vadd.f32 %v10644, %v10713
  %v10743 = vadd.f32 %v10645, %v10716
  %v10744 = vadd.f32 %v10646, %v10718
  %v10745 = vadd.f32 %v10647, %v10721
  %v10746 = vadd.f32 %v10648, %v10723
  %v10747 = vadd.f32 %v10649, %v10726
  %v10748 = vadd.f32 %v10650, %v10728
  %v10749 = vadd.f32 %v10651, %v10731
  %v10750 = vadd.f32 %v10652, %v10733
  %v10751 = vld [vmem:[%s6] sm:$0x1]
  %v10752 = vld [vmem:[%s6 + $0x1] sm:$0x1]
  %v10753 = vld [vmem:[%s6 + $0x2] sm:$0x1]
  %v10754 = vld [vmem:[%s6 + $0x3] sm:$0x1]
  %v10755 = vld [vmem:[%s6 + $0x4] sm:$0x1]
  %v10756 = vld [vmem:[%s6 + $0x5] sm:$0x1]
  %v10757 = vld [vmem:[%s6 + $0x6] sm:$0x1]
  %v10758 = vld [vmem:[%s6 + $0x7] sm:$0x1]
  %v10759 = vld [vmem:[%s6 + $0x8] sm:$0x1]
  %v10760 = vld [vmem:[%s6 + $0x9] sm:$0x1]
  %v10761 = vld [vmem:[%s6 + $0xa] sm:$0x1]
  %v10762 = vld [vmem:[%s6 + $0xb] sm:$0x1]
  %v10763 = vld [vmem:[%s6 + $0xc] sm:$0x1]
  %v10764 = vld [vmem:[%s6 + $0xd] sm:$0x1]
  %v10765 = vld [vmem:[%s6 + $0xe] sm:$0x1]
  %v10766 = vld [vmem:[%s6 + $0xf] sm:$0x1]
  %v10767 = vld [vmem:[%s7] sm:$0x1]
  %v10768 = vld [vmem:[%s7 + $0x1] sm:$0x1]
  %v10769 = vld [vmem:[%s7 + $0x2] sm:$0x1]
  %v10770 = vld [vmem:[%s7 + $0x3] sm:$0x1]
  %v10771 = vld [vmem:[%s7 + $0x4] sm:$0x1]
  %v10772 = vld [vmem:[%s7 + $0x5] sm:$0x1]
  %v10773 = vld [vmem:[%s7 + $0x6] sm:$0x1]
  %v10774 = vld [vmem:[%s7 + $0x7] sm:$0x1]
  %v10775 = vld [vmem:[%s7 + $0x8] sm:$0x1]
  %v10776 = vld [vmem:[%s7 + $0x9] sm:$0x1]
  %v10777 = vld [vmem:[%s7 + $0xa] sm:$0x1]
  %v10778 = vld [vmem:[%s7 + $0xb] sm:$0x1]
  %v10779 = vld [vmem:[%s7 + $0xc] sm:$0x1]
  %v10780 = vld [vmem:[%s7 + $0xd] sm:$0x1]
  %v10781 = vld [vmem:[%s7 + $0xe] sm:$0x1]
  %v10782 = vld [vmem:[%s7 + $0xf] sm:$0x1]
  %v10783 = vadd.f32 %v10735, %v10736
  %v10784 = vadd.f32 %v10783, %v10737
  %v10785 = vadd.f32 %v10784, %v10738
  %v10786 = vadd.f32 %v10785, %v10739
  %v10787 = vadd.f32 %v10786, %v10740
  %v10788 = vadd.f32 %v10787, %v10741
  %v10789 = vadd.f32 %v10788, %v10742
  %v10790 = vadd.f32 %v10789, %v10743
  %v10791 = vadd.f32 %v10790, %v10744
  %v10792 = vadd.f32 %v10791, %v10745
  %v10793 = vadd.f32 %v10792, %v10746
  %v10794 = vadd.f32 %v10793, %v10747
  %v10795 = vadd.f32 %v10794, %v10748
  %v10796 = vadd.f32 %v10795, %v10749
  %v10797 = vadd.f32 %v10796, %v10750
  %10798 = vadd.xlane.f32.xlu0 %v10797
  %v10799 = vpop.xlane.xlu0 %10798
  %v10800 = vrcp.pop 2048.0
  %v10801 = vmul.f32 2048.0, %v10800
  %v10802 = vsub.f32 1.0, %v10801
  %v10803 = vmul.f32 %v10800, %v10802
  %v10804 = vadd.f32 %v10800, %v10803
  %vm10805 = vweird.f32 %v10800
  %v10806 = vsel %vm10805, %v10800, %v10804
  %v10807 = vmul.f32 %v10799, %v10806
  %v10808 = vsub.f32 %v10735, %v10807
  %v10809 = vsub.f32 %v10736, %v10807
  %v10810 = vsub.f32 %v10737, %v10807
  %v10811 = vsub.f32 %v10738, %v10807
  %v10812 = vsub.f32 %v10739, %v10807
  %v10813 = vsub.f32 %v10740, %v10807
  %v10814 = vsub.f32 %v10741, %v10807
  %v10815 = vsub.f32 %v10742, %v10807
  %v10816 = vsub.f32 %v10743, %v10807
  %v10817 = vsub.f32 %v10744, %v10807
  %v10818 = vsub.f32 %v10745, %v10807
  %v10819 = vsub.f32 %v10746, %v10807
  %v10820 = vsub.f32 %v10747, %v10807
  %v10821 = vsub.f32 %v10748, %v10807
  %v10822 = vsub.f32 %v10749, %v10807
  %v10823 = vsub.f32 %v10750, %v10807
  %v10824 = vmul.f32 %v10808, %v10808
  %v10825 = vmul.f32 %v10809, %v10809
  %v10826 = vmul.f32 %v10810, %v10810
  %v10827 = vmul.f32 %v10811, %v10811
  %v10828 = vmul.f32 %v10812, %v10812
  %v10829 = vmul.f32 %v10813, %v10813
  %v10830 = vmul.f32 %v10814, %v10814
  %v10831 = vmul.f32 %v10815, %v10815
  %v10832 = vmul.f32 %v10816, %v10816
  %v10833 = vmul.f32 %v10817, %v10817
  %v10834 = vmul.f32 %v10818, %v10818
  %v10835 = vmul.f32 %v10819, %v10819
  %v10836 = vmul.f32 %v10820, %v10820
  %v10837 = vmul.f32 %v10821, %v10821
  %v10838 = vmul.f32 %v10822, %v10822
  %v10839 = vmul.f32 %v10823, %v10823
  %v10840 = vadd.f32 %v10824, %v10825
  %v10841 = vadd.f32 %v10840, %v10826
  %v10842 = vadd.f32 %v10841, %v10827
  %v10843 = vadd.f32 %v10842, %v10828
  %v10844 = vadd.f32 %v10843, %v10829
  %v10845 = vadd.f32 %v10844, %v10830
  %v10846 = vadd.f32 %v10845, %v10831
  %v10847 = vadd.f32 %v10846, %v10832
  %v10848 = vadd.f32 %v10847, %v10833
  %v10849 = vadd.f32 %v10848, %v10834
  %v10850 = vadd.f32 %v10849, %v10835
  %v10851 = vadd.f32 %v10850, %v10836
  %v10852 = vadd.f32 %v10851, %v10837
  %v10853 = vadd.f32 %v10852, %v10838
  %v10854 = vadd.f32 %v10853, %v10839
  %10855 = vadd.xlane.f32.xlu0 %v10854
  %v10856 = vpop.xlane.xlu0 %10855
  %v10857 = vmul.f32 %v10856, %v10806
  %v10858 = vadd.f32 %v10857, 1e-05
  %v10859 = vrsqrt.pop %v10858
  %v10860 = vmul.f32 %v10859, %v10858
  %v10861 = vmul.f32 %v10860, %v10859
  %v10862 = vmul.f32 0.5, %v10861
  %v10863 = vsub.f32 1.5, %v10862
  %v10864 = vmul.f32 %v10859, %v10863
  %vm10865 = vweird.f32 %v10858
  %vm10866 = vweird.f32 %v10859
  %vm10867 = vmor %vm10865, %vm10866
  %v10868 = vsel %vm10867, %v10859, %v10864
  %v10869 = vmul.f32 %v10808, %v10868
  %v10870 = vmul.f32 %v10809, %v10868
  %v10871 = vmul.f32 %v10810, %v10868
  %v10872 = vmul.f32 %v10811, %v10868
  %v10873 = vmul.f32 %v10812, %v10868
  %v10874 = vmul.f32 %v10813, %v10868
  %v10875 = vmul.f32 %v10814, %v10868
  %v10876 = vmul.f32 %v10815, %v10868
  %v10877 = vmul.f32 %v10816, %v10868
  %v10878 = vmul.f32 %v10817, %v10868
  %v10879 = vmul.f32 %v10818, %v10868
  %v10880 = vmul.f32 %v10819, %v10868
  %v10881 = vmul.f32 %v10820, %v10868
  %v10882 = vmul.f32 %v10821, %v10868
  %v10883 = vmul.f32 %v10822, %v10868
  %v10884 = vmul.f32 %v10823, %v10868
  %v10901 = vperm.slane %v10751, 0
  %v10902 = vperm.slane %v10752, 0
  %v10903 = vperm.slane %v10753, 0
  %v10904 = vperm.slane %v10754, 0
  %v10905 = vperm.slane %v10755, 0
  %v10906 = vperm.slane %v10756, 0
  %v10907 = vperm.slane %v10757, 0
  %v10908 = vperm.slane %v10758, 0
  %v10909 = vperm.slane %v10759, 0
  %v10910 = vperm.slane %v10760, 0
  %v10911 = vperm.slane %v10761, 0
  %v10912 = vperm.slane %v10762, 0
  %v10913 = vperm.slane %v10763, 0
  %v10914 = vperm.slane %v10764, 0
  %v10915 = vperm.slane %v10765, 0
  %v10916 = vperm.slane %v10766, 0
  %v10933 = vmul.f32 %v10869, %v10901
  %v10934 = vmul.f32 %v10870, %v10902
  %v10935 = vmul.f32 %v10871, %v10903
  %v10936 = vmul.f32 %v10872, %v10904
  %v10937 = vmul.f32 %v10873, %v10905
  %v10938 = vmul.f32 %v10874, %v10906
  %v10939 = vmul.f32 %v10875, %v10907
  %v10940 = vmul.f32 %v10876, %v10908
  %v10941 = vmul.f32 %v10877, %v10909
  %v10942 = vmul.f32 %v10878, %v10910
  %v10943 = vmul.f32 %v10879, %v10911
  %v10944 = vmul.f32 %v10880, %v10912
  %v10945 = vmul.f32 %v10881, %v10913
  %v10946 = vmul.f32 %v10882, %v10914
  %v10947 = vmul.f32 %v10883, %v10915
  %v10948 = vmul.f32 %v10884, %v10916
  %v10965 = vperm.slane %v10767, 0
  %v10966 = vperm.slane %v10768, 0
  %v10967 = vperm.slane %v10769, 0
  %v10968 = vperm.slane %v10770, 0
  %v10969 = vperm.slane %v10771, 0
  %v10970 = vperm.slane %v10772, 0
  %v10971 = vperm.slane %v10773, 0
  %v10972 = vperm.slane %v10774, 0
  %v10973 = vperm.slane %v10775, 0
  %v10974 = vperm.slane %v10776, 0
  %v10975 = vperm.slane %v10777, 0
  %v10976 = vperm.slane %v10778, 0
  %v10977 = vperm.slane %v10779, 0
  %v10978 = vperm.slane %v10780, 0
  %v10979 = vperm.slane %v10781, 0
  %v10980 = vperm.slane %v10782, 0
  %v10997 = vadd.f32 %v10933, %v10965
  %v10998 = vadd.f32 %v10934, %v10966
  %v10999 = vadd.f32 %v10935, %v10967
  %v11000 = vadd.f32 %v10936, %v10968
  %v11001 = vadd.f32 %v10937, %v10969
  %v11002 = vadd.f32 %v10938, %v10970
  %v11003 = vadd.f32 %v10939, %v10971
  %v11004 = vadd.f32 %v10940, %v10972
  %v11005 = vadd.f32 %v10941, %v10973
  %v11006 = vadd.f32 %v10942, %v10974
  %v11007 = vadd.f32 %v10943, %v10975
  %v11008 = vadd.f32 %v10944, %v10976
  %v11009 = vadd.f32 %v10945, %v10977
  %v11010 = vadd.f32 %v10946, %v10978
  %v11011 = vadd.f32 %v10947, %v10979
  %v11012 = vadd.f32 %v10948, %v10980
  %vm11013 = vcmp.ge.f32.partialorder %v10997, 0.0
  %vm11014 = vcmp.ge.f32.partialorder %v10998, 0.0
  %vm11015 = vcmp.ge.f32.partialorder %v10999, 0.0
  %vm11016 = vcmp.ge.f32.partialorder %v11000, 0.0
  %vm11017 = vcmp.ge.f32.partialorder %v11001, 0.0
  %vm11018 = vcmp.ge.f32.partialorder %v11002, 0.0
  %vm11019 = vcmp.ge.f32.partialorder %v11003, 0.0
  %vm11020 = vcmp.ge.f32.partialorder %v11004, 0.0
  %vm11021 = vcmp.ge.f32.partialorder %v11005, 0.0
  %vm11022 = vcmp.ge.f32.partialorder %v11006, 0.0
  %vm11023 = vcmp.ge.f32.partialorder %v11007, 0.0
  %vm11024 = vcmp.ge.f32.partialorder %v11008, 0.0
  %vm11025 = vcmp.ge.f32.partialorder %v11009, 0.0
  %vm11026 = vcmp.ge.f32.partialorder %v11010, 0.0
  %vm11027 = vcmp.ge.f32.partialorder %v11011, 0.0
  %vm11028 = vcmp.ge.f32.partialorder %v11012, 0.0
  %v11029 = vmul.f32 %v10997, 0.2
  %v11030 = vmul.f32 %v10998, 0.2
  %v11031 = vmul.f32 %v10999, 0.2
  %v11032 = vmul.f32 %v11000, 0.2
  %v11033 = vmul.f32 %v11001, 0.2
  %v11034 = vmul.f32 %v11002, 0.2
  %v11035 = vmul.f32 %v11003, 0.2
  %v11036 = vmul.f32 %v11004, 0.2
  %v11037 = vmul.f32 %v11005, 0.2
  %v11038 = vmul.f32 %v11006, 0.2
  %v11039 = vmul.f32 %v11007, 0.2
  %v11040 = vmul.f32 %v11008, 0.2
  %v11041 = vmul.f32 %v11009, 0.2
  %v11042 = vmul.f32 %v11010, 0.2
  %v11043 = vmul.f32 %v11011, 0.2
  %v11044 = vmul.f32 %v11012, 0.2
  %v11045 = vsel %vm11013, %v10997, %v11029
  %v11046 = vsel %vm11014, %v10998, %v11030
  %v11047 = vsel %vm11015, %v10999, %v11031
  %v11048 = vsel %vm11016, %v11000, %v11032
  %v11049 = vsel %vm11017, %v11001, %v11033
  %v11050 = vsel %vm11018, %v11002, %v11034
  %v11051 = vsel %vm11019, %v11003, %v11035
  %v11052 = vsel %vm11020, %v11004, %v11036
  %v11053 = vsel %vm11021, %v11005, %v11037
  %v11054 = vsel %vm11022, %v11006, %v11038
  %v11055 = vsel %vm11023, %v11007, %v11039
  %v11056 = vsel %vm11024, %v11008, %v11040
  %v11057 = vsel %vm11025, %v11009, %v11041
  %v11058 = vsel %vm11026, %v11010, %v11042
  %v11059 = vsel %vm11027, %v11011, %v11043
  %v11060 = vsel %vm11028, %v11012, %v11044
  %v11061 = vld [vmem:[%s8] sm:$0x1]
  %v11062 = vld [vmem:[%s8 + $0x1] sm:$0x1]
  %v11063 = vld [vmem:[%s8 + $0x2] sm:$0x1]
  %v11064 = vld [vmem:[%s8 + $0x3] sm:$0x1]
  %v11065 = vld [vmem:[%s8 + $0x4] sm:$0x1]
  %v11066 = vld [vmem:[%s8 + $0x5] sm:$0x1]
  %v11067 = vld [vmem:[%s8 + $0x6] sm:$0x1]
  %v11068 = vld [vmem:[%s8 + $0x7] sm:$0x1]
  %v11069 = vld [vmem:[%s8 + $0x8] sm:$0x1]
  %v11070 = vld [vmem:[%s8 + $0x9] sm:$0x1]
  %v11071 = vld [vmem:[%s8 + $0xa] sm:$0x1]
  %v11072 = vld [vmem:[%s8 + $0xb] sm:$0x1]
  %v11073 = vld [vmem:[%s8 + $0xc] sm:$0x1]
  %v11074 = vld [vmem:[%s8 + $0xd] sm:$0x1]
  %v11075 = vld [vmem:[%s8 + $0xe] sm:$0x1]
  %v11076 = vld [vmem:[%s8 + $0xf] sm:$0x1]
  %v11093 = vperm.slane %v11061, 0
  %v11094 = vperm.slane %v11062, 0
  %v11095 = vperm.slane %v11063, 0
  %v11096 = vperm.slane %v11064, 0
  %v11097 = vperm.slane %v11065, 0
  %v11098 = vperm.slane %v11066, 0
  %v11099 = vperm.slane %v11067, 0
  %v11100 = vperm.slane %v11068, 0
  %v11101 = vperm.slane %v11069, 0
  %v11102 = vperm.slane %v11070, 0
  %v11103 = vperm.slane %v11071, 0
  %v11104 = vperm.slane %v11072, 0
  %v11105 = vperm.slane %v11073, 0
  %v11106 = vperm.slane %v11074, 0
  %v11107 = vperm.slane %v11075, 0
  %v11108 = vperm.slane %v11076, 0
  %v11125 = vmul.f32 %v11045, %v11093
  %v11126 = vmul.f32 %v11046, %v11094
  %v11127 = vmul.f32 %v11047, %v11095
  %v11128 = vmul.f32 %v11048, %v11096
  %v11129 = vmul.f32 %v11049, %v11097
  %v11130 = vmul.f32 %v11050, %v11098
  %v11131 = vmul.f32 %v11051, %v11099
  %v11132 = vmul.f32 %v11052, %v11100
  %v11133 = vmul.f32 %v11053, %v11101
  %v11134 = vmul.f32 %v11054, %v11102
  %v11135 = vmul.f32 %v11055, %v11103
  %v11136 = vmul.f32 %v11056, %v11104
  %v11137 = vmul.f32 %v11057, %v11105
  %v11138 = vmul.f32 %v11058, %v11106
  %v11139 = vmul.f32 %v11059, %v11107
  %v11140 = vmul.f32 %v11060, %v11108
  %v11141 = vadd.f32 %v11125, %v11126
  %v11142 = vadd.f32 %v11141, %v11127
  %v11143 = vadd.f32 %v11142, %v11128
  %v11144 = vadd.f32 %v11143, %v11129
  %v11145 = vadd.f32 %v11144, %v11130
  %v11146 = vadd.f32 %v11145, %v11131
  %v11147 = vadd.f32 %v11146, %v11132
  %v11148 = vadd.f32 %v11147, %v11133
  %v11149 = vadd.f32 %v11148, %v11134
  %v11150 = vadd.f32 %v11149, %v11135
  %v11151 = vadd.f32 %v11150, %v11136
  %v11152 = vadd.f32 %v11151, %v11137
  %v11153 = vadd.f32 %v11152, %v11138
  %v11154 = vadd.f32 %v11153, %v11139
  %v11155 = vadd.f32 %v11154, %v11140
  %11156 = vadd.xlane.f32.xlu0 %v11155
  %v11157 = vpop.xlane.xlu0 %11156
  %vm11158 = vcmask 7168
  %11159 = vst.msk [vmem:[%s9] sm:$0xff] %vm11158, %v11157
  // Predicated region
  $region38: #{_lambda_.1} parent=0 // pred_check
    _
  $region39: #{_lambda_.1} parent=0 // pred_check_branch
    %11161 = sbr.rel (0) target = $region41
  $region40: #{_lambda_.1} parent=0 // pred_region
    _
  $region41: #{_lambda_.1} parent=0 // pred_fallthru
    _
  // Predicated region
  $region42: #{_lambda_.1} parent=0 // pred_check
    _
  $region43: #{_lambda_.1} parent=0 // pred_check_branch
    %11163 = sbr.rel (0) target = $region45
  $region44: #{_lambda_.1} parent=0 // pred_region
    _
  $region45: #{_lambda_.1} parent=0 // pred_fallthru
    _

</llo_original>
